<compile_context>
chip_gen: v5e
topology: v5e:2x2
jax: 0.10.0
libtpu: 0.0.40
codegen_flags: <defaults>
</compile_context>

<pallas_src>
import jax
import jax.numpy as jnp
from jax import lax
from jax.experimental import pallas as pl
from jax.experimental.pallas import tpu as pltpu


def _mish_fast(y):
    # Algebraically y * tanh(softplus(y)); the clamp matches PyTorch's softplus
    # threshold (=20), where tanh has already saturated to 1.0 in f32.
    e = jnp.exp(jnp.minimum(y, 20.0))
    num = e * (e + 2.0)
    return y * (num / (num + 2.0))


def _make_kernel(B, H, W):
    """Build the fused 6-layer NestedResidualBlock kernel for static B, H, W."""
    M = B * H * W

    def nac(a2d, scale_ref, shift_ref, wcol_ref, res2d=None):
        # a2d:         (M, Cin)       activations (flattened NHWC)
        # scale/shift: (1, Cin)       folded BatchRenorm (inference) params
        # wcol:        (9*Cin, Cout)  folded conv weights (1x1 already in centre tap)
        cin = a2d.shape[-1]
        y = a2d * scale_ref[...] + shift_ref[...]          # BatchRenorm(eval) + affine
        y = _mish_fast(y)                                  # Mish

        # im2col for the 3x3 SAME conv: zero-pad H and W by 1, gather 9 taps.
        y4 = y.reshape(B, H, W, cin)
        zrow = jnp.zeros((B, 1, W, cin), jnp.float32)
        zcol = jnp.zeros((B, H + 2, 1, cin), jnp.float32)
        yp = jnp.concatenate([zrow, y4, zrow], axis=1)     # (B, H+2, W,   Cin)
        yp = jnp.concatenate([zcol, yp, zcol], axis=2)     # (B, H+2, W+2, Cin)
        taps = [yp[:, dh:dh + H, dw:dw + W, :]
                for dh in range(3) for dw in range(3)]
        pat = jnp.concatenate(taps, axis=-1).reshape(M, 9 * cin)

        # One MXU matmul per layer (conv3x3 + conv1x1 fused).
        # TODO(synk): cast pat/wcol to bf16 for the MXU on v6e/v7x at larger
        # shapes; kept f32 here to stay numerically faithful to the f32 module.
        out = jnp.dot(pat, wcol_ref[...], preferred_element_type=jnp.float32)
        if res2d is not None:
            out = out + res2d                              # fused residual add
        return out

    def kernel(x_ref, *refs):
        o_ref = refs[-1]
        layers = [refs[3 * i: 3 * i + 3] for i in range(6)]

        x2d = x_ref[...]                                   # (M, C)
        out1 = nac(x2d, *layers[0])                        # conv_in:   C   -> C/2
        t = nac(out1, *layers[1])                          # ib1.conv1
        out2 = nac(t, *layers[2], res2d=out1)              # ib1.conv2 + out1
        t = nac(out2, *layers[3])                          # ib2.conv1
        out3 = nac(t, *layers[4], res2d=out2)              # ib2.conv2 + out2
        o_ref[...] = nac(out3, *layers[5], res2d=x2d)      # conv_out: C/2 -> C, + x

    return kernel


_LAYER_ORDER = ('conv_in', 'ib1_conv1', 'ib1_conv2',
                'ib2_conv1', 'ib2_conv2', 'conv_out')


@jax.jit
def nested_residual_block(x, params):
    """x: (B, H, W, C) NHWC float32. Mirrors NestedResidualBlock.forward
    (use_se=False); BatchRenorm2d is in its inference (eval) path."""
    # TODO(synk): training-mode BatchRenorm buffer updates (running stats,
    # num_batches_tracked) are stateful and not represented; inference only.
    B, H, W, C = x.shape
    M = B * H * W

    flat_inputs = [x.reshape(M, C)]                        # free reshape of contiguous NHWC
    for name in _LAYER_ORDER:
        p = params[name]
        cin, cout = p['w1'].shape
        scale = (p['gamma'] / p['std']).astype(jnp.float32)
        shift = (p['beta'] - p['mean'] * scale).astype(jnp.float32)
        wcol = p['w3'].at[1, 1].add(p['w1']).reshape(9 * cin, cout)
        flat_inputs += [scale.reshape(1, cin), shift.reshape(1, cin),
                        wcol.astype(jnp.float32)]

    out2d = pl.pallas_call(
        _make_kernel(B, H, W),
        out_shape=jax.ShapeDtypeStruct((M, C), jnp.float32),
        # No grid: whole arrays live in VMEM (~0.2 MB total at these shapes).
        compiler_params=pltpu.CompilerParams(vmem_limit_bytes=32 * 1024 * 1024),
    )(*flat_inputs)
    # TODO(synk): for large batches add a "parallel" batch grid axis so v7x's
    # two TensorCores split the work; at B*H*W = 128 a single step is optimal.
    return out2d.reshape(B, H, W, C)


def init_nac_params(key, cin, cout):
    k = jax.random.split(key, 6)
    return dict(
        mean=0.1 * jax.random.normal(k[0], (cin,), jnp.float32),
        std=1.0 + 0.1 * jnp.abs(jax.random.normal(k[1], (cin,), jnp.float32)),
        gamma=1.0 + 0.1 * jax.random.normal(k[2], (cin,), jnp.float32),
        beta=0.1 * jax.random.normal(k[3], (cin,), jnp.float32),
        w3=jax.random.normal(k[4], (3, 3, cin, cout), jnp.float32) / jnp.sqrt(9.0 * cin),
        w1=jax.random.normal(k[5], (cin, cout), jnp.float32) / jnp.sqrt(1.0 * cin),
    )


# ---------------- pure-JAX reference for verification ----------------
def _mish_exact(y):
    # PyTorch Mish: y * tanh(softplus(y)), softplus threshold = 20
    sp = jnp.where(y > 20.0, y, jnp.log1p(jnp.exp(jnp.minimum(y, 20.0))))
    return y * jnp.tanh(sp)


def _nac_ref(x, res, p):
    y = (x - p['mean']) / p['std'] * p['gamma'] + p['beta']
    y = _mish_exact(y)
    c3 = lax.conv_general_dilated(y, p['w3'], (1, 1), 'SAME',
                                  dimension_numbers=('NHWC', 'HWIO', 'NHWC'))
    c1 = lax.conv_general_dilated(y, p['w1'][None, None], (1, 1), 'SAME',
                                  dimension_numbers=('NHWC', 'HWIO', 'NHWC'))
    return c3 + c1 + res


def nested_residual_block_ref(x, params):
    B, H, W, C = x.shape
    c2 = C // 2
    z = jnp.zeros((B, H, W, c2), jnp.float32)
    out1 = _nac_ref(x, z, params['conv_in'])
    t = _nac_ref(out1, z, params['ib1_conv1'])
    out2 = _nac_ref(t, out1, params['ib1_conv2'])
    t = _nac_ref(out2, z, params['ib2_conv1'])
    out3 = _nac_ref(t, out2, params['ib2_conv2'])
    return _nac_ref(out3, x, params['conv_out'])


if __name__ == "__main__":
    B, C, H, W = 2, 32, 8, 8           # NCHW view: x is [2, 32, 8, 8]
    c2 = C // 2

    key = jax.random.PRNGKey(0)
    kx, kp = jax.random.split(key)
    x = jax.random.normal(kx, (B, H, W, C), jnp.float32)   # NHWC layout

    keys = jax.random.split(kp, 6)
    params = {
        'conv_in':   init_nac_params(keys[0], C, c2),
        'ib1_conv1': init_nac_params(keys[1], c2, c2),
        'ib1_conv2': init_nac_params(keys[2], c2, c2),
        'ib2_conv1': init_nac_params(keys[3], c2, c2),
        'ib2_conv2': init_nac_params(keys[4], c2, c2),
        'conv_out':  init_nac_params(keys[5], c2, C),
    }

    out = nested_residual_block(x, params)
    out = jax.block_until_ready(out)

    ref = nested_residual_block_ref(x, params)
    assert out.shape == (B, H, W, C)
    assert jnp.allclose(out, ref, rtol=1e-3, atol=1e-3), "mismatch vs reference"

    print("KERNEL_OK")
</pallas_src>

<mosaic_0001>
module attributes {stable_mosaic.version = 11 : i64} {
  func.func @kernel(%arg0: memref<128x32xf32, #tpu.memory_space<vmem>>, %arg1: memref<1x32xf32, #tpu.memory_space<vmem>>, %arg2: memref<1x32xf32, #tpu.memory_space<vmem>>, %arg3: memref<288x16xf32, #tpu.memory_space<vmem>>, %arg4: memref<1x16xf32, #tpu.memory_space<vmem>>, %arg5: memref<1x16xf32, #tpu.memory_space<vmem>>, %arg6: memref<144x16xf32, #tpu.memory_space<vmem>>, %arg7: memref<1x16xf32, #tpu.memory_space<vmem>>, %arg8: memref<1x16xf32, #tpu.memory_space<vmem>>, %arg9: memref<144x16xf32, #tpu.memory_space<vmem>>, %arg10: memref<1x16xf32, #tpu.memory_space<vmem>>, %arg11: memref<1x16xf32, #tpu.memory_space<vmem>>, %arg12: memref<144x16xf32, #tpu.memory_space<vmem>>, %arg13: memref<1x16xf32, #tpu.memory_space<vmem>>, %arg14: memref<1x16xf32, #tpu.memory_space<vmem>>, %arg15: memref<144x16xf32, #tpu.memory_space<vmem>>, %arg16: memref<1x16xf32, #tpu.memory_space<vmem>>, %arg17: memref<1x16xf32, #tpu.memory_space<vmem>>, %arg18: memref<144x32xf32, #tpu.memory_space<vmem>>, %arg19: memref<128x32xf32, #tpu.memory_space<vmem>>) attributes {dimension_semantics = [], scalar_prefetch = 0 : i64, scratch_operands = 0 : i64, tpu.core_type = #tpu.core_type<tc>} {
    %c0 = arith.constant 0 : index
    %c0_0 = arith.constant 0 : index
    %0 = vector.load %arg0[%c0, %c0_0] : memref<128x32xf32, #tpu.memory_space<vmem>>, vector<128x32xf32>
    %c0_1 = arith.constant 0 : index
    %c0_2 = arith.constant 0 : index
    %1 = vector.load %arg1[%c0_1, %c0_2] : memref<1x32xf32, #tpu.memory_space<vmem>>, vector<1x32xf32>
    %2 = vector.broadcast %1 : vector<1x32xf32> to vector<128x32xf32>
    %3 = arith.mulf %0, %2 : vector<128x32xf32>
    %c0_3 = arith.constant 0 : index
    %c0_4 = arith.constant 0 : index
    %4 = vector.load %arg2[%c0_3, %c0_4] : memref<1x32xf32, #tpu.memory_space<vmem>>, vector<1x32xf32>
    %5 = vector.broadcast %4 : vector<1x32xf32> to vector<128x32xf32>
    %6 = arith.addf %3, %5 : vector<128x32xf32>
    %cst = arith.constant 2.000000e+01 : f32
    %7 = vector.broadcast %cst : f32 to vector<128x32xf32>
    %8 = arith.minimumf %6, %7 : vector<128x32xf32>
    %9 = math.exp %8 : vector<128x32xf32>
    %cst_5 = arith.constant 2.000000e+00 : f32
    %10 = vector.broadcast %cst_5 : f32 to vector<128x32xf32>
    %11 = arith.addf %9, %10 : vector<128x32xf32>
    %12 = arith.mulf %9, %11 : vector<128x32xf32>
    %cst_6 = arith.constant 2.000000e+00 : f32
    %13 = vector.broadcast %cst_6 : f32 to vector<128x32xf32>
    %14 = arith.addf %12, %13 : vector<128x32xf32>
    %15 = arith.divf %12, %14 : vector<128x32xf32>
    %16 = arith.mulf %6, %15 : vector<128x32xf32>
    %17 = vector.shape_cast %16 : vector<128x32xf32> to vector<2x8x8x32xf32>
    %cst_7 = arith.constant 0.000000e+00 : f32
    %18 = vector.broadcast %cst_7 : f32 to vector<2x1x8x32xf32>
    %cst_8 = arith.constant 0.000000e+00 : f32
    %19 = vector.broadcast %cst_8 : f32 to vector<2x10x1x32xf32>
    %20 = tpu.concatenate %18, %17, %18 in 1 : vector<2x1x8x32xf32>, vector<2x8x8x32xf32>, vector<2x1x8x32xf32> -> vector<2x10x8x32xf32>
    %21 = tpu.concatenate %19, %20, %19 in 2 : vector<2x10x1x32xf32>, vector<2x10x8x32xf32>, vector<2x10x1x32xf32> -> vector<2x10x10x32xf32>
    %22 = vector.extract_strided_slice %21 {offsets = [0, 0, 0, 0], sizes = [2, 8, 8, 32], strides = [1, 1, 1, 1]} : vector<2x10x10x32xf32> to vector<2x8x8x32xf32>
    %23 = vector.extract_strided_slice %21 {offsets = [0, 0, 1, 0], sizes = [2, 8, 8, 32], strides = [1, 1, 1, 1]} : vector<2x10x10x32xf32> to vector<2x8x8x32xf32>
    %24 = vector.extract_strided_slice %21 {offsets = [0, 0, 2, 0], sizes = [2, 8, 8, 32], strides = [1, 1, 1, 1]} : vector<2x10x10x32xf32> to vector<2x8x8x32xf32>
    %25 = vector.extract_strided_slice %21 {offsets = [0, 1, 0, 0], sizes = [2, 8, 8, 32], strides = [1, 1, 1, 1]} : vector<2x10x10x32xf32> to vector<2x8x8x32xf32>
    %26 = vector.extract_strided_slice %21 {offsets = [0, 1, 1, 0], sizes = [2, 8, 8, 32], strides = [1, 1, 1, 1]} : vector<2x10x10x32xf32> to vector<2x8x8x32xf32>
    %27 = vector.extract_strided_slice %21 {offsets = [0, 1, 2, 0], sizes = [2, 8, 8, 32], strides = [1, 1, 1, 1]} : vector<2x10x10x32xf32> to vector<2x8x8x32xf32>
    %28 = vector.extract_strided_slice %21 {offsets = [0, 2, 0, 0], sizes = [2, 8, 8, 32], strides = [1, 1, 1, 1]} : vector<2x10x10x32xf32> to vector<2x8x8x32xf32>
    %29 = vector.extract_strided_slice %21 {offsets = [0, 2, 1, 0], sizes = [2, 8, 8, 32], strides = [1, 1, 1, 1]} : vector<2x10x10x32xf32> to vector<2x8x8x32xf32>
    %30 = vector.extract_strided_slice %21 {offsets = [0, 2, 2, 0], sizes = [2, 8, 8, 32], strides = [1, 1, 1, 1]} : vector<2x10x10x32xf32> to vector<2x8x8x32xf32>
    %31 = tpu.concatenate %22, %23, %24, %25, %26, %27, %28, %29, %30 in 3 : vector<2x8x8x32xf32>, vector<2x8x8x32xf32>, vector<2x8x8x32xf32>, vector<2x8x8x32xf32>, vector<2x8x8x32xf32>, vector<2x8x8x32xf32>, vector<2x8x8x32xf32>, vector<2x8x8x32xf32>, vector<2x8x8x32xf32> -> vector<2x8x8x288xf32>
    %32 = vector.shape_cast %31 : vector<2x8x8x288xf32> to vector<128x288xf32>
    %c0_9 = arith.constant 0 : index
    %c0_10 = arith.constant 0 : index
    %33 = vector.load %arg3[%c0_9, %c0_10] : memref<288x16xf32, #tpu.memory_space<vmem>>, vector<288x16xf32>
    %cst_11 = arith.constant dense<0.000000e+00> : vector<128x16xf32>
    %34 = tpu.matmul %32, %33, %cst_11 {dimension_numbers = #tpu.dot_dimension_numbers<[1], [0], [0], [1], [0, 0, 1, 1], [], []>} : vector<128x288xf32>, vector<288x16xf32>, vector<128x16xf32> -> vector<128x16xf32>
    %c0_12 = arith.constant 0 : index
    %c0_13 = arith.constant 0 : index
    %35 = vector.load %arg4[%c0_12, %c0_13] : memref<1x16xf32, #tpu.memory_space<vmem>>, vector<1x16xf32>
    %36 = vector.broadcast %35 : vector<1x16xf32> to vector<128x16xf32>
    %37 = arith.mulf %34, %36 : vector<128x16xf32>
    %c0_14 = arith.constant 0 : index
    %c0_15 = arith.constant 0 : index
    %38 = vector.load %arg5[%c0_14, %c0_15] : memref<1x16xf32, #tpu.memory_space<vmem>>, vector<1x16xf32>
    %39 = vector.broadcast %38 : vector<1x16xf32> to vector<128x16xf32>
    %40 = arith.addf %37, %39 : vector<128x16xf32>
    %cst_16 = arith.constant 2.000000e+01 : f32
    %41 = vector.broadcast %cst_16 : f32 to vector<128x16xf32>
    %42 = arith.minimumf %40, %41 : vector<128x16xf32>
    %43 = math.exp %42 : vector<128x16xf32>
    %cst_17 = arith.constant 2.000000e+00 : f32
    %44 = vector.broadcast %cst_17 : f32 to vector<128x16xf32>
    %45 = arith.addf %43, %44 : vector<128x16xf32>
    %46 = arith.mulf %43, %45 : vector<128x16xf32>
    %cst_18 = arith.constant 2.000000e+00 : f32
    %47 = vector.broadcast %cst_18 : f32 to vector<128x16xf32>
    %48 = arith.addf %46, %47 : vector<128x16xf32>
    %49 = arith.divf %46, %48 : vector<128x16xf32>
    %50 = arith.mulf %40, %49 : vector<128x16xf32>
    %51 = vector.shape_cast %50 : vector<128x16xf32> to vector<2x8x8x16xf32>
    %cst_19 = arith.constant 0.000000e+00 : f32
    %52 = vector.broadcast %cst_19 : f32 to vector<2x1x8x16xf32>
    %cst_20 = arith.constant 0.000000e+00 : f32
    %53 = vector.broadcast %cst_20 : f32 to vector<2x10x1x16xf32>
    %54 = tpu.concatenate %52, %51, %52 in 1 : vector<2x1x8x16xf32>, vector<2x8x8x16xf32>, vector<2x1x8x16xf32> -> vector<2x10x8x16xf32>
    %55 = tpu.concatenate %53, %54, %53 in 2 : vector<2x10x1x16xf32>, vector<2x10x8x16xf32>, vector<2x10x1x16xf32> -> vector<2x10x10x16xf32>
    %56 = vector.extract_strided_slice %55 {offsets = [0, 0, 0, 0], sizes = [2, 8, 8, 16], strides = [1, 1, 1, 1]} : vector<2x10x10x16xf32> to vector<2x8x8x16xf32>
    %57 = vector.extract_strided_slice %55 {offsets = [0, 0, 1, 0], sizes = [2, 8, 8, 16], strides = [1, 1, 1, 1]} : vector<2x10x10x16xf32> to vector<2x8x8x16xf32>
    %58 = vector.extract_strided_slice %55 {offsets = [0, 0, 2, 0], sizes = [2, 8, 8, 16], strides = [1, 1, 1, 1]} : vector<2x10x10x16xf32> to vector<2x8x8x16xf32>
    %59 = vector.extract_strided_slice %55 {offsets = [0, 1, 0, 0], sizes = [2, 8, 8, 16], strides = [1, 1, 1, 1]} : vector<2x10x10x16xf32> to vector<2x8x8x16xf32>
    %60 = vector.extract_strided_slice %55 {offsets = [0, 1, 1, 0], sizes = [2, 8, 8, 16], strides = [1, 1, 1, 1]} : vector<2x10x10x16xf32> to vector<2x8x8x16xf32>
    %61 = vector.extract_strided_slice %55 {offsets = [0, 1, 2, 0], sizes = [2, 8, 8, 16], strides = [1, 1, 1, 1]} : vector<2x10x10x16xf32> to vector<2x8x8x16xf32>
    %62 = vector.extract_strided_slice %55 {offsets = [0, 2, 0, 0], sizes = [2, 8, 8, 16], strides = [1, 1, 1, 1]} : vector<2x10x10x16xf32> to vector<2x8x8x16xf32>
    %63 = vector.extract_strided_slice %55 {offsets = [0, 2, 1, 0], sizes = [2, 8, 8, 16], strides = [1, 1, 1, 1]} : vector<2x10x10x16xf32> to vector<2x8x8x16xf32>
    %64 = vector.extract_strided_slice %55 {offsets = [0, 2, 2, 0], sizes = [2, 8, 8, 16], strides = [1, 1, 1, 1]} : vector<2x10x10x16xf32> to vector<2x8x8x16xf32>
    %65 = tpu.concatenate %56, %57, %58, %59, %60, %61, %62, %63, %64 in 3 : vector<2x8x8x16xf32>, vector<2x8x8x16xf32>, vector<2x8x8x16xf32>, vector<2x8x8x16xf32>, vector<2x8x8x16xf32>, vector<2x8x8x16xf32>, vector<2x8x8x16xf32>, vector<2x8x8x16xf32>, vector<2x8x8x16xf32> -> vector<2x8x8x144xf32>
    %66 = vector.shape_cast %65 : vector<2x8x8x144xf32> to vector<128x144xf32>
    %c0_21 = arith.constant 0 : index
    %c0_22 = arith.constant 0 : index
    %67 = vector.load %arg6[%c0_21, %c0_22] : memref<144x16xf32, #tpu.memory_space<vmem>>, vector<144x16xf32>
    %cst_23 = arith.constant dense<0.000000e+00> : vector<128x16xf32>
    %68 = tpu.matmul %66, %67, %cst_23 {dimension_numbers = #tpu.dot_dimension_numbers<[1], [0], [0], [1], [0, 0, 1, 1], [], []>} : vector<128x144xf32>, vector<144x16xf32>, vector<128x16xf32> -> vector<128x16xf32>
    %c0_24 = arith.constant 0 : index
    %c0_25 = arith.constant 0 : index
    %69 = vector.load %arg7[%c0_24, %c0_25] : memref<1x16xf32, #tpu.memory_space<vmem>>, vector<1x16xf32>
    %70 = vector.broadcast %69 : vector<1x16xf32> to vector<128x16xf32>
    %71 = arith.mulf %68, %70 : vector<128x16xf32>
    %c0_26 = arith.constant 0 : index
    %c0_27 = arith.constant 0 : index
    %72 = vector.load %arg8[%c0_26, %c0_27] : memref<1x16xf32, #tpu.memory_space<vmem>>, vector<1x16xf32>
    %73 = vector.broadcast %72 : vector<1x16xf32> to vector<128x16xf32>
    %74 = arith.addf %71, %73 : vector<128x16xf32>
    %cst_28 = arith.constant 2.000000e+01 : f32
    %75 = vector.broadcast %cst_28 : f32 to vector<128x16xf32>
    %76 = arith.minimumf %74, %75 : vector<128x16xf32>
    %77 = math.exp %76 : vector<128x16xf32>
    %cst_29 = arith.constant 2.000000e+00 : f32
    %78 = vector.broadcast %cst_29 : f32 to vector<128x16xf32>
    %79 = arith.addf %77, %78 : vector<128x16xf32>
    %80 = arith.mulf %77, %79 : vector<128x16xf32>
    %cst_30 = arith.constant 2.000000e+00 : f32
    %81 = vector.broadcast %cst_30 : f32 to vector<128x16xf32>
    %82 = arith.addf %80, %81 : vector<128x16xf32>
    %83 = arith.divf %80, %82 : vector<128x16xf32>
    %84 = arith.mulf %74, %83 : vector<128x16xf32>
    %85 = vector.shape_cast %84 : vector<128x16xf32> to vector<2x8x8x16xf32>
    %cst_31 = arith.constant 0.000000e+00 : f32
    %86 = vector.broadcast %cst_31 : f32 to vector<2x1x8x16xf32>
    %cst_32 = arith.constant 0.000000e+00 : f32
    %87 = vector.broadcast %cst_32 : f32 to vector<2x10x1x16xf32>
    %88 = tpu.concatenate %86, %85, %86 in 1 : vector<2x1x8x16xf32>, vector<2x8x8x16xf32>, vector<2x1x8x16xf32> -> vector<2x10x8x16xf32>
    %89 = tpu.concatenate %87, %88, %87 in 2 : vector<2x10x1x16xf32>, vector<2x10x8x16xf32>, vector<2x10x1x16xf32> -> vector<2x10x10x16xf32>
    %90 = vector.extract_strided_slice %89 {offsets = [0, 0, 0, 0], sizes = [2, 8, 8, 16], strides = [1, 1, 1, 1]} : vector<2x10x10x16xf32> to vector<2x8x8x16xf32>
    %91 = vector.extract_strided_slice %89 {offsets = [0, 0, 1, 0], sizes = [2, 8, 8, 16], strides = [1, 1, 1, 1]} : vector<2x10x10x16xf32> to vector<2x8x8x16xf32>
    %92 = vector.extract_strided_slice %89 {offsets = [0, 0, 2, 0], sizes = [2, 8, 8, 16], strides = [1, 1, 1, 1]} : vector<2x10x10x16xf32> to vector<2x8x8x16xf32>
    %93 = vector.extract_strided_slice %89 {offsets = [0, 1, 0, 0], sizes = [2, 8, 8, 16], strides = [1, 1, 1, 1]} : vector<2x10x10x16xf32> to vector<2x8x8x16xf32>
    %94 = vector.extract_strided_slice %89 {offsets = [0, 1, 1, 0], sizes = [2, 8, 8, 16], strides = [1, 1, 1, 1]} : vector<2x10x10x16xf32> to vector<2x8x8x16xf32>
    %95 = vector.extract_strided_slice %89 {offsets = [0, 1, 2, 0], sizes = [2, 8, 8, 16], strides = [1, 1, 1, 1]} : vector<2x10x10x16xf32> to vector<2x8x8x16xf32>
    %96 = vector.extract_strided_slice %89 {offsets = [0, 2, 0, 0], sizes = [2, 8, 8, 16], strides = [1, 1, 1, 1]} : vector<2x10x10x16xf32> to vector<2x8x8x16xf32>
    %97 = vector.extract_strided_slice %89 {offsets = [0, 2, 1, 0], sizes = [2, 8, 8, 16], strides = [1, 1, 1, 1]} : vector<2x10x10x16xf32> to vector<2x8x8x16xf32>
    %98 = vector.extract_strided_slice %89 {offsets = [0, 2, 2, 0], sizes = [2, 8, 8, 16], strides = [1, 1, 1, 1]} : vector<2x10x10x16xf32> to vector<2x8x8x16xf32>
    %99 = tpu.concatenate %90, %91, %92, %93, %94, %95, %96, %97, %98 in 3 : vector<2x8x8x16xf32>, vector<2x8x8x16xf32>, vector<2x8x8x16xf32>, vector<2x8x8x16xf32>, vector<2x8x8x16xf32>, vector<2x8x8x16xf32>, vector<2x8x8x16xf32>, vector<2x8x8x16xf32>, vector<2x8x8x16xf32> -> vector<2x8x8x144xf32>
    %100 = vector.shape_cast %99 : vector<2x8x8x144xf32> to vector<128x144xf32>
    %c0_33 = arith.constant 0 : index
    %c0_34 = arith.constant 0 : index
    %101 = vector.load %arg9[%c0_33, %c0_34] : memref<144x16xf32, #tpu.memory_space<vmem>>, vector<144x16xf32>
    %cst_35 = arith.constant dense<0.000000e+00> : vector<128x16xf32>
    %102 = tpu.matmul %100, %101, %cst_35 {dimension_numbers = #tpu.dot_dimension_numbers<[1], [0], [0], [1], [0, 0, 1, 1], [], []>} : vector<128x144xf32>, vector<144x16xf32>, vector<128x16xf32> -> vector<128x16xf32>
    %103 = arith.addf %102, %34 : vector<128x16xf32>
    %c0_36 = arith.constant 0 : index
    %c0_37 = arith.constant 0 : index
    %104 = vector.load %arg10[%c0_36, %c0_37] : memref<1x16xf32, #tpu.memory_space<vmem>>, vector<1x16xf32>
    %105 = vector.broadcast %104 : vector<1x16xf32> to vector<128x16xf32>
    %106 = arith.mulf %103, %105 : vector<128x16xf32>
    %c0_38 = arith.constant 0 : index
    %c0_39 = arith.constant 0 : index
    %107 = vector.load %arg11[%c0_38, %c0_39] : memref<1x16xf32, #tpu.memory_space<vmem>>, vector<1x16xf32>
    %108 = vector.broadcast %107 : vector<1x16xf32> to vector<128x16xf32>
    %109 = arith.addf %106, %108 : vector<128x16xf32>
    %cst_40 = arith.constant 2.000000e+01 : f32
    %110 = vector.broadcast %cst_40 : f32 to vector<128x16xf32>
    %111 = arith.minimumf %109, %110 : vector<128x16xf32>
    %112 = math.exp %111 : vector<128x16xf32>
    %cst_41 = arith.constant 2.000000e+00 : f32
    %113 = vector.broadcast %cst_41 : f32 to vector<128x16xf32>
    %114 = arith.addf %112, %113 : vector<128x16xf32>
    %115 = arith.mulf %112, %114 : vector<128x16xf32>
    %cst_42 = arith.constant 2.000000e+00 : f32
    %116 = vector.broadcast %cst_42 : f32 to vector<128x16xf32>
    %117 = arith.addf %115, %116 : vector<128x16xf32>
    %118 = arith.divf %115, %117 : vector<128x16xf32>
    %119 = arith.mulf %109, %118 : vector<128x16xf32>
    %120 = vector.shape_cast %119 : vector<128x16xf32> to vector<2x8x8x16xf32>
    %cst_43 = arith.constant 0.000000e+00 : f32
    %121 = vector.broadcast %cst_43 : f32 to vector<2x1x8x16xf32>
    %cst_44 = arith.constant 0.000000e+00 : f32
    %122 = vector.broadcast %cst_44 : f32 to vector<2x10x1x16xf32>
    %123 = tpu.concatenate %121, %120, %121 in 1 : vector<2x1x8x16xf32>, vector<2x8x8x16xf32>, vector<2x1x8x16xf32> -> vector<2x10x8x16xf32>
    %124 = tpu.concatenate %122, %123, %122 in 2 : vector<2x10x1x16xf32>, vector<2x10x8x16xf32>, vector<2x10x1x16xf32> -> vector<2x10x10x16xf32>
    %125 = vector.extract_strided_slice %124 {offsets = [0, 0, 0, 0], sizes = [2, 8, 8, 16], strides = [1, 1, 1, 1]} : vector<2x10x10x16xf32> to vector<2x8x8x16xf32>
    %126 = vector.extract_strided_slice %124 {offsets = [0, 0, 1, 0], sizes = [2, 8, 8, 16], strides = [1, 1, 1, 1]} : vector<2x10x10x16xf32> to vector<2x8x8x16xf32>
    %127 = vector.extract_strided_slice %124 {offsets = [0, 0, 2, 0], sizes = [2, 8, 8, 16], strides = [1, 1, 1, 1]} : vector<2x10x10x16xf32> to vector<2x8x8x16xf32>
    %128 = vector.extract_strided_slice %124 {offsets = [0, 1, 0, 0], sizes = [2, 8, 8, 16], strides = [1, 1, 1, 1]} : vector<2x10x10x16xf32> to vector<2x8x8x16xf32>
    %129 = vector.extract_strided_slice %124 {offsets = [0, 1, 1, 0], sizes = [2, 8, 8, 16], strides = [1, 1, 1, 1]} : vector<2x10x10x16xf32> to vector<2x8x8x16xf32>
    %130 = vector.extract_strided_slice %124 {offsets = [0, 1, 2, 0], sizes = [2, 8, 8, 16], strides = [1, 1, 1, 1]} : vector<2x10x10x16xf32> to vector<2x8x8x16xf32>
    %131 = vector.extract_strided_slice %124 {offsets = [0, 2, 0, 0], sizes = [2, 8, 8, 16], strides = [1, 1, 1, 1]} : vector<2x10x10x16xf32> to vector<2x8x8x16xf32>
    %132 = vector.extract_strided_slice %124 {offsets = [0, 2, 1, 0], sizes = [2, 8, 8, 16], strides = [1, 1, 1, 1]} : vector<2x10x10x16xf32> to vector<2x8x8x16xf32>
    %133 = vector.extract_strided_slice %124 {offsets = [0, 2, 2, 0], sizes = [2, 8, 8, 16], strides = [1, 1, 1, 1]} : vector<2x10x10x16xf32> to vector<2x8x8x16xf32>
    %134 = tpu.concatenate %125, %126, %127, %128, %129, %130, %131, %132, %133 in 3 : vector<2x8x8x16xf32>, vector<2x8x8x16xf32>, vector<2x8x8x16xf32>, vector<2x8x8x16xf32>, vector<2x8x8x16xf32>, vector<2x8x8x16xf32>, vector<2x8x8x16xf32>, vector<2x8x8x16xf32>, vector<2x8x8x16xf32> -> vector<2x8x8x144xf32>
    %135 = vector.shape_cast %134 : vector<2x8x8x144xf32> to vector<128x144xf32>
    %c0_45 = arith.constant 0 : index
    %c0_46 = arith.constant 0 : index
    %136 = vector.load %arg12[%c0_45, %c0_46] : memref<144x16xf32, #tpu.memory_space<vmem>>, vector<144x16xf32>
    %cst_47 = arith.constant dense<0.000000e+00> : vector<128x16xf32>
    %137 = tpu.matmul %135, %136, %cst_47 {dimension_numbers = #tpu.dot_dimension_numbers<[1], [0], [0], [1], [0, 0, 1, 1], [], []>} : vector<128x144xf32>, vector<144x16xf32>, vector<128x16xf32> -> vector<128x16xf32>
    %c0_48 = arith.constant 0 : index
    %c0_49 = arith.constant 0 : index
    %138 = vector.load %arg13[%c0_48, %c0_49] : memref<1x16xf32, #tpu.memory_space<vmem>>, vector<1x16xf32>
    %139 = vector.broadcast %138 : vector<1x16xf32> to vector<128x16xf32>
    %140 = arith.mulf %137, %139 : vector<128x16xf32>
    %c0_50 = arith.constant 0 : index
    %c0_51 = arith.constant 0 : index
    %141 = vector.load %arg14[%c0_50, %c0_51] : memref<1x16xf32, #tpu.memory_space<vmem>>, vector<1x16xf32>
    %142 = vector.broadcast %141 : vector<1x16xf32> to vector<128x16xf32>
    %143 = arith.addf %140, %142 : vector<128x16xf32>
    %cst_52 = arith.constant 2.000000e+01 : f32
    %144 = vector.broadcast %cst_52 : f32 to vector<128x16xf32>
    %145 = arith.minimumf %143, %144 : vector<128x16xf32>
    %146 = math.exp %145 : vector<128x16xf32>
    %cst_53 = arith.constant 2.000000e+00 : f32
    %147 = vector.broadcast %cst_53 : f32 to vector<128x16xf32>
    %148 = arith.addf %146, %147 : vector<128x16xf32>
    %149 = arith.mulf %146, %148 : vector<128x16xf32>
    %cst_54 = arith.constant 2.000000e+00 : f32
    %150 = vector.broadcast %cst_54 : f32 to vector<128x16xf32>
    %151 = arith.addf %149, %150 : vector<128x16xf32>
    %152 = arith.divf %149, %151 : vector<128x16xf32>
    %153 = arith.mulf %143, %152 : vector<128x16xf32>
    %154 = vector.shape_cast %153 : vector<128x16xf32> to vector<2x8x8x16xf32>
    %cst_55 = arith.constant 0.000000e+00 : f32
    %155 = vector.broadcast %cst_55 : f32 to vector<2x1x8x16xf32>
    %cst_56 = arith.constant 0.000000e+00 : f32
    %156 = vector.broadcast %cst_56 : f32 to vector<2x10x1x16xf32>
    %157 = tpu.concatenate %155, %154, %155 in 1 : vector<2x1x8x16xf32>, vector<2x8x8x16xf32>, vector<2x1x8x16xf32> -> vector<2x10x8x16xf32>
    %158 = tpu.concatenate %156, %157, %156 in 2 : vector<2x10x1x16xf32>, vector<2x10x8x16xf32>, vector<2x10x1x16xf32> -> vector<2x10x10x16xf32>
    %159 = vector.extract_strided_slice %158 {offsets = [0, 0, 0, 0], sizes = [2, 8, 8, 16], strides = [1, 1, 1, 1]} : vector<2x10x10x16xf32> to vector<2x8x8x16xf32>
    %160 = vector.extract_strided_slice %158 {offsets = [0, 0, 1, 0], sizes = [2, 8, 8, 16], strides = [1, 1, 1, 1]} : vector<2x10x10x16xf32> to vector<2x8x8x16xf32>
    %161 = vector.extract_strided_slice %158 {offsets = [0, 0, 2, 0], sizes = [2, 8, 8, 16], strides = [1, 1, 1, 1]} : vector<2x10x10x16xf32> to vector<2x8x8x16xf32>
    %162 = vector.extract_strided_slice %158 {offsets = [0, 1, 0, 0], sizes = [2, 8, 8, 16], strides = [1, 1, 1, 1]} : vector<2x10x10x16xf32> to vector<2x8x8x16xf32>
    %163 = vector.extract_strided_slice %158 {offsets = [0, 1, 1, 0], sizes = [2, 8, 8, 16], strides = [1, 1, 1, 1]} : vector<2x10x10x16xf32> to vector<2x8x8x16xf32>
    %164 = vector.extract_strided_slice %158 {offsets = [0, 1, 2, 0], sizes = [2, 8, 8, 16], strides = [1, 1, 1, 1]} : vector<2x10x10x16xf32> to vector<2x8x8x16xf32>
    %165 = vector.extract_strided_slice %158 {offsets = [0, 2, 0, 0], sizes = [2, 8, 8, 16], strides = [1, 1, 1, 1]} : vector<2x10x10x16xf32> to vector<2x8x8x16xf32>
    %166 = vector.extract_strided_slice %158 {offsets = [0, 2, 1, 0], sizes = [2, 8, 8, 16], strides = [1, 1, 1, 1]} : vector<2x10x10x16xf32> to vector<2x8x8x16xf32>
    %167 = vector.extract_strided_slice %158 {offsets = [0, 2, 2, 0], sizes = [2, 8, 8, 16], strides = [1, 1, 1, 1]} : vector<2x10x10x16xf32> to vector<2x8x8x16xf32>
    %168 = tpu.concatenate %159, %160, %161, %162, %163, %164, %165, %166, %167 in 3 : vector<2x8x8x16xf32>, vector<2x8x8x16xf32>, vector<2x8x8x16xf32>, vector<2x8x8x16xf32>, vector<2x8x8x16xf32>, vector<2x8x8x16xf32>, vector<2x8x8x16xf32>, vector<2x8x8x16xf32>, vector<2x8x8x16xf32> -> vector<2x8x8x144xf32>
    %169 = vector.shape_cast %168 : vector<2x8x8x144xf32> to vector<128x144xf32>
    %c0_57 = arith.constant 0 : index
    %c0_58 = arith.constant 0 : index
    %170 = vector.load %arg15[%c0_57, %c0_58] : memref<144x16xf32, #tpu.memory_space<vmem>>, vector<144x16xf32>
    %cst_59 = arith.constant dense<0.000000e+00> : vector<128x16xf32>
    %171 = tpu.matmul %169, %170, %cst_59 {dimension_numbers = #tpu.dot_dimension_numbers<[1], [0], [0], [1], [0, 0, 1, 1], [], []>} : vector<128x144xf32>, vector<144x16xf32>, vector<128x16xf32> -> vector<128x16xf32>
    %172 = arith.addf %171, %103 : vector<128x16xf32>
    %c0_60 = arith.constant 0 : index
    %c0_61 = arith.constant 0 : index
    %173 = vector.load %arg16[%c0_60, %c0_61] : memref<1x16xf32, #tpu.memory_space<vmem>>, vector<1x16xf32>
    %174 = vector.broadcast %173 : vector<1x16xf32> to vector<128x16xf32>
    %175 = arith.mulf %172, %174 : vector<128x16xf32>
    %c0_62 = arith.constant 0 : index
    %c0_63 = arith.constant 0 : index
    %176 = vector.load %arg17[%c0_62, %c0_63] : memref<1x16xf32, #tpu.memory_space<vmem>>, vector<1x16xf32>
    %177 = vector.broadcast %176 : vector<1x16xf32> to vector<128x16xf32>
    %178 = arith.addf %175, %177 : vector<128x16xf32>
    %cst_64 = arith.constant 2.000000e+01 : f32
    %179 = vector.broadcast %cst_64 : f32 to vector<128x16xf32>
    %180 = arith.minimumf %178, %179 : vector<128x16xf32>
    %181 = math.exp %180 : vector<128x16xf32>
    %cst_65 = arith.constant 2.000000e+00 : f32
    %182 = vector.broadcast %cst_65 : f32 to vector<128x16xf32>
    %183 = arith.addf %181, %182 : vector<128x16xf32>
    %184 = arith.mulf %181, %183 : vector<128x16xf32>
    %cst_66 = arith.constant 2.000000e+00 : f32
    %185 = vector.broadcast %cst_66 : f32 to vector<128x16xf32>
    %186 = arith.addf %184, %185 : vector<128x16xf32>
    %187 = arith.divf %184, %186 : vector<128x16xf32>
    %188 = arith.mulf %178, %187 : vector<128x16xf32>
    %189 = vector.shape_cast %188 : vector<128x16xf32> to vector<2x8x8x16xf32>
    %cst_67 = arith.constant 0.000000e+00 : f32
    %190 = vector.broadcast %cst_67 : f32 to vector<2x1x8x16xf32>
    %cst_68 = arith.constant 0.000000e+00 : f32
    %191 = vector.broadcast %cst_68 : f32 to vector<2x10x1x16xf32>
    %192 = tpu.concatenate %190, %189, %190 in 1 : vector<2x1x8x16xf32>, vector<2x8x8x16xf32>, vector<2x1x8x16xf32> -> vector<2x10x8x16xf32>
    %193 = tpu.concatenate %191, %192, %191 in 2 : vector<2x10x1x16xf32>, vector<2x10x8x16xf32>, vector<2x10x1x16xf32> -> vector<2x10x10x16xf32>
    %194 = vector.extract_strided_slice %193 {offsets = [0, 0, 0, 0], sizes = [2, 8, 8, 16], strides = [1, 1, 1, 1]} : vector<2x10x10x16xf32> to vector<2x8x8x16xf32>
    %195 = vector.extract_strided_slice %193 {offsets = [0, 0, 1, 0], sizes = [2, 8, 8, 16], strides = [1, 1, 1, 1]} : vector<2x10x10x16xf32> to vector<2x8x8x16xf32>
    %196 = vector.extract_strided_slice %193 {offsets = [0, 0, 2, 0], sizes = [2, 8, 8, 16], strides = [1, 1, 1, 1]} : vector<2x10x10x16xf32> to vector<2x8x8x16xf32>
    %197 = vector.extract_strided_slice %193 {offsets = [0, 1, 0, 0], sizes = [2, 8, 8, 16], strides = [1, 1, 1, 1]} : vector<2x10x10x16xf32> to vector<2x8x8x16xf32>
    %198 = vector.extract_strided_slice %193 {offsets = [0, 1, 1, 0], sizes = [2, 8, 8, 16], strides = [1, 1, 1, 1]} : vector<2x10x10x16xf32> to vector<2x8x8x16xf32>
    %199 = vector.extract_strided_slice %193 {offsets = [0, 1, 2, 0], sizes = [2, 8, 8, 16], strides = [1, 1, 1, 1]} : vector<2x10x10x16xf32> to vector<2x8x8x16xf32>
    %200 = vector.extract_strided_slice %193 {offsets = [0, 2, 0, 0], sizes = [2, 8, 8, 16], strides = [1, 1, 1, 1]} : vector<2x10x10x16xf32> to vector<2x8x8x16xf32>
    %201 = vector.extract_strided_slice %193 {offsets = [0, 2, 1, 0], sizes = [2, 8, 8, 16], strides = [1, 1, 1, 1]} : vector<2x10x10x16xf32> to vector<2x8x8x16xf32>
    %202 = vector.extract_strided_slice %193 {offsets = [0, 2, 2, 0], sizes = [2, 8, 8, 16], strides = [1, 1, 1, 1]} : vector<2x10x10x16xf32> to vector<2x8x8x16xf32>
    %203 = tpu.concatenate %194, %195, %196, %197, %198, %199, %200, %201, %202 in 3 : vector<2x8x8x16xf32>, vector<2x8x8x16xf32>, vector<2x8x8x16xf32>, vector<2x8x8x16xf32>, vector<2x8x8x16xf32>, vector<2x8x8x16xf32>, vector<2x8x8x16xf32>, vector<2x8x8x16xf32>, vector<2x8x8x16xf32> -> vector<2x8x8x144xf32>
    %204 = vector.shape_cast %203 : vector<2x8x8x144xf32> to vector<128x144xf32>
    %c0_69 = arith.constant 0 : index
    %c0_70 = arith.constant 0 : index
    %205 = vector.load %arg18[%c0_69, %c0_70] : memref<144x32xf32, #tpu.memory_space<vmem>>, vector<144x32xf32>
    %cst_71 = arith.constant dense<0.000000e+00> : vector<128x32xf32>
    %206 = tpu.matmul %204, %205, %cst_71 {dimension_numbers = #tpu.dot_dimension_numbers<[1], [0], [0], [1], [0, 0, 1, 1], [], []>} : vector<128x144xf32>, vector<144x32xf32>, vector<128x32xf32> -> vector<128x32xf32>
    %207 = arith.addf %206, %0 : vector<128x32xf32>
    %c0_72 = arith.constant 0 : index
    %c0_73 = arith.constant 0 : index
    %208 = vector.load %arg19[%c0_72, %c0_73] : memref<128x32xf32, #tpu.memory_space<vmem>>, vector<128x32xf32>
    tpu.vector_store %arg19[%c0_72, %c0_73], %207 {strides = array<i32>} : memref<128x32xf32, #tpu.memory_space<vmem>>, vector<128x32xf32>,
    return
  }
}

</mosaic_0001>

<llo_original>
// kernel: nested_residual_block.1
$region0: #{nested_residual_block.1}
  #allocation0 [shape = 'u32[]', space=smem, size = 0x4, offset = 0x4, fixed_abs, tag = 'smem constant byte address 0x4 - core index']
  #allocation1 [shape = 'u32[72,128]{1,0:T(1,128)}', space=vmem, size = 0x9000, scoped, tag = 'internal scratch']
  %s0 = inlined_call_operand.vmem [shape: f32[128,32], index: 0, kind: input, shape index: {}]
  %s1 = inlined_call_operand.vmem [shape: f32[1,32], index: 1, kind: input, shape index: {}]
  %s2 = inlined_call_operand.vmem [shape: f32[1,32], index: 2, kind: input, shape index: {}]
  %s3 = inlined_call_operand.vmem [shape: f32[288,16], index: 3, kind: input, shape index: {}]
  %s4 = inlined_call_operand.vmem [shape: f32[1,16], index: 4, kind: input, shape index: {}]
  %s5 = inlined_call_operand.vmem [shape: f32[1,16], index: 5, kind: input, shape index: {}]
  %s6 = inlined_call_operand.vmem [shape: f32[144,16], index: 6, kind: input, shape index: {}]
  %s7 = inlined_call_operand.vmem [shape: f32[1,16], index: 7, kind: input, shape index: {}]
  %s8 = inlined_call_operand.vmem [shape: f32[1,16], index: 8, kind: input, shape index: {}]
  %s9 = inlined_call_operand.vmem [shape: f32[144,16], index: 9, kind: input, shape index: {}]
  %s10 = inlined_call_operand.vmem [shape: f32[1,16], index: 10, kind: input, shape index: {}]
  %s11 = inlined_call_operand.vmem [shape: f32[1,16], index: 11, kind: input, shape index: {}]
  %s12 = inlined_call_operand.vmem [shape: f32[144,16], index: 12, kind: input, shape index: {}]
  %s13 = inlined_call_operand.vmem [shape: f32[1,16], index: 13, kind: input, shape index: {}]
  %s14 = inlined_call_operand.vmem [shape: f32[1,16], index: 14, kind: input, shape index: {}]
  %s15 = inlined_call_operand.vmem [shape: f32[144,16], index: 15, kind: input, shape index: {}]
  %s16 = inlined_call_operand.vmem [shape: f32[1,16], index: 16, kind: input, shape index: {}]
  %s17 = inlined_call_operand.vmem [shape: f32[1,16], index: 17, kind: input, shape index: {}]
  %s18 = inlined_call_operand.vmem [shape: f32[144,32], index: 18, kind: input, shape index: {}]
  %s19 = inlined_call_operand.hbm [shape: f32[128,32], index: 19, kind: output, shape index: {}]
  %s20 = sld [smem:[#allocation0]]
  $region86: #{nested_residual_block.1} parent=0
    _
  %s22 = ssub.s32 1, %s20
  %s23 = scalar_select 0, %s22, %s20
  $region1: #{nested_residual_block.1} parent=0
    #allocation2 [shape = 'u8[65536]{0}', space=vmem, size = 0x10000, scoped, tag = 'output window, operand 0, single buffered']
    #allocation3 [shape = 's32[1]{0}', space=sflag, size = 0x4, scoped, tag = 'scoped memory for nested_residual_block.1']
    %24 = vsyncpa [#allocation3], 0
    // Predicated region
    $region2: #{nested_residual_block.1} parent=1 // pred_check
      _
    $region3: #{nested_residual_block.1} parent=1 // pred_check_branch
      %26 = sbr.rel (0) target = $region5
    $region4: #{nested_residual_block.1} parent=1 // pred_region
      _
    $region5: #{nested_residual_block.1} parent=1 // pred_fallthru
      _
    // Predicated region
    $region6: #{nested_residual_block.1} parent=1 // pred_check
      _
    $region7: #{nested_residual_block.1} parent=1 // pred_check_branch
      %28 = sbr.rel (0) target = $region9
    $region8: #{nested_residual_block.1} parent=1 // pred_region
      _
    $region9: #{nested_residual_block.1} parent=1 // pred_fallthru
      _
    // Predicated region
    $region10: #{nested_residual_block.1} parent=1 // pred_check
      _
    $region11: #{nested_residual_block.1} parent=1 // pred_check_branch
      %30 = sbr.rel (0) target = $region13
    $region12: #{nested_residual_block.1} parent=1 // pred_region
      _
    $region13: #{nested_residual_block.1} parent=1 // pred_fallthru
      _
    // Predicated region
    $region14: #{nested_residual_block.1} parent=1 // pred_check
      _
    $region15: #{nested_residual_block.1} parent=1 // pred_check_branch
      %32 = sbr.rel (0) target = $region17
    $region16: #{nested_residual_block.1} parent=1 // pred_region
      _
    $region17: #{nested_residual_block.1} parent=1 // pred_fallthru
      _
    // Predicated region
    $region18: #{nested_residual_block.1} parent=1 // pred_check
      _
    $region19: #{nested_residual_block.1} parent=1 // pred_check_branch
      %34 = sbr.rel (0) target = $region21
    $region20: #{nested_residual_block.1} parent=1 // pred_region
      _
    $region21: #{nested_residual_block.1} parent=1 // pred_fallthru
      _
    // Predicated region
    $region22: #{nested_residual_block.1} parent=1 // pred_check
      _
    $region23: #{nested_residual_block.1} parent=1 // pred_check_branch
      %36 = sbr.rel (0) target = $region25
    $region24: #{nested_residual_block.1} parent=1 // pred_region
      _
    $region25: #{nested_residual_block.1} parent=1 // pred_fallthru
      _
    // Predicated region
    $region26: #{nested_residual_block.1} parent=1 // pred_check
      _
    $region27: #{nested_residual_block.1} parent=1 // pred_check_branch
      %38 = sbr.rel (0) target = $region29
    $region28: #{nested_residual_block.1} parent=1 // pred_region
      _
    $region29: #{nested_residual_block.1} parent=1 // pred_fallthru
      _
    // Predicated region
    $region30: #{nested_residual_block.1} parent=1 // pred_check
      _
    $region31: #{nested_residual_block.1} parent=1 // pred_check_branch
      %40 = sbr.rel (0) target = $region33
    $region32: #{nested_residual_block.1} parent=1 // pred_region
      _
    $region33: #{nested_residual_block.1} parent=1 // pred_fallthru
      _
    // Predicated region
    $region34: #{nested_residual_block.1} parent=1 // pred_check
      _
    $region35: #{nested_residual_block.1} parent=1 // pred_check_branch
      %42 = sbr.rel (0) target = $region37
    $region36: #{nested_residual_block.1} parent=1 // pred_region
      _
    $region37: #{nested_residual_block.1} parent=1 // pred_fallthru
      _
    // Predicated region
    $region38: #{nested_residual_block.1} parent=1 // pred_check
      _
    $region39: #{nested_residual_block.1} parent=1 // pred_check_branch
      %44 = sbr.rel (0) target = $region41
    $region40: #{nested_residual_block.1} parent=1 // pred_region
      _
    $region41: #{nested_residual_block.1} parent=1 // pred_fallthru
      _
    // Predicated region
    $region42: #{nested_residual_block.1} parent=1 // pred_check
      _
    $region43: #{nested_residual_block.1} parent=1 // pred_check_branch
      %46 = sbr.rel (0) target = $region45
    $region44: #{nested_residual_block.1} parent=1 // pred_region
      _
    $region45: #{nested_residual_block.1} parent=1 // pred_fallthru
      _
    // Predicated region
    $region46: #{nested_residual_block.1} parent=1 // pred_check
      _
    $region47: #{nested_residual_block.1} parent=1 // pred_check_branch
      %48 = sbr.rel (0) target = $region49
    $region48: #{nested_residual_block.1} parent=1 // pred_region
      _
    $region49: #{nested_residual_block.1} parent=1 // pred_fallthru
      _
    // Predicated region
    $region50: #{nested_residual_block.1} parent=1 // pred_check
      _
    $region51: #{nested_residual_block.1} parent=1 // pred_check_branch
      %50 = sbr.rel (0) target = $region53
    $region52: #{nested_residual_block.1} parent=1 // pred_region
      _
    $region53: #{nested_residual_block.1} parent=1 // pred_fallthru
      _
    // Predicated region
    $region54: #{nested_residual_block.1} parent=1 // pred_check
      _
    $region55: #{nested_residual_block.1} parent=1 // pred_check_branch
      %52 = sbr.rel (0) target = $region57
    $region56: #{nested_residual_block.1} parent=1 // pred_region
      _
    $region57: #{nested_residual_block.1} parent=1 // pred_fallthru
      _
    // Predicated region
    $region58: #{nested_residual_block.1} parent=1 // pred_check
      _
    $region59: #{nested_residual_block.1} parent=1 // pred_check_branch
      %54 = sbr.rel (0) target = $region61
    $region60: #{nested_residual_block.1} parent=1 // pred_region
      _
    $region61: #{nested_residual_block.1} parent=1 // pred_fallthru
      _
    // Predicated region
    $region62: #{nested_residual_block.1} parent=1 // pred_check
      _
    $region63: #{nested_residual_block.1} parent=1 // pred_check_branch
      %56 = sbr.rel (0) target = $region65
    $region64: #{nested_residual_block.1} parent=1 // pred_region
      _
    $region65: #{nested_residual_block.1} parent=1 // pred_fallthru
      _
    // Predicated region
    $region66: #{nested_residual_block.1} parent=1 // pred_check
      _
    $region67: #{nested_residual_block.1} parent=1 // pred_check_branch
      %58 = sbr.rel (0) target = $region69
    $region68: #{nested_residual_block.1} parent=1 // pred_region
      _
    $region69: #{nested_residual_block.1} parent=1 // pred_fallthru
      _
    // Predicated region
    $region70: #{nested_residual_block.1} parent=1 // pred_check
      _
    $region71: #{nested_residual_block.1} parent=1 // pred_check_branch
      %60 = sbr.rel (0) target = $region73
    $region72: #{nested_residual_block.1} parent=1 // pred_region
      _
    $region73: #{nested_residual_block.1} parent=1 // pred_fallthru
      _
    // Predicated region
    $region74: #{nested_residual_block.1} parent=1 // pred_check
      _
    $region75: #{nested_residual_block.1} parent=1 // pred_check_branch
      %62 = sbr.rel (0) target = $region77
    $region76: #{nested_residual_block.1} parent=1 // pred_region
      _
    $region77: #{nested_residual_block.1} parent=1 // pred_fallthru
      _
    %v63 = vld [vmem:[%s0] sm:$0xff]
    %v64 = vld [vmem:[%s0 + $0x8] sm:$0xff]
    %v65 = vld [vmem:[%s0 + $0x10] sm:$0xff]
    %v66 = vld [vmem:[%s0 + $0x18] sm:$0xff]
    %v67 = vld [vmem:[%s0 + $0x20] sm:$0xff]
    %v68 = vld [vmem:[%s0 + $0x28] sm:$0xff]
    %v69 = vld [vmem:[%s0 + $0x30] sm:$0xff]
    %v70 = vld [vmem:[%s0 + $0x38] sm:$0xff]
    %v71 = vld [vmem:[%s0 + $0x40] sm:$0xff]
    %v72 = vld [vmem:[%s0 + $0x48] sm:$0xff]
    %v73 = vld [vmem:[%s0 + $0x50] sm:$0xff]
    %v74 = vld [vmem:[%s0 + $0x58] sm:$0xff]
    %v75 = vld [vmem:[%s0 + $0x60] sm:$0xff]
    %v76 = vld [vmem:[%s0 + $0x68] sm:$0xff]
    %v77 = vld [vmem:[%s0 + $0x70] sm:$0xff]
    %v78 = vld [vmem:[%s0 + $0x78] sm:$0xff]
    %v79 = vld [vmem:[%s1] sm:$0x1]
    %v81 = vperm.slane %v79, 0
    %v83 = vmul.f32 %v63, %v81
    %v84 = vmul.f32 %v64, %v81
    %v85 = vmul.f32 %v65, %v81
    %v86 = vmul.f32 %v66, %v81
    %v87 = vmul.f32 %v67, %v81
    %v88 = vmul.f32 %v68, %v81
    %v89 = vmul.f32 %v69, %v81
    %v90 = vmul.f32 %v70, %v81
    %v91 = vmul.f32 %v71, %v81
    %v92 = vmul.f32 %v72, %v81
    %v93 = vmul.f32 %v73, %v81
    %v94 = vmul.f32 %v74, %v81
    %v95 = vmul.f32 %v75, %v81
    %v96 = vmul.f32 %v76, %v81
    %v97 = vmul.f32 %v77, %v81
    %v98 = vmul.f32 %v78, %v81
    %v99 = vld [vmem:[%s2] sm:$0x1]
    %v101 = vperm.slane %v99, 0
    %v103 = vadd.f32 %v83, %v101
    %v104 = vadd.f32 %v84, %v101
    %v105 = vadd.f32 %v85, %v101
    %v106 = vadd.f32 %v86, %v101
    %v107 = vadd.f32 %v87, %v101
    %v108 = vadd.f32 %v88, %v101
    %v109 = vadd.f32 %v89, %v101
    %v110 = vadd.f32 %v90, %v101
    %v111 = vadd.f32 %v91, %v101
    %v112 = vadd.f32 %v92, %v101
    %v113 = vadd.f32 %v93, %v101
    %v114 = vadd.f32 %v94, %v101
    %v115 = vadd.f32 %v95, %v101
    %v116 = vadd.f32 %v96, %v101
    %v117 = vadd.f32 %v97, %v101
    %v118 = vadd.f32 %v98, %v101
    %v119 = vmin.f32 %v103, 20.0
    %v120 = vmin.f32 %v104, 20.0
    %v121 = vmin.f32 %v105, 20.0
    %v122 = vmin.f32 %v106, 20.0
    %v123 = vmin.f32 %v107, 20.0
    %v124 = vmin.f32 %v108, 20.0
    %v125 = vmin.f32 %v109, 20.0
    %v126 = vmin.f32 %v110, 20.0
    %v127 = vmin.f32 %v111, 20.0
    %v128 = vmin.f32 %v112, 20.0
    %v129 = vmin.f32 %v113, 20.0
    %v130 = vmin.f32 %v114, 20.0
    %v131 = vmin.f32 %v115, 20.0
    %v132 = vmin.f32 %v116, 20.0
    %v133 = vmin.f32 %v117, 20.0
    %v134 = vmin.f32 %v118, 20.0
    %v135 = vmul.f32 %v119, 1.442695
    %v136 = vpow.pop %v135
    %v137 = vmul.f32 %v120, 1.442695
    %v138 = vpow.pop %v137
    %v139 = vmul.f32 %v121, 1.442695
    %v140 = vpow.pop %v139
    %v141 = vmul.f32 %v122, 1.442695
    %v142 = vpow.pop %v141
    %v143 = vmul.f32 %v123, 1.442695
    %v144 = vpow.pop %v143
    %v145 = vmul.f32 %v124, 1.442695
    %v146 = vpow.pop %v145
    %v147 = vmul.f32 %v125, 1.442695
    %v148 = vpow.pop %v147
    %v149 = vmul.f32 %v126, 1.442695
    %v150 = vpow.pop %v149
    %v151 = vmul.f32 %v127, 1.442695
    %v152 = vpow.pop %v151
    %v153 = vmul.f32 %v128, 1.442695
    %v154 = vpow.pop %v153
    %v155 = vmul.f32 %v129, 1.442695
    %v156 = vpow.pop %v155
    %v157 = vmul.f32 %v130, 1.442695
    %v158 = vpow.pop %v157
    %v159 = vmul.f32 %v131, 1.442695
    %v160 = vpow.pop %v159
    %v161 = vmul.f32 %v132, 1.442695
    %v162 = vpow.pop %v161
    %v163 = vmul.f32 %v133, 1.442695
    %v164 = vpow.pop %v163
    %v165 = vmul.f32 %v134, 1.442695
    %v166 = vpow.pop %v165
    %v167 = vadd.f32 %v136, 2.0
    %v168 = vadd.f32 %v138, 2.0
    %v169 = vadd.f32 %v140, 2.0
    %v170 = vadd.f32 %v142, 2.0
    %v171 = vadd.f32 %v144, 2.0
    %v172 = vadd.f32 %v146, 2.0
    %v173 = vadd.f32 %v148, 2.0
    %v174 = vadd.f32 %v150, 2.0
    %v175 = vadd.f32 %v152, 2.0
    %v176 = vadd.f32 %v154, 2.0
    %v177 = vadd.f32 %v156, 2.0
    %v178 = vadd.f32 %v158, 2.0
    %v179 = vadd.f32 %v160, 2.0
    %v180 = vadd.f32 %v162, 2.0
    %v181 = vadd.f32 %v164, 2.0
    %v182 = vadd.f32 %v166, 2.0
    %v183 = vmul.f32 %v136, %v167
    %v184 = vmul.f32 %v138, %v168
    %v185 = vmul.f32 %v140, %v169
    %v186 = vmul.f32 %v142, %v170
    %v187 = vmul.f32 %v144, %v171
    %v188 = vmul.f32 %v146, %v172
    %v189 = vmul.f32 %v148, %v173
    %v190 = vmul.f32 %v150, %v174
    %v191 = vmul.f32 %v152, %v175
    %v192 = vmul.f32 %v154, %v176
    %v193 = vmul.f32 %v156, %v177
    %v194 = vmul.f32 %v158, %v178
    %v195 = vmul.f32 %v160, %v179
    %v196 = vmul.f32 %v162, %v180
    %v197 = vmul.f32 %v164, %v181
    %v198 = vmul.f32 %v166, %v182
    %v199 = vadd.f32 %v183, 2.0
    %v200 = vadd.f32 %v184, 2.0
    %v201 = vadd.f32 %v185, 2.0
    %v202 = vadd.f32 %v186, 2.0
    %v203 = vadd.f32 %v187, 2.0
    %v204 = vadd.f32 %v188, 2.0
    %v205 = vadd.f32 %v189, 2.0
    %v206 = vadd.f32 %v190, 2.0
    %v207 = vadd.f32 %v191, 2.0
    %v208 = vadd.f32 %v192, 2.0
    %v209 = vadd.f32 %v193, 2.0
    %v210 = vadd.f32 %v194, 2.0
    %v211 = vadd.f32 %v195, 2.0
    %v212 = vadd.f32 %v196, 2.0
    %v213 = vadd.f32 %v197, 2.0
    %v214 = vadd.f32 %v198, 2.0
    %v215 = vrcp.pop %v199
    %v216 = vmul.f32 %v199, %v215
    %v217 = vsub.f32 1.0, %v216
    %v218 = vmul.f32 %v215, %v217
    %v219 = vadd.f32 %v215, %v218
    %vm220 = vweird.f32 %v199
    %vm221 = vweird.f32 %v215
    %vm222 = vmor %vm220, %vm221
    %v223 = vsel %vm222, %v215, %v219
    %v224 = vand.u32 2147483647, %v199
    %vm225 = vcmp.eq.f32.partialorder %v224, 8.507059e+37
    %v226 = vand.u32 %v199, 2147483648
    %v227 = vor.u32 1.1754944e-38, %v226
    %v228 = vsel %vm225, %v227, %v223
    %v229 = vmul.f32 %v183, %v228
    %v230 = vrcp.pop %v200
    %v231 = vmul.f32 %v200, %v230
    %v232 = vsub.f32 1.0, %v231
    %v233 = vmul.f32 %v230, %v232
    %v234 = vadd.f32 %v230, %v233
    %vm235 = vweird.f32 %v200
    %vm236 = vweird.f32 %v230
    %vm237 = vmor %vm235, %vm236
    %v238 = vsel %vm237, %v230, %v234
    %v239 = vand.u32 2147483647, %v200
    %vm240 = vcmp.eq.f32.partialorder %v239, 8.507059e+37
    %v241 = vand.u32 %v200, 2147483648
    %v242 = vor.u32 1.1754944e-38, %v241
    %v243 = vsel %vm240, %v242, %v238
    %v244 = vmul.f32 %v184, %v243
    %v245 = vrcp.pop %v201
    %v246 = vmul.f32 %v201, %v245
    %v247 = vsub.f32 1.0, %v246
    %v248 = vmul.f32 %v245, %v247
    %v249 = vadd.f32 %v245, %v248
    %vm250 = vweird.f32 %v201
    %vm251 = vweird.f32 %v245
    %vm252 = vmor %vm250, %vm251
    %v253 = vsel %vm252, %v245, %v249
    %v254 = vand.u32 2147483647, %v201
    %vm255 = vcmp.eq.f32.partialorder %v254, 8.507059e+37
    %v256 = vand.u32 %v201, 2147483648
    %v257 = vor.u32 1.1754944e-38, %v256
    %v258 = vsel %vm255, %v257, %v253
    %v259 = vmul.f32 %v185, %v258
    %v260 = vrcp.pop %v202
    %v261 = vmul.f32 %v202, %v260
    %v262 = vsub.f32 1.0, %v261
    %v263 = vmul.f32 %v260, %v262
    %v264 = vadd.f32 %v260, %v263
    %vm265 = vweird.f32 %v202
    %vm266 = vweird.f32 %v260
    %vm267 = vmor %vm265, %vm266
    %v268 = vsel %vm267, %v260, %v264
    %v269 = vand.u32 2147483647, %v202
    %vm270 = vcmp.eq.f32.partialorder %v269, 8.507059e+37
    %v271 = vand.u32 %v202, 2147483648
    %v272 = vor.u32 1.1754944e-38, %v271
    %v273 = vsel %vm270, %v272, %v268
    %v274 = vmul.f32 %v186, %v273
    %v275 = vrcp.pop %v203
    %v276 = vmul.f32 %v203, %v275
    %v277 = vsub.f32 1.0, %v276
    %v278 = vmul.f32 %v275, %v277
    %v279 = vadd.f32 %v275, %v278
    %vm280 = vweird.f32 %v203
    %vm281 = vweird.f32 %v275
    %vm282 = vmor %vm280, %vm281
    %v283 = vsel %vm282, %v275, %v279
    %v284 = vand.u32 2147483647, %v203
    %vm285 = vcmp.eq.f32.partialorder %v284, 8.507059e+37
    %v286 = vand.u32 %v203, 2147483648
    %v287 = vor.u32 1.1754944e-38, %v286
    %v288 = vsel %vm285, %v287, %v283
    %v289 = vmul.f32 %v187, %v288
    %v290 = vrcp.pop %v204
    %v291 = vmul.f32 %v204, %v290
    %v292 = vsub.f32 1.0, %v291
    %v293 = vmul.f32 %v290, %v292
    %v294 = vadd.f32 %v290, %v293
    %vm295 = vweird.f32 %v204
    %vm296 = vweird.f32 %v290
    %vm297 = vmor %vm295, %vm296
    %v298 = vsel %vm297, %v290, %v294
    %v299 = vand.u32 2147483647, %v204
    %vm300 = vcmp.eq.f32.partialorder %v299, 8.507059e+37
    %v301 = vand.u32 %v204, 2147483648
    %v302 = vor.u32 1.1754944e-38, %v301
    %v303 = vsel %vm300, %v302, %v298
    %v304 = vmul.f32 %v188, %v303
    %v305 = vrcp.pop %v205
    %v306 = vmul.f32 %v205, %v305
    %v307 = vsub.f32 1.0, %v306
    %v308 = vmul.f32 %v305, %v307
    %v309 = vadd.f32 %v305, %v308
    %vm310 = vweird.f32 %v205
    %vm311 = vweird.f32 %v305
    %vm312 = vmor %vm310, %vm311
    %v313 = vsel %vm312, %v305, %v309
    %v314 = vand.u32 2147483647, %v205
    %vm315 = vcmp.eq.f32.partialorder %v314, 8.507059e+37
    %v316 = vand.u32 %v205, 2147483648
    %v317 = vor.u32 1.1754944e-38, %v316
    %v318 = vsel %vm315, %v317, %v313
    %v319 = vmul.f32 %v189, %v318
    %v320 = vrcp.pop %v206
    %v321 = vmul.f32 %v206, %v320
    %v322 = vsub.f32 1.0, %v321
    %v323 = vmul.f32 %v320, %v322
    %v324 = vadd.f32 %v320, %v323
    %vm325 = vweird.f32 %v206
    %vm326 = vweird.f32 %v320
    %vm327 = vmor %vm325, %vm326
    %v328 = vsel %vm327, %v320, %v324
    %v329 = vand.u32 2147483647, %v206
    %vm330 = vcmp.eq.f32.partialorder %v329, 8.507059e+37
    %v331 = vand.u32 %v206, 2147483648
    %v332 = vor.u32 1.1754944e-38, %v331
    %v333 = vsel %vm330, %v332, %v328
    %v334 = vmul.f32 %v190, %v333
    %v335 = vrcp.pop %v207
    %v336 = vmul.f32 %v207, %v335
    %v337 = vsub.f32 1.0, %v336
    %v338 = vmul.f32 %v335, %v337
    %v339 = vadd.f32 %v335, %v338
    %vm340 = vweird.f32 %v207
    %vm341 = vweird.f32 %v335
    %vm342 = vmor %vm340, %vm341
    %v343 = vsel %vm342, %v335, %v339
    %v344 = vand.u32 2147483647, %v207
    %vm345 = vcmp.eq.f32.partialorder %v344, 8.507059e+37
    %v346 = vand.u32 %v207, 2147483648
    %v347 = vor.u32 1.1754944e-38, %v346
    %v348 = vsel %vm345, %v347, %v343
    %v349 = vmul.f32 %v191, %v348
    %v350 = vrcp.pop %v208
    %v351 = vmul.f32 %v208, %v350
    %v352 = vsub.f32 1.0, %v351
    %v353 = vmul.f32 %v350, %v352
    %v354 = vadd.f32 %v350, %v353
    %vm355 = vweird.f32 %v208
    %vm356 = vweird.f32 %v350
    %vm357 = vmor %vm355, %vm356
    %v358 = vsel %vm357, %v350, %v354
    %v359 = vand.u32 2147483647, %v208
    %vm360 = vcmp.eq.f32.partialorder %v359, 8.507059e+37
    %v361 = vand.u32 %v208, 2147483648
    %v362 = vor.u32 1.1754944e-38, %v361
    %v363 = vsel %vm360, %v362, %v358
    %v364 = vmul.f32 %v192, %v363
    %v365 = vrcp.pop %v209
    %v366 = vmul.f32 %v209, %v365
    %v367 = vsub.f32 1.0, %v366
    %v368 = vmul.f32 %v365, %v367
    %v369 = vadd.f32 %v365, %v368
    %vm370 = vweird.f32 %v209
    %vm371 = vweird.f32 %v365
    %vm372 = vmor %vm370, %vm371
    %v373 = vsel %vm372, %v365, %v369
    %v374 = vand.u32 2147483647, %v209
    %vm375 = vcmp.eq.f32.partialorder %v374, 8.507059e+37
    %v376 = vand.u32 %v209, 2147483648
    %v377 = vor.u32 1.1754944e-38, %v376
    %v378 = vsel %vm375, %v377, %v373
    %v379 = vmul.f32 %v193, %v378
    %v380 = vrcp.pop %v210
    %v381 = vmul.f32 %v210, %v380
    %v382 = vsub.f32 1.0, %v381
    %v383 = vmul.f32 %v380, %v382
    %v384 = vadd.f32 %v380, %v383
    %vm385 = vweird.f32 %v210
    %vm386 = vweird.f32 %v380
    %vm387 = vmor %vm385, %vm386
    %v388 = vsel %vm387, %v380, %v384
    %v389 = vand.u32 2147483647, %v210
    %vm390 = vcmp.eq.f32.partialorder %v389, 8.507059e+37
    %v391 = vand.u32 %v210, 2147483648
    %v392 = vor.u32 1.1754944e-38, %v391
    %v393 = vsel %vm390, %v392, %v388
    %v394 = vmul.f32 %v194, %v393
    %v395 = vrcp.pop %v211
    %v396 = vmul.f32 %v211, %v395
    %v397 = vsub.f32 1.0, %v396
    %v398 = vmul.f32 %v395, %v397
    %v399 = vadd.f32 %v395, %v398
    %vm400 = vweird.f32 %v211
    %vm401 = vweird.f32 %v395
    %vm402 = vmor %vm400, %vm401
    %v403 = vsel %vm402, %v395, %v399
    %v404 = vand.u32 2147483647, %v211
    %vm405 = vcmp.eq.f32.partialorder %v404, 8.507059e+37
    %v406 = vand.u32 %v211, 2147483648
    %v407 = vor.u32 1.1754944e-38, %v406
    %v408 = vsel %vm405, %v407, %v403
    %v409 = vmul.f32 %v195, %v408
    %v410 = vrcp.pop %v212
    %v411 = vmul.f32 %v212, %v410
    %v412 = vsub.f32 1.0, %v411
    %v413 = vmul.f32 %v410, %v412
    %v414 = vadd.f32 %v410, %v413
    %vm415 = vweird.f32 %v212
    %vm416 = vweird.f32 %v410
    %vm417 = vmor %vm415, %vm416
    %v418 = vsel %vm417, %v410, %v414
    %v419 = vand.u32 2147483647, %v212
    %vm420 = vcmp.eq.f32.partialorder %v419, 8.507059e+37
    %v421 = vand.u32 %v212, 2147483648
    %v422 = vor.u32 1.1754944e-38, %v421
    %v423 = vsel %vm420, %v422, %v418
    %v424 = vmul.f32 %v196, %v423
    %v425 = vrcp.pop %v213
    %v426 = vmul.f32 %v213, %v425
    %v427 = vsub.f32 1.0, %v426
    %v428 = vmul.f32 %v425, %v427
    %v429 = vadd.f32 %v425, %v428
    %vm430 = vweird.f32 %v213
    %vm431 = vweird.f32 %v425
    %vm432 = vmor %vm430, %vm431
    %v433 = vsel %vm432, %v425, %v429
    %v434 = vand.u32 2147483647, %v213
    %vm435 = vcmp.eq.f32.partialorder %v434, 8.507059e+37
    %v436 = vand.u32 %v213, 2147483648
    %v437 = vor.u32 1.1754944e-38, %v436
    %v438 = vsel %vm435, %v437, %v433
    %v439 = vmul.f32 %v197, %v438
    %v440 = vrcp.pop %v214
    %v441 = vmul.f32 %v214, %v440
    %v442 = vsub.f32 1.0, %v441
    %v443 = vmul.f32 %v440, %v442
    %v444 = vadd.f32 %v440, %v443
    %vm445 = vweird.f32 %v214
    %vm446 = vweird.f32 %v440
    %vm447 = vmor %vm445, %vm446
    %v448 = vsel %vm447, %v440, %v444
    %v449 = vand.u32 2147483647, %v214
    %vm450 = vcmp.eq.f32.partialorder %v449, 8.507059e+37
    %v451 = vand.u32 %v214, 2147483648
    %v452 = vor.u32 1.1754944e-38, %v451
    %v453 = vsel %vm450, %v452, %v448
    %v454 = vmul.f32 %v198, %v453
    %v455 = vmul.f32 %v103, %v229
    %v456 = vmul.f32 %v104, %v244
    %v457 = vmul.f32 %v105, %v259
    %v458 = vmul.f32 %v106, %v274
    %v459 = vmul.f32 %v107, %v289
    %v460 = vmul.f32 %v108, %v304
    %v461 = vmul.f32 %v109, %v319
    %v462 = vmul.f32 %v110, %v334
    %v463 = vmul.f32 %v111, %v349
    %v464 = vmul.f32 %v112, %v364
    %v465 = vmul.f32 %v113, %v379
    %v466 = vmul.f32 %v114, %v394
    %v467 = vmul.f32 %v115, %v409
    %v468 = vmul.f32 %v116, %v424
    %v469 = vmul.f32 %v117, %v439
    %v470 = vmul.f32 %v118, %v454
    %v488 = vrot.slane 0.0, 7
    %v489 = vrot.slane %v455, 7
    %v490 = vrot.slane %v456, 7
    %v491 = vrot.slane %v457, 7
    %v492 = vrot.slane %v458, 7
    %v493 = vrot.slane %v459, 7
    %v494 = vrot.slane %v460, 7
    %v495 = vrot.slane %v461, 7
    %v496 = vrot.slane %v462, 7
    %v497 = vrot.slane %v463, 7
    %v498 = vrot.slane %v464, 7
    %v499 = vrot.slane %v465, 7
    %v500 = vrot.slane %v466, 7
    %v501 = vrot.slane %v467, 7
    %v502 = vrot.slane %v468, 7
    %v503 = vrot.slane %v469, 7
    %v504 = vrot.slane %v470, 7
    %vm522 = vcmask 1040384
    %v523 = vsel %vm522, 0.0, %v488
    %v524 = vsel %vm522, 0.0, %v489
    %v525 = vsel %vm522, 0.0, %v490
    %v526 = vsel %vm522, 0.0, %v491
    %v527 = vsel %vm522, 0.0, %v492
    %v528 = vsel %vm522, 0.0, %v493
    %v529 = vsel %vm522, 0.0, %v494
    %v530 = vsel %vm522, 0.0, %v495
    %v531 = vsel %vm522, 0.0, %v496
    %v532 = vsel %vm522, 0.0, %v497
    %v533 = vsel %vm522, 0.0, %v498
    %v534 = vsel %vm522, 0.0, %v499
    %v535 = vsel %vm522, 0.0, %v500
    %v536 = vsel %vm522, 0.0, %v501
    %v537 = vsel %vm522, 0.0, %v502
    %v538 = vsel %vm522, 0.0, %v503
    %v539 = vsel %vm522, 0.0, %v504
    %v540 = vsel %vm522, %v488, 0.0
    %v541 = vsel %vm522, %v489, 0.0
    %v542 = vsel %vm522, %v490, 0.0
    %v543 = vsel %vm522, %v491, 0.0
    %v544 = vsel %vm522, %v492, 0.0
    %v545 = vsel %vm522, %v493, 0.0
    %v546 = vsel %vm522, %v494, 0.0
    %v547 = vsel %vm522, %v495, 0.0
    %v548 = vsel %vm522, %v496, 0.0
    %v549 = vsel %vm522, %v497, 0.0
    %v550 = vsel %vm522, %v498, 0.0
    %v551 = vsel %vm522, %v499, 0.0
    %v552 = vsel %vm522, %v500, 0.0
    %v553 = vsel %vm522, %v501, 0.0
    %v554 = vsel %vm522, %v502, 0.0
    %v555 = vsel %vm522, %v503, 0.0
    %v556 = vsel %vm522, %v504, 0.0
    %vm587 = vcmask 1046528
    %v588 = vrot.slane %v523, 1
    %v589 = vrot.slane %v540, 1
    %v590 = vsel %vm587, %v588, %v589
    %v591 = vrot.slane %v524, 1
    %v592 = vrot.slane %v541, 1
    %v593 = vsel %vm587, %v591, %v592
    %v594 = vrot.slane %v525, 1
    %v595 = vrot.slane %v542, 1
    %v596 = vsel %vm587, %v594, %v595
    %v597 = vrot.slane %v526, 1
    %v598 = vrot.slane %v543, 1
    %v599 = vsel %vm587, %v597, %v598
    %v600 = vrot.slane %v527, 1
    %v601 = vrot.slane %v544, 1
    %v602 = vsel %vm587, %v600, %v601
    %v603 = vrot.slane %v528, 1
    %v604 = vrot.slane %v545, 1
    %v605 = vsel %vm587, %v603, %v604
    %v606 = vrot.slane %v529, 1
    %v607 = vrot.slane %v546, 1
    %v608 = vsel %vm587, %v606, %v607
    %v609 = vrot.slane %v530, 1
    %v610 = vrot.slane %v547, 1
    %v611 = vsel %vm587, %v609, %v610
    %v612 = vrot.slane %v532, 1
    %v613 = vrot.slane %v549, 1
    %v614 = vsel %vm587, %v612, %v613
    %v615 = vrot.slane %v533, 1
    %v616 = vrot.slane %v550, 1
    %v617 = vsel %vm587, %v615, %v616
    %v618 = vrot.slane %v534, 1
    %v619 = vrot.slane %v551, 1
    %v620 = vsel %vm587, %v618, %v619
    %v621 = vrot.slane %v535, 1
    %v622 = vrot.slane %v552, 1
    %v623 = vsel %vm587, %v621, %v622
    %v624 = vrot.slane %v536, 1
    %v625 = vrot.slane %v553, 1
    %v626 = vsel %vm587, %v624, %v625
    %v627 = vrot.slane %v537, 1
    %v628 = vrot.slane %v554, 1
    %v629 = vsel %vm587, %v627, %v628
    %v630 = vrot.slane %v538, 1
    %v631 = vrot.slane %v555, 1
    %v632 = vsel %vm587, %v630, %v631
    %633 = vrot.lane.b32.xlu0 %v590, 32
    %v634 = vpop.permute.xlu0 %633
    %635 = vrot.lane.b32.xlu0 %v593, 32
    %v636 = vpop.permute.xlu0 %635
    %637 = vrot.lane.b32.xlu0 %v596, 32
    %v638 = vpop.permute.xlu0 %637
    %639 = vrot.lane.b32.xlu0 %v599, 32
    %v640 = vpop.permute.xlu0 %639
    %641 = vrot.lane.b32.xlu0 %v602, 32
    %v642 = vpop.permute.xlu0 %641
    %643 = vrot.lane.b32.xlu0 %v605, 32
    %v644 = vpop.permute.xlu0 %643
    %645 = vrot.lane.b32.xlu0 %v608, 32
    %v646 = vpop.permute.xlu0 %645
    %647 = vrot.lane.b32.xlu0 %v611, 32
    %v648 = vpop.permute.xlu0 %647
    %649 = vrot.lane.b32.xlu0 %v614, 32
    %v650 = vpop.permute.xlu0 %649
    %651 = vrot.lane.b32.xlu0 %v617, 32
    %v652 = vpop.permute.xlu0 %651
    %653 = vrot.lane.b32.xlu0 %v620, 32
    %v654 = vpop.permute.xlu0 %653
    %655 = vrot.lane.b32.xlu0 %v623, 32
    %v656 = vpop.permute.xlu0 %655
    %657 = vrot.lane.b32.xlu0 %v626, 32
    %v658 = vpop.permute.xlu0 %657
    %659 = vrot.lane.b32.xlu0 %v629, 32
    %v660 = vpop.permute.xlu0 %659
    %661 = vrot.lane.b32.xlu0 %v632, 32
    %v662 = vpop.permute.xlu0 %661
    %vm678 = vcmask 1045504
    %v679 = vrot.slane %v523, 2
    %v680 = vrot.slane %v540, 2
    %v681 = vsel %vm678, %v679, %v680
    %v682 = vrot.slane %v524, 2
    %v683 = vrot.slane %v541, 2
    %v684 = vsel %vm678, %v682, %v683
    %v685 = vrot.slane %v525, 2
    %v686 = vrot.slane %v542, 2
    %v687 = vsel %vm678, %v685, %v686
    %v688 = vrot.slane %v526, 2
    %v689 = vrot.slane %v543, 2
    %v690 = vsel %vm678, %v688, %v689
    %v691 = vrot.slane %v527, 2
    %v692 = vrot.slane %v544, 2
    %v693 = vsel %vm678, %v691, %v692
    %v694 = vrot.slane %v528, 2
    %v695 = vrot.slane %v545, 2
    %v696 = vsel %vm678, %v694, %v695
    %v697 = vrot.slane %v529, 2
    %v698 = vrot.slane %v546, 2
    %v699 = vsel %vm678, %v697, %v698
    %v700 = vrot.slane %v530, 2
    %v701 = vrot.slane %v547, 2
    %v702 = vsel %vm678, %v700, %v701
    %v703 = vrot.slane %v532, 2
    %v704 = vrot.slane %v549, 2
    %v705 = vsel %vm678, %v703, %v704
    %v706 = vrot.slane %v533, 2
    %v707 = vrot.slane %v550, 2
    %v708 = vsel %vm678, %v706, %v707
    %v709 = vrot.slane %v534, 2
    %v710 = vrot.slane %v551, 2
    %v711 = vsel %vm678, %v709, %v710
    %v712 = vrot.slane %v535, 2
    %v713 = vrot.slane %v552, 2
    %v714 = vsel %vm678, %v712, %v713
    %v715 = vrot.slane %v536, 2
    %v716 = vrot.slane %v553, 2
    %v717 = vsel %vm678, %v715, %v716
    %v718 = vrot.slane %v537, 2
    %v719 = vrot.slane %v554, 2
    %v720 = vsel %vm678, %v718, %v719
    %v721 = vrot.slane %v538, 2
    %v722 = vrot.slane %v555, 2
    %v723 = vsel %vm678, %v721, %v722
    %724 = vrot.lane.b32.xlu0 %v681, 64
    %v725 = vpop.permute.xlu0 %724
    %726 = vrot.lane.b32.xlu0 %v684, 64
    %v727 = vpop.permute.xlu0 %726
    %728 = vrot.lane.b32.xlu0 %v687, 64
    %v729 = vpop.permute.xlu0 %728
    %730 = vrot.lane.b32.xlu0 %v690, 64
    %v731 = vpop.permute.xlu0 %730
    %732 = vrot.lane.b32.xlu0 %v693, 64
    %v733 = vpop.permute.xlu0 %732
    %734 = vrot.lane.b32.xlu0 %v696, 64
    %v735 = vpop.permute.xlu0 %734
    %736 = vrot.lane.b32.xlu0 %v699, 64
    %v737 = vpop.permute.xlu0 %736
    %738 = vrot.lane.b32.xlu0 %v702, 64
    %v739 = vpop.permute.xlu0 %738
    %740 = vrot.lane.b32.xlu0 %v705, 64
    %v741 = vpop.permute.xlu0 %740
    %742 = vrot.lane.b32.xlu0 %v708, 64
    %v743 = vpop.permute.xlu0 %742
    %744 = vrot.lane.b32.xlu0 %v711, 64
    %v745 = vpop.permute.xlu0 %744
    %746 = vrot.lane.b32.xlu0 %v714, 64
    %v747 = vpop.permute.xlu0 %746
    %748 = vrot.lane.b32.xlu0 %v717, 64
    %v749 = vpop.permute.xlu0 %748
    %750 = vrot.lane.b32.xlu0 %v720, 64
    %v751 = vpop.permute.xlu0 %750
    %752 = vrot.lane.b32.xlu0 %v723, 64
    %v753 = vpop.permute.xlu0 %752
    %771 = vrot.lane.b32.xlu0 %v524, 96
    %v772 = vpop.permute.xlu0 %771
    %773 = vrot.lane.b32.xlu0 %v525, 96
    %v774 = vpop.permute.xlu0 %773
    %775 = vrot.lane.b32.xlu0 %v526, 96
    %v776 = vpop.permute.xlu0 %775
    %777 = vrot.lane.b32.xlu0 %v527, 96
    %v778 = vpop.permute.xlu0 %777
    %779 = vrot.lane.b32.xlu0 %v528, 96
    %v780 = vpop.permute.xlu0 %779
    %781 = vrot.lane.b32.xlu0 %v529, 96
    %v782 = vpop.permute.xlu0 %781
    %783 = vrot.lane.b32.xlu0 %v530, 96
    %v784 = vpop.permute.xlu0 %783
    %785 = vrot.lane.b32.xlu0 %v531, 96
    %v786 = vpop.permute.xlu0 %785
    %787 = vrot.lane.b32.xlu0 %v532, 96
    %v788 = vpop.permute.xlu0 %787
    %789 = vrot.lane.b32.xlu0 %v533, 96
    %v790 = vpop.permute.xlu0 %789
    %791 = vrot.lane.b32.xlu0 %v534, 96
    %v792 = vpop.permute.xlu0 %791
    %793 = vrot.lane.b32.xlu0 %v535, 96
    %v794 = vpop.permute.xlu0 %793
    %795 = vrot.lane.b32.xlu0 %v536, 96
    %v796 = vpop.permute.xlu0 %795
    %797 = vrot.lane.b32.xlu0 %v537, 96
    %v798 = vpop.permute.xlu0 %797
    %799 = vrot.lane.b32.xlu0 %v538, 96
    %v800 = vpop.permute.xlu0 %799
    %801 = vrot.lane.b32.xlu0 %v539, 96
    %v802 = vpop.permute.xlu0 %801
    %v821 = vrot.slane %v531, 1
    %v822 = vrot.slane %v548, 1
    %v823 = vsel %vm587, %v821, %v822
    %v824 = vrot.slane %v539, 1
    %v825 = vrot.slane %v556, 1
    %v826 = vsel %vm587, %v824, %v825
    %v843 = vrot.slane %v531, 2
    %v844 = vrot.slane %v548, 2
    %v845 = vsel %vm678, %v843, %v844
    %v846 = vrot.slane %v539, 2
    %v847 = vrot.slane %v556, 2
    %v848 = vsel %vm678, %v846, %v847
    %849 = vrot.lane.b32.xlu0 %v684, 32
    %v850 = vpop.permute.xlu0 %849
    %851 = vrot.lane.b32.xlu0 %v687, 32
    %v852 = vpop.permute.xlu0 %851
    %853 = vrot.lane.b32.xlu0 %v690, 32
    %v854 = vpop.permute.xlu0 %853
    %855 = vrot.lane.b32.xlu0 %v693, 32
    %v856 = vpop.permute.xlu0 %855
    %857 = vrot.lane.b32.xlu0 %v696, 32
    %v858 = vpop.permute.xlu0 %857
    %859 = vrot.lane.b32.xlu0 %v699, 32
    %v860 = vpop.permute.xlu0 %859
    %861 = vrot.lane.b32.xlu0 %v702, 32
    %v862 = vpop.permute.xlu0 %861
    %863 = vrot.lane.b32.xlu0 %v845, 32
    %v864 = vpop.permute.xlu0 %863
    %865 = vrot.lane.b32.xlu0 %v705, 32
    %v866 = vpop.permute.xlu0 %865
    %867 = vrot.lane.b32.xlu0 %v708, 32
    %v868 = vpop.permute.xlu0 %867
    %869 = vrot.lane.b32.xlu0 %v711, 32
    %v870 = vpop.permute.xlu0 %869
    %871 = vrot.lane.b32.xlu0 %v714, 32
    %v872 = vpop.permute.xlu0 %871
    %873 = vrot.lane.b32.xlu0 %v717, 32
    %v874 = vpop.permute.xlu0 %873
    %875 = vrot.lane.b32.xlu0 %v720, 32
    %v876 = vpop.permute.xlu0 %875
    %877 = vrot.lane.b32.xlu0 %v723, 32
    %v878 = vpop.permute.xlu0 %877
    %879 = vrot.lane.b32.xlu0 %v848, 32
    %v880 = vpop.permute.xlu0 %879
    %897 = vrot.lane.b32.xlu0 %v525, 64
    %v898 = vpop.permute.xlu0 %897
    %899 = vrot.lane.b32.xlu0 %v526, 64
    %v900 = vpop.permute.xlu0 %899
    %901 = vrot.lane.b32.xlu0 %v527, 64
    %v902 = vpop.permute.xlu0 %901
    %903 = vrot.lane.b32.xlu0 %v528, 64
    %v904 = vpop.permute.xlu0 %903
    %905 = vrot.lane.b32.xlu0 %v529, 64
    %v906 = vpop.permute.xlu0 %905
    %907 = vrot.lane.b32.xlu0 %v530, 64
    %v908 = vpop.permute.xlu0 %907
    %909 = vrot.lane.b32.xlu0 %v531, 64
    %v910 = vpop.permute.xlu0 %909
    %911 = vrot.lane.b32.xlu0 %v523, 64
    %v912 = vpop.permute.xlu0 %911
    %913 = vrot.lane.b32.xlu0 %v533, 64
    %v914 = vpop.permute.xlu0 %913
    %915 = vrot.lane.b32.xlu0 %v534, 64
    %v916 = vpop.permute.xlu0 %915
    %917 = vrot.lane.b32.xlu0 %v535, 64
    %v918 = vpop.permute.xlu0 %917
    %919 = vrot.lane.b32.xlu0 %v536, 64
    %v920 = vpop.permute.xlu0 %919
    %921 = vrot.lane.b32.xlu0 %v537, 64
    %v922 = vpop.permute.xlu0 %921
    %923 = vrot.lane.b32.xlu0 %v538, 64
    %v924 = vpop.permute.xlu0 %923
    %925 = vrot.lane.b32.xlu0 %v539, 64
    %v926 = vpop.permute.xlu0 %925
    %942 = vrot.lane.b32.xlu0 %v596, 96
    %v943 = vpop.permute.xlu0 %942
    %944 = vrot.lane.b32.xlu0 %v599, 96
    %v945 = vpop.permute.xlu0 %944
    %946 = vrot.lane.b32.xlu0 %v602, 96
    %v947 = vpop.permute.xlu0 %946
    %948 = vrot.lane.b32.xlu0 %v605, 96
    %v949 = vpop.permute.xlu0 %948
    %950 = vrot.lane.b32.xlu0 %v608, 96
    %v951 = vpop.permute.xlu0 %950
    %952 = vrot.lane.b32.xlu0 %v611, 96
    %v953 = vpop.permute.xlu0 %952
    %954 = vrot.lane.b32.xlu0 %v823, 96
    %v955 = vpop.permute.xlu0 %954
    %956 = vrot.lane.b32.xlu0 %v590, 96
    %v957 = vpop.permute.xlu0 %956
    %958 = vrot.lane.b32.xlu0 %v617, 96
    %v959 = vpop.permute.xlu0 %958
    %960 = vrot.lane.b32.xlu0 %v620, 96
    %v961 = vpop.permute.xlu0 %960
    %962 = vrot.lane.b32.xlu0 %v623, 96
    %v963 = vpop.permute.xlu0 %962
    %964 = vrot.lane.b32.xlu0 %v626, 96
    %v965 = vpop.permute.xlu0 %964
    %966 = vrot.lane.b32.xlu0 %v629, 96
    %v967 = vpop.permute.xlu0 %966
    %968 = vrot.lane.b32.xlu0 %v632, 96
    %v969 = vpop.permute.xlu0 %968
    %970 = vrot.lane.b32.xlu0 %v826, 96
    %v971 = vpop.permute.xlu0 %970
    %vm987 = vcmask 261120
    %v988 = vsel %vm987, %v523, %v634
    %v989 = vsel %vm987, %v524, %v636
    %v990 = vsel %vm987, %v525, %v638
    %v991 = vsel %vm987, %v526, %v640
    %v992 = vsel %vm987, %v527, %v642
    %v993 = vsel %vm987, %v528, %v644
    %v994 = vsel %vm987, %v529, %v646
    %v995 = vsel %vm987, %v530, %v648
    %v996 = vsel %vm987, %v532, %v650
    %v997 = vsel %vm987, %v533, %v652
    %v998 = vsel %vm987, %v534, %v654
    %v999 = vsel %vm987, %v535, %v656
    %v1000 = vsel %vm987, %v536, %v658
    %v1001 = vsel %vm987, %v537, %v660
    %v1002 = vsel %vm987, %v538, %v662
    %vm1003 = vcmask 523264
    %v1004 = vsel %vm1003, %v988, %v725
    %v1005 = vsel %vm1003, %v989, %v727
    %v1006 = vsel %vm1003, %v990, %v729
    %v1007 = vsel %vm1003, %v991, %v731
    %v1008 = vsel %vm1003, %v992, %v733
    %v1009 = vsel %vm1003, %v993, %v735
    %v1010 = vsel %vm1003, %v994, %v737
    %v1011 = vsel %vm1003, %v995, %v739
    %v1012 = vsel %vm1003, %v996, %v741
    %v1013 = vsel %vm1003, %v997, %v743
    %v1014 = vsel %vm1003, %v998, %v745
    %v1015 = vsel %vm1003, %v999, %v747
    %v1016 = vsel %vm1003, %v1000, %v749
    %v1017 = vsel %vm1003, %v1001, %v751
    %v1018 = vsel %vm1003, %v1002, %v753
    %vm1019 = vcmask 785408
    %v1020 = vsel %vm1019, %v1004, %v772
    %v1021 = vsel %vm1019, %v1005, %v774
    %v1022 = vsel %vm1019, %v1006, %v776
    %v1023 = vsel %vm1019, %v1007, %v778
    %v1024 = vsel %vm1019, %v1008, %v780
    %v1025 = vsel %vm1019, %v1009, %v782
    %v1026 = vsel %vm1019, %v1010, %v784
    %v1027 = vsel %vm1019, %v1011, %v786
    %v1028 = vsel %vm1019, %v1004, %v788
    %v1029 = vsel %vm1019, %v1012, %v790
    %v1030 = vsel %vm1019, %v1013, %v792
    %v1031 = vsel %vm1019, %v1014, %v794
    %v1032 = vsel %vm1019, %v1015, %v796
    %v1033 = vsel %vm1019, %v1016, %v798
    %v1034 = vsel %vm1019, %v1017, %v800
    %v1035 = vsel %vm1019, %v1018, %v802
    %v1036 = vsel %vm987, %v593, %v850
    %v1037 = vsel %vm987, %v596, %v852
    %v1038 = vsel %vm987, %v599, %v854
    %v1039 = vsel %vm987, %v602, %v856
    %v1040 = vsel %vm987, %v605, %v858
    %v1041 = vsel %vm987, %v608, %v860
    %v1042 = vsel %vm987, %v611, %v862
    %v1043 = vsel %vm987, %v823, %v864
    %v1044 = vsel %vm987, %v614, %v866
    %v1045 = vsel %vm987, %v617, %v868
    %v1046 = vsel %vm987, %v620, %v870
    %v1047 = vsel %vm987, %v623, %v872
    %v1048 = vsel %vm987, %v626, %v874
    %v1049 = vsel %vm987, %v629, %v876
    %v1050 = vsel %vm987, %v632, %v878
    %v1051 = vsel %vm987, %v826, %v880
    %v1052 = vsel %vm1003, %v1036, %v898
    %v1053 = vsel %vm1003, %v1037, %v900
    %v1054 = vsel %vm1003, %v1038, %v902
    %v1055 = vsel %vm1003, %v1039, %v904
    %v1056 = vsel %vm1003, %v1040, %v906
    %v1057 = vsel %vm1003, %v1041, %v908
    %v1058 = vsel %vm1003, %v1042, %v910
    %v1059 = vsel %vm1003, %v1043, %v912
    %v1060 = vsel %vm1003, %v1044, %v914
    %v1061 = vsel %vm1003, %v1045, %v916
    %v1062 = vsel %vm1003, %v1046, %v918
    %v1063 = vsel %vm1003, %v1047, %v920
    %v1064 = vsel %vm1003, %v1048, %v922
    %v1065 = vsel %vm1003, %v1049, %v924
    %v1066 = vsel %vm1003, %v1050, %v926
    %v1067 = vsel %vm1003, %v1051, %v912
    %v1068 = vsel %vm1019, %v1052, %v943
    %v1069 = vsel %vm1019, %v1053, %v945
    %v1070 = vsel %vm1019, %v1054, %v947
    %v1071 = vsel %vm1019, %v1055, %v949
    %v1072 = vsel %vm1019, %v1056, %v951
    %v1073 = vsel %vm1019, %v1057, %v953
    %v1074 = vsel %vm1019, %v1058, %v955
    %v1075 = vsel %vm1019, %v1059, %v957
    %v1076 = vsel %vm1019, %v1060, %v959
    %v1077 = vsel %vm1019, %v1061, %v961
    %v1078 = vsel %vm1019, %v1062, %v963
    %v1079 = vsel %vm1019, %v1063, %v965
    %v1080 = vsel %vm1019, %v1064, %v967
    %v1081 = vsel %vm1019, %v1065, %v969
    %v1082 = vsel %vm1019, %v1066, %v971
    %v1083 = vsel %vm1019, %v1067, %v957
    %v1084 = vld [vmem:[%s3] sm:$0xff]
    %v1085 = vld [vmem:[%s3 + $0x8] sm:$0xff]
    %v1086 = vld [vmem:[%s3 + $0x10] sm:$0xff]
    %v1087 = vld [vmem:[%s3 + $0x18] sm:$0xff]
    %v1088 = vld [vmem:[%s3 + $0x20] sm:$0xff]
    %v1089 = vld [vmem:[%s3 + $0x28] sm:$0xff]
    %v1090 = vld [vmem:[%s3 + $0x30] sm:$0xff]
    %v1091 = vld [vmem:[%s3 + $0x38] sm:$0xff]
    %v1092 = vld [vmem:[%s3 + $0x40] sm:$0xff]
    %v1093 = vld [vmem:[%s3 + $0x48] sm:$0xff]
    %v1094 = vld [vmem:[%s3 + $0x50] sm:$0xff]
    %v1095 = vld [vmem:[%s3 + $0x58] sm:$0xff]
    %v1096 = vld [vmem:[%s3 + $0x60] sm:$0xff]
    %v1097 = vld [vmem:[%s3 + $0x68] sm:$0xff]
    %v1098 = vld [vmem:[%s3 + $0x70] sm:$0xff]
    %v1099 = vld [vmem:[%s3 + $0x78] sm:$0xff]
    %v1100 = vld [vmem:[%s3 + $0x80] sm:$0xff]
    %v1101 = vld [vmem:[%s3 + $0x88] sm:$0xff]
    %v1102 = vld [vmem:[%s3 + $0x90] sm:$0xff]
    %v1103 = vld [vmem:[%s3 + $0x98] sm:$0xff]
    %v1104 = vld [vmem:[%s3 + $0xa0] sm:$0xff]
    %v1105 = vld [vmem:[%s3 + $0xa8] sm:$0xff]
    %v1106 = vld [vmem:[%s3 + $0xb0] sm:$0xff]
    %v1107 = vld [vmem:[%s3 + $0xb8] sm:$0xff]
    %v1108 = vld [vmem:[%s3 + $0xc0] sm:$0xff]
    %v1109 = vld [vmem:[%s3 + $0xc8] sm:$0xff]
    %v1110 = vld [vmem:[%s3 + $0xd0] sm:$0xff]
    %v1111 = vld [vmem:[%s3 + $0xd8] sm:$0xff]
    %v1112 = vld [vmem:[%s3 + $0xe0] sm:$0xff]
    %v1113 = vld [vmem:[%s3 + $0xe8] sm:$0xff]
    %v1114 = vld [vmem:[%s3 + $0xf0] sm:$0xff]
    %v1115 = vld [vmem:[%s3 + $0xf8] sm:$0xff]
    %v1116 = vld [vmem:[%s3 + $0x100] sm:$0xff]
    %v1117 = vld [vmem:[%s3 + $0x108] sm:$0xff]
    %v1118 = vld [vmem:[%s3 + $0x110] sm:$0xff]
    %v1119 = vld [vmem:[%s3 + $0x118] sm:$0xff]
    %v1120 = vsel %vm987, %v687, 0
    %v1122 = vsel %vm987, %v690, 0
    %v1124 = vsel %vm987, %v693, 0
    %v1126 = vsel %vm987, %v696, 0
    %v1128 = vsel %vm987, %v699, 0
    %v1130 = vsel %vm987, %v702, 0
    %v1132 = vsel %vm987, %v845, 0
    %v1134 = vsel %vm987, %v681, 0
    %v1136 = vsel %vm987, %v708, 0
    %v1138 = vsel %vm987, %v711, 0
    %v1140 = vsel %vm987, %v714, 0
    %v1142 = vsel %vm987, %v717, 0
    %v1144 = vsel %vm987, %v720, 0
    %v1146 = vsel %vm987, %v723, 0
    %v1148 = vsel %vm987, %v848, 0
    %1150 = vmatpush.msra.mxu0 %v1099
    %1151 = vmatpush.msra.mxu0 %v1098
    %1152 = vmatpush.msra.mxu0 %v1097
    %1153 = vmatpush.msra.mxu0 %v1096
    %1154 = vmatpush.msra.mxu0 %v1095
    %1155 = vmatpush.msra.mxu0 %v1094
    %1156 = vmatpush.msra.mxu0 %v1093
    %1157 = vmatpush.msra.mxu0 %v1092
    %1158 = vmatpush.msra.mxu0 %v1091
    %1159 = vmatpush.msra.mxu0 %v1090
    %1160 = vmatpush.msra.mxu0 %v1089
    %1161 = vmatpush.msra.mxu0 %v1088
    %1162 = vmatpush.msra.mxu0 %v1087
    %1163 = vmatpush.msra.mxu0 %v1086
    %1164 = vmatpush.msra.mxu0 %v1085
    %1165 = vmatpush.msra.mxu0 %v1084
    %1166 = vmatmul.f32.gmra.mxu0 %v1020
    %v1167 = vpop.f32.mrf.mxu0
    %v1168 = vadd.f32 0.0, %v1167
    %1169 = vmatmul.f32.gmra.mxu0 %v1021
    %v1170 = vpop.f32.mrf.mxu0
    %v1171 = vadd.f32 0.0, %v1170
    %1172 = vmatmul.f32.gmra.mxu0 %v1022
    %v1173 = vpop.f32.mrf.mxu0
    %v1174 = vadd.f32 0.0, %v1173
    %1175 = vmatmul.f32.gmra.mxu0 %v1023
    %v1176 = vpop.f32.mrf.mxu0
    %v1177 = vadd.f32 0.0, %v1176
    %1178 = vmatmul.f32.gmra.mxu0 %v1024
    %v1179 = vpop.f32.mrf.mxu0
    %v1180 = vadd.f32 0.0, %v1179
    %1181 = vmatmul.f32.gmra.mxu0 %v1025
    %v1182 = vpop.f32.mrf.mxu0
    %v1183 = vadd.f32 0.0, %v1182
    %1184 = vmatmul.f32.gmra.mxu0 %v1026
    %v1185 = vpop.f32.mrf.mxu0
    %v1186 = vadd.f32 0.0, %v1185
    %1187 = vmatmul.f32.gmra.mxu0 %v1027
    %v1188 = vpop.f32.mrf.mxu0
    %v1189 = vadd.f32 0.0, %v1188
    %1190 = vmatmul.f32.gmra.mxu0 %v1028
    %v1191 = vpop.f32.mrf.mxu0
    %v1192 = vadd.f32 0.0, %v1191
    %1193 = vmatmul.f32.gmra.mxu0 %v1029
    %v1194 = vpop.f32.mrf.mxu0
    %v1195 = vadd.f32 0.0, %v1194
    %1196 = vmatmul.f32.gmra.mxu0 %v1030
    %v1197 = vpop.f32.mrf.mxu0
    %v1198 = vadd.f32 0.0, %v1197
    %1199 = vmatmul.f32.gmra.mxu0 %v1031
    %v1200 = vpop.f32.mrf.mxu0
    %v1201 = vadd.f32 0.0, %v1200
    %1202 = vmatmul.f32.gmra.mxu0 %v1032
    %v1203 = vpop.f32.mrf.mxu0
    %v1204 = vadd.f32 0.0, %v1203
    %1205 = vmatmul.f32.gmra.mxu0 %v1033
    %v1206 = vpop.f32.mrf.mxu0
    %v1207 = vadd.f32 0.0, %v1206
    %1208 = vmatmul.f32.gmra.mxu0 %v1034
    %v1209 = vpop.f32.mrf.mxu0
    %v1210 = vadd.f32 0.0, %v1209
    %1211 = vmatmul.f32.gmra.mxu0 %v1035
    %v1212 = vpop.f32.mrf.mxu0
    %v1213 = vadd.f32 0.0, %v1212
    %1214 = vdwg.mxu0
    %1215 = vmatpush.msra.mxu0 %v1115
    %1216 = vmatpush.msra.mxu0 %v1114
    %1217 = vmatpush.msra.mxu0 %v1113
    %1218 = vmatpush.msra.mxu0 %v1112
    %1219 = vmatpush.msra.mxu0 %v1111
    %1220 = vmatpush.msra.mxu0 %v1110
    %1221 = vmatpush.msra.mxu0 %v1109
    %1222 = vmatpush.msra.mxu0 %v1108
    %1223 = vmatpush.msra.mxu0 %v1107
    %1224 = vmatpush.msra.mxu0 %v1106
    %1225 = vmatpush.msra.mxu0 %v1105
    %1226 = vmatpush.msra.mxu0 %v1104
    %1227 = vmatpush.msra.mxu0 %v1103
    %1228 = vmatpush.msra.mxu0 %v1102
    %1229 = vmatpush.msra.mxu0 %v1101
    %1230 = vmatpush.msra.mxu0 %v1100
    %1231 = vmatmul.f32.gmra.mxu0 %v1068
    %v1232 = vpop.f32.mrf.mxu0
    %v1233 = vadd.f32 %v1168, %v1232
    %1234 = vmatmul.f32.gmra.mxu0 %v1069
    %v1235 = vpop.f32.mrf.mxu0
    %v1236 = vadd.f32 %v1171, %v1235
    %1237 = vmatmul.f32.gmra.mxu0 %v1070
    %v1238 = vpop.f32.mrf.mxu0
    %v1239 = vadd.f32 %v1174, %v1238
    %1240 = vmatmul.f32.gmra.mxu0 %v1071
    %v1241 = vpop.f32.mrf.mxu0
    %v1242 = vadd.f32 %v1177, %v1241
    %1243 = vmatmul.f32.gmra.mxu0 %v1072
    %v1244 = vpop.f32.mrf.mxu0
    %v1245 = vadd.f32 %v1180, %v1244
    %1246 = vmatmul.f32.gmra.mxu0 %v1073
    %v1247 = vpop.f32.mrf.mxu0
    %v1248 = vadd.f32 %v1183, %v1247
    %1249 = vmatmul.f32.gmra.mxu0 %v1074
    %v1250 = vpop.f32.mrf.mxu0
    %v1251 = vadd.f32 %v1186, %v1250
    %1252 = vmatmul.f32.gmra.mxu0 %v1075
    %v1253 = vpop.f32.mrf.mxu0
    %v1254 = vadd.f32 %v1189, %v1253
    %1255 = vmatmul.f32.gmra.mxu0 %v1076
    %v1256 = vpop.f32.mrf.mxu0
    %v1257 = vadd.f32 %v1192, %v1256
    %1258 = vmatmul.f32.gmra.mxu0 %v1077
    %v1259 = vpop.f32.mrf.mxu0
    %v1260 = vadd.f32 %v1195, %v1259
    %1261 = vmatmul.f32.gmra.mxu0 %v1078
    %v1262 = vpop.f32.mrf.mxu0
    %v1263 = vadd.f32 %v1198, %v1262
    %1264 = vmatmul.f32.gmra.mxu0 %v1079
    %v1265 = vpop.f32.mrf.mxu0
    %v1266 = vadd.f32 %v1201, %v1265
    %1267 = vmatmul.f32.gmra.mxu0 %v1080
    %v1268 = vpop.f32.mrf.mxu0
    %v1269 = vadd.f32 %v1204, %v1268
    %1270 = vmatmul.f32.gmra.mxu0 %v1081
    %v1271 = vpop.f32.mrf.mxu0
    %v1272 = vadd.f32 %v1207, %v1271
    %1273 = vmatmul.f32.gmra.mxu0 %v1082
    %v1274 = vpop.f32.mrf.mxu0
    %v1275 = vadd.f32 %v1210, %v1274
    %1276 = vmatmul.f32.gmra.mxu0 %v1083
    %v1277 = vpop.f32.mrf.mxu0
    %v1278 = vadd.f32 %v1213, %v1277
    %1279 = vdwg.mxu0
    %1280 = vmatpush.msra.mxu0 0.0
    %1281 = vmatpush.msra.mxu0 0.0
    %1282 = vmatpush.msra.mxu0 0.0
    %1283 = vmatpush.msra.mxu0 0.0
    %1284 = vmatpush.msra.mxu0 0.0
    %1285 = vmatpush.msra.mxu0 0.0
    %1286 = vmatpush.msra.mxu0 0.0
    %1287 = vmatpush.msra.mxu0 0.0
    %1288 = vmatpush.msra.mxu0 0.0
    %1289 = vmatpush.msra.mxu0 0.0
    %1290 = vmatpush.msra.mxu0 0.0
    %1291 = vmatpush.msra.mxu0 0.0
    %1292 = vmatpush.msra.mxu0 %v1119
    %1293 = vmatpush.msra.mxu0 %v1118
    %1294 = vmatpush.msra.mxu0 %v1117
    %1295 = vmatpush.msra.mxu0 %v1116
    %1296 = vmatmul.f32.gmra.mxu0 %v1120
    %v1297 = vpop.f32.mrf.mxu0
    %v1298 = vadd.f32 %v1233, %v1297
    %1299 = vmatmul.f32.gmra.mxu0 %v1122
    %v1300 = vpop.f32.mrf.mxu0
    %v1301 = vadd.f32 %v1236, %v1300
    %1302 = vmatmul.f32.gmra.mxu0 %v1124
    %v1303 = vpop.f32.mrf.mxu0
    %v1304 = vadd.f32 %v1239, %v1303
    %1305 = vmatmul.f32.gmra.mxu0 %v1126
    %v1306 = vpop.f32.mrf.mxu0
    %v1307 = vadd.f32 %v1242, %v1306
    %1308 = vmatmul.f32.gmra.mxu0 %v1128
    %v1309 = vpop.f32.mrf.mxu0
    %v1310 = vadd.f32 %v1245, %v1309
    %1311 = vmatmul.f32.gmra.mxu0 %v1130
    %v1312 = vpop.f32.mrf.mxu0
    %v1313 = vadd.f32 %v1248, %v1312
    %1314 = vmatmul.f32.gmra.mxu0 %v1132
    %v1315 = vpop.f32.mrf.mxu0
    %v1316 = vadd.f32 %v1251, %v1315
    %1317 = vmatmul.f32.gmra.mxu0 %v1134
    %v1318 = vpop.f32.mrf.mxu0
    %v1319 = vadd.f32 %v1254, %v1318
    %1320 = vmatmul.f32.gmra.mxu0 %v1136
    %v1321 = vpop.f32.mrf.mxu0
    %v1322 = vadd.f32 %v1257, %v1321
    %1323 = vmatmul.f32.gmra.mxu0 %v1138
    %v1324 = vpop.f32.mrf.mxu0
    %v1325 = vadd.f32 %v1260, %v1324
    %1326 = vmatmul.f32.gmra.mxu0 %v1140
    %v1327 = vpop.f32.mrf.mxu0
    %v1328 = vadd.f32 %v1263, %v1327
    %1329 = vmatmul.f32.gmra.mxu0 %v1142
    %v1330 = vpop.f32.mrf.mxu0
    %v1331 = vadd.f32 %v1266, %v1330
    %1332 = vmatmul.f32.gmra.mxu0 %v1144
    %v1333 = vpop.f32.mrf.mxu0
    %v1334 = vadd.f32 %v1269, %v1333
    %1335 = vmatmul.f32.gmra.mxu0 %v1146
    %v1336 = vpop.f32.mrf.mxu0
    %v1337 = vadd.f32 %v1272, %v1336
    %1338 = vmatmul.f32.gmra.mxu0 %v1148
    %v1339 = vpop.f32.mrf.mxu0
    %v1340 = vadd.f32 %v1275, %v1339
    %1341 = vmatmul.f32.gmra.mxu0 %v1134
    %v1342 = vpop.f32.mrf.mxu0
    %v1343 = vadd.f32 %v1278, %v1342
    %1344 = vdwg.mxu0
    %v1345 = vld [vmem:[%s4] sm:$0x1]
    %v1347 = vperm.slane %v1345, 0
    %v1349 = vmul.f32 %v1298, %v1347
    %v1350 = vmul.f32 %v1301, %v1347
    %v1351 = vmul.f32 %v1304, %v1347
    %v1352 = vmul.f32 %v1307, %v1347
    %v1353 = vmul.f32 %v1310, %v1347
    %v1354 = vmul.f32 %v1313, %v1347
    %v1355 = vmul.f32 %v1316, %v1347
    %v1356 = vmul.f32 %v1319, %v1347
    %v1357 = vmul.f32 %v1322, %v1347
    %v1358 = vmul.f32 %v1325, %v1347
    %v1359 = vmul.f32 %v1328, %v1347
    %v1360 = vmul.f32 %v1331, %v1347
    %v1361 = vmul.f32 %v1334, %v1347
    %v1362 = vmul.f32 %v1337, %v1347
    %v1363 = vmul.f32 %v1340, %v1347
    %v1364 = vmul.f32 %v1343, %v1347
    %v1365 = vld [vmem:[%s5] sm:$0x1]
    %v1367 = vperm.slane %v1365, 0
    %v1369 = vadd.f32 %v1349, %v1367
    %v1370 = vadd.f32 %v1350, %v1367
    %v1371 = vadd.f32 %v1351, %v1367
    %v1372 = vadd.f32 %v1352, %v1367
    %v1373 = vadd.f32 %v1353, %v1367
    %v1374 = vadd.f32 %v1354, %v1367
    %v1375 = vadd.f32 %v1355, %v1367
    %v1376 = vadd.f32 %v1356, %v1367
    %v1377 = vadd.f32 %v1357, %v1367
    %v1378 = vadd.f32 %v1358, %v1367
    %v1379 = vadd.f32 %v1359, %v1367
    %v1380 = vadd.f32 %v1360, %v1367
    %v1381 = vadd.f32 %v1361, %v1367
    %v1382 = vadd.f32 %v1362, %v1367
    %v1383 = vadd.f32 %v1363, %v1367
    %v1384 = vadd.f32 %v1364, %v1367
    %v1385 = vmin.f32 %v1369, 20.0
    %v1386 = vmin.f32 %v1370, 20.0
    %v1387 = vmin.f32 %v1371, 20.0
    %v1388 = vmin.f32 %v1372, 20.0
    %v1389 = vmin.f32 %v1373, 20.0
    %v1390 = vmin.f32 %v1374, 20.0
    %v1391 = vmin.f32 %v1375, 20.0
    %v1392 = vmin.f32 %v1376, 20.0
    %v1393 = vmin.f32 %v1377, 20.0
    %v1394 = vmin.f32 %v1378, 20.0
    %v1395 = vmin.f32 %v1379, 20.0
    %v1396 = vmin.f32 %v1380, 20.0
    %v1397 = vmin.f32 %v1381, 20.0
    %v1398 = vmin.f32 %v1382, 20.0
    %v1399 = vmin.f32 %v1383, 20.0
    %v1400 = vmin.f32 %v1384, 20.0
    %v1401 = vmul.f32 %v1385, 1.442695
    %v1402 = vpow.pop %v1401
    %v1403 = vmul.f32 %v1386, 1.442695
    %v1404 = vpow.pop %v1403
    %v1405 = vmul.f32 %v1387, 1.442695
    %v1406 = vpow.pop %v1405
    %v1407 = vmul.f32 %v1388, 1.442695
    %v1408 = vpow.pop %v1407
    %v1409 = vmul.f32 %v1389, 1.442695
    %v1410 = vpow.pop %v1409
    %v1411 = vmul.f32 %v1390, 1.442695
    %v1412 = vpow.pop %v1411
    %v1413 = vmul.f32 %v1391, 1.442695
    %v1414 = vpow.pop %v1413
    %v1415 = vmul.f32 %v1392, 1.442695
    %v1416 = vpow.pop %v1415
    %v1417 = vmul.f32 %v1393, 1.442695
    %v1418 = vpow.pop %v1417
    %v1419 = vmul.f32 %v1394, 1.442695
    %v1420 = vpow.pop %v1419
    %v1421 = vmul.f32 %v1395, 1.442695
    %v1422 = vpow.pop %v1421
    %v1423 = vmul.f32 %v1396, 1.442695
    %v1424 = vpow.pop %v1423
    %v1425 = vmul.f32 %v1397, 1.442695
    %v1426 = vpow.pop %v1425
    %v1427 = vmul.f32 %v1398, 1.442695
    %v1428 = vpow.pop %v1427
    %v1429 = vmul.f32 %v1399, 1.442695
    %v1430 = vpow.pop %v1429
    %v1431 = vmul.f32 %v1400, 1.442695
    %v1432 = vpow.pop %v1431
    %v1433 = vadd.f32 %v1402, 2.0
    %v1434 = vadd.f32 %v1404, 2.0
    %v1435 = vadd.f32 %v1406, 2.0
    %v1436 = vadd.f32 %v1408, 2.0
    %v1437 = vadd.f32 %v1410, 2.0
    %v1438 = vadd.f32 %v1412, 2.0
    %v1439 = vadd.f32 %v1414, 2.0
    %v1440 = vadd.f32 %v1416, 2.0
    %v1441 = vadd.f32 %v1418, 2.0
    %v1442 = vadd.f32 %v1420, 2.0
    %v1443 = vadd.f32 %v1422, 2.0
    %v1444 = vadd.f32 %v1424, 2.0
    %v1445 = vadd.f32 %v1426, 2.0
    %v1446 = vadd.f32 %v1428, 2.0
    %v1447 = vadd.f32 %v1430, 2.0
    %v1448 = vadd.f32 %v1432, 2.0
    %v1449 = vmul.f32 %v1402, %v1433
    %v1450 = vmul.f32 %v1404, %v1434
    %v1451 = vmul.f32 %v1406, %v1435
    %v1452 = vmul.f32 %v1408, %v1436
    %v1453 = vmul.f32 %v1410, %v1437
    %v1454 = vmul.f32 %v1412, %v1438
    %v1455 = vmul.f32 %v1414, %v1439
    %v1456 = vmul.f32 %v1416, %v1440
    %v1457 = vmul.f32 %v1418, %v1441
    %v1458 = vmul.f32 %v1420, %v1442
    %v1459 = vmul.f32 %v1422, %v1443
    %v1460 = vmul.f32 %v1424, %v1444
    %v1461 = vmul.f32 %v1426, %v1445
    %v1462 = vmul.f32 %v1428, %v1446
    %v1463 = vmul.f32 %v1430, %v1447
    %v1464 = vmul.f32 %v1432, %v1448
    %v1465 = vadd.f32 %v1449, 2.0
    %v1466 = vadd.f32 %v1450, 2.0
    %v1467 = vadd.f32 %v1451, 2.0
    %v1468 = vadd.f32 %v1452, 2.0
    %v1469 = vadd.f32 %v1453, 2.0
    %v1470 = vadd.f32 %v1454, 2.0
    %v1471 = vadd.f32 %v1455, 2.0
    %v1472 = vadd.f32 %v1456, 2.0
    %v1473 = vadd.f32 %v1457, 2.0
    %v1474 = vadd.f32 %v1458, 2.0
    %v1475 = vadd.f32 %v1459, 2.0
    %v1476 = vadd.f32 %v1460, 2.0
    %v1477 = vadd.f32 %v1461, 2.0
    %v1478 = vadd.f32 %v1462, 2.0
    %v1479 = vadd.f32 %v1463, 2.0
    %v1480 = vadd.f32 %v1464, 2.0
    %v1481 = vrcp.pop %v1465
    %v1482 = vmul.f32 %v1465, %v1481
    %v1483 = vsub.f32 1.0, %v1482
    %v1484 = vmul.f32 %v1481, %v1483
    %v1485 = vadd.f32 %v1481, %v1484
    %vm1486 = vweird.f32 %v1465
    %vm1487 = vweird.f32 %v1481
    %vm1488 = vmor %vm1486, %vm1487
    %v1489 = vsel %vm1488, %v1481, %v1485
    %v1490 = vand.u32 2147483647, %v1465
    %vm1491 = vcmp.eq.f32.partialorder %v1490, 8.507059e+37
    %v1492 = vand.u32 %v1465, 2147483648
    %v1493 = vor.u32 1.1754944e-38, %v1492
    %v1494 = vsel %vm1491, %v1493, %v1489
    %v1495 = vmul.f32 %v1449, %v1494
    %v1496 = vrcp.pop %v1466
    %v1497 = vmul.f32 %v1466, %v1496
    %v1498 = vsub.f32 1.0, %v1497
    %v1499 = vmul.f32 %v1496, %v1498
    %v1500 = vadd.f32 %v1496, %v1499
    %vm1501 = vweird.f32 %v1466
    %vm1502 = vweird.f32 %v1496
    %vm1503 = vmor %vm1501, %vm1502
    %v1504 = vsel %vm1503, %v1496, %v1500
    %v1505 = vand.u32 2147483647, %v1466
    %vm1506 = vcmp.eq.f32.partialorder %v1505, 8.507059e+37
    %v1507 = vand.u32 %v1466, 2147483648
    %v1508 = vor.u32 1.1754944e-38, %v1507
    %v1509 = vsel %vm1506, %v1508, %v1504
    %v1510 = vmul.f32 %v1450, %v1509
    %v1511 = vrcp.pop %v1467
    %v1512 = vmul.f32 %v1467, %v1511
    %v1513 = vsub.f32 1.0, %v1512
    %v1514 = vmul.f32 %v1511, %v1513
    %v1515 = vadd.f32 %v1511, %v1514
    %vm1516 = vweird.f32 %v1467
    %vm1517 = vweird.f32 %v1511
    %vm1518 = vmor %vm1516, %vm1517
    %v1519 = vsel %vm1518, %v1511, %v1515
    %v1520 = vand.u32 2147483647, %v1467
    %vm1521 = vcmp.eq.f32.partialorder %v1520, 8.507059e+37
    %v1522 = vand.u32 %v1467, 2147483648
    %v1523 = vor.u32 1.1754944e-38, %v1522
    %v1524 = vsel %vm1521, %v1523, %v1519
    %v1525 = vmul.f32 %v1451, %v1524
    %v1526 = vrcp.pop %v1468
    %v1527 = vmul.f32 %v1468, %v1526
    %v1528 = vsub.f32 1.0, %v1527
    %v1529 = vmul.f32 %v1526, %v1528
    %v1530 = vadd.f32 %v1526, %v1529
    %vm1531 = vweird.f32 %v1468
    %vm1532 = vweird.f32 %v1526
    %vm1533 = vmor %vm1531, %vm1532
    %v1534 = vsel %vm1533, %v1526, %v1530
    %v1535 = vand.u32 2147483647, %v1468
    %vm1536 = vcmp.eq.f32.partialorder %v1535, 8.507059e+37
    %v1537 = vand.u32 %v1468, 2147483648
    %v1538 = vor.u32 1.1754944e-38, %v1537
    %v1539 = vsel %vm1536, %v1538, %v1534
    %v1540 = vmul.f32 %v1452, %v1539
    %v1541 = vrcp.pop %v1469
    %v1542 = vmul.f32 %v1469, %v1541
    %v1543 = vsub.f32 1.0, %v1542
    %v1544 = vmul.f32 %v1541, %v1543
    %v1545 = vadd.f32 %v1541, %v1544
    %vm1546 = vweird.f32 %v1469
    %vm1547 = vweird.f32 %v1541
    %vm1548 = vmor %vm1546, %vm1547
    %v1549 = vsel %vm1548, %v1541, %v1545
    %v1550 = vand.u32 2147483647, %v1469
    %vm1551 = vcmp.eq.f32.partialorder %v1550, 8.507059e+37
    %v1552 = vand.u32 %v1469, 2147483648
    %v1553 = vor.u32 1.1754944e-38, %v1552
    %v1554 = vsel %vm1551, %v1553, %v1549
    %v1555 = vmul.f32 %v1453, %v1554
    %v1556 = vrcp.pop %v1470
    %v1557 = vmul.f32 %v1470, %v1556
    %v1558 = vsub.f32 1.0, %v1557
    %v1559 = vmul.f32 %v1556, %v1558
    %v1560 = vadd.f32 %v1556, %v1559
    %vm1561 = vweird.f32 %v1470
    %vm1562 = vweird.f32 %v1556
    %vm1563 = vmor %vm1561, %vm1562
    %v1564 = vsel %vm1563, %v1556, %v1560
    %v1565 = vand.u32 2147483647, %v1470
    %vm1566 = vcmp.eq.f32.partialorder %v1565, 8.507059e+37
    %v1567 = vand.u32 %v1470, 2147483648
    %v1568 = vor.u32 1.1754944e-38, %v1567
    %v1569 = vsel %vm1566, %v1568, %v1564
    %v1570 = vmul.f32 %v1454, %v1569
    %v1571 = vrcp.pop %v1471
    %v1572 = vmul.f32 %v1471, %v1571
    %v1573 = vsub.f32 1.0, %v1572
    %v1574 = vmul.f32 %v1571, %v1573
    %v1575 = vadd.f32 %v1571, %v1574
    %vm1576 = vweird.f32 %v1471
    %vm1577 = vweird.f32 %v1571
    %vm1578 = vmor %vm1576, %vm1577
    %v1579 = vsel %vm1578, %v1571, %v1575
    %v1580 = vand.u32 2147483647, %v1471
    %vm1581 = vcmp.eq.f32.partialorder %v1580, 8.507059e+37
    %v1582 = vand.u32 %v1471, 2147483648
    %v1583 = vor.u32 1.1754944e-38, %v1582
    %v1584 = vsel %vm1581, %v1583, %v1579
    %v1585 = vmul.f32 %v1455, %v1584
    %v1586 = vrcp.pop %v1472
    %v1587 = vmul.f32 %v1472, %v1586
    %v1588 = vsub.f32 1.0, %v1587
    %v1589 = vmul.f32 %v1586, %v1588
    %v1590 = vadd.f32 %v1586, %v1589
    %vm1591 = vweird.f32 %v1472
    %vm1592 = vweird.f32 %v1586
    %vm1593 = vmor %vm1591, %vm1592
    %v1594 = vsel %vm1593, %v1586, %v1590
    %v1595 = vand.u32 2147483647, %v1472
    %vm1596 = vcmp.eq.f32.partialorder %v1595, 8.507059e+37
    %v1597 = vand.u32 %v1472, 2147483648
    %v1598 = vor.u32 1.1754944e-38, %v1597
    %v1599 = vsel %vm1596, %v1598, %v1594
    %v1600 = vmul.f32 %v1456, %v1599
    %v1601 = vrcp.pop %v1473
    %v1602 = vmul.f32 %v1473, %v1601
    %v1603 = vsub.f32 1.0, %v1602
    %v1604 = vmul.f32 %v1601, %v1603
    %v1605 = vadd.f32 %v1601, %v1604
    %vm1606 = vweird.f32 %v1473
    %vm1607 = vweird.f32 %v1601
    %vm1608 = vmor %vm1606, %vm1607
    %v1609 = vsel %vm1608, %v1601, %v1605
    %v1610 = vand.u32 2147483647, %v1473
    %vm1611 = vcmp.eq.f32.partialorder %v1610, 8.507059e+37
    %v1612 = vand.u32 %v1473, 2147483648
    %v1613 = vor.u32 1.1754944e-38, %v1612
    %v1614 = vsel %vm1611, %v1613, %v1609
    %v1615 = vmul.f32 %v1457, %v1614
    %v1616 = vrcp.pop %v1474
    %v1617 = vmul.f32 %v1474, %v1616
    %v1618 = vsub.f32 1.0, %v1617
    %v1619 = vmul.f32 %v1616, %v1618
    %v1620 = vadd.f32 %v1616, %v1619
    %vm1621 = vweird.f32 %v1474
    %vm1622 = vweird.f32 %v1616
    %vm1623 = vmor %vm1621, %vm1622
    %v1624 = vsel %vm1623, %v1616, %v1620
    %v1625 = vand.u32 2147483647, %v1474
    %vm1626 = vcmp.eq.f32.partialorder %v1625, 8.507059e+37
    %v1627 = vand.u32 %v1474, 2147483648
    %v1628 = vor.u32 1.1754944e-38, %v1627
    %v1629 = vsel %vm1626, %v1628, %v1624
    %v1630 = vmul.f32 %v1458, %v1629
    %v1631 = vrcp.pop %v1475
    %v1632 = vmul.f32 %v1475, %v1631
    %v1633 = vsub.f32 1.0, %v1632
    %v1634 = vmul.f32 %v1631, %v1633
    %v1635 = vadd.f32 %v1631, %v1634
    %vm1636 = vweird.f32 %v1475
    %vm1637 = vweird.f32 %v1631
    %vm1638 = vmor %vm1636, %vm1637
    %v1639 = vsel %vm1638, %v1631, %v1635
    %v1640 = vand.u32 2147483647, %v1475
    %vm1641 = vcmp.eq.f32.partialorder %v1640, 8.507059e+37
    %v1642 = vand.u32 %v1475, 2147483648
    %v1643 = vor.u32 1.1754944e-38, %v1642
    %v1644 = vsel %vm1641, %v1643, %v1639
    %v1645 = vmul.f32 %v1459, %v1644
    %v1646 = vrcp.pop %v1476
    %v1647 = vmul.f32 %v1476, %v1646
    %v1648 = vsub.f32 1.0, %v1647
    %v1649 = vmul.f32 %v1646, %v1648
    %v1650 = vadd.f32 %v1646, %v1649
    %vm1651 = vweird.f32 %v1476
    %vm1652 = vweird.f32 %v1646
    %vm1653 = vmor %vm1651, %vm1652
    %v1654 = vsel %vm1653, %v1646, %v1650
    %v1655 = vand.u32 2147483647, %v1476
    %vm1656 = vcmp.eq.f32.partialorder %v1655, 8.507059e+37
    %v1657 = vand.u32 %v1476, 2147483648
    %v1658 = vor.u32 1.1754944e-38, %v1657
    %v1659 = vsel %vm1656, %v1658, %v1654
    %v1660 = vmul.f32 %v1460, %v1659
    %v1661 = vrcp.pop %v1477
    %v1662 = vmul.f32 %v1477, %v1661
    %v1663 = vsub.f32 1.0, %v1662
    %v1664 = vmul.f32 %v1661, %v1663
    %v1665 = vadd.f32 %v1661, %v1664
    %vm1666 = vweird.f32 %v1477
    %vm1667 = vweird.f32 %v1661
    %vm1668 = vmor %vm1666, %vm1667
    %v1669 = vsel %vm1668, %v1661, %v1665
    %v1670 = vand.u32 2147483647, %v1477
    %vm1671 = vcmp.eq.f32.partialorder %v1670, 8.507059e+37
    %v1672 = vand.u32 %v1477, 2147483648
    %v1673 = vor.u32 1.1754944e-38, %v1672
    %v1674 = vsel %vm1671, %v1673, %v1669
    %v1675 = vmul.f32 %v1461, %v1674
    %v1676 = vrcp.pop %v1478
    %v1677 = vmul.f32 %v1478, %v1676
    %v1678 = vsub.f32 1.0, %v1677
    %v1679 = vmul.f32 %v1676, %v1678
    %v1680 = vadd.f32 %v1676, %v1679
    %vm1681 = vweird.f32 %v1478
    %vm1682 = vweird.f32 %v1676
    %vm1683 = vmor %vm1681, %vm1682
    %v1684 = vsel %vm1683, %v1676, %v1680
    %v1685 = vand.u32 2147483647, %v1478
    %vm1686 = vcmp.eq.f32.partialorder %v1685, 8.507059e+37
    %v1687 = vand.u32 %v1478, 2147483648
    %v1688 = vor.u32 1.1754944e-38, %v1687
    %v1689 = vsel %vm1686, %v1688, %v1684
    %v1690 = vmul.f32 %v1462, %v1689
    %v1691 = vrcp.pop %v1479
    %v1692 = vmul.f32 %v1479, %v1691
    %v1693 = vsub.f32 1.0, %v1692
    %v1694 = vmul.f32 %v1691, %v1693
    %v1695 = vadd.f32 %v1691, %v1694
    %vm1696 = vweird.f32 %v1479
    %vm1697 = vweird.f32 %v1691
    %vm1698 = vmor %vm1696, %vm1697
    %v1699 = vsel %vm1698, %v1691, %v1695
    %v1700 = vand.u32 2147483647, %v1479
    %vm1701 = vcmp.eq.f32.partialorder %v1700, 8.507059e+37
    %v1702 = vand.u32 %v1479, 2147483648
    %v1703 = vor.u32 1.1754944e-38, %v1702
    %v1704 = vsel %vm1701, %v1703, %v1699
    %v1705 = vmul.f32 %v1463, %v1704
    %v1706 = vrcp.pop %v1480
    %v1707 = vmul.f32 %v1480, %v1706
    %v1708 = vsub.f32 1.0, %v1707
    %v1709 = vmul.f32 %v1706, %v1708
    %v1710 = vadd.f32 %v1706, %v1709
    %vm1711 = vweird.f32 %v1480
    %vm1712 = vweird.f32 %v1706
    %vm1713 = vmor %vm1711, %vm1712
    %v1714 = vsel %vm1713, %v1706, %v1710
    %v1715 = vand.u32 2147483647, %v1480
    %vm1716 = vcmp.eq.f32.partialorder %v1715, 8.507059e+37
    %v1717 = vand.u32 %v1480, 2147483648
    %v1718 = vor.u32 1.1754944e-38, %v1717
    %v1719 = vsel %vm1716, %v1718, %v1714
    %v1720 = vmul.f32 %v1464, %v1719
    %v1721 = vmul.f32 %v1369, %v1495
    %v1722 = vmul.f32 %v1370, %v1510
    %v1723 = vmul.f32 %v1371, %v1525
    %v1724 = vmul.f32 %v1372, %v1540
    %v1725 = vmul.f32 %v1373, %v1555
    %v1726 = vmul.f32 %v1374, %v1570
    %v1727 = vmul.f32 %v1375, %v1585
    %v1728 = vmul.f32 %v1376, %v1600
    %v1729 = vmul.f32 %v1377, %v1615
    %v1730 = vmul.f32 %v1378, %v1630
    %v1731 = vmul.f32 %v1379, %v1645
    %v1732 = vmul.f32 %v1380, %v1660
    %v1733 = vmul.f32 %v1381, %v1675
    %v1734 = vmul.f32 %v1382, %v1690
    %v1735 = vmul.f32 %v1383, %v1705
    %v1736 = vmul.f32 %v1384, %v1720
    %v1753 = vrot.slane %v1721, 7
    %v1754 = vrot.slane %v1722, 7
    %v1755 = vrot.slane %v1723, 7
    %v1756 = vrot.slane %v1724, 7
    %v1757 = vrot.slane %v1725, 7
    %v1758 = vrot.slane %v1726, 7
    %v1759 = vrot.slane %v1727, 7
    %v1760 = vrot.slane %v1728, 7
    %v1761 = vrot.slane %v1729, 7
    %v1762 = vrot.slane %v1730, 7
    %v1763 = vrot.slane %v1731, 7
    %v1764 = vrot.slane %v1732, 7
    %v1765 = vrot.slane %v1733, 7
    %v1766 = vrot.slane %v1734, 7
    %v1767 = vrot.slane %v1735, 7
    %v1768 = vrot.slane %v1736, 7
    %v1785 = vsel %vm522, 0.0, %v1753
    %v1786 = vsel %vm522, 0.0, %v1754
    %v1787 = vsel %vm522, 0.0, %v1755
    %v1788 = vsel %vm522, 0.0, %v1756
    %v1789 = vsel %vm522, 0.0, %v1757
    %v1790 = vsel %vm522, 0.0, %v1758
    %v1791 = vsel %vm522, 0.0, %v1759
    %v1792 = vsel %vm522, 0.0, %v1760
    %v1793 = vsel %vm522, 0.0, %v1761
    %v1794 = vsel %vm522, 0.0, %v1762
    %v1795 = vsel %vm522, 0.0, %v1763
    %v1796 = vsel %vm522, 0.0, %v1764
    %v1797 = vsel %vm522, 0.0, %v1765
    %v1798 = vsel %vm522, 0.0, %v1766
    %v1799 = vsel %vm522, 0.0, %v1767
    %v1800 = vsel %vm522, 0.0, %v1768
    %v1801 = vsel %vm522, %v1753, 0.0
    %v1802 = vsel %vm522, %v1754, 0.0
    %v1803 = vsel %vm522, %v1755, 0.0
    %v1804 = vsel %vm522, %v1756, 0.0
    %v1805 = vsel %vm522, %v1757, 0.0
    %v1806 = vsel %vm522, %v1758, 0.0
    %v1807 = vsel %vm522, %v1759, 0.0
    %v1808 = vsel %vm522, %v1760, 0.0
    %v1809 = vsel %vm522, %v1761, 0.0
    %v1810 = vsel %vm522, %v1762, 0.0
    %v1811 = vsel %vm522, %v1763, 0.0
    %v1812 = vsel %vm522, %v1764, 0.0
    %v1813 = vsel %vm522, %v1765, 0.0
    %v1814 = vsel %vm522, %v1766, 0.0
    %v1815 = vsel %vm522, %v1767, 0.0
    %v1816 = vsel %vm522, %v1768, 0.0
    %v1845 = vrot.slane %v1785, 1
    %v1846 = vrot.slane %v1801, 1
    %v1847 = vsel %vm587, %v1845, %v1846
    %v1848 = vrot.slane %v1786, 1
    %v1849 = vrot.slane %v1802, 1
    %v1850 = vsel %vm587, %v1848, %v1849
    %v1851 = vrot.slane %v1787, 1
    %v1852 = vrot.slane %v1803, 1
    %v1853 = vsel %vm587, %v1851, %v1852
    %v1854 = vrot.slane %v1788, 1
    %v1855 = vrot.slane %v1804, 1
    %v1856 = vsel %vm587, %v1854, %v1855
    %v1857 = vrot.slane %v1789, 1
    %v1858 = vrot.slane %v1805, 1
    %v1859 = vsel %vm587, %v1857, %v1858
    %v1860 = vrot.slane %v1790, 1
    %v1861 = vrot.slane %v1806, 1
    %v1862 = vsel %vm587, %v1860, %v1861
    %v1863 = vrot.slane %v1791, 1
    %v1864 = vrot.slane %v1807, 1
    %v1865 = vsel %vm587, %v1863, %v1864
    %v1866 = vrot.slane %v1793, 1
    %v1867 = vrot.slane %v1809, 1
    %v1868 = vsel %vm587, %v1866, %v1867
    %v1869 = vrot.slane %v1794, 1
    %v1870 = vrot.slane %v1810, 1
    %v1871 = vsel %vm587, %v1869, %v1870
    %v1872 = vrot.slane %v1795, 1
    %v1873 = vrot.slane %v1811, 1
    %v1874 = vsel %vm587, %v1872, %v1873
    %v1875 = vrot.slane %v1796, 1
    %v1876 = vrot.slane %v1812, 1
    %v1877 = vsel %vm587, %v1875, %v1876
    %v1878 = vrot.slane %v1797, 1
    %v1879 = vrot.slane %v1813, 1
    %v1880 = vsel %vm587, %v1878, %v1879
    %v1881 = vrot.slane %v1798, 1
    %v1882 = vrot.slane %v1814, 1
    %v1883 = vsel %vm587, %v1881, %v1882
    %v1884 = vrot.slane %v1799, 1
    %v1885 = vrot.slane %v1815, 1
    %v1886 = vsel %vm587, %v1884, %v1885
    %1887 = vrot.lane.b32.xlu0 %v590, 16
    %v1888 = vpop.permute.xlu0 %1887
    %1889 = vrot.lane.b32.xlu0 %v1847, 16
    %v1890 = vpop.permute.xlu0 %1889
    %1891 = vrot.lane.b32.xlu0 %v1850, 16
    %v1892 = vpop.permute.xlu0 %1891
    %1893 = vrot.lane.b32.xlu0 %v1853, 16
    %v1894 = vpop.permute.xlu0 %1893
    %1895 = vrot.lane.b32.xlu0 %v1856, 16
    %v1896 = vpop.permute.xlu0 %1895
    %1897 = vrot.lane.b32.xlu0 %v1859, 16
    %v1898 = vpop.permute.xlu0 %1897
    %1899 = vrot.lane.b32.xlu0 %v1862, 16
    %v1900 = vpop.permute.xlu0 %1899
    %1901 = vrot.lane.b32.xlu0 %v1865, 16
    %v1902 = vpop.permute.xlu0 %1901
    %1903 = vrot.lane.b32.xlu0 %v1868, 16
    %v1904 = vpop.permute.xlu0 %1903
    %1905 = vrot.lane.b32.xlu0 %v1871, 16
    %v1906 = vpop.permute.xlu0 %1905
    %1907 = vrot.lane.b32.xlu0 %v1874, 16
    %v1908 = vpop.permute.xlu0 %1907
    %1909 = vrot.lane.b32.xlu0 %v1877, 16
    %v1910 = vpop.permute.xlu0 %1909
    %1911 = vrot.lane.b32.xlu0 %v1880, 16
    %v1912 = vpop.permute.xlu0 %1911
    %1913 = vrot.lane.b32.xlu0 %v1883, 16
    %v1914 = vpop.permute.xlu0 %1913
    %1915 = vrot.lane.b32.xlu0 %v1886, 16
    %v1916 = vpop.permute.xlu0 %1915
    %v1932 = vrot.slane %v1785, 2
    %v1933 = vrot.slane %v1801, 2
    %v1934 = vsel %vm678, %v1932, %v1933
    %v1935 = vrot.slane %v1786, 2
    %v1936 = vrot.slane %v1802, 2
    %v1937 = vsel %vm678, %v1935, %v1936
    %v1938 = vrot.slane %v1787, 2
    %v1939 = vrot.slane %v1803, 2
    %v1940 = vsel %vm678, %v1938, %v1939
    %v1941 = vrot.slane %v1788, 2
    %v1942 = vrot.slane %v1804, 2
    %v1943 = vsel %vm678, %v1941, %v1942
    %v1944 = vrot.slane %v1789, 2
    %v1945 = vrot.slane %v1805, 2
    %v1946 = vsel %vm678, %v1944, %v1945
    %v1947 = vrot.slane %v1790, 2
    %v1948 = vrot.slane %v1806, 2
    %v1949 = vsel %vm678, %v1947, %v1948
    %v1950 = vrot.slane %v1791, 2
    %v1951 = vrot.slane %v1807, 2
    %v1952 = vsel %vm678, %v1950, %v1951
    %v1953 = vrot.slane %v1793, 2
    %v1954 = vrot.slane %v1809, 2
    %v1955 = vsel %vm678, %v1953, %v1954
    %v1956 = vrot.slane %v1794, 2
    %v1957 = vrot.slane %v1810, 2
    %v1958 = vsel %vm678, %v1956, %v1957
    %v1959 = vrot.slane %v1795, 2
    %v1960 = vrot.slane %v1811, 2
    %v1961 = vsel %vm678, %v1959, %v1960
    %v1962 = vrot.slane %v1796, 2
    %v1963 = vrot.slane %v1812, 2
    %v1964 = vsel %vm678, %v1962, %v1963
    %v1965 = vrot.slane %v1797, 2
    %v1966 = vrot.slane %v1813, 2
    %v1967 = vsel %vm678, %v1965, %v1966
    %v1968 = vrot.slane %v1798, 2
    %v1969 = vrot.slane %v1814, 2
    %v1970 = vsel %vm678, %v1968, %v1969
    %v1971 = vrot.slane %v1799, 2
    %v1972 = vrot.slane %v1815, 2
    %v1973 = vsel %vm678, %v1971, %v1972
    %1974 = vrot.lane.b32.xlu0 %v681, 32
    %v1975 = vpop.permute.xlu0 %1974
    %1976 = vrot.lane.b32.xlu0 %v1934, 32
    %v1977 = vpop.permute.xlu0 %1976
    %1978 = vrot.lane.b32.xlu0 %v1937, 32
    %v1979 = vpop.permute.xlu0 %1978
    %1980 = vrot.lane.b32.xlu0 %v1940, 32
    %v1981 = vpop.permute.xlu0 %1980
    %1982 = vrot.lane.b32.xlu0 %v1943, 32
    %v1983 = vpop.permute.xlu0 %1982
    %1984 = vrot.lane.b32.xlu0 %v1946, 32
    %v1985 = vpop.permute.xlu0 %1984
    %1986 = vrot.lane.b32.xlu0 %v1949, 32
    %v1987 = vpop.permute.xlu0 %1986
    %1988 = vrot.lane.b32.xlu0 %v1952, 32
    %v1989 = vpop.permute.xlu0 %1988
    %1990 = vrot.lane.b32.xlu0 %v1955, 32
    %v1991 = vpop.permute.xlu0 %1990
    %1992 = vrot.lane.b32.xlu0 %v1958, 32
    %v1993 = vpop.permute.xlu0 %1992
    %1994 = vrot.lane.b32.xlu0 %v1961, 32
    %v1995 = vpop.permute.xlu0 %1994
    %1996 = vrot.lane.b32.xlu0 %v1964, 32
    %v1997 = vpop.permute.xlu0 %1996
    %1998 = vrot.lane.b32.xlu0 %v1967, 32
    %v1999 = vpop.permute.xlu0 %1998
    %2000 = vrot.lane.b32.xlu0 %v1970, 32
    %v2001 = vpop.permute.xlu0 %2000
    %2002 = vrot.lane.b32.xlu0 %v1973, 32
    %v2003 = vpop.permute.xlu0 %2002
    %2021 = vrot.lane.b32.xlu0 %v1785, 48
    %v2022 = vpop.permute.xlu0 %2021
    %2023 = vrot.lane.b32.xlu0 %v1786, 48
    %v2024 = vpop.permute.xlu0 %2023
    %2025 = vrot.lane.b32.xlu0 %v1787, 48
    %v2026 = vpop.permute.xlu0 %2025
    %2027 = vrot.lane.b32.xlu0 %v1788, 48
    %v2028 = vpop.permute.xlu0 %2027
    %2029 = vrot.lane.b32.xlu0 %v1789, 48
    %v2030 = vpop.permute.xlu0 %2029
    %2031 = vrot.lane.b32.xlu0 %v1790, 48
    %v2032 = vpop.permute.xlu0 %2031
    %2033 = vrot.lane.b32.xlu0 %v1791, 48
    %v2034 = vpop.permute.xlu0 %2033
    %2035 = vrot.lane.b32.xlu0 %v1792, 48
    %v2036 = vpop.permute.xlu0 %2035
    %2037 = vrot.lane.b32.xlu0 %v1793, 48
    %v2038 = vpop.permute.xlu0 %2037
    %2039 = vrot.lane.b32.xlu0 %v1794, 48
    %v2040 = vpop.permute.xlu0 %2039
    %2041 = vrot.lane.b32.xlu0 %v1795, 48
    %v2042 = vpop.permute.xlu0 %2041
    %2043 = vrot.lane.b32.xlu0 %v1796, 48
    %v2044 = vpop.permute.xlu0 %2043
    %2045 = vrot.lane.b32.xlu0 %v1797, 48
    %v2046 = vpop.permute.xlu0 %2045
    %2047 = vrot.lane.b32.xlu0 %v1798, 48
    %v2048 = vpop.permute.xlu0 %2047
    %2049 = vrot.lane.b32.xlu0 %v1799, 48
    %v2050 = vpop.permute.xlu0 %2049
    %2051 = vrot.lane.b32.xlu0 %v1800, 48
    %v2052 = vpop.permute.xlu0 %2051
    %v2071 = vrot.slane %v1792, 1
    %v2072 = vrot.slane %v1808, 1
    %v2073 = vsel %vm587, %v2071, %v2072
    %v2074 = vrot.slane %v1800, 1
    %v2075 = vrot.slane %v1816, 1
    %v2076 = vsel %vm587, %v2074, %v2075
    %2077 = vrot.lane.b32.xlu0 %v1847, 64
    %v2078 = vpop.permute.xlu0 %2077
    %2079 = vrot.lane.b32.xlu0 %v1850, 64
    %v2080 = vpop.permute.xlu0 %2079
    %2081 = vrot.lane.b32.xlu0 %v1853, 64
    %v2082 = vpop.permute.xlu0 %2081
    %2083 = vrot.lane.b32.xlu0 %v1856, 64
    %v2084 = vpop.permute.xlu0 %2083
    %2085 = vrot.lane.b32.xlu0 %v1859, 64
    %v2086 = vpop.permute.xlu0 %2085
    %2087 = vrot.lane.b32.xlu0 %v1862, 64
    %v2088 = vpop.permute.xlu0 %2087
    %2089 = vrot.lane.b32.xlu0 %v1865, 64
    %v2090 = vpop.permute.xlu0 %2089
    %2091 = vrot.lane.b32.xlu0 %v2073, 64
    %v2092 = vpop.permute.xlu0 %2091
    %2093 = vrot.lane.b32.xlu0 %v1868, 64
    %v2094 = vpop.permute.xlu0 %2093
    %2095 = vrot.lane.b32.xlu0 %v1871, 64
    %v2096 = vpop.permute.xlu0 %2095
    %2097 = vrot.lane.b32.xlu0 %v1874, 64
    %v2098 = vpop.permute.xlu0 %2097
    %2099 = vrot.lane.b32.xlu0 %v1877, 64
    %v2100 = vpop.permute.xlu0 %2099
    %2101 = vrot.lane.b32.xlu0 %v1880, 64
    %v2102 = vpop.permute.xlu0 %2101
    %2103 = vrot.lane.b32.xlu0 %v1883, 64
    %v2104 = vpop.permute.xlu0 %2103
    %2105 = vrot.lane.b32.xlu0 %v1886, 64
    %v2106 = vpop.permute.xlu0 %2105
    %2107 = vrot.lane.b32.xlu0 %v2076, 64
    %v2108 = vpop.permute.xlu0 %2107
    %v2125 = vrot.slane %v1792, 2
    %v2126 = vrot.slane %v1808, 2
    %v2127 = vsel %vm678, %v2125, %v2126
    %v2128 = vrot.slane %v1800, 2
    %v2129 = vrot.slane %v1816, 2
    %v2130 = vsel %vm678, %v2128, %v2129
    %2131 = vrot.lane.b32.xlu0 %v1934, 80
    %v2132 = vpop.permute.xlu0 %2131
    %2133 = vrot.lane.b32.xlu0 %v1937, 80
    %v2134 = vpop.permute.xlu0 %2133
    %2135 = vrot.lane.b32.xlu0 %v1940, 80
    %v2136 = vpop.permute.xlu0 %2135
    %2137 = vrot.lane.b32.xlu0 %v1943, 80
    %v2138 = vpop.permute.xlu0 %2137
    %2139 = vrot.lane.b32.xlu0 %v1946, 80
    %v2140 = vpop.permute.xlu0 %2139
    %2141 = vrot.lane.b32.xlu0 %v1949, 80
    %v2142 = vpop.permute.xlu0 %2141
    %2143 = vrot.lane.b32.xlu0 %v1952, 80
    %v2144 = vpop.permute.xlu0 %2143
    %2145 = vrot.lane.b32.xlu0 %v2127, 80
    %v2146 = vpop.permute.xlu0 %2145
    %2147 = vrot.lane.b32.xlu0 %v1955, 80
    %v2148 = vpop.permute.xlu0 %2147
    %2149 = vrot.lane.b32.xlu0 %v1958, 80
    %v2150 = vpop.permute.xlu0 %2149
    %2151 = vrot.lane.b32.xlu0 %v1961, 80
    %v2152 = vpop.permute.xlu0 %2151
    %2153 = vrot.lane.b32.xlu0 %v1964, 80
    %v2154 = vpop.permute.xlu0 %2153
    %2155 = vrot.lane.b32.xlu0 %v1967, 80
    %v2156 = vpop.permute.xlu0 %2155
    %2157 = vrot.lane.b32.xlu0 %v1970, 80
    %v2158 = vpop.permute.xlu0 %2157
    %2159 = vrot.lane.b32.xlu0 %v1973, 80
    %v2160 = vpop.permute.xlu0 %2159
    %2161 = vrot.lane.b32.xlu0 %v2130, 80
    %v2162 = vpop.permute.xlu0 %2161
    %2179 = vrot.lane.b32.xlu0 %v1786, 96
    %v2180 = vpop.permute.xlu0 %2179
    %2181 = vrot.lane.b32.xlu0 %v1787, 96
    %v2182 = vpop.permute.xlu0 %2181
    %2183 = vrot.lane.b32.xlu0 %v1788, 96
    %v2184 = vpop.permute.xlu0 %2183
    %2185 = vrot.lane.b32.xlu0 %v1789, 96
    %v2186 = vpop.permute.xlu0 %2185
    %2187 = vrot.lane.b32.xlu0 %v1790, 96
    %v2188 = vpop.permute.xlu0 %2187
    %2189 = vrot.lane.b32.xlu0 %v1791, 96
    %v2190 = vpop.permute.xlu0 %2189
    %2191 = vrot.lane.b32.xlu0 %v1792, 96
    %v2192 = vpop.permute.xlu0 %2191
    %2193 = vrot.lane.b32.xlu0 %v523, 96
    %v2194 = vpop.permute.xlu0 %2193
    %2195 = vrot.lane.b32.xlu0 %v1794, 96
    %v2196 = vpop.permute.xlu0 %2195
    %2197 = vrot.lane.b32.xlu0 %v1795, 96
    %v2198 = vpop.permute.xlu0 %2197
    %2199 = vrot.lane.b32.xlu0 %v1796, 96
    %v2200 = vpop.permute.xlu0 %2199
    %2201 = vrot.lane.b32.xlu0 %v1797, 96
    %v2202 = vpop.permute.xlu0 %2201
    %2203 = vrot.lane.b32.xlu0 %v1798, 96
    %v2204 = vpop.permute.xlu0 %2203
    %2205 = vrot.lane.b32.xlu0 %v1799, 96
    %v2206 = vpop.permute.xlu0 %2205
    %2207 = vrot.lane.b32.xlu0 %v1800, 96
    %v2208 = vpop.permute.xlu0 %2207
    %2224 = vrot.lane.b32.xlu0 %v1850, 112
    %v2225 = vpop.permute.xlu0 %2224
    %2226 = vrot.lane.b32.xlu0 %v1853, 112
    %v2227 = vpop.permute.xlu0 %2226
    %2228 = vrot.lane.b32.xlu0 %v1856, 112
    %v2229 = vpop.permute.xlu0 %2228
    %2230 = vrot.lane.b32.xlu0 %v1859, 112
    %v2231 = vpop.permute.xlu0 %2230
    %2232 = vrot.lane.b32.xlu0 %v1862, 112
    %v2233 = vpop.permute.xlu0 %2232
    %2234 = vrot.lane.b32.xlu0 %v1865, 112
    %v2235 = vpop.permute.xlu0 %2234
    %2236 = vrot.lane.b32.xlu0 %v2073, 112
    %v2237 = vpop.permute.xlu0 %2236
    %2238 = vrot.lane.b32.xlu0 %v590, 112
    %v2239 = vpop.permute.xlu0 %2238
    %2240 = vrot.lane.b32.xlu0 %v1871, 112
    %v2241 = vpop.permute.xlu0 %2240
    %2242 = vrot.lane.b32.xlu0 %v1874, 112
    %v2243 = vpop.permute.xlu0 %2242
    %2244 = vrot.lane.b32.xlu0 %v1877, 112
    %v2245 = vpop.permute.xlu0 %2244
    %2246 = vrot.lane.b32.xlu0 %v1880, 112
    %v2247 = vpop.permute.xlu0 %2246
    %2248 = vrot.lane.b32.xlu0 %v1883, 112
    %v2249 = vpop.permute.xlu0 %2248
    %2250 = vrot.lane.b32.xlu0 %v1886, 112
    %v2251 = vpop.permute.xlu0 %2250
    %2252 = vrot.lane.b32.xlu0 %v2076, 112
    %v2253 = vpop.permute.xlu0 %2252
    %vm2269 = vcmask 130048
    %v2270 = vsel %vm2269, %v523, %v1888
    %v2271 = vsel %vm2269, %v1785, %v1890
    %v2272 = vsel %vm2269, %v1786, %v1892
    %v2273 = vsel %vm2269, %v1787, %v1894
    %v2274 = vsel %vm2269, %v1788, %v1896
    %v2275 = vsel %vm2269, %v1789, %v1898
    %v2276 = vsel %vm2269, %v1790, %v1900
    %v2277 = vsel %vm2269, %v1791, %v1902
    %v2278 = vsel %vm2269, %v1793, %v1904
    %v2279 = vsel %vm2269, %v1794, %v1906
    %v2280 = vsel %vm2269, %v1795, %v1908
    %v2281 = vsel %vm2269, %v1796, %v1910
    %v2282 = vsel %vm2269, %v1797, %v1912
    %v2283 = vsel %vm2269, %v1798, %v1914
    %v2284 = vsel %vm2269, %v1799, %v1916
    %v2285 = vsel %vm987, %v2270, %v1975
    %v2286 = vsel %vm987, %v2271, %v1977
    %v2287 = vsel %vm987, %v2272, %v1979
    %v2288 = vsel %vm987, %v2273, %v1981
    %v2289 = vsel %vm987, %v2274, %v1983
    %v2290 = vsel %vm987, %v2275, %v1985
    %v2291 = vsel %vm987, %v2276, %v1987
    %v2292 = vsel %vm987, %v2277, %v1989
    %v2293 = vsel %vm987, %v2278, %v1991
    %v2294 = vsel %vm987, %v2279, %v1993
    %v2295 = vsel %vm987, %v2280, %v1995
    %v2296 = vsel %vm987, %v2281, %v1997
    %v2297 = vsel %vm987, %v2282, %v1999
    %v2298 = vsel %vm987, %v2283, %v2001
    %v2299 = vsel %vm987, %v2284, %v2003
    %vm2300 = vcmask 392192
    %v2301 = vsel %vm2300, %v2285, %v2022
    %v2302 = vsel %vm2300, %v2286, %v2024
    %v2303 = vsel %vm2300, %v2287, %v2026
    %v2304 = vsel %vm2300, %v2288, %v2028
    %v2305 = vsel %vm2300, %v2289, %v2030
    %v2306 = vsel %vm2300, %v2290, %v2032
    %v2307 = vsel %vm2300, %v2291, %v2034
    %v2308 = vsel %vm2300, %v2292, %v2036
    %v2309 = vsel %vm2300, %v2285, %v2038
    %v2310 = vsel %vm2300, %v2293, %v2040
    %v2311 = vsel %vm2300, %v2294, %v2042
    %v2312 = vsel %vm2300, %v2295, %v2044
    %v2313 = vsel %vm2300, %v2296, %v2046
    %v2314 = vsel %vm2300, %v2297, %v2048
    %v2315 = vsel %vm2300, %v2298, %v2050
    %v2316 = vsel %vm2300, %v2299, %v2052
    %v2317 = vsel %vm1003, %v2301, %v2078
    %v2318 = vsel %vm1003, %v2302, %v2080
    %v2319 = vsel %vm1003, %v2303, %v2082
    %v2320 = vsel %vm1003, %v2304, %v2084
    %v2321 = vsel %vm1003, %v2305, %v2086
    %v2322 = vsel %vm1003, %v2306, %v2088
    %v2323 = vsel %vm1003, %v2307, %v2090
    %v2324 = vsel %vm1003, %v2308, %v2092
    %v2325 = vsel %vm1003, %v2309, %v2094
    %v2326 = vsel %vm1003, %v2310, %v2096
    %v2327 = vsel %vm1003, %v2311, %v2098
    %v2328 = vsel %vm1003, %v2312, %v2100
    %v2329 = vsel %vm1003, %v2313, %v2102
    %v2330 = vsel %vm1003, %v2314, %v2104
    %v2331 = vsel %vm1003, %v2315, %v2106
    %v2332 = vsel %vm1003, %v2316, %v2108
    %vm2333 = vcmask 654336
    %v2334 = vsel %vm2333, %v2317, %v2132
    %v2335 = vsel %vm2333, %v2318, %v2134
    %v2336 = vsel %vm2333, %v2319, %v2136
    %v2337 = vsel %vm2333, %v2320, %v2138
    %v2338 = vsel %vm2333, %v2321, %v2140
    %v2339 = vsel %vm2333, %v2322, %v2142
    %v2340 = vsel %vm2333, %v2323, %v2144
    %v2341 = vsel %vm2333, %v2324, %v2146
    %v2342 = vsel %vm2333, %v2325, %v2148
    %v2343 = vsel %vm2333, %v2326, %v2150
    %v2344 = vsel %vm2333, %v2327, %v2152
    %v2345 = vsel %vm2333, %v2328, %v2154
    %v2346 = vsel %vm2333, %v2329, %v2156
    %v2347 = vsel %vm2333, %v2330, %v2158
    %v2348 = vsel %vm2333, %v2331, %v2160
    %v2349 = vsel %vm2333, %v2332, %v2162
    %v2350 = vsel %vm1019, %v2334, %v2180
    %v2351 = vsel %vm1019, %v2335, %v2182
    %v2352 = vsel %vm1019, %v2336, %v2184
    %v2353 = vsel %vm1019, %v2337, %v2186
    %v2354 = vsel %vm1019, %v2338, %v2188
    %v2355 = vsel %vm1019, %v2339, %v2190
    %v2356 = vsel %vm1019, %v2340, %v2192
    %v2357 = vsel %vm1019, %v2341, %v2194
    %v2358 = vsel %vm1019, %v2342, %v2196
    %v2359 = vsel %vm1019, %v2343, %v2198
    %v2360 = vsel %vm1019, %v2344, %v2200
    %v2361 = vsel %vm1019, %v2345, %v2202
    %v2362 = vsel %vm1019, %v2346, %v2204
    %v2363 = vsel %vm1019, %v2347, %v2206
    %v2364 = vsel %vm1019, %v2348, %v2208
    %v2365 = vsel %vm1019, %v2349, %v2194
    %vm2366 = vcmask 916480
    %v2367 = vsel %vm2366, %v2350, %v2225
    %v2368 = vsel %vm2366, %v2351, %v2227
    %v2369 = vsel %vm2366, %v2352, %v2229
    %v2370 = vsel %vm2366, %v2353, %v2231
    %v2371 = vsel %vm2366, %v2354, %v2233
    %v2372 = vsel %vm2366, %v2355, %v2235
    %v2373 = vsel %vm2366, %v2356, %v2237
    %v2374 = vsel %vm2366, %v2357, %v2239
    %v2375 = vsel %vm2366, %v2358, %v2241
    %v2376 = vsel %vm2366, %v2359, %v2243
    %v2377 = vsel %vm2366, %v2360, %v2245
    %v2378 = vsel %vm2366, %v2361, %v2247
    %v2379 = vsel %vm2366, %v2362, %v2249
    %v2380 = vsel %vm2366, %v2363, %v2251
    %v2381 = vsel %vm2366, %v2364, %v2253
    %v2382 = vsel %vm2366, %v2365, %v2239
    %v2383 = vld [vmem:[%s6] sm:$0xff]
    %v2384 = vld [vmem:[%s6 + $0x8] sm:$0xff]
    %v2385 = vld [vmem:[%s6 + $0x10] sm:$0xff]
    %v2386 = vld [vmem:[%s6 + $0x18] sm:$0xff]
    %v2387 = vld [vmem:[%s6 + $0x20] sm:$0xff]
    %v2388 = vld [vmem:[%s6 + $0x28] sm:$0xff]
    %v2389 = vld [vmem:[%s6 + $0x30] sm:$0xff]
    %v2390 = vld [vmem:[%s6 + $0x38] sm:$0xff]
    %v2391 = vld [vmem:[%s6 + $0x40] sm:$0xff]
    %v2392 = vld [vmem:[%s6 + $0x48] sm:$0xff]
    %v2393 = vld [vmem:[%s6 + $0x50] sm:$0xff]
    %v2394 = vld [vmem:[%s6 + $0x58] sm:$0xff]
    %v2395 = vld [vmem:[%s6 + $0x60] sm:$0xff]
    %v2396 = vld [vmem:[%s6 + $0x68] sm:$0xff]
    %v2397 = vld [vmem:[%s6 + $0x70] sm:$0xff]
    %v2398 = vld [vmem:[%s6 + $0x78] sm:$0xff]
    %v2399 = vld [vmem:[%s6 + $0x80] sm:$0xff]
    %v2400 = vld [vmem:[%s6 + $0x88] sm:$0xff]
    %v2401 = vsel %vm2269, %v1937, 0
    %v2403 = vsel %vm2269, %v1940, 0
    %v2405 = vsel %vm2269, %v1943, 0
    %v2407 = vsel %vm2269, %v1946, 0
    %v2409 = vsel %vm2269, %v1949, 0
    %v2411 = vsel %vm2269, %v1952, 0
    %v2413 = vsel %vm2269, %v2127, 0
    %v2415 = vsel %vm2269, %v681, 0
    %v2417 = vsel %vm2269, %v1958, 0
    %v2419 = vsel %vm2269, %v1961, 0
    %v2421 = vsel %vm2269, %v1964, 0
    %v2423 = vsel %vm2269, %v1967, 0
    %v2425 = vsel %vm2269, %v1970, 0
    %v2427 = vsel %vm2269, %v1973, 0
    %v2429 = vsel %vm2269, %v2130, 0
    %2431 = vmatpush.msra.mxu0 %v2398
    %2432 = vmatpush.msra.mxu0 %v2397
    %2433 = vmatpush.msra.mxu0 %v2396
    %2434 = vmatpush.msra.mxu0 %v2395
    %2435 = vmatpush.msra.mxu0 %v2394
    %2436 = vmatpush.msra.mxu0 %v2393
    %2437 = vmatpush.msra.mxu0 %v2392
    %2438 = vmatpush.msra.mxu0 %v2391
    %2439 = vmatpush.msra.mxu0 %v2390
    %2440 = vmatpush.msra.mxu0 %v2389
    %2441 = vmatpush.msra.mxu0 %v2388
    %2442 = vmatpush.msra.mxu0 %v2387
    %2443 = vmatpush.msra.mxu0 %v2386
    %2444 = vmatpush.msra.mxu0 %v2385
    %2445 = vmatpush.msra.mxu0 %v2384
    %2446 = vmatpush.msra.mxu0 %v2383
    %2447 = vmatmul.f32.gmra.mxu0 %v2367
    %v2448 = vpop.f32.mrf.mxu0
    %v2449 = vadd.f32 0.0, %v2448
    %2450 = vmatmul.f32.gmra.mxu0 %v2368
    %v2451 = vpop.f32.mrf.mxu0
    %v2452 = vadd.f32 0.0, %v2451
    %2453 = vmatmul.f32.gmra.mxu0 %v2369
    %v2454 = vpop.f32.mrf.mxu0
    %v2455 = vadd.f32 0.0, %v2454
    %2456 = vmatmul.f32.gmra.mxu0 %v2370
    %v2457 = vpop.f32.mrf.mxu0
    %v2458 = vadd.f32 0.0, %v2457
    %2459 = vmatmul.f32.gmra.mxu0 %v2371
    %v2460 = vpop.f32.mrf.mxu0
    %v2461 = vadd.f32 0.0, %v2460
    %2462 = vmatmul.f32.gmra.mxu0 %v2372
    %v2463 = vpop.f32.mrf.mxu0
    %v2464 = vadd.f32 0.0, %v2463
    %2465 = vmatmul.f32.gmra.mxu0 %v2373
    %v2466 = vpop.f32.mrf.mxu0
    %v2467 = vadd.f32 0.0, %v2466
    %2468 = vmatmul.f32.gmra.mxu0 %v2374
    %v2469 = vpop.f32.mrf.mxu0
    %v2470 = vadd.f32 0.0, %v2469
    %2471 = vmatmul.f32.gmra.mxu0 %v2375
    %v2472 = vpop.f32.mrf.mxu0
    %v2473 = vadd.f32 0.0, %v2472
    %2474 = vmatmul.f32.gmra.mxu0 %v2376
    %v2475 = vpop.f32.mrf.mxu0
    %v2476 = vadd.f32 0.0, %v2475
    %2477 = vmatmul.f32.gmra.mxu0 %v2377
    %v2478 = vpop.f32.mrf.mxu0
    %v2479 = vadd.f32 0.0, %v2478
    %2480 = vmatmul.f32.gmra.mxu0 %v2378
    %v2481 = vpop.f32.mrf.mxu0
    %v2482 = vadd.f32 0.0, %v2481
    %2483 = vmatmul.f32.gmra.mxu0 %v2379
    %v2484 = vpop.f32.mrf.mxu0
    %v2485 = vadd.f32 0.0, %v2484
    %2486 = vmatmul.f32.gmra.mxu0 %v2380
    %v2487 = vpop.f32.mrf.mxu0
    %v2488 = vadd.f32 0.0, %v2487
    %2489 = vmatmul.f32.gmra.mxu0 %v2381
    %v2490 = vpop.f32.mrf.mxu0
    %v2491 = vadd.f32 0.0, %v2490
    %2492 = vmatmul.f32.gmra.mxu0 %v2382
    %v2493 = vpop.f32.mrf.mxu0
    %v2494 = vadd.f32 0.0, %v2493
    %2495 = vdwg.mxu0
    %2496 = vmatpush.msra.mxu0 0.0
    %2497 = vmatpush.msra.mxu0 0.0
    %2498 = vmatpush.msra.mxu0 0.0
    %2499 = vmatpush.msra.mxu0 0.0
    %2500 = vmatpush.msra.mxu0 0.0
    %2501 = vmatpush.msra.mxu0 0.0
    %2502 = vmatpush.msra.mxu0 0.0
    %2503 = vmatpush.msra.mxu0 0.0
    %2504 = vmatpush.msra.mxu0 0.0
    %2505 = vmatpush.msra.mxu0 0.0
    %2506 = vmatpush.msra.mxu0 0.0
    %2507 = vmatpush.msra.mxu0 0.0
    %2508 = vmatpush.msra.mxu0 0.0
    %2509 = vmatpush.msra.mxu0 0.0
    %2510 = vmatpush.msra.mxu0 %v2400
    %2511 = vmatpush.msra.mxu0 %v2399
    %2512 = vmatmul.f32.gmra.mxu0 %v2401
    %v2513 = vpop.f32.mrf.mxu0
    %v2514 = vadd.f32 %v2449, %v2513
    %2515 = vmatmul.f32.gmra.mxu0 %v2403
    %v2516 = vpop.f32.mrf.mxu0
    %v2517 = vadd.f32 %v2452, %v2516
    %2518 = vmatmul.f32.gmra.mxu0 %v2405
    %v2519 = vpop.f32.mrf.mxu0
    %v2520 = vadd.f32 %v2455, %v2519
    %2521 = vmatmul.f32.gmra.mxu0 %v2407
    %v2522 = vpop.f32.mrf.mxu0
    %v2523 = vadd.f32 %v2458, %v2522
    %2524 = vmatmul.f32.gmra.mxu0 %v2409
    %v2525 = vpop.f32.mrf.mxu0
    %v2526 = vadd.f32 %v2461, %v2525
    %2527 = vmatmul.f32.gmra.mxu0 %v2411
    %v2528 = vpop.f32.mrf.mxu0
    %v2529 = vadd.f32 %v2464, %v2528
    %2530 = vmatmul.f32.gmra.mxu0 %v2413
    %v2531 = vpop.f32.mrf.mxu0
    %v2532 = vadd.f32 %v2467, %v2531
    %2533 = vmatmul.f32.gmra.mxu0 %v2415
    %v2534 = vpop.f32.mrf.mxu0
    %v2535 = vadd.f32 %v2470, %v2534
    %2536 = vmatmul.f32.gmra.mxu0 %v2417
    %v2537 = vpop.f32.mrf.mxu0
    %v2538 = vadd.f32 %v2473, %v2537
    %2539 = vmatmul.f32.gmra.mxu0 %v2419
    %v2540 = vpop.f32.mrf.mxu0
    %v2541 = vadd.f32 %v2476, %v2540
    %2542 = vmatmul.f32.gmra.mxu0 %v2421
    %v2543 = vpop.f32.mrf.mxu0
    %v2544 = vadd.f32 %v2479, %v2543
    %2545 = vmatmul.f32.gmra.mxu0 %v2423
    %v2546 = vpop.f32.mrf.mxu0
    %v2547 = vadd.f32 %v2482, %v2546
    %2548 = vmatmul.f32.gmra.mxu0 %v2425
    %v2549 = vpop.f32.mrf.mxu0
    %v2550 = vadd.f32 %v2485, %v2549
    %2551 = vmatmul.f32.gmra.mxu0 %v2427
    %v2552 = vpop.f32.mrf.mxu0
    %v2553 = vadd.f32 %v2488, %v2552
    %2554 = vmatmul.f32.gmra.mxu0 %v2429
    %v2555 = vpop.f32.mrf.mxu0
    %v2556 = vadd.f32 %v2491, %v2555
    %2557 = vmatmul.f32.gmra.mxu0 %v2415
    %v2558 = vpop.f32.mrf.mxu0
    %v2559 = vadd.f32 %v2494, %v2558
    %2560 = vdwg.mxu0
    %v2561 = vld [vmem:[%s7] sm:$0x1]
    %v2563 = vperm.slane %v2561, 0
    %v2565 = vmul.f32 %v2514, %v2563
    %v2566 = vmul.f32 %v2517, %v2563
    %v2567 = vmul.f32 %v2520, %v2563
    %v2568 = vmul.f32 %v2523, %v2563
    %v2569 = vmul.f32 %v2526, %v2563
    %v2570 = vmul.f32 %v2529, %v2563
    %v2571 = vmul.f32 %v2532, %v2563
    %v2572 = vmul.f32 %v2535, %v2563
    %v2573 = vmul.f32 %v2538, %v2563
    %v2574 = vmul.f32 %v2541, %v2563
    %v2575 = vmul.f32 %v2544, %v2563
    %v2576 = vmul.f32 %v2547, %v2563
    %v2577 = vmul.f32 %v2550, %v2563
    %v2578 = vmul.f32 %v2553, %v2563
    %v2579 = vmul.f32 %v2556, %v2563
    %v2580 = vmul.f32 %v2559, %v2563
    %v2581 = vld [vmem:[%s8] sm:$0x1]
    %v2583 = vperm.slane %v2581, 0
    %v2585 = vadd.f32 %v2565, %v2583
    %v2586 = vadd.f32 %v2566, %v2583
    %v2587 = vadd.f32 %v2567, %v2583
    %v2588 = vadd.f32 %v2568, %v2583
    %v2589 = vadd.f32 %v2569, %v2583
    %v2590 = vadd.f32 %v2570, %v2583
    %v2591 = vadd.f32 %v2571, %v2583
    %v2592 = vadd.f32 %v2572, %v2583
    %v2593 = vadd.f32 %v2573, %v2583
    %v2594 = vadd.f32 %v2574, %v2583
    %v2595 = vadd.f32 %v2575, %v2583
    %v2596 = vadd.f32 %v2576, %v2583
    %v2597 = vadd.f32 %v2577, %v2583
    %v2598 = vadd.f32 %v2578, %v2583
    %v2599 = vadd.f32 %v2579, %v2583
    %v2600 = vadd.f32 %v2580, %v2583
    %v2601 = vmin.f32 %v2585, 20.0
    %v2602 = vmin.f32 %v2586, 20.0
    %v2603 = vmin.f32 %v2587, 20.0
    %v2604 = vmin.f32 %v2588, 20.0
    %v2605 = vmin.f32 %v2589, 20.0
    %v2606 = vmin.f32 %v2590, 20.0
    %v2607 = vmin.f32 %v2591, 20.0
    %v2608 = vmin.f32 %v2592, 20.0
    %v2609 = vmin.f32 %v2593, 20.0
    %v2610 = vmin.f32 %v2594, 20.0
    %v2611 = vmin.f32 %v2595, 20.0
    %v2612 = vmin.f32 %v2596, 20.0
    %v2613 = vmin.f32 %v2597, 20.0
    %v2614 = vmin.f32 %v2598, 20.0
    %v2615 = vmin.f32 %v2599, 20.0
    %v2616 = vmin.f32 %v2600, 20.0
    %v2617 = vmul.f32 %v2601, 1.442695
    %v2618 = vpow.pop %v2617
    %v2619 = vmul.f32 %v2602, 1.442695
    %v2620 = vpow.pop %v2619
    %v2621 = vmul.f32 %v2603, 1.442695
    %v2622 = vpow.pop %v2621
    %v2623 = vmul.f32 %v2604, 1.442695
    %v2624 = vpow.pop %v2623
    %v2625 = vmul.f32 %v2605, 1.442695
    %v2626 = vpow.pop %v2625
    %v2627 = vmul.f32 %v2606, 1.442695
    %v2628 = vpow.pop %v2627
    %v2629 = vmul.f32 %v2607, 1.442695
    %v2630 = vpow.pop %v2629
    %v2631 = vmul.f32 %v2608, 1.442695
    %v2632 = vpow.pop %v2631
    %v2633 = vmul.f32 %v2609, 1.442695
    %v2634 = vpow.pop %v2633
    %v2635 = vmul.f32 %v2610, 1.442695
    %v2636 = vpow.pop %v2635
    %v2637 = vmul.f32 %v2611, 1.442695
    %v2638 = vpow.pop %v2637
    %v2639 = vmul.f32 %v2612, 1.442695
    %v2640 = vpow.pop %v2639
    %v2641 = vmul.f32 %v2613, 1.442695
    %v2642 = vpow.pop %v2641
    %v2643 = vmul.f32 %v2614, 1.442695
    %v2644 = vpow.pop %v2643
    %v2645 = vmul.f32 %v2615, 1.442695
    %v2646 = vpow.pop %v2645
    %v2647 = vmul.f32 %v2616, 1.442695
    %v2648 = vpow.pop %v2647
    %v2649 = vadd.f32 %v2618, 2.0
    %v2650 = vadd.f32 %v2620, 2.0
    %v2651 = vadd.f32 %v2622, 2.0
    %v2652 = vadd.f32 %v2624, 2.0
    %v2653 = vadd.f32 %v2626, 2.0
    %v2654 = vadd.f32 %v2628, 2.0
    %v2655 = vadd.f32 %v2630, 2.0
    %v2656 = vadd.f32 %v2632, 2.0
    %v2657 = vadd.f32 %v2634, 2.0
    %v2658 = vadd.f32 %v2636, 2.0
    %v2659 = vadd.f32 %v2638, 2.0
    %v2660 = vadd.f32 %v2640, 2.0
    %v2661 = vadd.f32 %v2642, 2.0
    %v2662 = vadd.f32 %v2644, 2.0
    %v2663 = vadd.f32 %v2646, 2.0
    %v2664 = vadd.f32 %v2648, 2.0
    %v2665 = vmul.f32 %v2618, %v2649
    %v2666 = vmul.f32 %v2620, %v2650
    %v2667 = vmul.f32 %v2622, %v2651
    %v2668 = vmul.f32 %v2624, %v2652
    %v2669 = vmul.f32 %v2626, %v2653
    %v2670 = vmul.f32 %v2628, %v2654
    %v2671 = vmul.f32 %v2630, %v2655
    %v2672 = vmul.f32 %v2632, %v2656
    %v2673 = vmul.f32 %v2634, %v2657
    %v2674 = vmul.f32 %v2636, %v2658
    %v2675 = vmul.f32 %v2638, %v2659
    %v2676 = vmul.f32 %v2640, %v2660
    %v2677 = vmul.f32 %v2642, %v2661
    %v2678 = vmul.f32 %v2644, %v2662
    %v2679 = vmul.f32 %v2646, %v2663
    %v2680 = vmul.f32 %v2648, %v2664
    %v2681 = vadd.f32 %v2665, 2.0
    %v2682 = vadd.f32 %v2666, 2.0
    %v2683 = vadd.f32 %v2667, 2.0
    %v2684 = vadd.f32 %v2668, 2.0
    %v2685 = vadd.f32 %v2669, 2.0
    %v2686 = vadd.f32 %v2670, 2.0
    %v2687 = vadd.f32 %v2671, 2.0
    %v2688 = vadd.f32 %v2672, 2.0
    %v2689 = vadd.f32 %v2673, 2.0
    %v2690 = vadd.f32 %v2674, 2.0
    %v2691 = vadd.f32 %v2675, 2.0
    %v2692 = vadd.f32 %v2676, 2.0
    %v2693 = vadd.f32 %v2677, 2.0
    %v2694 = vadd.f32 %v2678, 2.0
    %v2695 = vadd.f32 %v2679, 2.0
    %v2696 = vadd.f32 %v2680, 2.0
    %v2697 = vrcp.pop %v2681
    %v2698 = vmul.f32 %v2681, %v2697
    %v2699 = vsub.f32 1.0, %v2698
    %v2700 = vmul.f32 %v2697, %v2699
    %v2701 = vadd.f32 %v2697, %v2700
    %vm2702 = vweird.f32 %v2681
    %vm2703 = vweird.f32 %v2697
    %vm2704 = vmor %vm2702, %vm2703
    %v2705 = vsel %vm2704, %v2697, %v2701
    %v2706 = vand.u32 2147483647, %v2681
    %vm2707 = vcmp.eq.f32.partialorder %v2706, 8.507059e+37
    %v2708 = vand.u32 %v2681, 2147483648
    %v2709 = vor.u32 1.1754944e-38, %v2708
    %v2710 = vsel %vm2707, %v2709, %v2705
    %v2711 = vmul.f32 %v2665, %v2710
    %v2712 = vrcp.pop %v2682
    %v2713 = vmul.f32 %v2682, %v2712
    %v2714 = vsub.f32 1.0, %v2713
    %v2715 = vmul.f32 %v2712, %v2714
    %v2716 = vadd.f32 %v2712, %v2715
    %vm2717 = vweird.f32 %v2682
    %vm2718 = vweird.f32 %v2712
    %vm2719 = vmor %vm2717, %vm2718
    %v2720 = vsel %vm2719, %v2712, %v2716
    %v2721 = vand.u32 2147483647, %v2682
    %vm2722 = vcmp.eq.f32.partialorder %v2721, 8.507059e+37
    %v2723 = vand.u32 %v2682, 2147483648
    %v2724 = vor.u32 1.1754944e-38, %v2723
    %v2725 = vsel %vm2722, %v2724, %v2720
    %v2726 = vmul.f32 %v2666, %v2725
    %v2727 = vrcp.pop %v2683
    %v2728 = vmul.f32 %v2683, %v2727
    %v2729 = vsub.f32 1.0, %v2728
    %v2730 = vmul.f32 %v2727, %v2729
    %v2731 = vadd.f32 %v2727, %v2730
    %vm2732 = vweird.f32 %v2683
    %vm2733 = vweird.f32 %v2727
    %vm2734 = vmor %vm2732, %vm2733
    %v2735 = vsel %vm2734, %v2727, %v2731
    %v2736 = vand.u32 2147483647, %v2683
    %vm2737 = vcmp.eq.f32.partialorder %v2736, 8.507059e+37
    %v2738 = vand.u32 %v2683, 2147483648
    %v2739 = vor.u32 1.1754944e-38, %v2738
    %v2740 = vsel %vm2737, %v2739, %v2735
    %v2741 = vmul.f32 %v2667, %v2740
    %v2742 = vrcp.pop %v2684
    %v2743 = vmul.f32 %v2684, %v2742
    %v2744 = vsub.f32 1.0, %v2743
    %v2745 = vmul.f32 %v2742, %v2744
    %v2746 = vadd.f32 %v2742, %v2745
    %vm2747 = vweird.f32 %v2684
    %vm2748 = vweird.f32 %v2742
    %vm2749 = vmor %vm2747, %vm2748
    %v2750 = vsel %vm2749, %v2742, %v2746
    %v2751 = vand.u32 2147483647, %v2684
    %vm2752 = vcmp.eq.f32.partialorder %v2751, 8.507059e+37
    %v2753 = vand.u32 %v2684, 2147483648
    %v2754 = vor.u32 1.1754944e-38, %v2753
    %v2755 = vsel %vm2752, %v2754, %v2750
    %v2756 = vmul.f32 %v2668, %v2755
    %v2757 = vrcp.pop %v2685
    %v2758 = vmul.f32 %v2685, %v2757
    %v2759 = vsub.f32 1.0, %v2758
    %v2760 = vmul.f32 %v2757, %v2759
    %v2761 = vadd.f32 %v2757, %v2760
    %vm2762 = vweird.f32 %v2685
    %vm2763 = vweird.f32 %v2757
    %vm2764 = vmor %vm2762, %vm2763
    %v2765 = vsel %vm2764, %v2757, %v2761
    %v2766 = vand.u32 2147483647, %v2685
    %vm2767 = vcmp.eq.f32.partialorder %v2766, 8.507059e+37
    %v2768 = vand.u32 %v2685, 2147483648
    %v2769 = vor.u32 1.1754944e-38, %v2768
    %v2770 = vsel %vm2767, %v2769, %v2765
    %v2771 = vmul.f32 %v2669, %v2770
    %v2772 = vrcp.pop %v2686
    %v2773 = vmul.f32 %v2686, %v2772
    %v2774 = vsub.f32 1.0, %v2773
    %v2775 = vmul.f32 %v2772, %v2774
    %v2776 = vadd.f32 %v2772, %v2775
    %vm2777 = vweird.f32 %v2686
    %vm2778 = vweird.f32 %v2772
    %vm2779 = vmor %vm2777, %vm2778
    %v2780 = vsel %vm2779, %v2772, %v2776
    %v2781 = vand.u32 2147483647, %v2686
    %vm2782 = vcmp.eq.f32.partialorder %v2781, 8.507059e+37
    %v2783 = vand.u32 %v2686, 2147483648
    %v2784 = vor.u32 1.1754944e-38, %v2783
    %v2785 = vsel %vm2782, %v2784, %v2780
    %v2786 = vmul.f32 %v2670, %v2785
    %v2787 = vrcp.pop %v2687
    %v2788 = vmul.f32 %v2687, %v2787
    %v2789 = vsub.f32 1.0, %v2788
    %v2790 = vmul.f32 %v2787, %v2789
    %v2791 = vadd.f32 %v2787, %v2790
    %vm2792 = vweird.f32 %v2687
    %vm2793 = vweird.f32 %v2787
    %vm2794 = vmor %vm2792, %vm2793
    %v2795 = vsel %vm2794, %v2787, %v2791
    %v2796 = vand.u32 2147483647, %v2687
    %vm2797 = vcmp.eq.f32.partialorder %v2796, 8.507059e+37
    %v2798 = vand.u32 %v2687, 2147483648
    %v2799 = vor.u32 1.1754944e-38, %v2798
    %v2800 = vsel %vm2797, %v2799, %v2795
    %v2801 = vmul.f32 %v2671, %v2800
    %v2802 = vrcp.pop %v2688
    %v2803 = vmul.f32 %v2688, %v2802
    %v2804 = vsub.f32 1.0, %v2803
    %v2805 = vmul.f32 %v2802, %v2804
    %v2806 = vadd.f32 %v2802, %v2805
    %vm2807 = vweird.f32 %v2688
    %vm2808 = vweird.f32 %v2802
    %vm2809 = vmor %vm2807, %vm2808
    %v2810 = vsel %vm2809, %v2802, %v2806
    %v2811 = vand.u32 2147483647, %v2688
    %vm2812 = vcmp.eq.f32.partialorder %v2811, 8.507059e+37
    %v2813 = vand.u32 %v2688, 2147483648
    %v2814 = vor.u32 1.1754944e-38, %v2813
    %v2815 = vsel %vm2812, %v2814, %v2810
    %v2816 = vmul.f32 %v2672, %v2815
    %v2817 = vrcp.pop %v2689
    %v2818 = vmul.f32 %v2689, %v2817
    %v2819 = vsub.f32 1.0, %v2818
    %v2820 = vmul.f32 %v2817, %v2819
    %v2821 = vadd.f32 %v2817, %v2820
    %vm2822 = vweird.f32 %v2689
    %vm2823 = vweird.f32 %v2817
    %vm2824 = vmor %vm2822, %vm2823
    %v2825 = vsel %vm2824, %v2817, %v2821
    %v2826 = vand.u32 2147483647, %v2689
    %vm2827 = vcmp.eq.f32.partialorder %v2826, 8.507059e+37
    %v2828 = vand.u32 %v2689, 2147483648
    %v2829 = vor.u32 1.1754944e-38, %v2828
    %v2830 = vsel %vm2827, %v2829, %v2825
    %v2831 = vmul.f32 %v2673, %v2830
    %v2832 = vrcp.pop %v2690
    %v2833 = vmul.f32 %v2690, %v2832
    %v2834 = vsub.f32 1.0, %v2833
    %v2835 = vmul.f32 %v2832, %v2834
    %v2836 = vadd.f32 %v2832, %v2835
    %vm2837 = vweird.f32 %v2690
    %vm2838 = vweird.f32 %v2832
    %vm2839 = vmor %vm2837, %vm2838
    %v2840 = vsel %vm2839, %v2832, %v2836
    %v2841 = vand.u32 2147483647, %v2690
    %vm2842 = vcmp.eq.f32.partialorder %v2841, 8.507059e+37
    %v2843 = vand.u32 %v2690, 2147483648
    %v2844 = vor.u32 1.1754944e-38, %v2843
    %v2845 = vsel %vm2842, %v2844, %v2840
    %v2846 = vmul.f32 %v2674, %v2845
    %v2847 = vrcp.pop %v2691
    %v2848 = vmul.f32 %v2691, %v2847
    %v2849 = vsub.f32 1.0, %v2848
    %v2850 = vmul.f32 %v2847, %v2849
    %v2851 = vadd.f32 %v2847, %v2850
    %vm2852 = vweird.f32 %v2691
    %vm2853 = vweird.f32 %v2847
    %vm2854 = vmor %vm2852, %vm2853
    %v2855 = vsel %vm2854, %v2847, %v2851
    %v2856 = vand.u32 2147483647, %v2691
    %vm2857 = vcmp.eq.f32.partialorder %v2856, 8.507059e+37
    %v2858 = vand.u32 %v2691, 2147483648
    %v2859 = vor.u32 1.1754944e-38, %v2858
    %v2860 = vsel %vm2857, %v2859, %v2855
    %v2861 = vmul.f32 %v2675, %v2860
    %v2862 = vrcp.pop %v2692
    %v2863 = vmul.f32 %v2692, %v2862
    %v2864 = vsub.f32 1.0, %v2863
    %v2865 = vmul.f32 %v2862, %v2864
    %v2866 = vadd.f32 %v2862, %v2865
    %vm2867 = vweird.f32 %v2692
    %vm2868 = vweird.f32 %v2862
    %vm2869 = vmor %vm2867, %vm2868
    %v2870 = vsel %vm2869, %v2862, %v2866
    %v2871 = vand.u32 2147483647, %v2692
    %vm2872 = vcmp.eq.f32.partialorder %v2871, 8.507059e+37
    %v2873 = vand.u32 %v2692, 2147483648
    %v2874 = vor.u32 1.1754944e-38, %v2873
    %v2875 = vsel %vm2872, %v2874, %v2870
    %v2876 = vmul.f32 %v2676, %v2875
    %v2877 = vrcp.pop %v2693
    %v2878 = vmul.f32 %v2693, %v2877
    %v2879 = vsub.f32 1.0, %v2878
    %v2880 = vmul.f32 %v2877, %v2879
    %v2881 = vadd.f32 %v2877, %v2880
    %vm2882 = vweird.f32 %v2693
    %vm2883 = vweird.f32 %v2877
    %vm2884 = vmor %vm2882, %vm2883
    %v2885 = vsel %vm2884, %v2877, %v2881
    %v2886 = vand.u32 2147483647, %v2693
    %vm2887 = vcmp.eq.f32.partialorder %v2886, 8.507059e+37
    %v2888 = vand.u32 %v2693, 2147483648
    %v2889 = vor.u32 1.1754944e-38, %v2888
    %v2890 = vsel %vm2887, %v2889, %v2885
    %v2891 = vmul.f32 %v2677, %v2890
    %v2892 = vrcp.pop %v2694
    %v2893 = vmul.f32 %v2694, %v2892
    %v2894 = vsub.f32 1.0, %v2893
    %v2895 = vmul.f32 %v2892, %v2894
    %v2896 = vadd.f32 %v2892, %v2895
    %vm2897 = vweird.f32 %v2694
    %vm2898 = vweird.f32 %v2892
    %vm2899 = vmor %vm2897, %vm2898
    %v2900 = vsel %vm2899, %v2892, %v2896
    %v2901 = vand.u32 2147483647, %v2694
    %vm2902 = vcmp.eq.f32.partialorder %v2901, 8.507059e+37
    %v2903 = vand.u32 %v2694, 2147483648
    %v2904 = vor.u32 1.1754944e-38, %v2903
    %v2905 = vsel %vm2902, %v2904, %v2900
    %v2906 = vmul.f32 %v2678, %v2905
    %v2907 = vrcp.pop %v2695
    %v2908 = vmul.f32 %v2695, %v2907
    %v2909 = vsub.f32 1.0, %v2908
    %v2910 = vmul.f32 %v2907, %v2909
    %v2911 = vadd.f32 %v2907, %v2910
    %vm2912 = vweird.f32 %v2695
    %vm2913 = vweird.f32 %v2907
    %vm2914 = vmor %vm2912, %vm2913
    %v2915 = vsel %vm2914, %v2907, %v2911
    %v2916 = vand.u32 2147483647, %v2695
    %vm2917 = vcmp.eq.f32.partialorder %v2916, 8.507059e+37
    %v2918 = vand.u32 %v2695, 2147483648
    %v2919 = vor.u32 1.1754944e-38, %v2918
    %v2920 = vsel %vm2917, %v2919, %v2915
    %v2921 = vmul.f32 %v2679, %v2920
    %v2922 = vrcp.pop %v2696
    %v2923 = vmul.f32 %v2696, %v2922
    %v2924 = vsub.f32 1.0, %v2923
    %v2925 = vmul.f32 %v2922, %v2924
    %v2926 = vadd.f32 %v2922, %v2925
    %vm2927 = vweird.f32 %v2696
    %vm2928 = vweird.f32 %v2922
    %vm2929 = vmor %vm2927, %vm2928
    %v2930 = vsel %vm2929, %v2922, %v2926
    %v2931 = vand.u32 2147483647, %v2696
    %vm2932 = vcmp.eq.f32.partialorder %v2931, 8.507059e+37
    %v2933 = vand.u32 %v2696, 2147483648
    %v2934 = vor.u32 1.1754944e-38, %v2933
    %v2935 = vsel %vm2932, %v2934, %v2930
    %v2936 = vmul.f32 %v2680, %v2935
    %v2937 = vmul.f32 %v2585, %v2711
    %v2938 = vmul.f32 %v2586, %v2726
    %v2939 = vmul.f32 %v2587, %v2741
    %v2940 = vmul.f32 %v2588, %v2756
    %v2941 = vmul.f32 %v2589, %v2771
    %v2942 = vmul.f32 %v2590, %v2786
    %v2943 = vmul.f32 %v2591, %v2801
    %v2944 = vmul.f32 %v2592, %v2816
    %v2945 = vmul.f32 %v2593, %v2831
    %v2946 = vmul.f32 %v2594, %v2846
    %v2947 = vmul.f32 %v2595, %v2861
    %v2948 = vmul.f32 %v2596, %v2876
    %v2949 = vmul.f32 %v2597, %v2891
    %v2950 = vmul.f32 %v2598, %v2906
    %v2951 = vmul.f32 %v2599, %v2921
    %v2952 = vmul.f32 %v2600, %v2936
    %v2969 = vrot.slane %v2937, 7
    %v2970 = vrot.slane %v2938, 7
    %v2971 = vrot.slane %v2939, 7
    %v2972 = vrot.slane %v2940, 7
    %v2973 = vrot.slane %v2941, 7
    %v2974 = vrot.slane %v2942, 7
    %v2975 = vrot.slane %v2943, 7
    %v2976 = vrot.slane %v2944, 7
    %v2977 = vrot.slane %v2945, 7
    %v2978 = vrot.slane %v2946, 7
    %v2979 = vrot.slane %v2947, 7
    %v2980 = vrot.slane %v2948, 7
    %v2981 = vrot.slane %v2949, 7
    %v2982 = vrot.slane %v2950, 7
    %v2983 = vrot.slane %v2951, 7
    %v2984 = vrot.slane %v2952, 7
    %v3001 = vsel %vm522, 0.0, %v2969
    %v3002 = vsel %vm522, 0.0, %v2970
    %v3003 = vsel %vm522, 0.0, %v2971
    %v3004 = vsel %vm522, 0.0, %v2972
    %v3005 = vsel %vm522, 0.0, %v2973
    %v3006 = vsel %vm522, 0.0, %v2974
    %v3007 = vsel %vm522, 0.0, %v2975
    %v3008 = vsel %vm522, 0.0, %v2976
    %v3009 = vsel %vm522, 0.0, %v2977
    %v3010 = vsel %vm522, 0.0, %v2978
    %v3011 = vsel %vm522, 0.0, %v2979
    %v3012 = vsel %vm522, 0.0, %v2980
    %v3013 = vsel %vm522, 0.0, %v2981
    %v3014 = vsel %vm522, 0.0, %v2982
    %v3015 = vsel %vm522, 0.0, %v2983
    %v3016 = vsel %vm522, 0.0, %v2984
    %v3017 = vsel %vm522, %v2969, 0.0
    %v3018 = vsel %vm522, %v2970, 0.0
    %v3019 = vsel %vm522, %v2971, 0.0
    %v3020 = vsel %vm522, %v2972, 0.0
    %v3021 = vsel %vm522, %v2973, 0.0
    %v3022 = vsel %vm522, %v2974, 0.0
    %v3023 = vsel %vm522, %v2975, 0.0
    %v3024 = vsel %vm522, %v2976, 0.0
    %v3025 = vsel %vm522, %v2977, 0.0
    %v3026 = vsel %vm522, %v2978, 0.0
    %v3027 = vsel %vm522, %v2979, 0.0
    %v3028 = vsel %vm522, %v2980, 0.0
    %v3029 = vsel %vm522, %v2981, 0.0
    %v3030 = vsel %vm522, %v2982, 0.0
    %v3031 = vsel %vm522, %v2983, 0.0
    %v3032 = vsel %vm522, %v2984, 0.0
    %v3061 = vrot.slane %v3001, 1
    %v3062 = vrot.slane %v3017, 1
    %v3063 = vsel %vm587, %v3061, %v3062
    %v3064 = vrot.slane %v3002, 1
    %v3065 = vrot.slane %v3018, 1
    %v3066 = vsel %vm587, %v3064, %v3065
    %v3067 = vrot.slane %v3003, 1
    %v3068 = vrot.slane %v3019, 1
    %v3069 = vsel %vm587, %v3067, %v3068
    %v3070 = vrot.slane %v3004, 1
    %v3071 = vrot.slane %v3020, 1
    %v3072 = vsel %vm587, %v3070, %v3071
    %v3073 = vrot.slane %v3005, 1
    %v3074 = vrot.slane %v3021, 1
    %v3075 = vsel %vm587, %v3073, %v3074
    %v3076 = vrot.slane %v3006, 1
    %v3077 = vrot.slane %v3022, 1
    %v3078 = vsel %vm587, %v3076, %v3077
    %v3079 = vrot.slane %v3007, 1
    %v3080 = vrot.slane %v3023, 1
    %v3081 = vsel %vm587, %v3079, %v3080
    %v3082 = vrot.slane %v3009, 1
    %v3083 = vrot.slane %v3025, 1
    %v3084 = vsel %vm587, %v3082, %v3083
    %v3085 = vrot.slane %v3010, 1
    %v3086 = vrot.slane %v3026, 1
    %v3087 = vsel %vm587, %v3085, %v3086
    %v3088 = vrot.slane %v3011, 1
    %v3089 = vrot.slane %v3027, 1
    %v3090 = vsel %vm587, %v3088, %v3089
    %v3091 = vrot.slane %v3012, 1
    %v3092 = vrot.slane %v3028, 1
    %v3093 = vsel %vm587, %v3091, %v3092
    %v3094 = vrot.slane %v3013, 1
    %v3095 = vrot.slane %v3029, 1
    %v3096 = vsel %vm587, %v3094, %v3095
    %v3097 = vrot.slane %v3014, 1
    %v3098 = vrot.slane %v3030, 1
    %v3099 = vsel %vm587, %v3097, %v3098
    %v3100 = vrot.slane %v3015, 1
    %v3101 = vrot.slane %v3031, 1
    %v3102 = vsel %vm587, %v3100, %v3101
    %3103 = vrot.lane.b32.xlu0 %v3063, 16
    %v3104 = vpop.permute.xlu0 %3103
    %3105 = vrot.lane.b32.xlu0 %v3066, 16
    %v3106 = vpop.permute.xlu0 %3105
    %3107 = vrot.lane.b32.xlu0 %v3069, 16
    %v3108 = vpop.permute.xlu0 %3107
    %3109 = vrot.lane.b32.xlu0 %v3072, 16
    %v3110 = vpop.permute.xlu0 %3109
    %3111 = vrot.lane.b32.xlu0 %v3075, 16
    %v3112 = vpop.permute.xlu0 %3111
    %3113 = vrot.lane.b32.xlu0 %v3078, 16
    %v3114 = vpop.permute.xlu0 %3113
    %3115 = vrot.lane.b32.xlu0 %v3081, 16
    %v3116 = vpop.permute.xlu0 %3115
    %3117 = vrot.lane.b32.xlu0 %v3084, 16
    %v3118 = vpop.permute.xlu0 %3117
    %3119 = vrot.lane.b32.xlu0 %v3087, 16
    %v3120 = vpop.permute.xlu0 %3119
    %3121 = vrot.lane.b32.xlu0 %v3090, 16
    %v3122 = vpop.permute.xlu0 %3121
    %3123 = vrot.lane.b32.xlu0 %v3093, 16
    %v3124 = vpop.permute.xlu0 %3123
    %3125 = vrot.lane.b32.xlu0 %v3096, 16
    %v3126 = vpop.permute.xlu0 %3125
    %3127 = vrot.lane.b32.xlu0 %v3099, 16
    %v3128 = vpop.permute.xlu0 %3127
    %3129 = vrot.lane.b32.xlu0 %v3102, 16
    %v3130 = vpop.permute.xlu0 %3129
    %v3145 = vrot.slane %v3001, 2
    %v3146 = vrot.slane %v3017, 2
    %v3147 = vsel %vm678, %v3145, %v3146
    %v3148 = vrot.slane %v3002, 2
    %v3149 = vrot.slane %v3018, 2
    %v3150 = vsel %vm678, %v3148, %v3149
    %v3151 = vrot.slane %v3003, 2
    %v3152 = vrot.slane %v3019, 2
    %v3153 = vsel %vm678, %v3151, %v3152
    %v3154 = vrot.slane %v3004, 2
    %v3155 = vrot.slane %v3020, 2
    %v3156 = vsel %vm678, %v3154, %v3155
    %v3157 = vrot.slane %v3005, 2
    %v3158 = vrot.slane %v3021, 2
    %v3159 = vsel %vm678, %v3157, %v3158
    %v3160 = vrot.slane %v3006, 2
    %v3161 = vrot.slane %v3022, 2
    %v3162 = vsel %vm678, %v3160, %v3161
    %v3163 = vrot.slane %v3007, 2
    %v3164 = vrot.slane %v3023, 2
    %v3165 = vsel %vm678, %v3163, %v3164
    %v3166 = vrot.slane %v3009, 2
    %v3167 = vrot.slane %v3025, 2
    %v3168 = vsel %vm678, %v3166, %v3167
    %v3169 = vrot.slane %v3010, 2
    %v3170 = vrot.slane %v3026, 2
    %v3171 = vsel %vm678, %v3169, %v3170
    %v3172 = vrot.slane %v3011, 2
    %v3173 = vrot.slane %v3027, 2
    %v3174 = vsel %vm678, %v3172, %v3173
    %v3175 = vrot.slane %v3012, 2
    %v3176 = vrot.slane %v3028, 2
    %v3177 = vsel %vm678, %v3175, %v3176
    %v3178 = vrot.slane %v3013, 2
    %v3179 = vrot.slane %v3029, 2
    %v3180 = vsel %vm678, %v3178, %v3179
    %v3181 = vrot.slane %v3014, 2
    %v3182 = vrot.slane %v3030, 2
    %v3183 = vsel %vm678, %v3181, %v3182
    %v3184 = vrot.slane %v3015, 2
    %v3185 = vrot.slane %v3031, 2
    %v3186 = vsel %vm678, %v3184, %v3185
    %3187 = vrot.lane.b32.xlu0 %v3147, 32
    %v3188 = vpop.permute.xlu0 %3187
    %3189 = vrot.lane.b32.xlu0 %v3150, 32
    %v3190 = vpop.permute.xlu0 %3189
    %3191 = vrot.lane.b32.xlu0 %v3153, 32
    %v3192 = vpop.permute.xlu0 %3191
    %3193 = vrot.lane.b32.xlu0 %v3156, 32
    %v3194 = vpop.permute.xlu0 %3193
    %3195 = vrot.lane.b32.xlu0 %v3159, 32
    %v3196 = vpop.permute.xlu0 %3195
    %3197 = vrot.lane.b32.xlu0 %v3162, 32
    %v3198 = vpop.permute.xlu0 %3197
    %3199 = vrot.lane.b32.xlu0 %v3165, 32
    %v3200 = vpop.permute.xlu0 %3199
    %3201 = vrot.lane.b32.xlu0 %v3168, 32
    %v3202 = vpop.permute.xlu0 %3201
    %3203 = vrot.lane.b32.xlu0 %v3171, 32
    %v3204 = vpop.permute.xlu0 %3203
    %3205 = vrot.lane.b32.xlu0 %v3174, 32
    %v3206 = vpop.permute.xlu0 %3205
    %3207 = vrot.lane.b32.xlu0 %v3177, 32
    %v3208 = vpop.permute.xlu0 %3207
    %3209 = vrot.lane.b32.xlu0 %v3180, 32
    %v3210 = vpop.permute.xlu0 %3209
    %3211 = vrot.lane.b32.xlu0 %v3183, 32
    %v3212 = vpop.permute.xlu0 %3211
    %3213 = vrot.lane.b32.xlu0 %v3186, 32
    %v3214 = vpop.permute.xlu0 %3213
    %3231 = vrot.lane.b32.xlu0 %v3001, 48
    %v3232 = vpop.permute.xlu0 %3231
    %3233 = vrot.lane.b32.xlu0 %v3002, 48
    %v3234 = vpop.permute.xlu0 %3233
    %3235 = vrot.lane.b32.xlu0 %v3003, 48
    %v3236 = vpop.permute.xlu0 %3235
    %3237 = vrot.lane.b32.xlu0 %v3004, 48
    %v3238 = vpop.permute.xlu0 %3237
    %3239 = vrot.lane.b32.xlu0 %v3005, 48
    %v3240 = vpop.permute.xlu0 %3239
    %3241 = vrot.lane.b32.xlu0 %v3006, 48
    %v3242 = vpop.permute.xlu0 %3241
    %3243 = vrot.lane.b32.xlu0 %v3007, 48
    %v3244 = vpop.permute.xlu0 %3243
    %3245 = vrot.lane.b32.xlu0 %v3008, 48
    %v3246 = vpop.permute.xlu0 %3245
    %3247 = vrot.lane.b32.xlu0 %v3009, 48
    %v3248 = vpop.permute.xlu0 %3247
    %3249 = vrot.lane.b32.xlu0 %v3010, 48
    %v3250 = vpop.permute.xlu0 %3249
    %3251 = vrot.lane.b32.xlu0 %v3011, 48
    %v3252 = vpop.permute.xlu0 %3251
    %3253 = vrot.lane.b32.xlu0 %v3012, 48
    %v3254 = vpop.permute.xlu0 %3253
    %3255 = vrot.lane.b32.xlu0 %v3013, 48
    %v3256 = vpop.permute.xlu0 %3255
    %3257 = vrot.lane.b32.xlu0 %v3014, 48
    %v3258 = vpop.permute.xlu0 %3257
    %3259 = vrot.lane.b32.xlu0 %v3015, 48
    %v3260 = vpop.permute.xlu0 %3259
    %3261 = vrot.lane.b32.xlu0 %v3016, 48
    %v3262 = vpop.permute.xlu0 %3261
    %v3281 = vrot.slane %v3008, 1
    %v3282 = vrot.slane %v3024, 1
    %v3283 = vsel %vm587, %v3281, %v3282
    %v3284 = vrot.slane %v3016, 1
    %v3285 = vrot.slane %v3032, 1
    %v3286 = vsel %vm587, %v3284, %v3285
    %3287 = vrot.lane.b32.xlu0 %v3063, 64
    %v3288 = vpop.permute.xlu0 %3287
    %3289 = vrot.lane.b32.xlu0 %v3066, 64
    %v3290 = vpop.permute.xlu0 %3289
    %3291 = vrot.lane.b32.xlu0 %v3069, 64
    %v3292 = vpop.permute.xlu0 %3291
    %3293 = vrot.lane.b32.xlu0 %v3072, 64
    %v3294 = vpop.permute.xlu0 %3293
    %3295 = vrot.lane.b32.xlu0 %v3075, 64
    %v3296 = vpop.permute.xlu0 %3295
    %3297 = vrot.lane.b32.xlu0 %v3078, 64
    %v3298 = vpop.permute.xlu0 %3297
    %3299 = vrot.lane.b32.xlu0 %v3081, 64
    %v3300 = vpop.permute.xlu0 %3299
    %3301 = vrot.lane.b32.xlu0 %v3283, 64
    %v3302 = vpop.permute.xlu0 %3301
    %3303 = vrot.lane.b32.xlu0 %v3084, 64
    %v3304 = vpop.permute.xlu0 %3303
    %3305 = vrot.lane.b32.xlu0 %v3087, 64
    %v3306 = vpop.permute.xlu0 %3305
    %3307 = vrot.lane.b32.xlu0 %v3090, 64
    %v3308 = vpop.permute.xlu0 %3307
    %3309 = vrot.lane.b32.xlu0 %v3093, 64
    %v3310 = vpop.permute.xlu0 %3309
    %3311 = vrot.lane.b32.xlu0 %v3096, 64
    %v3312 = vpop.permute.xlu0 %3311
    %3313 = vrot.lane.b32.xlu0 %v3099, 64
    %v3314 = vpop.permute.xlu0 %3313
    %3315 = vrot.lane.b32.xlu0 %v3102, 64
    %v3316 = vpop.permute.xlu0 %3315
    %3317 = vrot.lane.b32.xlu0 %v3286, 64
    %v3318 = vpop.permute.xlu0 %3317
    %v3335 = vrot.slane %v3008, 2
    %v3336 = vrot.slane %v3024, 2
    %v3337 = vsel %vm678, %v3335, %v3336
    %v3338 = vrot.slane %v3016, 2
    %v3339 = vrot.slane %v3032, 2
    %v3340 = vsel %vm678, %v3338, %v3339
    %3341 = vrot.lane.b32.xlu0 %v3147, 80
    %v3342 = vpop.permute.xlu0 %3341
    %3343 = vrot.lane.b32.xlu0 %v3150, 80
    %v3344 = vpop.permute.xlu0 %3343
    %3345 = vrot.lane.b32.xlu0 %v3153, 80
    %v3346 = vpop.permute.xlu0 %3345
    %3347 = vrot.lane.b32.xlu0 %v3156, 80
    %v3348 = vpop.permute.xlu0 %3347
    %3349 = vrot.lane.b32.xlu0 %v3159, 80
    %v3350 = vpop.permute.xlu0 %3349
    %3351 = vrot.lane.b32.xlu0 %v3162, 80
    %v3352 = vpop.permute.xlu0 %3351
    %3353 = vrot.lane.b32.xlu0 %v3165, 80
    %v3354 = vpop.permute.xlu0 %3353
    %3355 = vrot.lane.b32.xlu0 %v3337, 80
    %v3356 = vpop.permute.xlu0 %3355
    %3357 = vrot.lane.b32.xlu0 %v3168, 80
    %v3358 = vpop.permute.xlu0 %3357
    %3359 = vrot.lane.b32.xlu0 %v3171, 80
    %v3360 = vpop.permute.xlu0 %3359
    %3361 = vrot.lane.b32.xlu0 %v3174, 80
    %v3362 = vpop.permute.xlu0 %3361
    %3363 = vrot.lane.b32.xlu0 %v3177, 80
    %v3364 = vpop.permute.xlu0 %3363
    %3365 = vrot.lane.b32.xlu0 %v3180, 80
    %v3366 = vpop.permute.xlu0 %3365
    %3367 = vrot.lane.b32.xlu0 %v3183, 80
    %v3368 = vpop.permute.xlu0 %3367
    %3369 = vrot.lane.b32.xlu0 %v3186, 80
    %v3370 = vpop.permute.xlu0 %3369
    %3371 = vrot.lane.b32.xlu0 %v3340, 80
    %v3372 = vpop.permute.xlu0 %3371
    %3389 = vrot.lane.b32.xlu0 %v3002, 96
    %v3390 = vpop.permute.xlu0 %3389
    %3391 = vrot.lane.b32.xlu0 %v3003, 96
    %v3392 = vpop.permute.xlu0 %3391
    %3393 = vrot.lane.b32.xlu0 %v3004, 96
    %v3394 = vpop.permute.xlu0 %3393
    %3395 = vrot.lane.b32.xlu0 %v3005, 96
    %v3396 = vpop.permute.xlu0 %3395
    %3397 = vrot.lane.b32.xlu0 %v3006, 96
    %v3398 = vpop.permute.xlu0 %3397
    %3399 = vrot.lane.b32.xlu0 %v3007, 96
    %v3400 = vpop.permute.xlu0 %3399
    %3401 = vrot.lane.b32.xlu0 %v3008, 96
    %v3402 = vpop.permute.xlu0 %3401
    %3403 = vrot.lane.b32.xlu0 %v3010, 96
    %v3404 = vpop.permute.xlu0 %3403
    %3405 = vrot.lane.b32.xlu0 %v3011, 96
    %v3406 = vpop.permute.xlu0 %3405
    %3407 = vrot.lane.b32.xlu0 %v3012, 96
    %v3408 = vpop.permute.xlu0 %3407
    %3409 = vrot.lane.b32.xlu0 %v3013, 96
    %v3410 = vpop.permute.xlu0 %3409
    %3411 = vrot.lane.b32.xlu0 %v3014, 96
    %v3412 = vpop.permute.xlu0 %3411
    %3413 = vrot.lane.b32.xlu0 %v3015, 96
    %v3414 = vpop.permute.xlu0 %3413
    %3415 = vrot.lane.b32.xlu0 %v3016, 96
    %v3416 = vpop.permute.xlu0 %3415
    %3431 = vrot.lane.b32.xlu0 %v3066, 112
    %v3432 = vpop.permute.xlu0 %3431
    %3433 = vrot.lane.b32.xlu0 %v3069, 112
    %v3434 = vpop.permute.xlu0 %3433
    %3435 = vrot.lane.b32.xlu0 %v3072, 112
    %v3436 = vpop.permute.xlu0 %3435
    %3437 = vrot.lane.b32.xlu0 %v3075, 112
    %v3438 = vpop.permute.xlu0 %3437
    %3439 = vrot.lane.b32.xlu0 %v3078, 112
    %v3440 = vpop.permute.xlu0 %3439
    %3441 = vrot.lane.b32.xlu0 %v3081, 112
    %v3442 = vpop.permute.xlu0 %3441
    %3443 = vrot.lane.b32.xlu0 %v3283, 112
    %v3444 = vpop.permute.xlu0 %3443
    %3445 = vrot.lane.b32.xlu0 %v3087, 112
    %v3446 = vpop.permute.xlu0 %3445
    %3447 = vrot.lane.b32.xlu0 %v3090, 112
    %v3448 = vpop.permute.xlu0 %3447
    %3449 = vrot.lane.b32.xlu0 %v3093, 112
    %v3450 = vpop.permute.xlu0 %3449
    %3451 = vrot.lane.b32.xlu0 %v3096, 112
    %v3452 = vpop.permute.xlu0 %3451
    %3453 = vrot.lane.b32.xlu0 %v3099, 112
    %v3454 = vpop.permute.xlu0 %3453
    %3455 = vrot.lane.b32.xlu0 %v3102, 112
    %v3456 = vpop.permute.xlu0 %3455
    %3457 = vrot.lane.b32.xlu0 %v3286, 112
    %v3458 = vpop.permute.xlu0 %3457
    %v3473 = vsel %vm2269, %v3001, %v3104
    %v3474 = vsel %vm2269, %v3002, %v3106
    %v3475 = vsel %vm2269, %v3003, %v3108
    %v3476 = vsel %vm2269, %v3004, %v3110
    %v3477 = vsel %vm2269, %v3005, %v3112
    %v3478 = vsel %vm2269, %v3006, %v3114
    %v3479 = vsel %vm2269, %v3007, %v3116
    %v3480 = vsel %vm2269, %v3009, %v3118
    %v3481 = vsel %vm2269, %v3010, %v3120
    %v3482 = vsel %vm2269, %v3011, %v3122
    %v3483 = vsel %vm2269, %v3012, %v3124
    %v3484 = vsel %vm2269, %v3013, %v3126
    %v3485 = vsel %vm2269, %v3014, %v3128
    %v3486 = vsel %vm2269, %v3015, %v3130
    %v3487 = vsel %vm987, %v3473, %v3188
    %v3488 = vsel %vm987, %v3474, %v3190
    %v3489 = vsel %vm987, %v3475, %v3192
    %v3490 = vsel %vm987, %v3476, %v3194
    %v3491 = vsel %vm987, %v3477, %v3196
    %v3492 = vsel %vm987, %v3478, %v3198
    %v3493 = vsel %vm987, %v3479, %v3200
    %v3494 = vsel %vm987, %v3480, %v3202
    %v3495 = vsel %vm987, %v3481, %v3204
    %v3496 = vsel %vm987, %v3482, %v3206
    %v3497 = vsel %vm987, %v3483, %v3208
    %v3498 = vsel %vm987, %v3484, %v3210
    %v3499 = vsel %vm987, %v3485, %v3212
    %v3500 = vsel %vm987, %v3486, %v3214
    %v3501 = vsel %vm2300, %v2285, %v3232
    %v3502 = vsel %vm2300, %v3487, %v3234
    %v3503 = vsel %vm2300, %v3488, %v3236
    %v3504 = vsel %vm2300, %v3489, %v3238
    %v3505 = vsel %vm2300, %v3490, %v3240
    %v3506 = vsel %vm2300, %v3491, %v3242
    %v3507 = vsel %vm2300, %v3492, %v3244
    %v3508 = vsel %vm2300, %v3493, %v3246
    %v3509 = vsel %vm2300, %v2285, %v3248
    %v3510 = vsel %vm2300, %v3494, %v3250
    %v3511 = vsel %vm2300, %v3495, %v3252
    %v3512 = vsel %vm2300, %v3496, %v3254
    %v3513 = vsel %vm2300, %v3497, %v3256
    %v3514 = vsel %vm2300, %v3498, %v3258
    %v3515 = vsel %vm2300, %v3499, %v3260
    %v3516 = vsel %vm2300, %v3500, %v3262
    %v3517 = vsel %vm1003, %v3501, %v3288
    %v3518 = vsel %vm1003, %v3502, %v3290
    %v3519 = vsel %vm1003, %v3503, %v3292
    %v3520 = vsel %vm1003, %v3504, %v3294
    %v3521 = vsel %vm1003, %v3505, %v3296
    %v3522 = vsel %vm1003, %v3506, %v3298
    %v3523 = vsel %vm1003, %v3507, %v3300
    %v3524 = vsel %vm1003, %v3508, %v3302
    %v3525 = vsel %vm1003, %v3509, %v3304
    %v3526 = vsel %vm1003, %v3510, %v3306
    %v3527 = vsel %vm1003, %v3511, %v3308
    %v3528 = vsel %vm1003, %v3512, %v3310
    %v3529 = vsel %vm1003, %v3513, %v3312
    %v3530 = vsel %vm1003, %v3514, %v3314
    %v3531 = vsel %vm1003, %v3515, %v3316
    %v3532 = vsel %vm1003, %v3516, %v3318
    %v3533 = vsel %vm2333, %v3517, %v3342
    %v3534 = vsel %vm2333, %v3518, %v3344
    %v3535 = vsel %vm2333, %v3519, %v3346
    %v3536 = vsel %vm2333, %v3520, %v3348
    %v3537 = vsel %vm2333, %v3521, %v3350
    %v3538 = vsel %vm2333, %v3522, %v3352
    %v3539 = vsel %vm2333, %v3523, %v3354
    %v3540 = vsel %vm2333, %v3524, %v3356
    %v3541 = vsel %vm2333, %v3525, %v3358
    %v3542 = vsel %vm2333, %v3526, %v3360
    %v3543 = vsel %vm2333, %v3527, %v3362
    %v3544 = vsel %vm2333, %v3528, %v3364
    %v3545 = vsel %vm2333, %v3529, %v3366
    %v3546 = vsel %vm2333, %v3530, %v3368
    %v3547 = vsel %vm2333, %v3531, %v3370
    %v3548 = vsel %vm2333, %v3532, %v3372
    %v3549 = vsel %vm1019, %v3533, %v3390
    %v3550 = vsel %vm1019, %v3534, %v3392
    %v3551 = vsel %vm1019, %v3535, %v3394
    %v3552 = vsel %vm1019, %v3536, %v3396
    %v3553 = vsel %vm1019, %v3537, %v3398
    %v3554 = vsel %vm1019, %v3538, %v3400
    %v3555 = vsel %vm1019, %v3539, %v3402
    %v3556 = vsel %vm1019, %v3540, %v2194
    %v3557 = vsel %vm1019, %v3541, %v3404
    %v3558 = vsel %vm1019, %v3542, %v3406
    %v3559 = vsel %vm1019, %v3543, %v3408
    %v3560 = vsel %vm1019, %v3544, %v3410
    %v3561 = vsel %vm1019, %v3545, %v3412
    %v3562 = vsel %vm1019, %v3546, %v3414
    %v3563 = vsel %vm1019, %v3547, %v3416
    %v3564 = vsel %vm1019, %v3548, %v2194
    %v3565 = vsel %vm2366, %v3549, %v3432
    %v3566 = vsel %vm2366, %v3550, %v3434
    %v3567 = vsel %vm2366, %v3551, %v3436
    %v3568 = vsel %vm2366, %v3552, %v3438
    %v3569 = vsel %vm2366, %v3553, %v3440
    %v3570 = vsel %vm2366, %v3554, %v3442
    %v3571 = vsel %vm2366, %v3555, %v3444
    %v3572 = vsel %vm2366, %v3556, %v2239
    %v3573 = vsel %vm2366, %v3557, %v3446
    %v3574 = vsel %vm2366, %v3558, %v3448
    %v3575 = vsel %vm2366, %v3559, %v3450
    %v3576 = vsel %vm2366, %v3560, %v3452
    %v3577 = vsel %vm2366, %v3561, %v3454
    %v3578 = vsel %vm2366, %v3562, %v3456
    %v3579 = vsel %vm2366, %v3563, %v3458
    %v3580 = vsel %vm2366, %v3564, %v2239
    %v3581 = vld [vmem:[%s9] sm:$0xff]
    %v3582 = vld [vmem:[%s9 + $0x8] sm:$0xff]
    %v3583 = vld [vmem:[%s9 + $0x10] sm:$0xff]
    %v3584 = vld [vmem:[%s9 + $0x18] sm:$0xff]
    %v3585 = vld [vmem:[%s9 + $0x20] sm:$0xff]
    %v3586 = vld [vmem:[%s9 + $0x28] sm:$0xff]
    %v3587 = vld [vmem:[%s9 + $0x30] sm:$0xff]
    %v3588 = vld [vmem:[%s9 + $0x38] sm:$0xff]
    %v3589 = vld [vmem:[%s9 + $0x40] sm:$0xff]
    %v3590 = vld [vmem:[%s9 + $0x48] sm:$0xff]
    %v3591 = vld [vmem:[%s9 + $0x50] sm:$0xff]
    %v3592 = vld [vmem:[%s9 + $0x58] sm:$0xff]
    %v3593 = vld [vmem:[%s9 + $0x60] sm:$0xff]
    %v3594 = vld [vmem:[%s9 + $0x68] sm:$0xff]
    %v3595 = vld [vmem:[%s9 + $0x70] sm:$0xff]
    %v3596 = vld [vmem:[%s9 + $0x78] sm:$0xff]
    %v3597 = vld [vmem:[%s9 + $0x80] sm:$0xff]
    %v3598 = vld [vmem:[%s9 + $0x88] sm:$0xff]
    %v3599 = vsel %vm2269, %v3150, 0
    %v3601 = vsel %vm2269, %v3153, 0
    %v3603 = vsel %vm2269, %v3156, 0
    %v3605 = vsel %vm2269, %v3159, 0
    %v3607 = vsel %vm2269, %v3162, 0
    %v3609 = vsel %vm2269, %v3165, 0
    %v3611 = vsel %vm2269, %v3337, 0
    %v3613 = vsel %vm2269, %v3171, 0
    %v3615 = vsel %vm2269, %v3174, 0
    %v3617 = vsel %vm2269, %v3177, 0
    %v3619 = vsel %vm2269, %v3180, 0
    %v3621 = vsel %vm2269, %v3183, 0
    %v3623 = vsel %vm2269, %v3186, 0
    %v3625 = vsel %vm2269, %v3340, 0
    %3627 = vmatpush.msra.mxu0 %v3596
    %3628 = vmatpush.msra.mxu0 %v3595
    %3629 = vmatpush.msra.mxu0 %v3594
    %3630 = vmatpush.msra.mxu0 %v3593
    %3631 = vmatpush.msra.mxu0 %v3592
    %3632 = vmatpush.msra.mxu0 %v3591
    %3633 = vmatpush.msra.mxu0 %v3590
    %3634 = vmatpush.msra.mxu0 %v3589
    %3635 = vmatpush.msra.mxu0 %v3588
    %3636 = vmatpush.msra.mxu0 %v3587
    %3637 = vmatpush.msra.mxu0 %v3586
    %3638 = vmatpush.msra.mxu0 %v3585
    %3639 = vmatpush.msra.mxu0 %v3584
    %3640 = vmatpush.msra.mxu0 %v3583
    %3641 = vmatpush.msra.mxu0 %v3582
    %3642 = vmatpush.msra.mxu0 %v3581
    %3643 = vmatmul.f32.gmra.mxu0 %v3565
    %v3644 = vpop.f32.mrf.mxu0
    %v3645 = vadd.f32 %v1298, %v3644
    %3646 = vmatmul.f32.gmra.mxu0 %v3566
    %v3647 = vpop.f32.mrf.mxu0
    %v3648 = vadd.f32 %v1301, %v3647
    %3649 = vmatmul.f32.gmra.mxu0 %v3567
    %v3650 = vpop.f32.mrf.mxu0
    %v3651 = vadd.f32 %v1304, %v3650
    %3652 = vmatmul.f32.gmra.mxu0 %v3568
    %v3653 = vpop.f32.mrf.mxu0
    %v3654 = vadd.f32 %v1307, %v3653
    %3655 = vmatmul.f32.gmra.mxu0 %v3569
    %v3656 = vpop.f32.mrf.mxu0
    %v3657 = vadd.f32 %v1310, %v3656
    %3658 = vmatmul.f32.gmra.mxu0 %v3570
    %v3659 = vpop.f32.mrf.mxu0
    %v3660 = vadd.f32 %v1313, %v3659
    %3661 = vmatmul.f32.gmra.mxu0 %v3571
    %v3662 = vpop.f32.mrf.mxu0
    %v3663 = vadd.f32 %v1316, %v3662
    %3664 = vmatmul.f32.gmra.mxu0 %v3572
    %v3665 = vpop.f32.mrf.mxu0
    %v3666 = vadd.f32 %v1319, %v3665
    %3667 = vmatmul.f32.gmra.mxu0 %v3573
    %v3668 = vpop.f32.mrf.mxu0
    %v3669 = vadd.f32 %v1322, %v3668
    %3670 = vmatmul.f32.gmra.mxu0 %v3574
    %v3671 = vpop.f32.mrf.mxu0
    %v3672 = vadd.f32 %v1325, %v3671
    %3673 = vmatmul.f32.gmra.mxu0 %v3575
    %v3674 = vpop.f32.mrf.mxu0
    %v3675 = vadd.f32 %v1328, %v3674
    %3676 = vmatmul.f32.gmra.mxu0 %v3576
    %v3677 = vpop.f32.mrf.mxu0
    %v3678 = vadd.f32 %v1331, %v3677
    %3679 = vmatmul.f32.gmra.mxu0 %v3577
    %v3680 = vpop.f32.mrf.mxu0
    %v3681 = vadd.f32 %v1334, %v3680
    %3682 = vmatmul.f32.gmra.mxu0 %v3578
    %v3683 = vpop.f32.mrf.mxu0
    %v3684 = vadd.f32 %v1337, %v3683
    %3685 = vmatmul.f32.gmra.mxu0 %v3579
    %v3686 = vpop.f32.mrf.mxu0
    %v3687 = vadd.f32 %v1340, %v3686
    %3688 = vmatmul.f32.gmra.mxu0 %v3580
    %v3689 = vpop.f32.mrf.mxu0
    %v3690 = vadd.f32 %v1343, %v3689
    %3691 = vdwg.mxu0
    %3692 = vmatpush.msra.mxu0 0.0
    %3693 = vmatpush.msra.mxu0 0.0
    %3694 = vmatpush.msra.mxu0 0.0
    %3695 = vmatpush.msra.mxu0 0.0
    %3696 = vmatpush.msra.mxu0 0.0
    %3697 = vmatpush.msra.mxu0 0.0
    %3698 = vmatpush.msra.mxu0 0.0
    %3699 = vmatpush.msra.mxu0 0.0
    %3700 = vmatpush.msra.mxu0 0.0
    %3701 = vmatpush.msra.mxu0 0.0
    %3702 = vmatpush.msra.mxu0 0.0
    %3703 = vmatpush.msra.mxu0 0.0
    %3704 = vmatpush.msra.mxu0 0.0
    %3705 = vmatpush.msra.mxu0 0.0
    %3706 = vmatpush.msra.mxu0 %v3598
    %3707 = vmatpush.msra.mxu0 %v3597
    %3708 = vmatmul.f32.gmra.mxu0 %v3599
    %v3709 = vpop.f32.mrf.mxu0
    %v3710 = vadd.f32 %v3645, %v3709
    %3711 = vmatmul.f32.gmra.mxu0 %v3601
    %v3712 = vpop.f32.mrf.mxu0
    %v3713 = vadd.f32 %v3648, %v3712
    %3714 = vmatmul.f32.gmra.mxu0 %v3603
    %v3715 = vpop.f32.mrf.mxu0
    %v3716 = vadd.f32 %v3651, %v3715
    %3717 = vmatmul.f32.gmra.mxu0 %v3605
    %v3718 = vpop.f32.mrf.mxu0
    %v3719 = vadd.f32 %v3654, %v3718
    %3720 = vmatmul.f32.gmra.mxu0 %v3607
    %v3721 = vpop.f32.mrf.mxu0
    %v3722 = vadd.f32 %v3657, %v3721
    %3723 = vmatmul.f32.gmra.mxu0 %v3609
    %v3724 = vpop.f32.mrf.mxu0
    %v3725 = vadd.f32 %v3660, %v3724
    %3726 = vmatmul.f32.gmra.mxu0 %v3611
    %v3727 = vpop.f32.mrf.mxu0
    %v3728 = vadd.f32 %v3663, %v3727
    %3729 = vmatmul.f32.gmra.mxu0 %v2415
    %v3730 = vpop.f32.mrf.mxu0
    %v3731 = vadd.f32 %v3666, %v3730
    %3732 = vmatmul.f32.gmra.mxu0 %v3613
    %v3733 = vpop.f32.mrf.mxu0
    %v3734 = vadd.f32 %v3669, %v3733
    %3735 = vmatmul.f32.gmra.mxu0 %v3615
    %v3736 = vpop.f32.mrf.mxu0
    %v3737 = vadd.f32 %v3672, %v3736
    %3738 = vmatmul.f32.gmra.mxu0 %v3617
    %v3739 = vpop.f32.mrf.mxu0
    %v3740 = vadd.f32 %v3675, %v3739
    %3741 = vmatmul.f32.gmra.mxu0 %v3619
    %v3742 = vpop.f32.mrf.mxu0
    %v3743 = vadd.f32 %v3678, %v3742
    %3744 = vmatmul.f32.gmra.mxu0 %v3621
    %v3745 = vpop.f32.mrf.mxu0
    %v3746 = vadd.f32 %v3681, %v3745
    %3747 = vmatmul.f32.gmra.mxu0 %v3623
    %v3748 = vpop.f32.mrf.mxu0
    %v3749 = vadd.f32 %v3684, %v3748
    %3750 = vmatmul.f32.gmra.mxu0 %v3625
    %v3751 = vpop.f32.mrf.mxu0
    %v3752 = vadd.f32 %v3687, %v3751
    %3753 = vmatmul.f32.gmra.mxu0 %v2415
    %v3754 = vpop.f32.mrf.mxu0
    %v3755 = vadd.f32 %v3690, %v3754
    %3756 = vdwg.mxu0
    %v3757 = vld [vmem:[%s10] sm:$0x1]
    %v3759 = vperm.slane %v3757, 0
    %v3761 = vmul.f32 %v3710, %v3759
    %v3762 = vmul.f32 %v3713, %v3759
    %v3763 = vmul.f32 %v3716, %v3759
    %v3764 = vmul.f32 %v3719, %v3759
    %v3765 = vmul.f32 %v3722, %v3759
    %v3766 = vmul.f32 %v3725, %v3759
    %v3767 = vmul.f32 %v3728, %v3759
    %v3768 = vmul.f32 %v3731, %v3759
    %v3769 = vmul.f32 %v3734, %v3759
    %v3770 = vmul.f32 %v3737, %v3759
    %v3771 = vmul.f32 %v3740, %v3759
    %v3772 = vmul.f32 %v3743, %v3759
    %v3773 = vmul.f32 %v3746, %v3759
    %v3774 = vmul.f32 %v3749, %v3759
    %v3775 = vmul.f32 %v3752, %v3759
    %v3776 = vmul.f32 %v3755, %v3759
    %v3777 = vld [vmem:[%s11] sm:$0x1]
    %v3779 = vperm.slane %v3777, 0
    %v3781 = vadd.f32 %v3761, %v3779
    %v3782 = vadd.f32 %v3762, %v3779
    %v3783 = vadd.f32 %v3763, %v3779
    %v3784 = vadd.f32 %v3764, %v3779
    %v3785 = vadd.f32 %v3765, %v3779
    %v3786 = vadd.f32 %v3766, %v3779
    %v3787 = vadd.f32 %v3767, %v3779
    %v3788 = vadd.f32 %v3768, %v3779
    %v3789 = vadd.f32 %v3769, %v3779
    %v3790 = vadd.f32 %v3770, %v3779
    %v3791 = vadd.f32 %v3771, %v3779
    %v3792 = vadd.f32 %v3772, %v3779
    %v3793 = vadd.f32 %v3773, %v3779
    %v3794 = vadd.f32 %v3774, %v3779
    %v3795 = vadd.f32 %v3775, %v3779
    %v3796 = vadd.f32 %v3776, %v3779
    %v3797 = vmin.f32 %v3781, 20.0
    %v3798 = vmin.f32 %v3782, 20.0
    %v3799 = vmin.f32 %v3783, 20.0
    %v3800 = vmin.f32 %v3784, 20.0
    %v3801 = vmin.f32 %v3785, 20.0
    %v3802 = vmin.f32 %v3786, 20.0
    %v3803 = vmin.f32 %v3787, 20.0
    %v3804 = vmin.f32 %v3788, 20.0
    %v3805 = vmin.f32 %v3789, 20.0
    %v3806 = vmin.f32 %v3790, 20.0
    %v3807 = vmin.f32 %v3791, 20.0
    %v3808 = vmin.f32 %v3792, 20.0
    %v3809 = vmin.f32 %v3793, 20.0
    %v3810 = vmin.f32 %v3794, 20.0
    %v3811 = vmin.f32 %v3795, 20.0
    %v3812 = vmin.f32 %v3796, 20.0
    %v3813 = vmul.f32 %v3797, 1.442695
    %v3814 = vpow.pop %v3813
    %v3815 = vmul.f32 %v3798, 1.442695
    %v3816 = vpow.pop %v3815
    %v3817 = vmul.f32 %v3799, 1.442695
    %v3818 = vpow.pop %v3817
    %v3819 = vmul.f32 %v3800, 1.442695
    %v3820 = vpow.pop %v3819
    %v3821 = vmul.f32 %v3801, 1.442695
    %v3822 = vpow.pop %v3821
    %v3823 = vmul.f32 %v3802, 1.442695
    %v3824 = vpow.pop %v3823
    %v3825 = vmul.f32 %v3803, 1.442695
    %v3826 = vpow.pop %v3825
    %v3827 = vmul.f32 %v3804, 1.442695
    %v3828 = vpow.pop %v3827
    %v3829 = vmul.f32 %v3805, 1.442695
    %v3830 = vpow.pop %v3829
    %v3831 = vmul.f32 %v3806, 1.442695
    %v3832 = vpow.pop %v3831
    %v3833 = vmul.f32 %v3807, 1.442695
    %v3834 = vpow.pop %v3833
    %v3835 = vmul.f32 %v3808, 1.442695
    %v3836 = vpow.pop %v3835
    %v3837 = vmul.f32 %v3809, 1.442695
    %v3838 = vpow.pop %v3837
    %v3839 = vmul.f32 %v3810, 1.442695
    %v3840 = vpow.pop %v3839
    %v3841 = vmul.f32 %v3811, 1.442695
    %v3842 = vpow.pop %v3841
    %v3843 = vmul.f32 %v3812, 1.442695
    %v3844 = vpow.pop %v3843
    %v3845 = vadd.f32 %v3814, 2.0
    %v3846 = vadd.f32 %v3816, 2.0
    %v3847 = vadd.f32 %v3818, 2.0
    %v3848 = vadd.f32 %v3820, 2.0
    %v3849 = vadd.f32 %v3822, 2.0
    %v3850 = vadd.f32 %v3824, 2.0
    %v3851 = vadd.f32 %v3826, 2.0
    %v3852 = vadd.f32 %v3828, 2.0
    %v3853 = vadd.f32 %v3830, 2.0
    %v3854 = vadd.f32 %v3832, 2.0
    %v3855 = vadd.f32 %v3834, 2.0
    %v3856 = vadd.f32 %v3836, 2.0
    %v3857 = vadd.f32 %v3838, 2.0
    %v3858 = vadd.f32 %v3840, 2.0
    %v3859 = vadd.f32 %v3842, 2.0
    %v3860 = vadd.f32 %v3844, 2.0
    %v3861 = vmul.f32 %v3814, %v3845
    %v3862 = vmul.f32 %v3816, %v3846
    %v3863 = vmul.f32 %v3818, %v3847
    %v3864 = vmul.f32 %v3820, %v3848
    %v3865 = vmul.f32 %v3822, %v3849
    %v3866 = vmul.f32 %v3824, %v3850
    %v3867 = vmul.f32 %v3826, %v3851
    %v3868 = vmul.f32 %v3828, %v3852
    %v3869 = vmul.f32 %v3830, %v3853
    %v3870 = vmul.f32 %v3832, %v3854
    %v3871 = vmul.f32 %v3834, %v3855
    %v3872 = vmul.f32 %v3836, %v3856
    %v3873 = vmul.f32 %v3838, %v3857
    %v3874 = vmul.f32 %v3840, %v3858
    %v3875 = vmul.f32 %v3842, %v3859
    %v3876 = vmul.f32 %v3844, %v3860
    %v3877 = vadd.f32 %v3861, 2.0
    %v3878 = vadd.f32 %v3862, 2.0
    %v3879 = vadd.f32 %v3863, 2.0
    %v3880 = vadd.f32 %v3864, 2.0
    %v3881 = vadd.f32 %v3865, 2.0
    %v3882 = vadd.f32 %v3866, 2.0
    %v3883 = vadd.f32 %v3867, 2.0
    %v3884 = vadd.f32 %v3868, 2.0
    %v3885 = vadd.f32 %v3869, 2.0
    %v3886 = vadd.f32 %v3870, 2.0
    %v3887 = vadd.f32 %v3871, 2.0
    %v3888 = vadd.f32 %v3872, 2.0
    %v3889 = vadd.f32 %v3873, 2.0
    %v3890 = vadd.f32 %v3874, 2.0
    %v3891 = vadd.f32 %v3875, 2.0
    %v3892 = vadd.f32 %v3876, 2.0
    %v3893 = vrcp.pop %v3877
    %v3894 = vmul.f32 %v3877, %v3893
    %v3895 = vsub.f32 1.0, %v3894
    %v3896 = vmul.f32 %v3893, %v3895
    %v3897 = vadd.f32 %v3893, %v3896
    %vm3898 = vweird.f32 %v3877
    %vm3899 = vweird.f32 %v3893
    %vm3900 = vmor %vm3898, %vm3899
    %v3901 = vsel %vm3900, %v3893, %v3897
    %v3902 = vand.u32 2147483647, %v3877
    %vm3903 = vcmp.eq.f32.partialorder %v3902, 8.507059e+37
    %v3904 = vand.u32 %v3877, 2147483648
    %v3905 = vor.u32 1.1754944e-38, %v3904
    %v3906 = vsel %vm3903, %v3905, %v3901
    %v3907 = vmul.f32 %v3861, %v3906
    %v3908 = vrcp.pop %v3878
    %v3909 = vmul.f32 %v3878, %v3908
    %v3910 = vsub.f32 1.0, %v3909
    %v3911 = vmul.f32 %v3908, %v3910
    %v3912 = vadd.f32 %v3908, %v3911
    %vm3913 = vweird.f32 %v3878
    %vm3914 = vweird.f32 %v3908
    %vm3915 = vmor %vm3913, %vm3914
    %v3916 = vsel %vm3915, %v3908, %v3912
    %v3917 = vand.u32 2147483647, %v3878
    %vm3918 = vcmp.eq.f32.partialorder %v3917, 8.507059e+37
    %v3919 = vand.u32 %v3878, 2147483648
    %v3920 = vor.u32 1.1754944e-38, %v3919
    %v3921 = vsel %vm3918, %v3920, %v3916
    %v3922 = vmul.f32 %v3862, %v3921
    %v3923 = vrcp.pop %v3879
    %v3924 = vmul.f32 %v3879, %v3923
    %v3925 = vsub.f32 1.0, %v3924
    %v3926 = vmul.f32 %v3923, %v3925
    %v3927 = vadd.f32 %v3923, %v3926
    %vm3928 = vweird.f32 %v3879
    %vm3929 = vweird.f32 %v3923
    %vm3930 = vmor %vm3928, %vm3929
    %v3931 = vsel %vm3930, %v3923, %v3927
    %v3932 = vand.u32 2147483647, %v3879
    %vm3933 = vcmp.eq.f32.partialorder %v3932, 8.507059e+37
    %v3934 = vand.u32 %v3879, 2147483648
    %v3935 = vor.u32 1.1754944e-38, %v3934
    %v3936 = vsel %vm3933, %v3935, %v3931
    %v3937 = vmul.f32 %v3863, %v3936
    %v3938 = vrcp.pop %v3880
    %v3939 = vmul.f32 %v3880, %v3938
    %v3940 = vsub.f32 1.0, %v3939
    %v3941 = vmul.f32 %v3938, %v3940
    %v3942 = vadd.f32 %v3938, %v3941
    %vm3943 = vweird.f32 %v3880
    %vm3944 = vweird.f32 %v3938
    %vm3945 = vmor %vm3943, %vm3944
    %v3946 = vsel %vm3945, %v3938, %v3942
    %v3947 = vand.u32 2147483647, %v3880
    %vm3948 = vcmp.eq.f32.partialorder %v3947, 8.507059e+37
    %v3949 = vand.u32 %v3880, 2147483648
    %v3950 = vor.u32 1.1754944e-38, %v3949
    %v3951 = vsel %vm3948, %v3950, %v3946
    %v3952 = vmul.f32 %v3864, %v3951
    %v3953 = vrcp.pop %v3881
    %v3954 = vmul.f32 %v3881, %v3953
    %v3955 = vsub.f32 1.0, %v3954
    %v3956 = vmul.f32 %v3953, %v3955
    %v3957 = vadd.f32 %v3953, %v3956
    %vm3958 = vweird.f32 %v3881
    %vm3959 = vweird.f32 %v3953
    %vm3960 = vmor %vm3958, %vm3959
    %v3961 = vsel %vm3960, %v3953, %v3957
    %v3962 = vand.u32 2147483647, %v3881
    %vm3963 = vcmp.eq.f32.partialorder %v3962, 8.507059e+37
    %v3964 = vand.u32 %v3881, 2147483648
    %v3965 = vor.u32 1.1754944e-38, %v3964
    %v3966 = vsel %vm3963, %v3965, %v3961
    %v3967 = vmul.f32 %v3865, %v3966
    %v3968 = vrcp.pop %v3882
    %v3969 = vmul.f32 %v3882, %v3968
    %v3970 = vsub.f32 1.0, %v3969
    %v3971 = vmul.f32 %v3968, %v3970
    %v3972 = vadd.f32 %v3968, %v3971
    %vm3973 = vweird.f32 %v3882
    %vm3974 = vweird.f32 %v3968
    %vm3975 = vmor %vm3973, %vm3974
    %v3976 = vsel %vm3975, %v3968, %v3972
    %v3977 = vand.u32 2147483647, %v3882
    %vm3978 = vcmp.eq.f32.partialorder %v3977, 8.507059e+37
    %v3979 = vand.u32 %v3882, 2147483648
    %v3980 = vor.u32 1.1754944e-38, %v3979
    %v3981 = vsel %vm3978, %v3980, %v3976
    %v3982 = vmul.f32 %v3866, %v3981
    %v3983 = vrcp.pop %v3883
    %v3984 = vmul.f32 %v3883, %v3983
    %v3985 = vsub.f32 1.0, %v3984
    %v3986 = vmul.f32 %v3983, %v3985
    %v3987 = vadd.f32 %v3983, %v3986
    %vm3988 = vweird.f32 %v3883
    %vm3989 = vweird.f32 %v3983
    %vm3990 = vmor %vm3988, %vm3989
    %v3991 = vsel %vm3990, %v3983, %v3987
    %v3992 = vand.u32 2147483647, %v3883
    %vm3993 = vcmp.eq.f32.partialorder %v3992, 8.507059e+37
    %v3994 = vand.u32 %v3883, 2147483648
    %v3995 = vor.u32 1.1754944e-38, %v3994
    %v3996 = vsel %vm3993, %v3995, %v3991
    %v3997 = vmul.f32 %v3867, %v3996
    %v3998 = vrcp.pop %v3884
    %v3999 = vmul.f32 %v3884, %v3998
    %v4000 = vsub.f32 1.0, %v3999
    %v4001 = vmul.f32 %v3998, %v4000
    %v4002 = vadd.f32 %v3998, %v4001
    %vm4003 = vweird.f32 %v3884
    %vm4004 = vweird.f32 %v3998
    %vm4005 = vmor %vm4003, %vm4004
    %v4006 = vsel %vm4005, %v3998, %v4002
    %v4007 = vand.u32 2147483647, %v3884
    %vm4008 = vcmp.eq.f32.partialorder %v4007, 8.507059e+37
    %v4009 = vand.u32 %v3884, 2147483648
    %v4010 = vor.u32 1.1754944e-38, %v4009
    %v4011 = vsel %vm4008, %v4010, %v4006
    %v4012 = vmul.f32 %v3868, %v4011
    %v4013 = vrcp.pop %v3885
    %v4014 = vmul.f32 %v3885, %v4013
    %v4015 = vsub.f32 1.0, %v4014
    %v4016 = vmul.f32 %v4013, %v4015
    %v4017 = vadd.f32 %v4013, %v4016
    %vm4018 = vweird.f32 %v3885
    %vm4019 = vweird.f32 %v4013
    %vm4020 = vmor %vm4018, %vm4019
    %v4021 = vsel %vm4020, %v4013, %v4017
    %v4022 = vand.u32 2147483647, %v3885
    %vm4023 = vcmp.eq.f32.partialorder %v4022, 8.507059e+37
    %v4024 = vand.u32 %v3885, 2147483648
    %v4025 = vor.u32 1.1754944e-38, %v4024
    %v4026 = vsel %vm4023, %v4025, %v4021
    %v4027 = vmul.f32 %v3869, %v4026
    %v4028 = vrcp.pop %v3886
    %v4029 = vmul.f32 %v3886, %v4028
    %v4030 = vsub.f32 1.0, %v4029
    %v4031 = vmul.f32 %v4028, %v4030
    %v4032 = vadd.f32 %v4028, %v4031
    %vm4033 = vweird.f32 %v3886
    %vm4034 = vweird.f32 %v4028
    %vm4035 = vmor %vm4033, %vm4034
    %v4036 = vsel %vm4035, %v4028, %v4032
    %v4037 = vand.u32 2147483647, %v3886
    %vm4038 = vcmp.eq.f32.partialorder %v4037, 8.507059e+37
    %v4039 = vand.u32 %v3886, 2147483648
    %v4040 = vor.u32 1.1754944e-38, %v4039
    %v4041 = vsel %vm4038, %v4040, %v4036
    %v4042 = vmul.f32 %v3870, %v4041
    %v4043 = vrcp.pop %v3887
    %v4044 = vmul.f32 %v3887, %v4043
    %v4045 = vsub.f32 1.0, %v4044
    %v4046 = vmul.f32 %v4043, %v4045
    %v4047 = vadd.f32 %v4043, %v4046
    %vm4048 = vweird.f32 %v3887
    %vm4049 = vweird.f32 %v4043
    %vm4050 = vmor %vm4048, %vm4049
    %v4051 = vsel %vm4050, %v4043, %v4047
    %v4052 = vand.u32 2147483647, %v3887
    %vm4053 = vcmp.eq.f32.partialorder %v4052, 8.507059e+37
    %v4054 = vand.u32 %v3887, 2147483648
    %v4055 = vor.u32 1.1754944e-38, %v4054
    %v4056 = vsel %vm4053, %v4055, %v4051
    %v4057 = vmul.f32 %v3871, %v4056
    %v4058 = vrcp.pop %v3888
    %v4059 = vmul.f32 %v3888, %v4058
    %v4060 = vsub.f32 1.0, %v4059
    %v4061 = vmul.f32 %v4058, %v4060
    %v4062 = vadd.f32 %v4058, %v4061
    %vm4063 = vweird.f32 %v3888
    %vm4064 = vweird.f32 %v4058
    %vm4065 = vmor %vm4063, %vm4064
    %v4066 = vsel %vm4065, %v4058, %v4062
    %v4067 = vand.u32 2147483647, %v3888
    %vm4068 = vcmp.eq.f32.partialorder %v4067, 8.507059e+37
    %v4069 = vand.u32 %v3888, 2147483648
    %v4070 = vor.u32 1.1754944e-38, %v4069
    %v4071 = vsel %vm4068, %v4070, %v4066
    %v4072 = vmul.f32 %v3872, %v4071
    %v4073 = vrcp.pop %v3889
    %v4074 = vmul.f32 %v3889, %v4073
    %v4075 = vsub.f32 1.0, %v4074
    %v4076 = vmul.f32 %v4073, %v4075
    %v4077 = vadd.f32 %v4073, %v4076
    %vm4078 = vweird.f32 %v3889
    %vm4079 = vweird.f32 %v4073
    %vm4080 = vmor %vm4078, %vm4079
    %v4081 = vsel %vm4080, %v4073, %v4077
    %v4082 = vand.u32 2147483647, %v3889
    %vm4083 = vcmp.eq.f32.partialorder %v4082, 8.507059e+37
    %v4084 = vand.u32 %v3889, 2147483648
    %v4085 = vor.u32 1.1754944e-38, %v4084
    %v4086 = vsel %vm4083, %v4085, %v4081
    %v4087 = vmul.f32 %v3873, %v4086
    %v4088 = vrcp.pop %v3890
    %v4089 = vmul.f32 %v3890, %v4088
    %v4090 = vsub.f32 1.0, %v4089
    %v4091 = vmul.f32 %v4088, %v4090
    %v4092 = vadd.f32 %v4088, %v4091
    %vm4093 = vweird.f32 %v3890
    %vm4094 = vweird.f32 %v4088
    %vm4095 = vmor %vm4093, %vm4094
    %v4096 = vsel %vm4095, %v4088, %v4092
    %v4097 = vand.u32 2147483647, %v3890
    %vm4098 = vcmp.eq.f32.partialorder %v4097, 8.507059e+37
    %v4099 = vand.u32 %v3890, 2147483648
    %v4100 = vor.u32 1.1754944e-38, %v4099
    %v4101 = vsel %vm4098, %v4100, %v4096
    %v4102 = vmul.f32 %v3874, %v4101
    %v4103 = vrcp.pop %v3891
    %v4104 = vmul.f32 %v3891, %v4103
    %v4105 = vsub.f32 1.0, %v4104
    %v4106 = vmul.f32 %v4103, %v4105
    %v4107 = vadd.f32 %v4103, %v4106
    %vm4108 = vweird.f32 %v3891
    %vm4109 = vweird.f32 %v4103
    %vm4110 = vmor %vm4108, %vm4109
    %v4111 = vsel %vm4110, %v4103, %v4107
    %v4112 = vand.u32 2147483647, %v3891
    %vm4113 = vcmp.eq.f32.partialorder %v4112, 8.507059e+37
    %v4114 = vand.u32 %v3891, 2147483648
    %v4115 = vor.u32 1.1754944e-38, %v4114
    %v4116 = vsel %vm4113, %v4115, %v4111
    %v4117 = vmul.f32 %v3875, %v4116
    %v4118 = vrcp.pop %v3892
    %v4119 = vmul.f32 %v3892, %v4118
    %v4120 = vsub.f32 1.0, %v4119
    %v4121 = vmul.f32 %v4118, %v4120
    %v4122 = vadd.f32 %v4118, %v4121
    %vm4123 = vweird.f32 %v3892
    %vm4124 = vweird.f32 %v4118
    %vm4125 = vmor %vm4123, %vm4124
    %v4126 = vsel %vm4125, %v4118, %v4122
    %v4127 = vand.u32 2147483647, %v3892
    %vm4128 = vcmp.eq.f32.partialorder %v4127, 8.507059e+37
    %v4129 = vand.u32 %v3892, 2147483648
    %v4130 = vor.u32 1.1754944e-38, %v4129
    %v4131 = vsel %vm4128, %v4130, %v4126
    %v4132 = vmul.f32 %v3876, %v4131
    %v4133 = vmul.f32 %v3781, %v3907
    %v4134 = vmul.f32 %v3782, %v3922
    %v4135 = vmul.f32 %v3783, %v3937
    %v4136 = vmul.f32 %v3784, %v3952
    %v4137 = vmul.f32 %v3785, %v3967
    %v4138 = vmul.f32 %v3786, %v3982
    %v4139 = vmul.f32 %v3787, %v3997
    %v4140 = vmul.f32 %v3788, %v4012
    %v4141 = vmul.f32 %v3789, %v4027
    %v4142 = vmul.f32 %v3790, %v4042
    %v4143 = vmul.f32 %v3791, %v4057
    %v4144 = vmul.f32 %v3792, %v4072
    %v4145 = vmul.f32 %v3793, %v4087
    %v4146 = vmul.f32 %v3794, %v4102
    %v4147 = vmul.f32 %v3795, %v4117
    %v4148 = vmul.f32 %v3796, %v4132
    %v4165 = vrot.slane %v4133, 7
    %v4166 = vrot.slane %v4134, 7
    %v4167 = vrot.slane %v4135, 7
    %v4168 = vrot.slane %v4136, 7
    %v4169 = vrot.slane %v4137, 7
    %v4170 = vrot.slane %v4138, 7
    %v4171 = vrot.slane %v4139, 7
    %v4172 = vrot.slane %v4140, 7
    %v4173 = vrot.slane %v4141, 7
    %v4174 = vrot.slane %v4142, 7
    %v4175 = vrot.slane %v4143, 7
    %v4176 = vrot.slane %v4144, 7
    %v4177 = vrot.slane %v4145, 7
    %v4178 = vrot.slane %v4146, 7
    %v4179 = vrot.slane %v4147, 7
    %v4180 = vrot.slane %v4148, 7
    %v4197 = vsel %vm522, 0.0, %v4165
    %v4198 = vsel %vm522, 0.0, %v4166
    %v4199 = vsel %vm522, 0.0, %v4167
    %v4200 = vsel %vm522, 0.0, %v4168
    %v4201 = vsel %vm522, 0.0, %v4169
    %v4202 = vsel %vm522, 0.0, %v4170
    %v4203 = vsel %vm522, 0.0, %v4171
    %v4204 = vsel %vm522, 0.0, %v4172
    %v4205 = vsel %vm522, 0.0, %v4173
    %v4206 = vsel %vm522, 0.0, %v4174
    %v4207 = vsel %vm522, 0.0, %v4175
    %v4208 = vsel %vm522, 0.0, %v4176
    %v4209 = vsel %vm522, 0.0, %v4177
    %v4210 = vsel %vm522, 0.0, %v4178
    %v4211 = vsel %vm522, 0.0, %v4179
    %v4212 = vsel %vm522, 0.0, %v4180
    %v4213 = vsel %vm522, %v4165, 0.0
    %v4214 = vsel %vm522, %v4166, 0.0
    %v4215 = vsel %vm522, %v4167, 0.0
    %v4216 = vsel %vm522, %v4168, 0.0
    %v4217 = vsel %vm522, %v4169, 0.0
    %v4218 = vsel %vm522, %v4170, 0.0
    %v4219 = vsel %vm522, %v4171, 0.0
    %v4220 = vsel %vm522, %v4172, 0.0
    %v4221 = vsel %vm522, %v4173, 0.0
    %v4222 = vsel %vm522, %v4174, 0.0
    %v4223 = vsel %vm522, %v4175, 0.0
    %v4224 = vsel %vm522, %v4176, 0.0
    %v4225 = vsel %vm522, %v4177, 0.0
    %v4226 = vsel %vm522, %v4178, 0.0
    %v4227 = vsel %vm522, %v4179, 0.0
    %v4228 = vsel %vm522, %v4180, 0.0
    %v4257 = vrot.slane %v4197, 1
    %v4258 = vrot.slane %v4213, 1
    %v4259 = vsel %vm587, %v4257, %v4258
    %v4260 = vrot.slane %v4198, 1
    %v4261 = vrot.slane %v4214, 1
    %v4262 = vsel %vm587, %v4260, %v4261
    %v4263 = vrot.slane %v4199, 1
    %v4264 = vrot.slane %v4215, 1
    %v4265 = vsel %vm587, %v4263, %v4264
    %v4266 = vrot.slane %v4200, 1
    %v4267 = vrot.slane %v4216, 1
    %v4268 = vsel %vm587, %v4266, %v4267
    %v4269 = vrot.slane %v4201, 1
    %v4270 = vrot.slane %v4217, 1
    %v4271 = vsel %vm587, %v4269, %v4270
    %v4272 = vrot.slane %v4202, 1
    %v4273 = vrot.slane %v4218, 1
    %v4274 = vsel %vm587, %v4272, %v4273
    %v4275 = vrot.slane %v4203, 1
    %v4276 = vrot.slane %v4219, 1
    %v4277 = vsel %vm587, %v4275, %v4276
    %v4278 = vrot.slane %v4205, 1
    %v4279 = vrot.slane %v4221, 1
    %v4280 = vsel %vm587, %v4278, %v4279
    %v4281 = vrot.slane %v4206, 1
    %v4282 = vrot.slane %v4222, 1
    %v4283 = vsel %vm587, %v4281, %v4282
    %v4284 = vrot.slane %v4207, 1
    %v4285 = vrot.slane %v4223, 1
    %v4286 = vsel %vm587, %v4284, %v4285
    %v4287 = vrot.slane %v4208, 1
    %v4288 = vrot.slane %v4224, 1
    %v4289 = vsel %vm587, %v4287, %v4288
    %v4290 = vrot.slane %v4209, 1
    %v4291 = vrot.slane %v4225, 1
    %v4292 = vsel %vm587, %v4290, %v4291
    %v4293 = vrot.slane %v4210, 1
    %v4294 = vrot.slane %v4226, 1
    %v4295 = vsel %vm587, %v4293, %v4294
    %v4296 = vrot.slane %v4211, 1
    %v4297 = vrot.slane %v4227, 1
    %v4298 = vsel %vm587, %v4296, %v4297
    %4299 = vrot.lane.b32.xlu0 %v4259, 16
    %v4300 = vpop.permute.xlu0 %4299
    %4301 = vrot.lane.b32.xlu0 %v4262, 16
    %v4302 = vpop.permute.xlu0 %4301
    %4303 = vrot.lane.b32.xlu0 %v4265, 16
    %v4304 = vpop.permute.xlu0 %4303
    %4305 = vrot.lane.b32.xlu0 %v4268, 16
    %v4306 = vpop.permute.xlu0 %4305
    %4307 = vrot.lane.b32.xlu0 %v4271, 16
    %v4308 = vpop.permute.xlu0 %4307
    %4309 = vrot.lane.b32.xlu0 %v4274, 16
    %v4310 = vpop.permute.xlu0 %4309
    %4311 = vrot.lane.b32.xlu0 %v4277, 16
    %v4312 = vpop.permute.xlu0 %4311
    %4313 = vrot.lane.b32.xlu0 %v4280, 16
    %v4314 = vpop.permute.xlu0 %4313
    %4315 = vrot.lane.b32.xlu0 %v4283, 16
    %v4316 = vpop.permute.xlu0 %4315
    %4317 = vrot.lane.b32.xlu0 %v4286, 16
    %v4318 = vpop.permute.xlu0 %4317
    %4319 = vrot.lane.b32.xlu0 %v4289, 16
    %v4320 = vpop.permute.xlu0 %4319
    %4321 = vrot.lane.b32.xlu0 %v4292, 16
    %v4322 = vpop.permute.xlu0 %4321
    %4323 = vrot.lane.b32.xlu0 %v4295, 16
    %v4324 = vpop.permute.xlu0 %4323
    %4325 = vrot.lane.b32.xlu0 %v4298, 16
    %v4326 = vpop.permute.xlu0 %4325
    %v4341 = vrot.slane %v4197, 2
    %v4342 = vrot.slane %v4213, 2
    %v4343 = vsel %vm678, %v4341, %v4342
    %v4344 = vrot.slane %v4198, 2
    %v4345 = vrot.slane %v4214, 2
    %v4346 = vsel %vm678, %v4344, %v4345
    %v4347 = vrot.slane %v4199, 2
    %v4348 = vrot.slane %v4215, 2
    %v4349 = vsel %vm678, %v4347, %v4348
    %v4350 = vrot.slane %v4200, 2
    %v4351 = vrot.slane %v4216, 2
    %v4352 = vsel %vm678, %v4350, %v4351
    %v4353 = vrot.slane %v4201, 2
    %v4354 = vrot.slane %v4217, 2
    %v4355 = vsel %vm678, %v4353, %v4354
    %v4356 = vrot.slane %v4202, 2
    %v4357 = vrot.slane %v4218, 2
    %v4358 = vsel %vm678, %v4356, %v4357
    %v4359 = vrot.slane %v4203, 2
    %v4360 = vrot.slane %v4219, 2
    %v4361 = vsel %vm678, %v4359, %v4360
    %v4362 = vrot.slane %v4205, 2
    %v4363 = vrot.slane %v4221, 2
    %v4364 = vsel %vm678, %v4362, %v4363
    %v4365 = vrot.slane %v4206, 2
    %v4366 = vrot.slane %v4222, 2
    %v4367 = vsel %vm678, %v4365, %v4366
    %v4368 = vrot.slane %v4207, 2
    %v4369 = vrot.slane %v4223, 2
    %v4370 = vsel %vm678, %v4368, %v4369
    %v4371 = vrot.slane %v4208, 2
    %v4372 = vrot.slane %v4224, 2
    %v4373 = vsel %vm678, %v4371, %v4372
    %v4374 = vrot.slane %v4209, 2
    %v4375 = vrot.slane %v4225, 2
    %v4376 = vsel %vm678, %v4374, %v4375
    %v4377 = vrot.slane %v4210, 2
    %v4378 = vrot.slane %v4226, 2
    %v4379 = vsel %vm678, %v4377, %v4378
    %v4380 = vrot.slane %v4211, 2
    %v4381 = vrot.slane %v4227, 2
    %v4382 = vsel %vm678, %v4380, %v4381
    %4383 = vrot.lane.b32.xlu0 %v4343, 32
    %v4384 = vpop.permute.xlu0 %4383
    %4385 = vrot.lane.b32.xlu0 %v4346, 32
    %v4386 = vpop.permute.xlu0 %4385
    %4387 = vrot.lane.b32.xlu0 %v4349, 32
    %v4388 = vpop.permute.xlu0 %4387
    %4389 = vrot.lane.b32.xlu0 %v4352, 32
    %v4390 = vpop.permute.xlu0 %4389
    %4391 = vrot.lane.b32.xlu0 %v4355, 32
    %v4392 = vpop.permute.xlu0 %4391
    %4393 = vrot.lane.b32.xlu0 %v4358, 32
    %v4394 = vpop.permute.xlu0 %4393
    %4395 = vrot.lane.b32.xlu0 %v4361, 32
    %v4396 = vpop.permute.xlu0 %4395
    %4397 = vrot.lane.b32.xlu0 %v4364, 32
    %v4398 = vpop.permute.xlu0 %4397
    %4399 = vrot.lane.b32.xlu0 %v4367, 32
    %v4400 = vpop.permute.xlu0 %4399
    %4401 = vrot.lane.b32.xlu0 %v4370, 32
    %v4402 = vpop.permute.xlu0 %4401
    %4403 = vrot.lane.b32.xlu0 %v4373, 32
    %v4404 = vpop.permute.xlu0 %4403
    %4405 = vrot.lane.b32.xlu0 %v4376, 32
    %v4406 = vpop.permute.xlu0 %4405
    %4407 = vrot.lane.b32.xlu0 %v4379, 32
    %v4408 = vpop.permute.xlu0 %4407
    %4409 = vrot.lane.b32.xlu0 %v4382, 32
    %v4410 = vpop.permute.xlu0 %4409
    %4427 = vrot.lane.b32.xlu0 %v4197, 48
    %v4428 = vpop.permute.xlu0 %4427
    %4429 = vrot.lane.b32.xlu0 %v4198, 48
    %v4430 = vpop.permute.xlu0 %4429
    %4431 = vrot.lane.b32.xlu0 %v4199, 48
    %v4432 = vpop.permute.xlu0 %4431
    %4433 = vrot.lane.b32.xlu0 %v4200, 48
    %v4434 = vpop.permute.xlu0 %4433
    %4435 = vrot.lane.b32.xlu0 %v4201, 48
    %v4436 = vpop.permute.xlu0 %4435
    %4437 = vrot.lane.b32.xlu0 %v4202, 48
    %v4438 = vpop.permute.xlu0 %4437
    %4439 = vrot.lane.b32.xlu0 %v4203, 48
    %v4440 = vpop.permute.xlu0 %4439
    %4441 = vrot.lane.b32.xlu0 %v4204, 48
    %v4442 = vpop.permute.xlu0 %4441
    %4443 = vrot.lane.b32.xlu0 %v4205, 48
    %v4444 = vpop.permute.xlu0 %4443
    %4445 = vrot.lane.b32.xlu0 %v4206, 48
    %v4446 = vpop.permute.xlu0 %4445
    %4447 = vrot.lane.b32.xlu0 %v4207, 48
    %v4448 = vpop.permute.xlu0 %4447
    %4449 = vrot.lane.b32.xlu0 %v4208, 48
    %v4450 = vpop.permute.xlu0 %4449
    %4451 = vrot.lane.b32.xlu0 %v4209, 48
    %v4452 = vpop.permute.xlu0 %4451
    %4453 = vrot.lane.b32.xlu0 %v4210, 48
    %v4454 = vpop.permute.xlu0 %4453
    %4455 = vrot.lane.b32.xlu0 %v4211, 48
    %v4456 = vpop.permute.xlu0 %4455
    %4457 = vrot.lane.b32.xlu0 %v4212, 48
    %v4458 = vpop.permute.xlu0 %4457
    %v4477 = vrot.slane %v4204, 1
    %v4478 = vrot.slane %v4220, 1
    %v4479 = vsel %vm587, %v4477, %v4478
    %v4480 = vrot.slane %v4212, 1
    %v4481 = vrot.slane %v4228, 1
    %v4482 = vsel %vm587, %v4480, %v4481
    %4483 = vrot.lane.b32.xlu0 %v4259, 64
    %v4484 = vpop.permute.xlu0 %4483
    %4485 = vrot.lane.b32.xlu0 %v4262, 64
    %v4486 = vpop.permute.xlu0 %4485
    %4487 = vrot.lane.b32.xlu0 %v4265, 64
    %v4488 = vpop.permute.xlu0 %4487
    %4489 = vrot.lane.b32.xlu0 %v4268, 64
    %v4490 = vpop.permute.xlu0 %4489
    %4491 = vrot.lane.b32.xlu0 %v4271, 64
    %v4492 = vpop.permute.xlu0 %4491
    %4493 = vrot.lane.b32.xlu0 %v4274, 64
    %v4494 = vpop.permute.xlu0 %4493
    %4495 = vrot.lane.b32.xlu0 %v4277, 64
    %v4496 = vpop.permute.xlu0 %4495
    %4497 = vrot.lane.b32.xlu0 %v4479, 64
    %v4498 = vpop.permute.xlu0 %4497
    %4499 = vrot.lane.b32.xlu0 %v4280, 64
    %v4500 = vpop.permute.xlu0 %4499
    %4501 = vrot.lane.b32.xlu0 %v4283, 64
    %v4502 = vpop.permute.xlu0 %4501
    %4503 = vrot.lane.b32.xlu0 %v4286, 64
    %v4504 = vpop.permute.xlu0 %4503
    %4505 = vrot.lane.b32.xlu0 %v4289, 64
    %v4506 = vpop.permute.xlu0 %4505
    %4507 = vrot.lane.b32.xlu0 %v4292, 64
    %v4508 = vpop.permute.xlu0 %4507
    %4509 = vrot.lane.b32.xlu0 %v4295, 64
    %v4510 = vpop.permute.xlu0 %4509
    %4511 = vrot.lane.b32.xlu0 %v4298, 64
    %v4512 = vpop.permute.xlu0 %4511
    %4513 = vrot.lane.b32.xlu0 %v4482, 64
    %v4514 = vpop.permute.xlu0 %4513
    %v4531 = vrot.slane %v4204, 2
    %v4532 = vrot.slane %v4220, 2
    %v4533 = vsel %vm678, %v4531, %v4532
    %v4534 = vrot.slane %v4212, 2
    %v4535 = vrot.slane %v4228, 2
    %v4536 = vsel %vm678, %v4534, %v4535
    %4537 = vrot.lane.b32.xlu0 %v4343, 80
    %v4538 = vpop.permute.xlu0 %4537
    %4539 = vrot.lane.b32.xlu0 %v4346, 80
    %v4540 = vpop.permute.xlu0 %4539
    %4541 = vrot.lane.b32.xlu0 %v4349, 80
    %v4542 = vpop.permute.xlu0 %4541
    %4543 = vrot.lane.b32.xlu0 %v4352, 80
    %v4544 = vpop.permute.xlu0 %4543
    %4545 = vrot.lane.b32.xlu0 %v4355, 80
    %v4546 = vpop.permute.xlu0 %4545
    %4547 = vrot.lane.b32.xlu0 %v4358, 80
    %v4548 = vpop.permute.xlu0 %4547
    %4549 = vrot.lane.b32.xlu0 %v4361, 80
    %v4550 = vpop.permute.xlu0 %4549
    %4551 = vrot.lane.b32.xlu0 %v4533, 80
    %v4552 = vpop.permute.xlu0 %4551
    %4553 = vrot.lane.b32.xlu0 %v4364, 80
    %v4554 = vpop.permute.xlu0 %4553
    %4555 = vrot.lane.b32.xlu0 %v4367, 80
    %v4556 = vpop.permute.xlu0 %4555
    %4557 = vrot.lane.b32.xlu0 %v4370, 80
    %v4558 = vpop.permute.xlu0 %4557
    %4559 = vrot.lane.b32.xlu0 %v4373, 80
    %v4560 = vpop.permute.xlu0 %4559
    %4561 = vrot.lane.b32.xlu0 %v4376, 80
    %v4562 = vpop.permute.xlu0 %4561
    %4563 = vrot.lane.b32.xlu0 %v4379, 80
    %v4564 = vpop.permute.xlu0 %4563
    %4565 = vrot.lane.b32.xlu0 %v4382, 80
    %v4566 = vpop.permute.xlu0 %4565
    %4567 = vrot.lane.b32.xlu0 %v4536, 80
    %v4568 = vpop.permute.xlu0 %4567
    %4585 = vrot.lane.b32.xlu0 %v4198, 96
    %v4586 = vpop.permute.xlu0 %4585
    %4587 = vrot.lane.b32.xlu0 %v4199, 96
    %v4588 = vpop.permute.xlu0 %4587
    %4589 = vrot.lane.b32.xlu0 %v4200, 96
    %v4590 = vpop.permute.xlu0 %4589
    %4591 = vrot.lane.b32.xlu0 %v4201, 96
    %v4592 = vpop.permute.xlu0 %4591
    %4593 = vrot.lane.b32.xlu0 %v4202, 96
    %v4594 = vpop.permute.xlu0 %4593
    %4595 = vrot.lane.b32.xlu0 %v4203, 96
    %v4596 = vpop.permute.xlu0 %4595
    %4597 = vrot.lane.b32.xlu0 %v4204, 96
    %v4598 = vpop.permute.xlu0 %4597
    %4599 = vrot.lane.b32.xlu0 %v4206, 96
    %v4600 = vpop.permute.xlu0 %4599
    %4601 = vrot.lane.b32.xlu0 %v4207, 96
    %v4602 = vpop.permute.xlu0 %4601
    %4603 = vrot.lane.b32.xlu0 %v4208, 96
    %v4604 = vpop.permute.xlu0 %4603
    %4605 = vrot.lane.b32.xlu0 %v4209, 96
    %v4606 = vpop.permute.xlu0 %4605
    %4607 = vrot.lane.b32.xlu0 %v4210, 96
    %v4608 = vpop.permute.xlu0 %4607
    %4609 = vrot.lane.b32.xlu0 %v4211, 96
    %v4610 = vpop.permute.xlu0 %4609
    %4611 = vrot.lane.b32.xlu0 %v4212, 96
    %v4612 = vpop.permute.xlu0 %4611
    %4627 = vrot.lane.b32.xlu0 %v4262, 112
    %v4628 = vpop.permute.xlu0 %4627
    %4629 = vrot.lane.b32.xlu0 %v4265, 112
    %v4630 = vpop.permute.xlu0 %4629
    %4631 = vrot.lane.b32.xlu0 %v4268, 112
    %v4632 = vpop.permute.xlu0 %4631
    %4633 = vrot.lane.b32.xlu0 %v4271, 112
    %v4634 = vpop.permute.xlu0 %4633
    %4635 = vrot.lane.b32.xlu0 %v4274, 112
    %v4636 = vpop.permute.xlu0 %4635
    %4637 = vrot.lane.b32.xlu0 %v4277, 112
    %v4638 = vpop.permute.xlu0 %4637
    %4639 = vrot.lane.b32.xlu0 %v4479, 112
    %v4640 = vpop.permute.xlu0 %4639
    %4641 = vrot.lane.b32.xlu0 %v4283, 112
    %v4642 = vpop.permute.xlu0 %4641
    %4643 = vrot.lane.b32.xlu0 %v4286, 112
    %v4644 = vpop.permute.xlu0 %4643
    %4645 = vrot.lane.b32.xlu0 %v4289, 112
    %v4646 = vpop.permute.xlu0 %4645
    %4647 = vrot.lane.b32.xlu0 %v4292, 112
    %v4648 = vpop.permute.xlu0 %4647
    %4649 = vrot.lane.b32.xlu0 %v4295, 112
    %v4650 = vpop.permute.xlu0 %4649
    %4651 = vrot.lane.b32.xlu0 %v4298, 112
    %v4652 = vpop.permute.xlu0 %4651
    %4653 = vrot.lane.b32.xlu0 %v4482, 112
    %v4654 = vpop.permute.xlu0 %4653
    %v4669 = vsel %vm2269, %v4197, %v4300
    %v4670 = vsel %vm2269, %v4198, %v4302
    %v4671 = vsel %vm2269, %v4199, %v4304
    %v4672 = vsel %vm2269, %v4200, %v4306
    %v4673 = vsel %vm2269, %v4201, %v4308
    %v4674 = vsel %vm2269, %v4202, %v4310
    %v4675 = vsel %vm2269, %v4203, %v4312
    %v4676 = vsel %vm2269, %v4205, %v4314
    %v4677 = vsel %vm2269, %v4206, %v4316
    %v4678 = vsel %vm2269, %v4207, %v4318
    %v4679 = vsel %vm2269, %v4208, %v4320
    %v4680 = vsel %vm2269, %v4209, %v4322
    %v4681 = vsel %vm2269, %v4210, %v4324
    %v4682 = vsel %vm2269, %v4211, %v4326
    %v4683 = vsel %vm987, %v4669, %v4384
    %v4684 = vsel %vm987, %v4670, %v4386
    %v4685 = vsel %vm987, %v4671, %v4388
    %v4686 = vsel %vm987, %v4672, %v4390
    %v4687 = vsel %vm987, %v4673, %v4392
    %v4688 = vsel %vm987, %v4674, %v4394
    %v4689 = vsel %vm987, %v4675, %v4396
    %v4690 = vsel %vm987, %v4676, %v4398
    %v4691 = vsel %vm987, %v4677, %v4400
    %v4692 = vsel %vm987, %v4678, %v4402
    %v4693 = vsel %vm987, %v4679, %v4404
    %v4694 = vsel %vm987, %v4680, %v4406
    %v4695 = vsel %vm987, %v4681, %v4408
    %v4696 = vsel %vm987, %v4682, %v4410
    %v4697 = vsel %vm2300, %v2285, %v4428
    %v4698 = vsel %vm2300, %v4683, %v4430
    %v4699 = vsel %vm2300, %v4684, %v4432
    %v4700 = vsel %vm2300, %v4685, %v4434
    %v4701 = vsel %vm2300, %v4686, %v4436
    %v4702 = vsel %vm2300, %v4687, %v4438
    %v4703 = vsel %vm2300, %v4688, %v4440
    %v4704 = vsel %vm2300, %v4689, %v4442
    %v4705 = vsel %vm2300, %v2285, %v4444
    %v4706 = vsel %vm2300, %v4690, %v4446
    %v4707 = vsel %vm2300, %v4691, %v4448
    %v4708 = vsel %vm2300, %v4692, %v4450
    %v4709 = vsel %vm2300, %v4693, %v4452
    %v4710 = vsel %vm2300, %v4694, %v4454
    %v4711 = vsel %vm2300, %v4695, %v4456
    %v4712 = vsel %vm2300, %v4696, %v4458
    %v4713 = vsel %vm1003, %v4697, %v4484
    %v4714 = vsel %vm1003, %v4698, %v4486
    %v4715 = vsel %vm1003, %v4699, %v4488
    %v4716 = vsel %vm1003, %v4700, %v4490
    %v4717 = vsel %vm1003, %v4701, %v4492
    %v4718 = vsel %vm1003, %v4702, %v4494
    %v4719 = vsel %vm1003, %v4703, %v4496
    %v4720 = vsel %vm1003, %v4704, %v4498
    %v4721 = vsel %vm1003, %v4705, %v4500
    %v4722 = vsel %vm1003, %v4706, %v4502
    %v4723 = vsel %vm1003, %v4707, %v4504
    %v4724 = vsel %vm1003, %v4708, %v4506
    %v4725 = vsel %vm1003, %v4709, %v4508
    %v4726 = vsel %vm1003, %v4710, %v4510
    %v4727 = vsel %vm1003, %v4711, %v4512
    %v4728 = vsel %vm1003, %v4712, %v4514
    %v4729 = vsel %vm2333, %v4713, %v4538
    %v4730 = vsel %vm2333, %v4714, %v4540
    %v4731 = vsel %vm2333, %v4715, %v4542
    %v4732 = vsel %vm2333, %v4716, %v4544
    %v4733 = vsel %vm2333, %v4717, %v4546
    %v4734 = vsel %vm2333, %v4718, %v4548
    %v4735 = vsel %vm2333, %v4719, %v4550
    %v4736 = vsel %vm2333, %v4720, %v4552
    %v4737 = vsel %vm2333, %v4721, %v4554
    %v4738 = vsel %vm2333, %v4722, %v4556
    %v4739 = vsel %vm2333, %v4723, %v4558
    %v4740 = vsel %vm2333, %v4724, %v4560
    %v4741 = vsel %vm2333, %v4725, %v4562
    %v4742 = vsel %vm2333, %v4726, %v4564
    %v4743 = vsel %vm2333, %v4727, %v4566
    %v4744 = vsel %vm2333, %v4728, %v4568
    %v4745 = vsel %vm1019, %v4729, %v4586
    %v4746 = vsel %vm1019, %v4730, %v4588
    %v4747 = vsel %vm1019, %v4731, %v4590
    %v4748 = vsel %vm1019, %v4732, %v4592
    %v4749 = vsel %vm1019, %v4733, %v4594
    %v4750 = vsel %vm1019, %v4734, %v4596
    %v4751 = vsel %vm1019, %v4735, %v4598
    %v4752 = vsel %vm1019, %v4736, %v2194
    %v4753 = vsel %vm1019, %v4737, %v4600
    %v4754 = vsel %vm1019, %v4738, %v4602
    %v4755 = vsel %vm1019, %v4739, %v4604
    %v4756 = vsel %vm1019, %v4740, %v4606
    %v4757 = vsel %vm1019, %v4741, %v4608
    %v4758 = vsel %vm1019, %v4742, %v4610
    %v4759 = vsel %vm1019, %v4743, %v4612
    %v4760 = vsel %vm1019, %v4744, %v2194
    %v4761 = vsel %vm2366, %v4745, %v4628
    %v4762 = vsel %vm2366, %v4746, %v4630
    %v4763 = vsel %vm2366, %v4747, %v4632
    %v4764 = vsel %vm2366, %v4748, %v4634
    %v4765 = vsel %vm2366, %v4749, %v4636
    %v4766 = vsel %vm2366, %v4750, %v4638
    %v4767 = vsel %vm2366, %v4751, %v4640
    %v4768 = vsel %vm2366, %v4752, %v2239
    %v4769 = vsel %vm2366, %v4753, %v4642
    %v4770 = vsel %vm2366, %v4754, %v4644
    %v4771 = vsel %vm2366, %v4755, %v4646
    %v4772 = vsel %vm2366, %v4756, %v4648
    %v4773 = vsel %vm2366, %v4757, %v4650
    %v4774 = vsel %vm2366, %v4758, %v4652
    %v4775 = vsel %vm2366, %v4759, %v4654
    %v4776 = vsel %vm2366, %v4760, %v2239
    %v4777 = vld [vmem:[%s12] sm:$0xff]
    %v4778 = vld [vmem:[%s12 + $0x8] sm:$0xff]
    %v4779 = vld [vmem:[%s12 + $0x10] sm:$0xff]
    %v4780 = vld [vmem:[%s12 + $0x18] sm:$0xff]
    %v4781 = vld [vmem:[%s12 + $0x20] sm:$0xff]
    %v4782 = vld [vmem:[%s12 + $0x28] sm:$0xff]
    %v4783 = vld [vmem:[%s12 + $0x30] sm:$0xff]
    %v4784 = vld [vmem:[%s12 + $0x38] sm:$0xff]
    %v4785 = vld [vmem:[%s12 + $0x40] sm:$0xff]
    %v4786 = vld [vmem:[%s12 + $0x48] sm:$0xff]
    %v4787 = vld [vmem:[%s12 + $0x50] sm:$0xff]
    %v4788 = vld [vmem:[%s12 + $0x58] sm:$0xff]
    %v4789 = vld [vmem:[%s12 + $0x60] sm:$0xff]
    %v4790 = vld [vmem:[%s12 + $0x68] sm:$0xff]
    %v4791 = vld [vmem:[%s12 + $0x70] sm:$0xff]
    %v4792 = vld [vmem:[%s12 + $0x78] sm:$0xff]
    %v4793 = vld [vmem:[%s12 + $0x80] sm:$0xff]
    %v4794 = vld [vmem:[%s12 + $0x88] sm:$0xff]
    %v4795 = vsel %vm2269, %v4346, 0
    %v4797 = vsel %vm2269, %v4349, 0
    %v4799 = vsel %vm2269, %v4352, 0
    %v4801 = vsel %vm2269, %v4355, 0
    %v4803 = vsel %vm2269, %v4358, 0
    %v4805 = vsel %vm2269, %v4361, 0
    %v4807 = vsel %vm2269, %v4533, 0
    %v4809 = vsel %vm2269, %v4367, 0
    %v4811 = vsel %vm2269, %v4370, 0
    %v4813 = vsel %vm2269, %v4373, 0
    %v4815 = vsel %vm2269, %v4376, 0
    %v4817 = vsel %vm2269, %v4379, 0
    %v4819 = vsel %vm2269, %v4382, 0
    %v4821 = vsel %vm2269, %v4536, 0
    %4823 = vmatpush.msra.mxu0 %v4792
    %4824 = vmatpush.msra.mxu0 %v4791
    %4825 = vmatpush.msra.mxu0 %v4790
    %4826 = vmatpush.msra.mxu0 %v4789
    %4827 = vmatpush.msra.mxu0 %v4788
    %4828 = vmatpush.msra.mxu0 %v4787
    %4829 = vmatpush.msra.mxu0 %v4786
    %4830 = vmatpush.msra.mxu0 %v4785
    %4831 = vmatpush.msra.mxu0 %v4784
    %4832 = vmatpush.msra.mxu0 %v4783
    %4833 = vmatpush.msra.mxu0 %v4782
    %4834 = vmatpush.msra.mxu0 %v4781
    %4835 = vmatpush.msra.mxu0 %v4780
    %4836 = vmatpush.msra.mxu0 %v4779
    %4837 = vmatpush.msra.mxu0 %v4778
    %4838 = vmatpush.msra.mxu0 %v4777
    %4839 = vmatmul.f32.gmra.mxu0 %v4761
    %v4840 = vpop.f32.mrf.mxu0
    %v4841 = vadd.f32 0.0, %v4840
    %4842 = vmatmul.f32.gmra.mxu0 %v4762
    %v4843 = vpop.f32.mrf.mxu0
    %v4844 = vadd.f32 0.0, %v4843
    %4845 = vmatmul.f32.gmra.mxu0 %v4763
    %v4846 = vpop.f32.mrf.mxu0
    %v4847 = vadd.f32 0.0, %v4846
    %4848 = vmatmul.f32.gmra.mxu0 %v4764
    %v4849 = vpop.f32.mrf.mxu0
    %v4850 = vadd.f32 0.0, %v4849
    %4851 = vmatmul.f32.gmra.mxu0 %v4765
    %v4852 = vpop.f32.mrf.mxu0
    %v4853 = vadd.f32 0.0, %v4852
    %4854 = vmatmul.f32.gmra.mxu0 %v4766
    %v4855 = vpop.f32.mrf.mxu0
    %v4856 = vadd.f32 0.0, %v4855
    %4857 = vmatmul.f32.gmra.mxu0 %v4767
    %v4858 = vpop.f32.mrf.mxu0
    %v4859 = vadd.f32 0.0, %v4858
    %4860 = vmatmul.f32.gmra.mxu0 %v4768
    %v4861 = vpop.f32.mrf.mxu0
    %v4862 = vadd.f32 0.0, %v4861
    %4863 = vmatmul.f32.gmra.mxu0 %v4769
    %v4864 = vpop.f32.mrf.mxu0
    %v4865 = vadd.f32 0.0, %v4864
    %4866 = vmatmul.f32.gmra.mxu0 %v4770
    %v4867 = vpop.f32.mrf.mxu0
    %v4868 = vadd.f32 0.0, %v4867
    %4869 = vmatmul.f32.gmra.mxu0 %v4771
    %v4870 = vpop.f32.mrf.mxu0
    %v4871 = vadd.f32 0.0, %v4870
    %4872 = vmatmul.f32.gmra.mxu0 %v4772
    %v4873 = vpop.f32.mrf.mxu0
    %v4874 = vadd.f32 0.0, %v4873
    %4875 = vmatmul.f32.gmra.mxu0 %v4773
    %v4876 = vpop.f32.mrf.mxu0
    %v4877 = vadd.f32 0.0, %v4876
    %4878 = vmatmul.f32.gmra.mxu0 %v4774
    %v4879 = vpop.f32.mrf.mxu0
    %v4880 = vadd.f32 0.0, %v4879
    %4881 = vmatmul.f32.gmra.mxu0 %v4775
    %v4882 = vpop.f32.mrf.mxu0
    %v4883 = vadd.f32 0.0, %v4882
    %4884 = vmatmul.f32.gmra.mxu0 %v4776
    %v4885 = vpop.f32.mrf.mxu0
    %v4886 = vadd.f32 0.0, %v4885
    %4887 = vdwg.mxu0
    %4888 = vmatpush.msra.mxu0 0.0
    %4889 = vmatpush.msra.mxu0 0.0
    %4890 = vmatpush.msra.mxu0 0.0
    %4891 = vmatpush.msra.mxu0 0.0
    %4892 = vmatpush.msra.mxu0 0.0
    %4893 = vmatpush.msra.mxu0 0.0
    %4894 = vmatpush.msra.mxu0 0.0
    %4895 = vmatpush.msra.mxu0 0.0
    %4896 = vmatpush.msra.mxu0 0.0
    %4897 = vmatpush.msra.mxu0 0.0
    %4898 = vmatpush.msra.mxu0 0.0
    %4899 = vmatpush.msra.mxu0 0.0
    %4900 = vmatpush.msra.mxu0 0.0
    %4901 = vmatpush.msra.mxu0 0.0
    %4902 = vmatpush.msra.mxu0 %v4794
    %4903 = vmatpush.msra.mxu0 %v4793
    %4904 = vmatmul.f32.gmra.mxu0 %v4795
    %v4905 = vpop.f32.mrf.mxu0
    %v4906 = vadd.f32 %v4841, %v4905
    %4907 = vmatmul.f32.gmra.mxu0 %v4797
    %v4908 = vpop.f32.mrf.mxu0
    %v4909 = vadd.f32 %v4844, %v4908
    %4910 = vmatmul.f32.gmra.mxu0 %v4799
    %v4911 = vpop.f32.mrf.mxu0
    %v4912 = vadd.f32 %v4847, %v4911
    %4913 = vmatmul.f32.gmra.mxu0 %v4801
    %v4914 = vpop.f32.mrf.mxu0
    %v4915 = vadd.f32 %v4850, %v4914
    %4916 = vmatmul.f32.gmra.mxu0 %v4803
    %v4917 = vpop.f32.mrf.mxu0
    %v4918 = vadd.f32 %v4853, %v4917
    %4919 = vmatmul.f32.gmra.mxu0 %v4805
    %v4920 = vpop.f32.mrf.mxu0
    %v4921 = vadd.f32 %v4856, %v4920
    %4922 = vmatmul.f32.gmra.mxu0 %v4807
    %v4923 = vpop.f32.mrf.mxu0
    %v4924 = vadd.f32 %v4859, %v4923
    %4925 = vmatmul.f32.gmra.mxu0 %v2415
    %v4926 = vpop.f32.mrf.mxu0
    %v4927 = vadd.f32 %v4862, %v4926
    %4928 = vmatmul.f32.gmra.mxu0 %v4809
    %v4929 = vpop.f32.mrf.mxu0
    %v4930 = vadd.f32 %v4865, %v4929
    %4931 = vmatmul.f32.gmra.mxu0 %v4811
    %v4932 = vpop.f32.mrf.mxu0
    %v4933 = vadd.f32 %v4868, %v4932
    %4934 = vmatmul.f32.gmra.mxu0 %v4813
    %v4935 = vpop.f32.mrf.mxu0
    %v4936 = vadd.f32 %v4871, %v4935
    %4937 = vmatmul.f32.gmra.mxu0 %v4815
    %v4938 = vpop.f32.mrf.mxu0
    %v4939 = vadd.f32 %v4874, %v4938
    %4940 = vmatmul.f32.gmra.mxu0 %v4817
    %v4941 = vpop.f32.mrf.mxu0
    %v4942 = vadd.f32 %v4877, %v4941
    %4943 = vmatmul.f32.gmra.mxu0 %v4819
    %v4944 = vpop.f32.mrf.mxu0
    %v4945 = vadd.f32 %v4880, %v4944
    %4946 = vmatmul.f32.gmra.mxu0 %v4821
    %v4947 = vpop.f32.mrf.mxu0
    %v4948 = vadd.f32 %v4883, %v4947
    %4949 = vmatmul.f32.gmra.mxu0 %v2415
    %v4950 = vpop.f32.mrf.mxu0
    %v4951 = vadd.f32 %v4886, %v4950
    %4952 = vdwg.mxu0
    %v4953 = vld [vmem:[%s13] sm:$0x1]
    %v4955 = vperm.slane %v4953, 0
    %v4957 = vmul.f32 %v4906, %v4955
    %v4958 = vmul.f32 %v4909, %v4955
    %v4959 = vmul.f32 %v4912, %v4955
    %v4960 = vmul.f32 %v4915, %v4955
    %v4961 = vmul.f32 %v4918, %v4955
    %v4962 = vmul.f32 %v4921, %v4955
    %v4963 = vmul.f32 %v4924, %v4955
    %v4964 = vmul.f32 %v4927, %v4955
    %v4965 = vmul.f32 %v4930, %v4955
    %v4966 = vmul.f32 %v4933, %v4955
    %v4967 = vmul.f32 %v4936, %v4955
    %v4968 = vmul.f32 %v4939, %v4955
    %v4969 = vmul.f32 %v4942, %v4955
    %v4970 = vmul.f32 %v4945, %v4955
    %v4971 = vmul.f32 %v4948, %v4955
    %v4972 = vmul.f32 %v4951, %v4955
    %v4973 = vld [vmem:[%s14] sm:$0x1]
    %v4975 = vperm.slane %v4973, 0
    %v4977 = vadd.f32 %v4957, %v4975
    %v4978 = vadd.f32 %v4958, %v4975
    %v4979 = vadd.f32 %v4959, %v4975
    %v4980 = vadd.f32 %v4960, %v4975
    %v4981 = vadd.f32 %v4961, %v4975
    %v4982 = vadd.f32 %v4962, %v4975
    %v4983 = vadd.f32 %v4963, %v4975
    %v4984 = vadd.f32 %v4964, %v4975
    %v4985 = vadd.f32 %v4965, %v4975
    %v4986 = vadd.f32 %v4966, %v4975
    %v4987 = vadd.f32 %v4967, %v4975
    %v4988 = vadd.f32 %v4968, %v4975
    %v4989 = vadd.f32 %v4969, %v4975
    %v4990 = vadd.f32 %v4970, %v4975
    %v4991 = vadd.f32 %v4971, %v4975
    %v4992 = vadd.f32 %v4972, %v4975
    %v4993 = vmin.f32 %v4977, 20.0
    %v4994 = vmin.f32 %v4978, 20.0
    %v4995 = vmin.f32 %v4979, 20.0
    %v4996 = vmin.f32 %v4980, 20.0
    %v4997 = vmin.f32 %v4981, 20.0
    %v4998 = vmin.f32 %v4982, 20.0
    %v4999 = vmin.f32 %v4983, 20.0
    %v5000 = vmin.f32 %v4984, 20.0
    %v5001 = vmin.f32 %v4985, 20.0
    %v5002 = vmin.f32 %v4986, 20.0
    %v5003 = vmin.f32 %v4987, 20.0
    %v5004 = vmin.f32 %v4988, 20.0
    %v5005 = vmin.f32 %v4989, 20.0
    %v5006 = vmin.f32 %v4990, 20.0
    %v5007 = vmin.f32 %v4991, 20.0
    %v5008 = vmin.f32 %v4992, 20.0
    %v5009 = vmul.f32 %v4993, 1.442695
    %v5010 = vpow.pop %v5009
    %v5011 = vmul.f32 %v4994, 1.442695
    %v5012 = vpow.pop %v5011
    %v5013 = vmul.f32 %v4995, 1.442695
    %v5014 = vpow.pop %v5013
    %v5015 = vmul.f32 %v4996, 1.442695
    %v5016 = vpow.pop %v5015
    %v5017 = vmul.f32 %v4997, 1.442695
    %v5018 = vpow.pop %v5017
    %v5019 = vmul.f32 %v4998, 1.442695
    %v5020 = vpow.pop %v5019
    %v5021 = vmul.f32 %v4999, 1.442695
    %v5022 = vpow.pop %v5021
    %v5023 = vmul.f32 %v5000, 1.442695
    %v5024 = vpow.pop %v5023
    %v5025 = vmul.f32 %v5001, 1.442695
    %v5026 = vpow.pop %v5025
    %v5027 = vmul.f32 %v5002, 1.442695
    %v5028 = vpow.pop %v5027
    %v5029 = vmul.f32 %v5003, 1.442695
    %v5030 = vpow.pop %v5029
    %v5031 = vmul.f32 %v5004, 1.442695
    %v5032 = vpow.pop %v5031
    %v5033 = vmul.f32 %v5005, 1.442695
    %v5034 = vpow.pop %v5033
    %v5035 = vmul.f32 %v5006, 1.442695
    %v5036 = vpow.pop %v5035
    %v5037 = vmul.f32 %v5007, 1.442695
    %v5038 = vpow.pop %v5037
    %v5039 = vmul.f32 %v5008, 1.442695
    %v5040 = vpow.pop %v5039
    %v5041 = vadd.f32 %v5010, 2.0
    %v5042 = vadd.f32 %v5012, 2.0
    %v5043 = vadd.f32 %v5014, 2.0
    %v5044 = vadd.f32 %v5016, 2.0
    %v5045 = vadd.f32 %v5018, 2.0
    %v5046 = vadd.f32 %v5020, 2.0
    %v5047 = vadd.f32 %v5022, 2.0
    %v5048 = vadd.f32 %v5024, 2.0
    %v5049 = vadd.f32 %v5026, 2.0
    %v5050 = vadd.f32 %v5028, 2.0
    %v5051 = vadd.f32 %v5030, 2.0
    %v5052 = vadd.f32 %v5032, 2.0
    %v5053 = vadd.f32 %v5034, 2.0
    %v5054 = vadd.f32 %v5036, 2.0
    %v5055 = vadd.f32 %v5038, 2.0
    %v5056 = vadd.f32 %v5040, 2.0
    %v5057 = vmul.f32 %v5010, %v5041
    %v5058 = vmul.f32 %v5012, %v5042
    %v5059 = vmul.f32 %v5014, %v5043
    %v5060 = vmul.f32 %v5016, %v5044
    %v5061 = vmul.f32 %v5018, %v5045
    %v5062 = vmul.f32 %v5020, %v5046
    %v5063 = vmul.f32 %v5022, %v5047
    %v5064 = vmul.f32 %v5024, %v5048
    %v5065 = vmul.f32 %v5026, %v5049
    %v5066 = vmul.f32 %v5028, %v5050
    %v5067 = vmul.f32 %v5030, %v5051
    %v5068 = vmul.f32 %v5032, %v5052
    %v5069 = vmul.f32 %v5034, %v5053
    %v5070 = vmul.f32 %v5036, %v5054
    %v5071 = vmul.f32 %v5038, %v5055
    %v5072 = vmul.f32 %v5040, %v5056
    %v5073 = vadd.f32 %v5057, 2.0
    %v5074 = vadd.f32 %v5058, 2.0
    %v5075 = vadd.f32 %v5059, 2.0
    %v5076 = vadd.f32 %v5060, 2.0
    %v5077 = vadd.f32 %v5061, 2.0
    %v5078 = vadd.f32 %v5062, 2.0
    %v5079 = vadd.f32 %v5063, 2.0
    %v5080 = vadd.f32 %v5064, 2.0
    %v5081 = vadd.f32 %v5065, 2.0
    %v5082 = vadd.f32 %v5066, 2.0
    %v5083 = vadd.f32 %v5067, 2.0
    %v5084 = vadd.f32 %v5068, 2.0
    %v5085 = vadd.f32 %v5069, 2.0
    %v5086 = vadd.f32 %v5070, 2.0
    %v5087 = vadd.f32 %v5071, 2.0
    %v5088 = vadd.f32 %v5072, 2.0
    %v5089 = vrcp.pop %v5073
    %v5090 = vmul.f32 %v5073, %v5089
    %v5091 = vsub.f32 1.0, %v5090
    %v5092 = vmul.f32 %v5089, %v5091
    %v5093 = vadd.f32 %v5089, %v5092
    %vm5094 = vweird.f32 %v5073
    %vm5095 = vweird.f32 %v5089
    %vm5096 = vmor %vm5094, %vm5095
    %v5097 = vsel %vm5096, %v5089, %v5093
    %v5098 = vand.u32 2147483647, %v5073
    %vm5099 = vcmp.eq.f32.partialorder %v5098, 8.507059e+37
    %v5100 = vand.u32 %v5073, 2147483648
    %v5101 = vor.u32 1.1754944e-38, %v5100
    %v5102 = vsel %vm5099, %v5101, %v5097
    %v5103 = vmul.f32 %v5057, %v5102
    %v5104 = vrcp.pop %v5074
    %v5105 = vmul.f32 %v5074, %v5104
    %v5106 = vsub.f32 1.0, %v5105
    %v5107 = vmul.f32 %v5104, %v5106
    %v5108 = vadd.f32 %v5104, %v5107
    %vm5109 = vweird.f32 %v5074
    %vm5110 = vweird.f32 %v5104
    %vm5111 = vmor %vm5109, %vm5110
    %v5112 = vsel %vm5111, %v5104, %v5108
    %v5113 = vand.u32 2147483647, %v5074
    %vm5114 = vcmp.eq.f32.partialorder %v5113, 8.507059e+37
    %v5115 = vand.u32 %v5074, 2147483648
    %v5116 = vor.u32 1.1754944e-38, %v5115
    %v5117 = vsel %vm5114, %v5116, %v5112
    %v5118 = vmul.f32 %v5058, %v5117
    %v5119 = vrcp.pop %v5075
    %v5120 = vmul.f32 %v5075, %v5119
    %v5121 = vsub.f32 1.0, %v5120
    %v5122 = vmul.f32 %v5119, %v5121
    %v5123 = vadd.f32 %v5119, %v5122
    %vm5124 = vweird.f32 %v5075
    %vm5125 = vweird.f32 %v5119
    %vm5126 = vmor %vm5124, %vm5125
    %v5127 = vsel %vm5126, %v5119, %v5123
    %v5128 = vand.u32 2147483647, %v5075
    %vm5129 = vcmp.eq.f32.partialorder %v5128, 8.507059e+37
    %v5130 = vand.u32 %v5075, 2147483648
    %v5131 = vor.u32 1.1754944e-38, %v5130
    %v5132 = vsel %vm5129, %v5131, %v5127
    %v5133 = vmul.f32 %v5059, %v5132
    %v5134 = vrcp.pop %v5076
    %v5135 = vmul.f32 %v5076, %v5134
    %v5136 = vsub.f32 1.0, %v5135
    %v5137 = vmul.f32 %v5134, %v5136
    %v5138 = vadd.f32 %v5134, %v5137
    %vm5139 = vweird.f32 %v5076
    %vm5140 = vweird.f32 %v5134
    %vm5141 = vmor %vm5139, %vm5140
    %v5142 = vsel %vm5141, %v5134, %v5138
    %v5143 = vand.u32 2147483647, %v5076
    %vm5144 = vcmp.eq.f32.partialorder %v5143, 8.507059e+37
    %v5145 = vand.u32 %v5076, 2147483648
    %v5146 = vor.u32 1.1754944e-38, %v5145
    %v5147 = vsel %vm5144, %v5146, %v5142
    %v5148 = vmul.f32 %v5060, %v5147
    %v5149 = vrcp.pop %v5077
    %v5150 = vmul.f32 %v5077, %v5149
    %v5151 = vsub.f32 1.0, %v5150
    %v5152 = vmul.f32 %v5149, %v5151
    %v5153 = vadd.f32 %v5149, %v5152
    %vm5154 = vweird.f32 %v5077
    %vm5155 = vweird.f32 %v5149
    %vm5156 = vmor %vm5154, %vm5155
    %v5157 = vsel %vm5156, %v5149, %v5153
    %v5158 = vand.u32 2147483647, %v5077
    %vm5159 = vcmp.eq.f32.partialorder %v5158, 8.507059e+37
    %v5160 = vand.u32 %v5077, 2147483648
    %v5161 = vor.u32 1.1754944e-38, %v5160
    %v5162 = vsel %vm5159, %v5161, %v5157
    %v5163 = vmul.f32 %v5061, %v5162
    %v5164 = vrcp.pop %v5078
    %v5165 = vmul.f32 %v5078, %v5164
    %v5166 = vsub.f32 1.0, %v5165
    %v5167 = vmul.f32 %v5164, %v5166
    %v5168 = vadd.f32 %v5164, %v5167
    %vm5169 = vweird.f32 %v5078
    %vm5170 = vweird.f32 %v5164
    %vm5171 = vmor %vm5169, %vm5170
    %v5172 = vsel %vm5171, %v5164, %v5168
    %v5173 = vand.u32 2147483647, %v5078
    %vm5174 = vcmp.eq.f32.partialorder %v5173, 8.507059e+37
    %v5175 = vand.u32 %v5078, 2147483648
    %v5176 = vor.u32 1.1754944e-38, %v5175
    %v5177 = vsel %vm5174, %v5176, %v5172
    %v5178 = vmul.f32 %v5062, %v5177
    %v5179 = vrcp.pop %v5079
    %v5180 = vmul.f32 %v5079, %v5179
    %v5181 = vsub.f32 1.0, %v5180
    %v5182 = vmul.f32 %v5179, %v5181
    %v5183 = vadd.f32 %v5179, %v5182
    %vm5184 = vweird.f32 %v5079
    %vm5185 = vweird.f32 %v5179
    %vm5186 = vmor %vm5184, %vm5185
    %v5187 = vsel %vm5186, %v5179, %v5183
    %v5188 = vand.u32 2147483647, %v5079
    %vm5189 = vcmp.eq.f32.partialorder %v5188, 8.507059e+37
    %v5190 = vand.u32 %v5079, 2147483648
    %v5191 = vor.u32 1.1754944e-38, %v5190
    %v5192 = vsel %vm5189, %v5191, %v5187
    %v5193 = vmul.f32 %v5063, %v5192
    %v5194 = vrcp.pop %v5080
    %v5195 = vmul.f32 %v5080, %v5194
    %v5196 = vsub.f32 1.0, %v5195
    %v5197 = vmul.f32 %v5194, %v5196
    %v5198 = vadd.f32 %v5194, %v5197
    %vm5199 = vweird.f32 %v5080
    %vm5200 = vweird.f32 %v5194
    %vm5201 = vmor %vm5199, %vm5200
    %v5202 = vsel %vm5201, %v5194, %v5198
    %v5203 = vand.u32 2147483647, %v5080
    %vm5204 = vcmp.eq.f32.partialorder %v5203, 8.507059e+37
    %v5205 = vand.u32 %v5080, 2147483648
    %v5206 = vor.u32 1.1754944e-38, %v5205
    %v5207 = vsel %vm5204, %v5206, %v5202
    %v5208 = vmul.f32 %v5064, %v5207
    %v5209 = vrcp.pop %v5081
    %v5210 = vmul.f32 %v5081, %v5209
    %v5211 = vsub.f32 1.0, %v5210
    %v5212 = vmul.f32 %v5209, %v5211
    %v5213 = vadd.f32 %v5209, %v5212
    %vm5214 = vweird.f32 %v5081
    %vm5215 = vweird.f32 %v5209
    %vm5216 = vmor %vm5214, %vm5215
    %v5217 = vsel %vm5216, %v5209, %v5213
    %v5218 = vand.u32 2147483647, %v5081
    %vm5219 = vcmp.eq.f32.partialorder %v5218, 8.507059e+37
    %v5220 = vand.u32 %v5081, 2147483648
    %v5221 = vor.u32 1.1754944e-38, %v5220
    %v5222 = vsel %vm5219, %v5221, %v5217
    %v5223 = vmul.f32 %v5065, %v5222
    %v5224 = vrcp.pop %v5082
    %v5225 = vmul.f32 %v5082, %v5224
    %v5226 = vsub.f32 1.0, %v5225
    %v5227 = vmul.f32 %v5224, %v5226
    %v5228 = vadd.f32 %v5224, %v5227
    %vm5229 = vweird.f32 %v5082
    %vm5230 = vweird.f32 %v5224
    %vm5231 = vmor %vm5229, %vm5230
    %v5232 = vsel %vm5231, %v5224, %v5228
    %v5233 = vand.u32 2147483647, %v5082
    %vm5234 = vcmp.eq.f32.partialorder %v5233, 8.507059e+37
    %v5235 = vand.u32 %v5082, 2147483648
    %v5236 = vor.u32 1.1754944e-38, %v5235
    %v5237 = vsel %vm5234, %v5236, %v5232
    %v5238 = vmul.f32 %v5066, %v5237
    %v5239 = vrcp.pop %v5083
    %v5240 = vmul.f32 %v5083, %v5239
    %v5241 = vsub.f32 1.0, %v5240
    %v5242 = vmul.f32 %v5239, %v5241
    %v5243 = vadd.f32 %v5239, %v5242
    %vm5244 = vweird.f32 %v5083
    %vm5245 = vweird.f32 %v5239
    %vm5246 = vmor %vm5244, %vm5245
    %v5247 = vsel %vm5246, %v5239, %v5243
    %v5248 = vand.u32 2147483647, %v5083
    %vm5249 = vcmp.eq.f32.partialorder %v5248, 8.507059e+37
    %v5250 = vand.u32 %v5083, 2147483648
    %v5251 = vor.u32 1.1754944e-38, %v5250
    %v5252 = vsel %vm5249, %v5251, %v5247
    %v5253 = vmul.f32 %v5067, %v5252
    %v5254 = vrcp.pop %v5084
    %v5255 = vmul.f32 %v5084, %v5254
    %v5256 = vsub.f32 1.0, %v5255
    %v5257 = vmul.f32 %v5254, %v5256
    %v5258 = vadd.f32 %v5254, %v5257
    %vm5259 = vweird.f32 %v5084
    %vm5260 = vweird.f32 %v5254
    %vm5261 = vmor %vm5259, %vm5260
    %v5262 = vsel %vm5261, %v5254, %v5258
    %v5263 = vand.u32 2147483647, %v5084
    %vm5264 = vcmp.eq.f32.partialorder %v5263, 8.507059e+37
    %v5265 = vand.u32 %v5084, 2147483648
    %v5266 = vor.u32 1.1754944e-38, %v5265
    %v5267 = vsel %vm5264, %v5266, %v5262
    %v5268 = vmul.f32 %v5068, %v5267
    %v5269 = vrcp.pop %v5085
    %v5270 = vmul.f32 %v5085, %v5269
    %v5271 = vsub.f32 1.0, %v5270
    %v5272 = vmul.f32 %v5269, %v5271
    %v5273 = vadd.f32 %v5269, %v5272
    %vm5274 = vweird.f32 %v5085
    %vm5275 = vweird.f32 %v5269
    %vm5276 = vmor %vm5274, %vm5275
    %v5277 = vsel %vm5276, %v5269, %v5273
    %v5278 = vand.u32 2147483647, %v5085
    %vm5279 = vcmp.eq.f32.partialorder %v5278, 8.507059e+37
    %v5280 = vand.u32 %v5085, 2147483648
    %v5281 = vor.u32 1.1754944e-38, %v5280
    %v5282 = vsel %vm5279, %v5281, %v5277
    %v5283 = vmul.f32 %v5069, %v5282
    %v5284 = vrcp.pop %v5086
    %v5285 = vmul.f32 %v5086, %v5284
    %v5286 = vsub.f32 1.0, %v5285
    %v5287 = vmul.f32 %v5284, %v5286
    %v5288 = vadd.f32 %v5284, %v5287
    %vm5289 = vweird.f32 %v5086
    %vm5290 = vweird.f32 %v5284
    %vm5291 = vmor %vm5289, %vm5290
    %v5292 = vsel %vm5291, %v5284, %v5288
    %v5293 = vand.u32 2147483647, %v5086
    %vm5294 = vcmp.eq.f32.partialorder %v5293, 8.507059e+37
    %v5295 = vand.u32 %v5086, 2147483648
    %v5296 = vor.u32 1.1754944e-38, %v5295
    %v5297 = vsel %vm5294, %v5296, %v5292
    %v5298 = vmul.f32 %v5070, %v5297
    %v5299 = vrcp.pop %v5087
    %v5300 = vmul.f32 %v5087, %v5299
    %v5301 = vsub.f32 1.0, %v5300
    %v5302 = vmul.f32 %v5299, %v5301
    %v5303 = vadd.f32 %v5299, %v5302
    %vm5304 = vweird.f32 %v5087
    %vm5305 = vweird.f32 %v5299
    %vm5306 = vmor %vm5304, %vm5305
    %v5307 = vsel %vm5306, %v5299, %v5303
    %v5308 = vand.u32 2147483647, %v5087
    %vm5309 = vcmp.eq.f32.partialorder %v5308, 8.507059e+37
    %v5310 = vand.u32 %v5087, 2147483648
    %v5311 = vor.u32 1.1754944e-38, %v5310
    %v5312 = vsel %vm5309, %v5311, %v5307
    %v5313 = vmul.f32 %v5071, %v5312
    %v5314 = vrcp.pop %v5088
    %v5315 = vmul.f32 %v5088, %v5314
    %v5316 = vsub.f32 1.0, %v5315
    %v5317 = vmul.f32 %v5314, %v5316
    %v5318 = vadd.f32 %v5314, %v5317
    %vm5319 = vweird.f32 %v5088
    %vm5320 = vweird.f32 %v5314
    %vm5321 = vmor %vm5319, %vm5320
    %v5322 = vsel %vm5321, %v5314, %v5318
    %v5323 = vand.u32 2147483647, %v5088
    %vm5324 = vcmp.eq.f32.partialorder %v5323, 8.507059e+37
    %v5325 = vand.u32 %v5088, 2147483648
    %v5326 = vor.u32 1.1754944e-38, %v5325
    %v5327 = vsel %vm5324, %v5326, %v5322
    %v5328 = vmul.f32 %v5072, %v5327
    %v5329 = vmul.f32 %v4977, %v5103
    %v5330 = vmul.f32 %v4978, %v5118
    %v5331 = vmul.f32 %v4979, %v5133
    %v5332 = vmul.f32 %v4980, %v5148
    %v5333 = vmul.f32 %v4981, %v5163
    %v5334 = vmul.f32 %v4982, %v5178
    %v5335 = vmul.f32 %v4983, %v5193
    %v5336 = vmul.f32 %v4984, %v5208
    %v5337 = vmul.f32 %v4985, %v5223
    %v5338 = vmul.f32 %v4986, %v5238
    %v5339 = vmul.f32 %v4987, %v5253
    %v5340 = vmul.f32 %v4988, %v5268
    %v5341 = vmul.f32 %v4989, %v5283
    %v5342 = vmul.f32 %v4990, %v5298
    %v5343 = vmul.f32 %v4991, %v5313
    %v5344 = vmul.f32 %v4992, %v5328
    %v5361 = vrot.slane %v5329, 7
    %v5362 = vrot.slane %v5330, 7
    %v5363 = vrot.slane %v5331, 7
    %v5364 = vrot.slane %v5332, 7
    %v5365 = vrot.slane %v5333, 7
    %v5366 = vrot.slane %v5334, 7
    %v5367 = vrot.slane %v5335, 7
    %v5368 = vrot.slane %v5336, 7
    %v5369 = vrot.slane %v5337, 7
    %v5370 = vrot.slane %v5338, 7
    %v5371 = vrot.slane %v5339, 7
    %v5372 = vrot.slane %v5340, 7
    %v5373 = vrot.slane %v5341, 7
    %v5374 = vrot.slane %v5342, 7
    %v5375 = vrot.slane %v5343, 7
    %v5376 = vrot.slane %v5344, 7
    %v5393 = vsel %vm522, 0.0, %v5361
    %v5394 = vsel %vm522, 0.0, %v5362
    %v5395 = vsel %vm522, 0.0, %v5363
    %v5396 = vsel %vm522, 0.0, %v5364
    %v5397 = vsel %vm522, 0.0, %v5365
    %v5398 = vsel %vm522, 0.0, %v5366
    %v5399 = vsel %vm522, 0.0, %v5367
    %v5400 = vsel %vm522, 0.0, %v5368
    %v5401 = vsel %vm522, 0.0, %v5369
    %v5402 = vsel %vm522, 0.0, %v5370
    %v5403 = vsel %vm522, 0.0, %v5371
    %v5404 = vsel %vm522, 0.0, %v5372
    %v5405 = vsel %vm522, 0.0, %v5373
    %v5406 = vsel %vm522, 0.0, %v5374
    %v5407 = vsel %vm522, 0.0, %v5375
    %v5408 = vsel %vm522, 0.0, %v5376
    %v5409 = vsel %vm522, %v5361, 0.0
    %v5410 = vsel %vm522, %v5362, 0.0
    %v5411 = vsel %vm522, %v5363, 0.0
    %v5412 = vsel %vm522, %v5364, 0.0
    %v5413 = vsel %vm522, %v5365, 0.0
    %v5414 = vsel %vm522, %v5366, 0.0
    %v5415 = vsel %vm522, %v5367, 0.0
    %v5416 = vsel %vm522, %v5368, 0.0
    %v5417 = vsel %vm522, %v5369, 0.0
    %v5418 = vsel %vm522, %v5370, 0.0
    %v5419 = vsel %vm522, %v5371, 0.0
    %v5420 = vsel %vm522, %v5372, 0.0
    %v5421 = vsel %vm522, %v5373, 0.0
    %v5422 = vsel %vm522, %v5374, 0.0
    %v5423 = vsel %vm522, %v5375, 0.0
    %v5424 = vsel %vm522, %v5376, 0.0
    %v5453 = vrot.slane %v5393, 1
    %v5454 = vrot.slane %v5409, 1
    %v5455 = vsel %vm587, %v5453, %v5454
    %v5456 = vrot.slane %v5394, 1
    %v5457 = vrot.slane %v5410, 1
    %v5458 = vsel %vm587, %v5456, %v5457
    %v5459 = vrot.slane %v5395, 1
    %v5460 = vrot.slane %v5411, 1
    %v5461 = vsel %vm587, %v5459, %v5460
    %v5462 = vrot.slane %v5396, 1
    %v5463 = vrot.slane %v5412, 1
    %v5464 = vsel %vm587, %v5462, %v5463
    %v5465 = vrot.slane %v5397, 1
    %v5466 = vrot.slane %v5413, 1
    %v5467 = vsel %vm587, %v5465, %v5466
    %v5468 = vrot.slane %v5398, 1
    %v5469 = vrot.slane %v5414, 1
    %v5470 = vsel %vm587, %v5468, %v5469
    %v5471 = vrot.slane %v5399, 1
    %v5472 = vrot.slane %v5415, 1
    %v5473 = vsel %vm587, %v5471, %v5472
    %v5474 = vrot.slane %v5401, 1
    %v5475 = vrot.slane %v5417, 1
    %v5476 = vsel %vm587, %v5474, %v5475
    %v5477 = vrot.slane %v5402, 1
    %v5478 = vrot.slane %v5418, 1
    %v5479 = vsel %vm587, %v5477, %v5478
    %v5480 = vrot.slane %v5403, 1
    %v5481 = vrot.slane %v5419, 1
    %v5482 = vsel %vm587, %v5480, %v5481
    %v5483 = vrot.slane %v5404, 1
    %v5484 = vrot.slane %v5420, 1
    %v5485 = vsel %vm587, %v5483, %v5484
    %v5486 = vrot.slane %v5405, 1
    %v5487 = vrot.slane %v5421, 1
    %v5488 = vsel %vm587, %v5486, %v5487
    %v5489 = vrot.slane %v5406, 1
    %v5490 = vrot.slane %v5422, 1
    %v5491 = vsel %vm587, %v5489, %v5490
    %v5492 = vrot.slane %v5407, 1
    %v5493 = vrot.slane %v5423, 1
    %v5494 = vsel %vm587, %v5492, %v5493
    %5495 = vrot.lane.b32.xlu0 %v5455, 16
    %v5496 = vpop.permute.xlu0 %5495
    %5497 = vrot.lane.b32.xlu0 %v5458, 16
    %v5498 = vpop.permute.xlu0 %5497
    %5499 = vrot.lane.b32.xlu0 %v5461, 16
    %v5500 = vpop.permute.xlu0 %5499
    %5501 = vrot.lane.b32.xlu0 %v5464, 16
    %v5502 = vpop.permute.xlu0 %5501
    %5503 = vrot.lane.b32.xlu0 %v5467, 16
    %v5504 = vpop.permute.xlu0 %5503
    %5505 = vrot.lane.b32.xlu0 %v5470, 16
    %v5506 = vpop.permute.xlu0 %5505
    %5507 = vrot.lane.b32.xlu0 %v5473, 16
    %v5508 = vpop.permute.xlu0 %5507
    %5509 = vrot.lane.b32.xlu0 %v5476, 16
    %v5510 = vpop.permute.xlu0 %5509
    %5511 = vrot.lane.b32.xlu0 %v5479, 16
    %v5512 = vpop.permute.xlu0 %5511
    %5513 = vrot.lane.b32.xlu0 %v5482, 16
    %v5514 = vpop.permute.xlu0 %5513
    %5515 = vrot.lane.b32.xlu0 %v5485, 16
    %v5516 = vpop.permute.xlu0 %5515
    %5517 = vrot.lane.b32.xlu0 %v5488, 16
    %v5518 = vpop.permute.xlu0 %5517
    %5519 = vrot.lane.b32.xlu0 %v5491, 16
    %v5520 = vpop.permute.xlu0 %5519
    %5521 = vrot.lane.b32.xlu0 %v5494, 16
    %v5522 = vpop.permute.xlu0 %5521
    %v5537 = vrot.slane %v5393, 2
    %v5538 = vrot.slane %v5409, 2
    %v5539 = vsel %vm678, %v5537, %v5538
    %v5540 = vrot.slane %v5394, 2
    %v5541 = vrot.slane %v5410, 2
    %v5542 = vsel %vm678, %v5540, %v5541
    %v5543 = vrot.slane %v5395, 2
    %v5544 = vrot.slane %v5411, 2
    %v5545 = vsel %vm678, %v5543, %v5544
    %v5546 = vrot.slane %v5396, 2
    %v5547 = vrot.slane %v5412, 2
    %v5548 = vsel %vm678, %v5546, %v5547
    %v5549 = vrot.slane %v5397, 2
    %v5550 = vrot.slane %v5413, 2
    %v5551 = vsel %vm678, %v5549, %v5550
    %v5552 = vrot.slane %v5398, 2
    %v5553 = vrot.slane %v5414, 2
    %v5554 = vsel %vm678, %v5552, %v5553
    %v5555 = vrot.slane %v5399, 2
    %v5556 = vrot.slane %v5415, 2
    %v5557 = vsel %vm678, %v5555, %v5556
    %v5558 = vrot.slane %v5401, 2
    %v5559 = vrot.slane %v5417, 2
    %v5560 = vsel %vm678, %v5558, %v5559
    %v5561 = vrot.slane %v5402, 2
    %v5562 = vrot.slane %v5418, 2
    %v5563 = vsel %vm678, %v5561, %v5562
    %v5564 = vrot.slane %v5403, 2
    %v5565 = vrot.slane %v5419, 2
    %v5566 = vsel %vm678, %v5564, %v5565
    %v5567 = vrot.slane %v5404, 2
    %v5568 = vrot.slane %v5420, 2
    %v5569 = vsel %vm678, %v5567, %v5568
    %v5570 = vrot.slane %v5405, 2
    %v5571 = vrot.slane %v5421, 2
    %v5572 = vsel %vm678, %v5570, %v5571
    %v5573 = vrot.slane %v5406, 2
    %v5574 = vrot.slane %v5422, 2
    %v5575 = vsel %vm678, %v5573, %v5574
    %v5576 = vrot.slane %v5407, 2
    %v5577 = vrot.slane %v5423, 2
    %v5578 = vsel %vm678, %v5576, %v5577
    %5579 = vrot.lane.b32.xlu0 %v5539, 32
    %v5580 = vpop.permute.xlu0 %5579
    %5581 = vrot.lane.b32.xlu0 %v5542, 32
    %v5582 = vpop.permute.xlu0 %5581
    %5583 = vrot.lane.b32.xlu0 %v5545, 32
    %v5584 = vpop.permute.xlu0 %5583
    %5585 = vrot.lane.b32.xlu0 %v5548, 32
    %v5586 = vpop.permute.xlu0 %5585
    %5587 = vrot.lane.b32.xlu0 %v5551, 32
    %v5588 = vpop.permute.xlu0 %5587
    %5589 = vrot.lane.b32.xlu0 %v5554, 32
    %v5590 = vpop.permute.xlu0 %5589
    %5591 = vrot.lane.b32.xlu0 %v5557, 32
    %v5592 = vpop.permute.xlu0 %5591
    %5593 = vrot.lane.b32.xlu0 %v5560, 32
    %v5594 = vpop.permute.xlu0 %5593
    %5595 = vrot.lane.b32.xlu0 %v5563, 32
    %v5596 = vpop.permute.xlu0 %5595
    %5597 = vrot.lane.b32.xlu0 %v5566, 32
    %v5598 = vpop.permute.xlu0 %5597
    %5599 = vrot.lane.b32.xlu0 %v5569, 32
    %v5600 = vpop.permute.xlu0 %5599
    %5601 = vrot.lane.b32.xlu0 %v5572, 32
    %v5602 = vpop.permute.xlu0 %5601
    %5603 = vrot.lane.b32.xlu0 %v5575, 32
    %v5604 = vpop.permute.xlu0 %5603
    %5605 = vrot.lane.b32.xlu0 %v5578, 32
    %v5606 = vpop.permute.xlu0 %5605
    %5623 = vrot.lane.b32.xlu0 %v5393, 48
    %v5624 = vpop.permute.xlu0 %5623
    %5625 = vrot.lane.b32.xlu0 %v5394, 48
    %v5626 = vpop.permute.xlu0 %5625
    %5627 = vrot.lane.b32.xlu0 %v5395, 48
    %v5628 = vpop.permute.xlu0 %5627
    %5629 = vrot.lane.b32.xlu0 %v5396, 48
    %v5630 = vpop.permute.xlu0 %5629
    %5631 = vrot.lane.b32.xlu0 %v5397, 48
    %v5632 = vpop.permute.xlu0 %5631
    %5633 = vrot.lane.b32.xlu0 %v5398, 48
    %v5634 = vpop.permute.xlu0 %5633
    %5635 = vrot.lane.b32.xlu0 %v5399, 48
    %v5636 = vpop.permute.xlu0 %5635
    %5637 = vrot.lane.b32.xlu0 %v5400, 48
    %v5638 = vpop.permute.xlu0 %5637
    %5639 = vrot.lane.b32.xlu0 %v5401, 48
    %v5640 = vpop.permute.xlu0 %5639
    %5641 = vrot.lane.b32.xlu0 %v5402, 48
    %v5642 = vpop.permute.xlu0 %5641
    %5643 = vrot.lane.b32.xlu0 %v5403, 48
    %v5644 = vpop.permute.xlu0 %5643
    %5645 = vrot.lane.b32.xlu0 %v5404, 48
    %v5646 = vpop.permute.xlu0 %5645
    %5647 = vrot.lane.b32.xlu0 %v5405, 48
    %v5648 = vpop.permute.xlu0 %5647
    %5649 = vrot.lane.b32.xlu0 %v5406, 48
    %v5650 = vpop.permute.xlu0 %5649
    %5651 = vrot.lane.b32.xlu0 %v5407, 48
    %v5652 = vpop.permute.xlu0 %5651
    %5653 = vrot.lane.b32.xlu0 %v5408, 48
    %v5654 = vpop.permute.xlu0 %5653
    %v5673 = vrot.slane %v5400, 1
    %v5674 = vrot.slane %v5416, 1
    %v5675 = vsel %vm587, %v5673, %v5674
    %v5676 = vrot.slane %v5408, 1
    %v5677 = vrot.slane %v5424, 1
    %v5678 = vsel %vm587, %v5676, %v5677
    %5679 = vrot.lane.b32.xlu0 %v5455, 64
    %v5680 = vpop.permute.xlu0 %5679
    %5681 = vrot.lane.b32.xlu0 %v5458, 64
    %v5682 = vpop.permute.xlu0 %5681
    %5683 = vrot.lane.b32.xlu0 %v5461, 64
    %v5684 = vpop.permute.xlu0 %5683
    %5685 = vrot.lane.b32.xlu0 %v5464, 64
    %v5686 = vpop.permute.xlu0 %5685
    %5687 = vrot.lane.b32.xlu0 %v5467, 64
    %v5688 = vpop.permute.xlu0 %5687
    %5689 = vrot.lane.b32.xlu0 %v5470, 64
    %v5690 = vpop.permute.xlu0 %5689
    %5691 = vrot.lane.b32.xlu0 %v5473, 64
    %v5692 = vpop.permute.xlu0 %5691
    %5693 = vrot.lane.b32.xlu0 %v5675, 64
    %v5694 = vpop.permute.xlu0 %5693
    %5695 = vrot.lane.b32.xlu0 %v5476, 64
    %v5696 = vpop.permute.xlu0 %5695
    %5697 = vrot.lane.b32.xlu0 %v5479, 64
    %v5698 = vpop.permute.xlu0 %5697
    %5699 = vrot.lane.b32.xlu0 %v5482, 64
    %v5700 = vpop.permute.xlu0 %5699
    %5701 = vrot.lane.b32.xlu0 %v5485, 64
    %v5702 = vpop.permute.xlu0 %5701
    %5703 = vrot.lane.b32.xlu0 %v5488, 64
    %v5704 = vpop.permute.xlu0 %5703
    %5705 = vrot.lane.b32.xlu0 %v5491, 64
    %v5706 = vpop.permute.xlu0 %5705
    %5707 = vrot.lane.b32.xlu0 %v5494, 64
    %v5708 = vpop.permute.xlu0 %5707
    %5709 = vrot.lane.b32.xlu0 %v5678, 64
    %v5710 = vpop.permute.xlu0 %5709
    %v5727 = vrot.slane %v5400, 2
    %v5728 = vrot.slane %v5416, 2
    %v5729 = vsel %vm678, %v5727, %v5728
    %v5730 = vrot.slane %v5408, 2
    %v5731 = vrot.slane %v5424, 2
    %v5732 = vsel %vm678, %v5730, %v5731
    %5733 = vrot.lane.b32.xlu0 %v5539, 80
    %v5734 = vpop.permute.xlu0 %5733
    %5735 = vrot.lane.b32.xlu0 %v5542, 80
    %v5736 = vpop.permute.xlu0 %5735
    %5737 = vrot.lane.b32.xlu0 %v5545, 80
    %v5738 = vpop.permute.xlu0 %5737
    %5739 = vrot.lane.b32.xlu0 %v5548, 80
    %v5740 = vpop.permute.xlu0 %5739
    %5741 = vrot.lane.b32.xlu0 %v5551, 80
    %v5742 = vpop.permute.xlu0 %5741
    %5743 = vrot.lane.b32.xlu0 %v5554, 80
    %v5744 = vpop.permute.xlu0 %5743
    %5745 = vrot.lane.b32.xlu0 %v5557, 80
    %v5746 = vpop.permute.xlu0 %5745
    %5747 = vrot.lane.b32.xlu0 %v5729, 80
    %v5748 = vpop.permute.xlu0 %5747
    %5749 = vrot.lane.b32.xlu0 %v5560, 80
    %v5750 = vpop.permute.xlu0 %5749
    %5751 = vrot.lane.b32.xlu0 %v5563, 80
    %v5752 = vpop.permute.xlu0 %5751
    %5753 = vrot.lane.b32.xlu0 %v5566, 80
    %v5754 = vpop.permute.xlu0 %5753
    %5755 = vrot.lane.b32.xlu0 %v5569, 80
    %v5756 = vpop.permute.xlu0 %5755
    %5757 = vrot.lane.b32.xlu0 %v5572, 80
    %v5758 = vpop.permute.xlu0 %5757
    %5759 = vrot.lane.b32.xlu0 %v5575, 80
    %v5760 = vpop.permute.xlu0 %5759
    %5761 = vrot.lane.b32.xlu0 %v5578, 80
    %v5762 = vpop.permute.xlu0 %5761
    %5763 = vrot.lane.b32.xlu0 %v5732, 80
    %v5764 = vpop.permute.xlu0 %5763
    %5781 = vrot.lane.b32.xlu0 %v5394, 96
    %v5782 = vpop.permute.xlu0 %5781
    %5783 = vrot.lane.b32.xlu0 %v5395, 96
    %v5784 = vpop.permute.xlu0 %5783
    %5785 = vrot.lane.b32.xlu0 %v5396, 96
    %v5786 = vpop.permute.xlu0 %5785
    %5787 = vrot.lane.b32.xlu0 %v5397, 96
    %v5788 = vpop.permute.xlu0 %5787
    %5789 = vrot.lane.b32.xlu0 %v5398, 96
    %v5790 = vpop.permute.xlu0 %5789
    %5791 = vrot.lane.b32.xlu0 %v5399, 96
    %v5792 = vpop.permute.xlu0 %5791
    %5793 = vrot.lane.b32.xlu0 %v5400, 96
    %v5794 = vpop.permute.xlu0 %5793
    %5795 = vrot.lane.b32.xlu0 %v5402, 96
    %v5796 = vpop.permute.xlu0 %5795
    %5797 = vrot.lane.b32.xlu0 %v5403, 96
    %v5798 = vpop.permute.xlu0 %5797
    %5799 = vrot.lane.b32.xlu0 %v5404, 96
    %v5800 = vpop.permute.xlu0 %5799
    %5801 = vrot.lane.b32.xlu0 %v5405, 96
    %v5802 = vpop.permute.xlu0 %5801
    %5803 = vrot.lane.b32.xlu0 %v5406, 96
    %v5804 = vpop.permute.xlu0 %5803
    %5805 = vrot.lane.b32.xlu0 %v5407, 96
    %v5806 = vpop.permute.xlu0 %5805
    %5807 = vrot.lane.b32.xlu0 %v5408, 96
    %v5808 = vpop.permute.xlu0 %5807
    %5823 = vrot.lane.b32.xlu0 %v5458, 112
    %v5824 = vpop.permute.xlu0 %5823
    %5825 = vrot.lane.b32.xlu0 %v5461, 112
    %v5826 = vpop.permute.xlu0 %5825
    %5827 = vrot.lane.b32.xlu0 %v5464, 112
    %v5828 = vpop.permute.xlu0 %5827
    %5829 = vrot.lane.b32.xlu0 %v5467, 112
    %v5830 = vpop.permute.xlu0 %5829
    %5831 = vrot.lane.b32.xlu0 %v5470, 112
    %v5832 = vpop.permute.xlu0 %5831
    %5833 = vrot.lane.b32.xlu0 %v5473, 112
    %v5834 = vpop.permute.xlu0 %5833
    %5835 = vrot.lane.b32.xlu0 %v5675, 112
    %v5836 = vpop.permute.xlu0 %5835
    %5837 = vrot.lane.b32.xlu0 %v5479, 112
    %v5838 = vpop.permute.xlu0 %5837
    %5839 = vrot.lane.b32.xlu0 %v5482, 112
    %v5840 = vpop.permute.xlu0 %5839
    %5841 = vrot.lane.b32.xlu0 %v5485, 112
    %v5842 = vpop.permute.xlu0 %5841
    %5843 = vrot.lane.b32.xlu0 %v5488, 112
    %v5844 = vpop.permute.xlu0 %5843
    %5845 = vrot.lane.b32.xlu0 %v5491, 112
    %v5846 = vpop.permute.xlu0 %5845
    %5847 = vrot.lane.b32.xlu0 %v5494, 112
    %v5848 = vpop.permute.xlu0 %5847
    %5849 = vrot.lane.b32.xlu0 %v5678, 112
    %v5850 = vpop.permute.xlu0 %5849
    %v5865 = vsel %vm2269, %v5393, %v5496
    %v5866 = vsel %vm2269, %v5394, %v5498
    %v5867 = vsel %vm2269, %v5395, %v5500
    %v5868 = vsel %vm2269, %v5396, %v5502
    %v5869 = vsel %vm2269, %v5397, %v5504
    %v5870 = vsel %vm2269, %v5398, %v5506
    %v5871 = vsel %vm2269, %v5399, %v5508
    %v5872 = vsel %vm2269, %v5401, %v5510
    %v5873 = vsel %vm2269, %v5402, %v5512
    %v5874 = vsel %vm2269, %v5403, %v5514
    %v5875 = vsel %vm2269, %v5404, %v5516
    %v5876 = vsel %vm2269, %v5405, %v5518
    %v5877 = vsel %vm2269, %v5406, %v5520
    %v5878 = vsel %vm2269, %v5407, %v5522
    %v5879 = vsel %vm987, %v5865, %v5580
    %v5880 = vsel %vm987, %v5866, %v5582
    %v5881 = vsel %vm987, %v5867, %v5584
    %v5882 = vsel %vm987, %v5868, %v5586
    %v5883 = vsel %vm987, %v5869, %v5588
    %v5884 = vsel %vm987, %v5870, %v5590
    %v5885 = vsel %vm987, %v5871, %v5592
    %v5886 = vsel %vm987, %v5872, %v5594
    %v5887 = vsel %vm987, %v5873, %v5596
    %v5888 = vsel %vm987, %v5874, %v5598
    %v5889 = vsel %vm987, %v5875, %v5600
    %v5890 = vsel %vm987, %v5876, %v5602
    %v5891 = vsel %vm987, %v5877, %v5604
    %v5892 = vsel %vm987, %v5878, %v5606
    %v5893 = vsel %vm2300, %v2285, %v5624
    %v5894 = vsel %vm2300, %v5879, %v5626
    %v5895 = vsel %vm2300, %v5880, %v5628
    %v5896 = vsel %vm2300, %v5881, %v5630
    %v5897 = vsel %vm2300, %v5882, %v5632
    %v5898 = vsel %vm2300, %v5883, %v5634
    %v5899 = vsel %vm2300, %v5884, %v5636
    %v5900 = vsel %vm2300, %v5885, %v5638
    %v5901 = vsel %vm2300, %v2285, %v5640
    %v5902 = vsel %vm2300, %v5886, %v5642
    %v5903 = vsel %vm2300, %v5887, %v5644
    %v5904 = vsel %vm2300, %v5888, %v5646
    %v5905 = vsel %vm2300, %v5889, %v5648
    %v5906 = vsel %vm2300, %v5890, %v5650
    %v5907 = vsel %vm2300, %v5891, %v5652
    %v5908 = vsel %vm2300, %v5892, %v5654
    %v5909 = vsel %vm1003, %v5893, %v5680
    %v5910 = vsel %vm1003, %v5894, %v5682
    %v5911 = vsel %vm1003, %v5895, %v5684
    %v5912 = vsel %vm1003, %v5896, %v5686
    %v5913 = vsel %vm1003, %v5897, %v5688
    %v5914 = vsel %vm1003, %v5898, %v5690
    %v5915 = vsel %vm1003, %v5899, %v5692
    %v5916 = vsel %vm1003, %v5900, %v5694
    %v5917 = vsel %vm1003, %v5901, %v5696
    %v5918 = vsel %vm1003, %v5902, %v5698
    %v5919 = vsel %vm1003, %v5903, %v5700
    %v5920 = vsel %vm1003, %v5904, %v5702
    %v5921 = vsel %vm1003, %v5905, %v5704
    %v5922 = vsel %vm1003, %v5906, %v5706
    %v5923 = vsel %vm1003, %v5907, %v5708
    %v5924 = vsel %vm1003, %v5908, %v5710
    %v5925 = vsel %vm2333, %v5909, %v5734
    %v5926 = vsel %vm2333, %v5910, %v5736
    %v5927 = vsel %vm2333, %v5911, %v5738
    %v5928 = vsel %vm2333, %v5912, %v5740
    %v5929 = vsel %vm2333, %v5913, %v5742
    %v5930 = vsel %vm2333, %v5914, %v5744
    %v5931 = vsel %vm2333, %v5915, %v5746
    %v5932 = vsel %vm2333, %v5916, %v5748
    %v5933 = vsel %vm2333, %v5917, %v5750
    %v5934 = vsel %vm2333, %v5918, %v5752
    %v5935 = vsel %vm2333, %v5919, %v5754
    %v5936 = vsel %vm2333, %v5920, %v5756
    %v5937 = vsel %vm2333, %v5921, %v5758
    %v5938 = vsel %vm2333, %v5922, %v5760
    %v5939 = vsel %vm2333, %v5923, %v5762
    %v5940 = vsel %vm2333, %v5924, %v5764
    %v5941 = vsel %vm1019, %v5925, %v5782
    %v5942 = vsel %vm1019, %v5926, %v5784
    %v5943 = vsel %vm1019, %v5927, %v5786
    %v5944 = vsel %vm1019, %v5928, %v5788
    %v5945 = vsel %vm1019, %v5929, %v5790
    %v5946 = vsel %vm1019, %v5930, %v5792
    %v5947 = vsel %vm1019, %v5931, %v5794
    %v5948 = vsel %vm1019, %v5932, %v2194
    %v5949 = vsel %vm1019, %v5933, %v5796
    %v5950 = vsel %vm1019, %v5934, %v5798
    %v5951 = vsel %vm1019, %v5935, %v5800
    %v5952 = vsel %vm1019, %v5936, %v5802
    %v5953 = vsel %vm1019, %v5937, %v5804
    %v5954 = vsel %vm1019, %v5938, %v5806
    %v5955 = vsel %vm1019, %v5939, %v5808
    %v5956 = vsel %vm1019, %v5940, %v2194
    %v5957 = vsel %vm2366, %v5941, %v5824
    %v5958 = vsel %vm2366, %v5942, %v5826
    %v5959 = vsel %vm2366, %v5943, %v5828
    %v5960 = vsel %vm2366, %v5944, %v5830
    %v5961 = vsel %vm2366, %v5945, %v5832
    %v5962 = vsel %vm2366, %v5946, %v5834
    %v5963 = vsel %vm2366, %v5947, %v5836
    %v5964 = vsel %vm2366, %v5948, %v2239
    %v5965 = vsel %vm2366, %v5949, %v5838
    %v5966 = vsel %vm2366, %v5950, %v5840
    %v5967 = vsel %vm2366, %v5951, %v5842
    %v5968 = vsel %vm2366, %v5952, %v5844
    %v5969 = vsel %vm2366, %v5953, %v5846
    %v5970 = vsel %vm2366, %v5954, %v5848
    %v5971 = vsel %vm2366, %v5955, %v5850
    %v5972 = vsel %vm2366, %v5956, %v2239
    %v5973 = vld [vmem:[%s15] sm:$0xff]
    %v5974 = vld [vmem:[%s15 + $0x8] sm:$0xff]
    %v5975 = vld [vmem:[%s15 + $0x10] sm:$0xff]
    %v5976 = vld [vmem:[%s15 + $0x18] sm:$0xff]
    %v5977 = vld [vmem:[%s15 + $0x20] sm:$0xff]
    %v5978 = vld [vmem:[%s15 + $0x28] sm:$0xff]
    %v5979 = vld [vmem:[%s15 + $0x30] sm:$0xff]
    %v5980 = vld [vmem:[%s15 + $0x38] sm:$0xff]
    %v5981 = vld [vmem:[%s15 + $0x40] sm:$0xff]
    %v5982 = vld [vmem:[%s15 + $0x48] sm:$0xff]
    %v5983 = vld [vmem:[%s15 + $0x50] sm:$0xff]
    %v5984 = vld [vmem:[%s15 + $0x58] sm:$0xff]
    %v5985 = vld [vmem:[%s15 + $0x60] sm:$0xff]
    %v5986 = vld [vmem:[%s15 + $0x68] sm:$0xff]
    %v5987 = vld [vmem:[%s15 + $0x70] sm:$0xff]
    %v5988 = vld [vmem:[%s15 + $0x78] sm:$0xff]
    %v5989 = vld [vmem:[%s15 + $0x80] sm:$0xff]
    %v5990 = vld [vmem:[%s15 + $0x88] sm:$0xff]
    %v5991 = vsel %vm2269, %v5542, 0
    %v5993 = vsel %vm2269, %v5545, 0
    %v5995 = vsel %vm2269, %v5548, 0
    %v5997 = vsel %vm2269, %v5551, 0
    %v5999 = vsel %vm2269, %v5554, 0
    %v6001 = vsel %vm2269, %v5557, 0
    %v6003 = vsel %vm2269, %v5729, 0
    %v6005 = vsel %vm2269, %v5563, 0
    %v6007 = vsel %vm2269, %v5566, 0
    %v6009 = vsel %vm2269, %v5569, 0
    %v6011 = vsel %vm2269, %v5572, 0
    %v6013 = vsel %vm2269, %v5575, 0
    %v6015 = vsel %vm2269, %v5578, 0
    %v6017 = vsel %vm2269, %v5732, 0
    %6019 = vmatpush.msra.mxu0 %v5988
    %6020 = vmatpush.msra.mxu0 %v5987
    %6021 = vmatpush.msra.mxu0 %v5986
    %6022 = vmatpush.msra.mxu0 %v5985
    %6023 = vmatpush.msra.mxu0 %v5984
    %6024 = vmatpush.msra.mxu0 %v5983
    %6025 = vmatpush.msra.mxu0 %v5982
    %6026 = vmatpush.msra.mxu0 %v5981
    %6027 = vmatpush.msra.mxu0 %v5980
    %6028 = vmatpush.msra.mxu0 %v5979
    %6029 = vmatpush.msra.mxu0 %v5978
    %6030 = vmatpush.msra.mxu0 %v5977
    %6031 = vmatpush.msra.mxu0 %v5976
    %6032 = vmatpush.msra.mxu0 %v5975
    %6033 = vmatpush.msra.mxu0 %v5974
    %6034 = vmatpush.msra.mxu0 %v5973
    %6035 = vmatmul.f32.gmra.mxu0 %v5957
    %v6036 = vpop.f32.mrf.mxu0
    %v6037 = vadd.f32 %v3710, %v6036
    %6038 = vmatmul.f32.gmra.mxu0 %v5958
    %v6039 = vpop.f32.mrf.mxu0
    %v6040 = vadd.f32 %v3713, %v6039
    %6041 = vmatmul.f32.gmra.mxu0 %v5959
    %v6042 = vpop.f32.mrf.mxu0
    %v6043 = vadd.f32 %v3716, %v6042
    %6044 = vmatmul.f32.gmra.mxu0 %v5960
    %v6045 = vpop.f32.mrf.mxu0
    %v6046 = vadd.f32 %v3719, %v6045
    %6047 = vmatmul.f32.gmra.mxu0 %v5961
    %v6048 = vpop.f32.mrf.mxu0
    %v6049 = vadd.f32 %v3722, %v6048
    %6050 = vmatmul.f32.gmra.mxu0 %v5962
    %v6051 = vpop.f32.mrf.mxu0
    %v6052 = vadd.f32 %v3725, %v6051
    %6053 = vmatmul.f32.gmra.mxu0 %v5963
    %v6054 = vpop.f32.mrf.mxu0
    %v6055 = vadd.f32 %v3728, %v6054
    %6056 = vmatmul.f32.gmra.mxu0 %v5964
    %v6057 = vpop.f32.mrf.mxu0
    %v6058 = vadd.f32 %v3731, %v6057
    %6059 = vmatmul.f32.gmra.mxu0 %v5965
    %v6060 = vpop.f32.mrf.mxu0
    %v6061 = vadd.f32 %v3734, %v6060
    %6062 = vmatmul.f32.gmra.mxu0 %v5966
    %v6063 = vpop.f32.mrf.mxu0
    %v6064 = vadd.f32 %v3737, %v6063
    %6065 = vmatmul.f32.gmra.mxu0 %v5967
    %v6066 = vpop.f32.mrf.mxu0
    %v6067 = vadd.f32 %v3740, %v6066
    %6068 = vmatmul.f32.gmra.mxu0 %v5968
    %v6069 = vpop.f32.mrf.mxu0
    %v6070 = vadd.f32 %v3743, %v6069
    %6071 = vmatmul.f32.gmra.mxu0 %v5969
    %v6072 = vpop.f32.mrf.mxu0
    %v6073 = vadd.f32 %v3746, %v6072
    %6074 = vmatmul.f32.gmra.mxu0 %v5970
    %v6075 = vpop.f32.mrf.mxu0
    %v6076 = vadd.f32 %v3749, %v6075
    %6077 = vmatmul.f32.gmra.mxu0 %v5971
    %v6078 = vpop.f32.mrf.mxu0
    %v6079 = vadd.f32 %v3752, %v6078
    %6080 = vmatmul.f32.gmra.mxu0 %v5972
    %v6081 = vpop.f32.mrf.mxu0
    %v6082 = vadd.f32 %v3755, %v6081
    %6083 = vdwg.mxu0
    %6084 = vmatpush.msra.mxu0 0.0
    %6085 = vmatpush.msra.mxu0 0.0
    %6086 = vmatpush.msra.mxu0 0.0
    %6087 = vmatpush.msra.mxu0 0.0
    %6088 = vmatpush.msra.mxu0 0.0
    %6089 = vmatpush.msra.mxu0 0.0
    %6090 = vmatpush.msra.mxu0 0.0
    %6091 = vmatpush.msra.mxu0 0.0
    %6092 = vmatpush.msra.mxu0 0.0
    %6093 = vmatpush.msra.mxu0 0.0
    %6094 = vmatpush.msra.mxu0 0.0
    %6095 = vmatpush.msra.mxu0 0.0
    %6096 = vmatpush.msra.mxu0 0.0
    %6097 = vmatpush.msra.mxu0 0.0
    %6098 = vmatpush.msra.mxu0 %v5990
    %6099 = vmatpush.msra.mxu0 %v5989
    %6100 = vmatmul.f32.gmra.mxu0 %v5991
    %v6101 = vpop.f32.mrf.mxu0
    %v6102 = vadd.f32 %v6037, %v6101
    %6103 = vmatmul.f32.gmra.mxu0 %v5993
    %v6104 = vpop.f32.mrf.mxu0
    %v6105 = vadd.f32 %v6040, %v6104
    %6106 = vmatmul.f32.gmra.mxu0 %v5995
    %v6107 = vpop.f32.mrf.mxu0
    %v6108 = vadd.f32 %v6043, %v6107
    %6109 = vmatmul.f32.gmra.mxu0 %v5997
    %v6110 = vpop.f32.mrf.mxu0
    %v6111 = vadd.f32 %v6046, %v6110
    %6112 = vmatmul.f32.gmra.mxu0 %v5999
    %v6113 = vpop.f32.mrf.mxu0
    %v6114 = vadd.f32 %v6049, %v6113
    %6115 = vmatmul.f32.gmra.mxu0 %v6001
    %v6116 = vpop.f32.mrf.mxu0
    %v6117 = vadd.f32 %v6052, %v6116
    %6118 = vmatmul.f32.gmra.mxu0 %v6003
    %v6119 = vpop.f32.mrf.mxu0
    %v6120 = vadd.f32 %v6055, %v6119
    %6121 = vmatmul.f32.gmra.mxu0 %v2415
    %v6122 = vpop.f32.mrf.mxu0
    %v6123 = vadd.f32 %v6058, %v6122
    %6124 = vmatmul.f32.gmra.mxu0 %v6005
    %v6125 = vpop.f32.mrf.mxu0
    %v6126 = vadd.f32 %v6061, %v6125
    %6127 = vmatmul.f32.gmra.mxu0 %v6007
    %v6128 = vpop.f32.mrf.mxu0
    %v6129 = vadd.f32 %v6064, %v6128
    %6130 = vmatmul.f32.gmra.mxu0 %v6009
    %v6131 = vpop.f32.mrf.mxu0
    %v6132 = vadd.f32 %v6067, %v6131
    %6133 = vmatmul.f32.gmra.mxu0 %v6011
    %v6134 = vpop.f32.mrf.mxu0
    %v6135 = vadd.f32 %v6070, %v6134
    %6136 = vmatmul.f32.gmra.mxu0 %v6013
    %v6137 = vpop.f32.mrf.mxu0
    %v6138 = vadd.f32 %v6073, %v6137
    %6139 = vmatmul.f32.gmra.mxu0 %v6015
    %v6140 = vpop.f32.mrf.mxu0
    %v6141 = vadd.f32 %v6076, %v6140
    %6142 = vmatmul.f32.gmra.mxu0 %v6017
    %v6143 = vpop.f32.mrf.mxu0
    %v6144 = vadd.f32 %v6079, %v6143
    %6145 = vmatmul.f32.gmra.mxu0 %v2415
    %v6146 = vpop.f32.mrf.mxu0
    %v6147 = vadd.f32 %v6082, %v6146
    %6148 = vdwg.mxu0
    %v6149 = vld [vmem:[%s16] sm:$0x1]
    %v6151 = vperm.slane %v6149, 0
    %v6153 = vmul.f32 %v6102, %v6151
    %v6154 = vmul.f32 %v6105, %v6151
    %v6155 = vmul.f32 %v6108, %v6151
    %v6156 = vmul.f32 %v6111, %v6151
    %v6157 = vmul.f32 %v6114, %v6151
    %v6158 = vmul.f32 %v6117, %v6151
    %v6159 = vmul.f32 %v6120, %v6151
    %v6160 = vmul.f32 %v6123, %v6151
    %v6161 = vmul.f32 %v6126, %v6151
    %v6162 = vmul.f32 %v6129, %v6151
    %v6163 = vmul.f32 %v6132, %v6151
    %v6164 = vmul.f32 %v6135, %v6151
    %v6165 = vmul.f32 %v6138, %v6151
    %v6166 = vmul.f32 %v6141, %v6151
    %v6167 = vmul.f32 %v6144, %v6151
    %v6168 = vmul.f32 %v6147, %v6151
    %v6169 = vld [vmem:[%s17] sm:$0x1]
    %v6171 = vperm.slane %v6169, 0
    %v6173 = vadd.f32 %v6153, %v6171
    %v6174 = vadd.f32 %v6154, %v6171
    %v6175 = vadd.f32 %v6155, %v6171
    %v6176 = vadd.f32 %v6156, %v6171
    %v6177 = vadd.f32 %v6157, %v6171
    %v6178 = vadd.f32 %v6158, %v6171
    %v6179 = vadd.f32 %v6159, %v6171
    %v6180 = vadd.f32 %v6160, %v6171
    %v6181 = vadd.f32 %v6161, %v6171
    %v6182 = vadd.f32 %v6162, %v6171
    %v6183 = vadd.f32 %v6163, %v6171
    %v6184 = vadd.f32 %v6164, %v6171
    %v6185 = vadd.f32 %v6165, %v6171
    %v6186 = vadd.f32 %v6166, %v6171
    %v6187 = vadd.f32 %v6167, %v6171
    %v6188 = vadd.f32 %v6168, %v6171
    %v6189 = vmin.f32 %v6173, 20.0
    %v6190 = vmin.f32 %v6174, 20.0
    %v6191 = vmin.f32 %v6175, 20.0
    %v6192 = vmin.f32 %v6176, 20.0
    %v6193 = vmin.f32 %v6177, 20.0
    %v6194 = vmin.f32 %v6178, 20.0
    %v6195 = vmin.f32 %v6179, 20.0
    %v6196 = vmin.f32 %v6180, 20.0
    %v6197 = vmin.f32 %v6181, 20.0
    %v6198 = vmin.f32 %v6182, 20.0
    %v6199 = vmin.f32 %v6183, 20.0
    %v6200 = vmin.f32 %v6184, 20.0
    %v6201 = vmin.f32 %v6185, 20.0
    %v6202 = vmin.f32 %v6186, 20.0
    %v6203 = vmin.f32 %v6187, 20.0
    %v6204 = vmin.f32 %v6188, 20.0
    %v6205 = vmul.f32 %v6189, 1.442695
    %v6206 = vpow.pop %v6205
    %v6207 = vmul.f32 %v6190, 1.442695
    %v6208 = vpow.pop %v6207
    %v6209 = vmul.f32 %v6191, 1.442695
    %v6210 = vpow.pop %v6209
    %v6211 = vmul.f32 %v6192, 1.442695
    %v6212 = vpow.pop %v6211
    %v6213 = vmul.f32 %v6193, 1.442695
    %v6214 = vpow.pop %v6213
    %v6215 = vmul.f32 %v6194, 1.442695
    %v6216 = vpow.pop %v6215
    %v6217 = vmul.f32 %v6195, 1.442695
    %v6218 = vpow.pop %v6217
    %v6219 = vmul.f32 %v6196, 1.442695
    %v6220 = vpow.pop %v6219
    %v6221 = vmul.f32 %v6197, 1.442695
    %v6222 = vpow.pop %v6221
    %v6223 = vmul.f32 %v6198, 1.442695
    %v6224 = vpow.pop %v6223
    %v6225 = vmul.f32 %v6199, 1.442695
    %v6226 = vpow.pop %v6225
    %v6227 = vmul.f32 %v6200, 1.442695
    %v6228 = vpow.pop %v6227
    %v6229 = vmul.f32 %v6201, 1.442695
    %v6230 = vpow.pop %v6229
    %v6231 = vmul.f32 %v6202, 1.442695
    %v6232 = vpow.pop %v6231
    %v6233 = vmul.f32 %v6203, 1.442695
    %v6234 = vpow.pop %v6233
    %v6235 = vmul.f32 %v6204, 1.442695
    %v6236 = vpow.pop %v6235
    %v6237 = vadd.f32 %v6206, 2.0
    %v6238 = vadd.f32 %v6208, 2.0
    %v6239 = vadd.f32 %v6210, 2.0
    %v6240 = vadd.f32 %v6212, 2.0
    %v6241 = vadd.f32 %v6214, 2.0
    %v6242 = vadd.f32 %v6216, 2.0
    %v6243 = vadd.f32 %v6218, 2.0
    %v6244 = vadd.f32 %v6220, 2.0
    %v6245 = vadd.f32 %v6222, 2.0
    %v6246 = vadd.f32 %v6224, 2.0
    %v6247 = vadd.f32 %v6226, 2.0
    %v6248 = vadd.f32 %v6228, 2.0
    %v6249 = vadd.f32 %v6230, 2.0
    %v6250 = vadd.f32 %v6232, 2.0
    %v6251 = vadd.f32 %v6234, 2.0
    %v6252 = vadd.f32 %v6236, 2.0
    %v6253 = vmul.f32 %v6206, %v6237
    %v6254 = vmul.f32 %v6208, %v6238
    %v6255 = vmul.f32 %v6210, %v6239
    %v6256 = vmul.f32 %v6212, %v6240
    %v6257 = vmul.f32 %v6214, %v6241
    %v6258 = vmul.f32 %v6216, %v6242
    %v6259 = vmul.f32 %v6218, %v6243
    %v6260 = vmul.f32 %v6220, %v6244
    %v6261 = vmul.f32 %v6222, %v6245
    %v6262 = vmul.f32 %v6224, %v6246
    %v6263 = vmul.f32 %v6226, %v6247
    %v6264 = vmul.f32 %v6228, %v6248
    %v6265 = vmul.f32 %v6230, %v6249
    %v6266 = vmul.f32 %v6232, %v6250
    %v6267 = vmul.f32 %v6234, %v6251
    %v6268 = vmul.f32 %v6236, %v6252
    %v6269 = vadd.f32 %v6253, 2.0
    %v6270 = vadd.f32 %v6254, 2.0
    %v6271 = vadd.f32 %v6255, 2.0
    %v6272 = vadd.f32 %v6256, 2.0
    %v6273 = vadd.f32 %v6257, 2.0
    %v6274 = vadd.f32 %v6258, 2.0
    %v6275 = vadd.f32 %v6259, 2.0
    %v6276 = vadd.f32 %v6260, 2.0
    %v6277 = vadd.f32 %v6261, 2.0
    %v6278 = vadd.f32 %v6262, 2.0
    %v6279 = vadd.f32 %v6263, 2.0
    %v6280 = vadd.f32 %v6264, 2.0
    %v6281 = vadd.f32 %v6265, 2.0
    %v6282 = vadd.f32 %v6266, 2.0
    %v6283 = vadd.f32 %v6267, 2.0
    %v6284 = vadd.f32 %v6268, 2.0
    %v6285 = vrcp.pop %v6269
    %v6286 = vmul.f32 %v6269, %v6285
    %v6287 = vsub.f32 1.0, %v6286
    %v6288 = vmul.f32 %v6285, %v6287
    %v6289 = vadd.f32 %v6285, %v6288
    %vm6290 = vweird.f32 %v6269
    %vm6291 = vweird.f32 %v6285
    %vm6292 = vmor %vm6290, %vm6291
    %v6293 = vsel %vm6292, %v6285, %v6289
    %v6294 = vand.u32 2147483647, %v6269
    %vm6295 = vcmp.eq.f32.partialorder %v6294, 8.507059e+37
    %v6296 = vand.u32 %v6269, 2147483648
    %v6297 = vor.u32 1.1754944e-38, %v6296
    %v6298 = vsel %vm6295, %v6297, %v6293
    %v6299 = vmul.f32 %v6253, %v6298
    %v6300 = vrcp.pop %v6270
    %v6301 = vmul.f32 %v6270, %v6300
    %v6302 = vsub.f32 1.0, %v6301
    %v6303 = vmul.f32 %v6300, %v6302
    %v6304 = vadd.f32 %v6300, %v6303
    %vm6305 = vweird.f32 %v6270
    %vm6306 = vweird.f32 %v6300
    %vm6307 = vmor %vm6305, %vm6306
    %v6308 = vsel %vm6307, %v6300, %v6304
    %v6309 = vand.u32 2147483647, %v6270
    %vm6310 = vcmp.eq.f32.partialorder %v6309, 8.507059e+37
    %v6311 = vand.u32 %v6270, 2147483648
    %v6312 = vor.u32 1.1754944e-38, %v6311
    %v6313 = vsel %vm6310, %v6312, %v6308
    %v6314 = vmul.f32 %v6254, %v6313
    %v6315 = vrcp.pop %v6271
    %v6316 = vmul.f32 %v6271, %v6315
    %v6317 = vsub.f32 1.0, %v6316
    %v6318 = vmul.f32 %v6315, %v6317
    %v6319 = vadd.f32 %v6315, %v6318
    %vm6320 = vweird.f32 %v6271
    %vm6321 = vweird.f32 %v6315
    %vm6322 = vmor %vm6320, %vm6321
    %v6323 = vsel %vm6322, %v6315, %v6319
    %v6324 = vand.u32 2147483647, %v6271
    %vm6325 = vcmp.eq.f32.partialorder %v6324, 8.507059e+37
    %v6326 = vand.u32 %v6271, 2147483648
    %v6327 = vor.u32 1.1754944e-38, %v6326
    %v6328 = vsel %vm6325, %v6327, %v6323
    %v6329 = vmul.f32 %v6255, %v6328
    %v6330 = vrcp.pop %v6272
    %v6331 = vmul.f32 %v6272, %v6330
    %v6332 = vsub.f32 1.0, %v6331
    %v6333 = vmul.f32 %v6330, %v6332
    %v6334 = vadd.f32 %v6330, %v6333
    %vm6335 = vweird.f32 %v6272
    %vm6336 = vweird.f32 %v6330
    %vm6337 = vmor %vm6335, %vm6336
    %v6338 = vsel %vm6337, %v6330, %v6334
    %v6339 = vand.u32 2147483647, %v6272
    %vm6340 = vcmp.eq.f32.partialorder %v6339, 8.507059e+37
    %v6341 = vand.u32 %v6272, 2147483648
    %v6342 = vor.u32 1.1754944e-38, %v6341
    %v6343 = vsel %vm6340, %v6342, %v6338
    %v6344 = vmul.f32 %v6256, %v6343
    %v6345 = vrcp.pop %v6273
    %v6346 = vmul.f32 %v6273, %v6345
    %v6347 = vsub.f32 1.0, %v6346
    %v6348 = vmul.f32 %v6345, %v6347
    %v6349 = vadd.f32 %v6345, %v6348
    %vm6350 = vweird.f32 %v6273
    %vm6351 = vweird.f32 %v6345
    %vm6352 = vmor %vm6350, %vm6351
    %v6353 = vsel %vm6352, %v6345, %v6349
    %v6354 = vand.u32 2147483647, %v6273
    %vm6355 = vcmp.eq.f32.partialorder %v6354, 8.507059e+37
    %v6356 = vand.u32 %v6273, 2147483648
    %v6357 = vor.u32 1.1754944e-38, %v6356
    %v6358 = vsel %vm6355, %v6357, %v6353
    %v6359 = vmul.f32 %v6257, %v6358
    %v6360 = vrcp.pop %v6274
    %v6361 = vmul.f32 %v6274, %v6360
    %v6362 = vsub.f32 1.0, %v6361
    %v6363 = vmul.f32 %v6360, %v6362
    %v6364 = vadd.f32 %v6360, %v6363
    %vm6365 = vweird.f32 %v6274
    %vm6366 = vweird.f32 %v6360
    %vm6367 = vmor %vm6365, %vm6366
    %v6368 = vsel %vm6367, %v6360, %v6364
    %v6369 = vand.u32 2147483647, %v6274
    %vm6370 = vcmp.eq.f32.partialorder %v6369, 8.507059e+37
    %v6371 = vand.u32 %v6274, 2147483648
    %v6372 = vor.u32 1.1754944e-38, %v6371
    %v6373 = vsel %vm6370, %v6372, %v6368
    %v6374 = vmul.f32 %v6258, %v6373
    %v6375 = vrcp.pop %v6275
    %v6376 = vmul.f32 %v6275, %v6375
    %v6377 = vsub.f32 1.0, %v6376
    %v6378 = vmul.f32 %v6375, %v6377
    %v6379 = vadd.f32 %v6375, %v6378
    %vm6380 = vweird.f32 %v6275
    %vm6381 = vweird.f32 %v6375
    %vm6382 = vmor %vm6380, %vm6381
    %v6383 = vsel %vm6382, %v6375, %v6379
    %v6384 = vand.u32 2147483647, %v6275
    %vm6385 = vcmp.eq.f32.partialorder %v6384, 8.507059e+37
    %v6386 = vand.u32 %v6275, 2147483648
    %v6387 = vor.u32 1.1754944e-38, %v6386
    %v6388 = vsel %vm6385, %v6387, %v6383
    %v6389 = vmul.f32 %v6259, %v6388
    %v6390 = vrcp.pop %v6276
    %v6391 = vmul.f32 %v6276, %v6390
    %v6392 = vsub.f32 1.0, %v6391
    %v6393 = vmul.f32 %v6390, %v6392
    %v6394 = vadd.f32 %v6390, %v6393
    %vm6395 = vweird.f32 %v6276
    %vm6396 = vweird.f32 %v6390
    %vm6397 = vmor %vm6395, %vm6396
    %v6398 = vsel %vm6397, %v6390, %v6394
    %v6399 = vand.u32 2147483647, %v6276
    %vm6400 = vcmp.eq.f32.partialorder %v6399, 8.507059e+37
    %v6401 = vand.u32 %v6276, 2147483648
    %v6402 = vor.u32 1.1754944e-38, %v6401
    %v6403 = vsel %vm6400, %v6402, %v6398
    %v6404 = vmul.f32 %v6260, %v6403
    %v6405 = vrcp.pop %v6277
    %v6406 = vmul.f32 %v6277, %v6405
    %v6407 = vsub.f32 1.0, %v6406
    %v6408 = vmul.f32 %v6405, %v6407
    %v6409 = vadd.f32 %v6405, %v6408
    %vm6410 = vweird.f32 %v6277
    %vm6411 = vweird.f32 %v6405
    %vm6412 = vmor %vm6410, %vm6411
    %v6413 = vsel %vm6412, %v6405, %v6409
    %v6414 = vand.u32 2147483647, %v6277
    %vm6415 = vcmp.eq.f32.partialorder %v6414, 8.507059e+37
    %v6416 = vand.u32 %v6277, 2147483648
    %v6417 = vor.u32 1.1754944e-38, %v6416
    %v6418 = vsel %vm6415, %v6417, %v6413
    %v6419 = vmul.f32 %v6261, %v6418
    %v6420 = vrcp.pop %v6278
    %v6421 = vmul.f32 %v6278, %v6420
    %v6422 = vsub.f32 1.0, %v6421
    %v6423 = vmul.f32 %v6420, %v6422
    %v6424 = vadd.f32 %v6420, %v6423
    %vm6425 = vweird.f32 %v6278
    %vm6426 = vweird.f32 %v6420
    %vm6427 = vmor %vm6425, %vm6426
    %v6428 = vsel %vm6427, %v6420, %v6424
    %v6429 = vand.u32 2147483647, %v6278
    %vm6430 = vcmp.eq.f32.partialorder %v6429, 8.507059e+37
    %v6431 = vand.u32 %v6278, 2147483648
    %v6432 = vor.u32 1.1754944e-38, %v6431
    %v6433 = vsel %vm6430, %v6432, %v6428
    %v6434 = vmul.f32 %v6262, %v6433
    %v6435 = vrcp.pop %v6279
    %v6436 = vmul.f32 %v6279, %v6435
    %v6437 = vsub.f32 1.0, %v6436
    %v6438 = vmul.f32 %v6435, %v6437
    %v6439 = vadd.f32 %v6435, %v6438
    %vm6440 = vweird.f32 %v6279
    %vm6441 = vweird.f32 %v6435
    %vm6442 = vmor %vm6440, %vm6441
    %v6443 = vsel %vm6442, %v6435, %v6439
    %v6444 = vand.u32 2147483647, %v6279
    %vm6445 = vcmp.eq.f32.partialorder %v6444, 8.507059e+37
    %v6446 = vand.u32 %v6279, 2147483648
    %v6447 = vor.u32 1.1754944e-38, %v6446
    %v6448 = vsel %vm6445, %v6447, %v6443
    %v6449 = vmul.f32 %v6263, %v6448
    %v6450 = vrcp.pop %v6280
    %v6451 = vmul.f32 %v6280, %v6450
    %v6452 = vsub.f32 1.0, %v6451
    %v6453 = vmul.f32 %v6450, %v6452
    %v6454 = vadd.f32 %v6450, %v6453
    %vm6455 = vweird.f32 %v6280
    %vm6456 = vweird.f32 %v6450
    %vm6457 = vmor %vm6455, %vm6456
    %v6458 = vsel %vm6457, %v6450, %v6454
    %v6459 = vand.u32 2147483647, %v6280
    %vm6460 = vcmp.eq.f32.partialorder %v6459, 8.507059e+37
    %v6461 = vand.u32 %v6280, 2147483648
    %v6462 = vor.u32 1.1754944e-38, %v6461
    %v6463 = vsel %vm6460, %v6462, %v6458
    %v6464 = vmul.f32 %v6264, %v6463
    %v6465 = vrcp.pop %v6281
    %v6466 = vmul.f32 %v6281, %v6465
    %v6467 = vsub.f32 1.0, %v6466
    %v6468 = vmul.f32 %v6465, %v6467
    %v6469 = vadd.f32 %v6465, %v6468
    %vm6470 = vweird.f32 %v6281
    %vm6471 = vweird.f32 %v6465
    %vm6472 = vmor %vm6470, %vm6471
    %v6473 = vsel %vm6472, %v6465, %v6469
    %v6474 = vand.u32 2147483647, %v6281
    %vm6475 = vcmp.eq.f32.partialorder %v6474, 8.507059e+37
    %v6476 = vand.u32 %v6281, 2147483648
    %v6477 = vor.u32 1.1754944e-38, %v6476
    %v6478 = vsel %vm6475, %v6477, %v6473
    %v6479 = vmul.f32 %v6265, %v6478
    %v6480 = vrcp.pop %v6282
    %v6481 = vmul.f32 %v6282, %v6480
    %v6482 = vsub.f32 1.0, %v6481
    %v6483 = vmul.f32 %v6480, %v6482
    %v6484 = vadd.f32 %v6480, %v6483
    %vm6485 = vweird.f32 %v6282
    %vm6486 = vweird.f32 %v6480
    %vm6487 = vmor %vm6485, %vm6486
    %v6488 = vsel %vm6487, %v6480, %v6484
    %v6489 = vand.u32 2147483647, %v6282
    %vm6490 = vcmp.eq.f32.partialorder %v6489, 8.507059e+37
    %v6491 = vand.u32 %v6282, 2147483648
    %v6492 = vor.u32 1.1754944e-38, %v6491
    %v6493 = vsel %vm6490, %v6492, %v6488
    %v6494 = vmul.f32 %v6266, %v6493
    %v6495 = vrcp.pop %v6283
    %v6496 = vmul.f32 %v6283, %v6495
    %v6497 = vsub.f32 1.0, %v6496
    %v6498 = vmul.f32 %v6495, %v6497
    %v6499 = vadd.f32 %v6495, %v6498
    %vm6500 = vweird.f32 %v6283
    %vm6501 = vweird.f32 %v6495
    %vm6502 = vmor %vm6500, %vm6501
    %v6503 = vsel %vm6502, %v6495, %v6499
    %v6504 = vand.u32 2147483647, %v6283
    %vm6505 = vcmp.eq.f32.partialorder %v6504, 8.507059e+37
    %v6506 = vand.u32 %v6283, 2147483648
    %v6507 = vor.u32 1.1754944e-38, %v6506
    %v6508 = vsel %vm6505, %v6507, %v6503
    %v6509 = vmul.f32 %v6267, %v6508
    %v6510 = vrcp.pop %v6284
    %v6511 = vmul.f32 %v6284, %v6510
    %v6512 = vsub.f32 1.0, %v6511
    %v6513 = vmul.f32 %v6510, %v6512
    %v6514 = vadd.f32 %v6510, %v6513
    %vm6515 = vweird.f32 %v6284
    %vm6516 = vweird.f32 %v6510
    %vm6517 = vmor %vm6515, %vm6516
    %v6518 = vsel %vm6517, %v6510, %v6514
    %v6519 = vand.u32 2147483647, %v6284
    %vm6520 = vcmp.eq.f32.partialorder %v6519, 8.507059e+37
    %v6521 = vand.u32 %v6284, 2147483648
    %v6522 = vor.u32 1.1754944e-38, %v6521
    %v6523 = vsel %vm6520, %v6522, %v6518
    %v6524 = vmul.f32 %v6268, %v6523
    %v6525 = vmul.f32 %v6173, %v6299
    %v6526 = vmul.f32 %v6174, %v6314
    %v6527 = vmul.f32 %v6175, %v6329
    %v6528 = vmul.f32 %v6176, %v6344
    %v6529 = vmul.f32 %v6177, %v6359
    %v6530 = vmul.f32 %v6178, %v6374
    %v6531 = vmul.f32 %v6179, %v6389
    %v6532 = vmul.f32 %v6180, %v6404
    %v6533 = vmul.f32 %v6181, %v6419
    %v6534 = vmul.f32 %v6182, %v6434
    %v6535 = vmul.f32 %v6183, %v6449
    %v6536 = vmul.f32 %v6184, %v6464
    %v6537 = vmul.f32 %v6185, %v6479
    %v6538 = vmul.f32 %v6186, %v6494
    %v6539 = vmul.f32 %v6187, %v6509
    %v6540 = vmul.f32 %v6188, %v6524
    %v6557 = vrot.slane %v6525, 7
    %v6558 = vrot.slane %v6526, 7
    %v6559 = vrot.slane %v6527, 7
    %v6560 = vrot.slane %v6528, 7
    %v6561 = vrot.slane %v6529, 7
    %v6562 = vrot.slane %v6530, 7
    %v6563 = vrot.slane %v6531, 7
    %v6564 = vrot.slane %v6532, 7
    %v6565 = vrot.slane %v6533, 7
    %v6566 = vrot.slane %v6534, 7
    %v6567 = vrot.slane %v6535, 7
    %v6568 = vrot.slane %v6536, 7
    %v6569 = vrot.slane %v6537, 7
    %v6570 = vrot.slane %v6538, 7
    %v6571 = vrot.slane %v6539, 7
    %v6572 = vrot.slane %v6540, 7
    %v6589 = vsel %vm522, 0.0, %v6557
    %v6590 = vsel %vm522, 0.0, %v6558
    %v6591 = vsel %vm522, 0.0, %v6559
    %v6592 = vsel %vm522, 0.0, %v6560
    %v6593 = vsel %vm522, 0.0, %v6561
    %v6594 = vsel %vm522, 0.0, %v6562
    %v6595 = vsel %vm522, 0.0, %v6563
    %v6596 = vsel %vm522, 0.0, %v6564
    %v6597 = vsel %vm522, 0.0, %v6565
    %v6598 = vsel %vm522, 0.0, %v6566
    %v6599 = vsel %vm522, 0.0, %v6567
    %v6600 = vsel %vm522, 0.0, %v6568
    %v6601 = vsel %vm522, 0.0, %v6569
    %v6602 = vsel %vm522, 0.0, %v6570
    %v6603 = vsel %vm522, 0.0, %v6571
    %v6604 = vsel %vm522, 0.0, %v6572
    %v6605 = vsel %vm522, %v6557, 0.0
    %v6606 = vsel %vm522, %v6558, 0.0
    %v6607 = vsel %vm522, %v6559, 0.0
    %v6608 = vsel %vm522, %v6560, 0.0
    %v6609 = vsel %vm522, %v6561, 0.0
    %v6610 = vsel %vm522, %v6562, 0.0
    %v6611 = vsel %vm522, %v6563, 0.0
    %v6612 = vsel %vm522, %v6564, 0.0
    %v6613 = vsel %vm522, %v6565, 0.0
    %v6614 = vsel %vm522, %v6566, 0.0
    %v6615 = vsel %vm522, %v6567, 0.0
    %v6616 = vsel %vm522, %v6568, 0.0
    %v6617 = vsel %vm522, %v6569, 0.0
    %v6618 = vsel %vm522, %v6570, 0.0
    %v6619 = vsel %vm522, %v6571, 0.0
    %v6620 = vsel %vm522, %v6572, 0.0
    %v6649 = vrot.slane %v6589, 1
    %v6650 = vrot.slane %v6605, 1
    %v6651 = vsel %vm587, %v6649, %v6650
    %v6652 = vrot.slane %v6590, 1
    %v6653 = vrot.slane %v6606, 1
    %v6654 = vsel %vm587, %v6652, %v6653
    %v6655 = vrot.slane %v6591, 1
    %v6656 = vrot.slane %v6607, 1
    %v6657 = vsel %vm587, %v6655, %v6656
    %v6658 = vrot.slane %v6592, 1
    %v6659 = vrot.slane %v6608, 1
    %v6660 = vsel %vm587, %v6658, %v6659
    %v6661 = vrot.slane %v6593, 1
    %v6662 = vrot.slane %v6609, 1
    %v6663 = vsel %vm587, %v6661, %v6662
    %v6664 = vrot.slane %v6594, 1
    %v6665 = vrot.slane %v6610, 1
    %v6666 = vsel %vm587, %v6664, %v6665
    %v6667 = vrot.slane %v6595, 1
    %v6668 = vrot.slane %v6611, 1
    %v6669 = vsel %vm587, %v6667, %v6668
    %v6670 = vrot.slane %v6597, 1
    %v6671 = vrot.slane %v6613, 1
    %v6672 = vsel %vm587, %v6670, %v6671
    %v6673 = vrot.slane %v6598, 1
    %v6674 = vrot.slane %v6614, 1
    %v6675 = vsel %vm587, %v6673, %v6674
    %v6676 = vrot.slane %v6599, 1
    %v6677 = vrot.slane %v6615, 1
    %v6678 = vsel %vm587, %v6676, %v6677
    %v6679 = vrot.slane %v6600, 1
    %v6680 = vrot.slane %v6616, 1
    %v6681 = vsel %vm587, %v6679, %v6680
    %v6682 = vrot.slane %v6601, 1
    %v6683 = vrot.slane %v6617, 1
    %v6684 = vsel %vm587, %v6682, %v6683
    %v6685 = vrot.slane %v6602, 1
    %v6686 = vrot.slane %v6618, 1
    %v6687 = vsel %vm587, %v6685, %v6686
    %v6688 = vrot.slane %v6603, 1
    %v6689 = vrot.slane %v6619, 1
    %v6690 = vsel %vm587, %v6688, %v6689
    %6691 = vrot.lane.b32.xlu0 %v6651, 16
    %v6692 = vpop.permute.xlu0 %6691
    %6693 = vrot.lane.b32.xlu0 %v6654, 16
    %v6694 = vpop.permute.xlu0 %6693
    %6695 = vrot.lane.b32.xlu0 %v6657, 16
    %v6696 = vpop.permute.xlu0 %6695
    %6697 = vrot.lane.b32.xlu0 %v6660, 16
    %v6698 = vpop.permute.xlu0 %6697
    %6699 = vrot.lane.b32.xlu0 %v6663, 16
    %v6700 = vpop.permute.xlu0 %6699
    %6701 = vrot.lane.b32.xlu0 %v6666, 16
    %v6702 = vpop.permute.xlu0 %6701
    %6703 = vrot.lane.b32.xlu0 %v6669, 16
    %v6704 = vpop.permute.xlu0 %6703
    %6705 = vrot.lane.b32.xlu0 %v6672, 16
    %v6706 = vpop.permute.xlu0 %6705
    %6707 = vrot.lane.b32.xlu0 %v6675, 16
    %v6708 = vpop.permute.xlu0 %6707
    %6709 = vrot.lane.b32.xlu0 %v6678, 16
    %v6710 = vpop.permute.xlu0 %6709
    %6711 = vrot.lane.b32.xlu0 %v6681, 16
    %v6712 = vpop.permute.xlu0 %6711
    %6713 = vrot.lane.b32.xlu0 %v6684, 16
    %v6714 = vpop.permute.xlu0 %6713
    %6715 = vrot.lane.b32.xlu0 %v6687, 16
    %v6716 = vpop.permute.xlu0 %6715
    %6717 = vrot.lane.b32.xlu0 %v6690, 16
    %v6718 = vpop.permute.xlu0 %6717
    %v6733 = vrot.slane %v6589, 2
    %v6734 = vrot.slane %v6605, 2
    %v6735 = vsel %vm678, %v6733, %v6734
    %v6736 = vrot.slane %v6590, 2
    %v6737 = vrot.slane %v6606, 2
    %v6738 = vsel %vm678, %v6736, %v6737
    %v6739 = vrot.slane %v6591, 2
    %v6740 = vrot.slane %v6607, 2
    %v6741 = vsel %vm678, %v6739, %v6740
    %v6742 = vrot.slane %v6592, 2
    %v6743 = vrot.slane %v6608, 2
    %v6744 = vsel %vm678, %v6742, %v6743
    %v6745 = vrot.slane %v6593, 2
    %v6746 = vrot.slane %v6609, 2
    %v6747 = vsel %vm678, %v6745, %v6746
    %v6748 = vrot.slane %v6594, 2
    %v6749 = vrot.slane %v6610, 2
    %v6750 = vsel %vm678, %v6748, %v6749
    %v6751 = vrot.slane %v6595, 2
    %v6752 = vrot.slane %v6611, 2
    %v6753 = vsel %vm678, %v6751, %v6752
    %v6754 = vrot.slane %v6597, 2
    %v6755 = vrot.slane %v6613, 2
    %v6756 = vsel %vm678, %v6754, %v6755
    %v6757 = vrot.slane %v6598, 2
    %v6758 = vrot.slane %v6614, 2
    %v6759 = vsel %vm678, %v6757, %v6758
    %v6760 = vrot.slane %v6599, 2
    %v6761 = vrot.slane %v6615, 2
    %v6762 = vsel %vm678, %v6760, %v6761
    %v6763 = vrot.slane %v6600, 2
    %v6764 = vrot.slane %v6616, 2
    %v6765 = vsel %vm678, %v6763, %v6764
    %v6766 = vrot.slane %v6601, 2
    %v6767 = vrot.slane %v6617, 2
    %v6768 = vsel %vm678, %v6766, %v6767
    %v6769 = vrot.slane %v6602, 2
    %v6770 = vrot.slane %v6618, 2
    %v6771 = vsel %vm678, %v6769, %v6770
    %v6772 = vrot.slane %v6603, 2
    %v6773 = vrot.slane %v6619, 2
    %v6774 = vsel %vm678, %v6772, %v6773
    %6775 = vrot.lane.b32.xlu0 %v6735, 32
    %v6776 = vpop.permute.xlu0 %6775
    %6777 = vrot.lane.b32.xlu0 %v6738, 32
    %v6778 = vpop.permute.xlu0 %6777
    %6779 = vrot.lane.b32.xlu0 %v6741, 32
    %v6780 = vpop.permute.xlu0 %6779
    %6781 = vrot.lane.b32.xlu0 %v6744, 32
    %v6782 = vpop.permute.xlu0 %6781
    %6783 = vrot.lane.b32.xlu0 %v6747, 32
    %v6784 = vpop.permute.xlu0 %6783
    %6785 = vrot.lane.b32.xlu0 %v6750, 32
    %v6786 = vpop.permute.xlu0 %6785
    %6787 = vrot.lane.b32.xlu0 %v6753, 32
    %v6788 = vpop.permute.xlu0 %6787
    %6789 = vrot.lane.b32.xlu0 %v6756, 32
    %v6790 = vpop.permute.xlu0 %6789
    %6791 = vrot.lane.b32.xlu0 %v6759, 32
    %v6792 = vpop.permute.xlu0 %6791
    %6793 = vrot.lane.b32.xlu0 %v6762, 32
    %v6794 = vpop.permute.xlu0 %6793
    %6795 = vrot.lane.b32.xlu0 %v6765, 32
    %v6796 = vpop.permute.xlu0 %6795
    %6797 = vrot.lane.b32.xlu0 %v6768, 32
    %v6798 = vpop.permute.xlu0 %6797
    %6799 = vrot.lane.b32.xlu0 %v6771, 32
    %v6800 = vpop.permute.xlu0 %6799
    %6801 = vrot.lane.b32.xlu0 %v6774, 32
    %v6802 = vpop.permute.xlu0 %6801
    %6819 = vrot.lane.b32.xlu0 %v6589, 48
    %v6820 = vpop.permute.xlu0 %6819
    %6821 = vrot.lane.b32.xlu0 %v6590, 48
    %v6822 = vpop.permute.xlu0 %6821
    %6823 = vrot.lane.b32.xlu0 %v6591, 48
    %v6824 = vpop.permute.xlu0 %6823
    %6825 = vrot.lane.b32.xlu0 %v6592, 48
    %v6826 = vpop.permute.xlu0 %6825
    %6827 = vrot.lane.b32.xlu0 %v6593, 48
    %v6828 = vpop.permute.xlu0 %6827
    %6829 = vrot.lane.b32.xlu0 %v6594, 48
    %v6830 = vpop.permute.xlu0 %6829
    %6831 = vrot.lane.b32.xlu0 %v6595, 48
    %v6832 = vpop.permute.xlu0 %6831
    %6833 = vrot.lane.b32.xlu0 %v6596, 48
    %v6834 = vpop.permute.xlu0 %6833
    %6835 = vrot.lane.b32.xlu0 %v6597, 48
    %v6836 = vpop.permute.xlu0 %6835
    %6837 = vrot.lane.b32.xlu0 %v6598, 48
    %v6838 = vpop.permute.xlu0 %6837
    %6839 = vrot.lane.b32.xlu0 %v6599, 48
    %v6840 = vpop.permute.xlu0 %6839
    %6841 = vrot.lane.b32.xlu0 %v6600, 48
    %v6842 = vpop.permute.xlu0 %6841
    %6843 = vrot.lane.b32.xlu0 %v6601, 48
    %v6844 = vpop.permute.xlu0 %6843
    %6845 = vrot.lane.b32.xlu0 %v6602, 48
    %v6846 = vpop.permute.xlu0 %6845
    %6847 = vrot.lane.b32.xlu0 %v6603, 48
    %v6848 = vpop.permute.xlu0 %6847
    %6849 = vrot.lane.b32.xlu0 %v6604, 48
    %v6850 = vpop.permute.xlu0 %6849
    %v6869 = vrot.slane %v6596, 1
    %v6870 = vrot.slane %v6612, 1
    %v6871 = vsel %vm587, %v6869, %v6870
    %v6872 = vrot.slane %v6604, 1
    %v6873 = vrot.slane %v6620, 1
    %v6874 = vsel %vm587, %v6872, %v6873
    %6875 = vrot.lane.b32.xlu0 %v6651, 64
    %v6876 = vpop.permute.xlu0 %6875
    %6877 = vrot.lane.b32.xlu0 %v6654, 64
    %v6878 = vpop.permute.xlu0 %6877
    %6879 = vrot.lane.b32.xlu0 %v6657, 64
    %v6880 = vpop.permute.xlu0 %6879
    %6881 = vrot.lane.b32.xlu0 %v6660, 64
    %v6882 = vpop.permute.xlu0 %6881
    %6883 = vrot.lane.b32.xlu0 %v6663, 64
    %v6884 = vpop.permute.xlu0 %6883
    %6885 = vrot.lane.b32.xlu0 %v6666, 64
    %v6886 = vpop.permute.xlu0 %6885
    %6887 = vrot.lane.b32.xlu0 %v6669, 64
    %v6888 = vpop.permute.xlu0 %6887
    %6889 = vrot.lane.b32.xlu0 %v6871, 64
    %v6890 = vpop.permute.xlu0 %6889
    %6891 = vrot.lane.b32.xlu0 %v6672, 64
    %v6892 = vpop.permute.xlu0 %6891
    %6893 = vrot.lane.b32.xlu0 %v6675, 64
    %v6894 = vpop.permute.xlu0 %6893
    %6895 = vrot.lane.b32.xlu0 %v6678, 64
    %v6896 = vpop.permute.xlu0 %6895
    %6897 = vrot.lane.b32.xlu0 %v6681, 64
    %v6898 = vpop.permute.xlu0 %6897
    %6899 = vrot.lane.b32.xlu0 %v6684, 64
    %v6900 = vpop.permute.xlu0 %6899
    %6901 = vrot.lane.b32.xlu0 %v6687, 64
    %v6902 = vpop.permute.xlu0 %6901
    %6903 = vrot.lane.b32.xlu0 %v6690, 64
    %v6904 = vpop.permute.xlu0 %6903
    %6905 = vrot.lane.b32.xlu0 %v6874, 64
    %v6906 = vpop.permute.xlu0 %6905
    %v6923 = vrot.slane %v6596, 2
    %v6924 = vrot.slane %v6612, 2
    %v6925 = vsel %vm678, %v6923, %v6924
    %v6926 = vrot.slane %v6604, 2
    %v6927 = vrot.slane %v6620, 2
    %v6928 = vsel %vm678, %v6926, %v6927
    %6929 = vrot.lane.b32.xlu0 %v6735, 80
    %v6930 = vpop.permute.xlu0 %6929
    %6931 = vrot.lane.b32.xlu0 %v6738, 80
    %v6932 = vpop.permute.xlu0 %6931
    %6933 = vrot.lane.b32.xlu0 %v6741, 80
    %v6934 = vpop.permute.xlu0 %6933
    %6935 = vrot.lane.b32.xlu0 %v6744, 80
    %v6936 = vpop.permute.xlu0 %6935
    %6937 = vrot.lane.b32.xlu0 %v6747, 80
    %v6938 = vpop.permute.xlu0 %6937
    %6939 = vrot.lane.b32.xlu0 %v6750, 80
    %v6940 = vpop.permute.xlu0 %6939
    %6941 = vrot.lane.b32.xlu0 %v6753, 80
    %v6942 = vpop.permute.xlu0 %6941
    %6943 = vrot.lane.b32.xlu0 %v6925, 80
    %v6944 = vpop.permute.xlu0 %6943
    %6945 = vrot.lane.b32.xlu0 %v6756, 80
    %v6946 = vpop.permute.xlu0 %6945
    %6947 = vrot.lane.b32.xlu0 %v6759, 80
    %v6948 = vpop.permute.xlu0 %6947
    %6949 = vrot.lane.b32.xlu0 %v6762, 80
    %v6950 = vpop.permute.xlu0 %6949
    %6951 = vrot.lane.b32.xlu0 %v6765, 80
    %v6952 = vpop.permute.xlu0 %6951
    %6953 = vrot.lane.b32.xlu0 %v6768, 80
    %v6954 = vpop.permute.xlu0 %6953
    %6955 = vrot.lane.b32.xlu0 %v6771, 80
    %v6956 = vpop.permute.xlu0 %6955
    %6957 = vrot.lane.b32.xlu0 %v6774, 80
    %v6958 = vpop.permute.xlu0 %6957
    %6959 = vrot.lane.b32.xlu0 %v6928, 80
    %v6960 = vpop.permute.xlu0 %6959
    %6977 = vrot.lane.b32.xlu0 %v6590, 96
    %v6978 = vpop.permute.xlu0 %6977
    %6979 = vrot.lane.b32.xlu0 %v6591, 96
    %v6980 = vpop.permute.xlu0 %6979
    %6981 = vrot.lane.b32.xlu0 %v6592, 96
    %v6982 = vpop.permute.xlu0 %6981
    %6983 = vrot.lane.b32.xlu0 %v6593, 96
    %v6984 = vpop.permute.xlu0 %6983
    %6985 = vrot.lane.b32.xlu0 %v6594, 96
    %v6986 = vpop.permute.xlu0 %6985
    %6987 = vrot.lane.b32.xlu0 %v6595, 96
    %v6988 = vpop.permute.xlu0 %6987
    %6989 = vrot.lane.b32.xlu0 %v6596, 96
    %v6990 = vpop.permute.xlu0 %6989
    %6991 = vrot.lane.b32.xlu0 %v6598, 96
    %v6992 = vpop.permute.xlu0 %6991
    %6993 = vrot.lane.b32.xlu0 %v6599, 96
    %v6994 = vpop.permute.xlu0 %6993
    %6995 = vrot.lane.b32.xlu0 %v6600, 96
    %v6996 = vpop.permute.xlu0 %6995
    %6997 = vrot.lane.b32.xlu0 %v6601, 96
    %v6998 = vpop.permute.xlu0 %6997
    %6999 = vrot.lane.b32.xlu0 %v6602, 96
    %v7000 = vpop.permute.xlu0 %6999
    %7001 = vrot.lane.b32.xlu0 %v6603, 96
    %v7002 = vpop.permute.xlu0 %7001
    %7003 = vrot.lane.b32.xlu0 %v6604, 96
    %v7004 = vpop.permute.xlu0 %7003
    %7019 = vrot.lane.b32.xlu0 %v6654, 112
    %v7020 = vpop.permute.xlu0 %7019
    %7021 = vrot.lane.b32.xlu0 %v6657, 112
    %v7022 = vpop.permute.xlu0 %7021
    %7023 = vrot.lane.b32.xlu0 %v6660, 112
    %v7024 = vpop.permute.xlu0 %7023
    %7025 = vrot.lane.b32.xlu0 %v6663, 112
    %v7026 = vpop.permute.xlu0 %7025
    %7027 = vrot.lane.b32.xlu0 %v6666, 112
    %v7028 = vpop.permute.xlu0 %7027
    %7029 = vrot.lane.b32.xlu0 %v6669, 112
    %v7030 = vpop.permute.xlu0 %7029
    %7031 = vrot.lane.b32.xlu0 %v6871, 112
    %v7032 = vpop.permute.xlu0 %7031
    %7033 = vrot.lane.b32.xlu0 %v6675, 112
    %v7034 = vpop.permute.xlu0 %7033
    %7035 = vrot.lane.b32.xlu0 %v6678, 112
    %v7036 = vpop.permute.xlu0 %7035
    %7037 = vrot.lane.b32.xlu0 %v6681, 112
    %v7038 = vpop.permute.xlu0 %7037
    %7039 = vrot.lane.b32.xlu0 %v6684, 112
    %v7040 = vpop.permute.xlu0 %7039
    %7041 = vrot.lane.b32.xlu0 %v6687, 112
    %v7042 = vpop.permute.xlu0 %7041
    %7043 = vrot.lane.b32.xlu0 %v6690, 112
    %v7044 = vpop.permute.xlu0 %7043
    %7045 = vrot.lane.b32.xlu0 %v6874, 112
    %v7046 = vpop.permute.xlu0 %7045
    %v7061 = vsel %vm2269, %v6589, %v6692
    %v7062 = vsel %vm2269, %v6590, %v6694
    %v7063 = vsel %vm2269, %v6591, %v6696
    %v7064 = vsel %vm2269, %v6592, %v6698
    %v7065 = vsel %vm2269, %v6593, %v6700
    %v7066 = vsel %vm2269, %v6594, %v6702
    %v7067 = vsel %vm2269, %v6595, %v6704
    %v7068 = vsel %vm2269, %v6597, %v6706
    %v7069 = vsel %vm2269, %v6598, %v6708
    %v7070 = vsel %vm2269, %v6599, %v6710
    %v7071 = vsel %vm2269, %v6600, %v6712
    %v7072 = vsel %vm2269, %v6601, %v6714
    %v7073 = vsel %vm2269, %v6602, %v6716
    %v7074 = vsel %vm2269, %v6603, %v6718
    %v7075 = vsel %vm987, %v7061, %v6776
    %v7076 = vsel %vm987, %v7062, %v6778
    %v7077 = vsel %vm987, %v7063, %v6780
    %v7078 = vsel %vm987, %v7064, %v6782
    %v7079 = vsel %vm987, %v7065, %v6784
    %v7080 = vsel %vm987, %v7066, %v6786
    %v7081 = vsel %vm987, %v7067, %v6788
    %v7082 = vsel %vm987, %v7068, %v6790
    %v7083 = vsel %vm987, %v7069, %v6792
    %v7084 = vsel %vm987, %v7070, %v6794
    %v7085 = vsel %vm987, %v7071, %v6796
    %v7086 = vsel %vm987, %v7072, %v6798
    %v7087 = vsel %vm987, %v7073, %v6800
    %v7088 = vsel %vm987, %v7074, %v6802
    %v7089 = vsel %vm2300, %v2285, %v6820
    %v7090 = vsel %vm2300, %v7075, %v6822
    %v7091 = vsel %vm2300, %v7076, %v6824
    %v7092 = vsel %vm2300, %v7077, %v6826
    %v7093 = vsel %vm2300, %v7078, %v6828
    %v7094 = vsel %vm2300, %v7079, %v6830
    %v7095 = vsel %vm2300, %v7080, %v6832
    %v7096 = vsel %vm2300, %v7081, %v6834
    %v7097 = vsel %vm2300, %v2285, %v6836
    %v7098 = vsel %vm2300, %v7082, %v6838
    %v7099 = vsel %vm2300, %v7083, %v6840
    %v7100 = vsel %vm2300, %v7084, %v6842
    %v7101 = vsel %vm2300, %v7085, %v6844
    %v7102 = vsel %vm2300, %v7086, %v6846
    %v7103 = vsel %vm2300, %v7087, %v6848
    %v7104 = vsel %vm2300, %v7088, %v6850
    %v7105 = vsel %vm1003, %v7089, %v6876
    %v7106 = vsel %vm1003, %v7090, %v6878
    %v7107 = vsel %vm1003, %v7091, %v6880
    %v7108 = vsel %vm1003, %v7092, %v6882
    %v7109 = vsel %vm1003, %v7093, %v6884
    %v7110 = vsel %vm1003, %v7094, %v6886
    %v7111 = vsel %vm1003, %v7095, %v6888
    %v7112 = vsel %vm1003, %v7096, %v6890
    %v7113 = vsel %vm1003, %v7097, %v6892
    %v7114 = vsel %vm1003, %v7098, %v6894
    %v7115 = vsel %vm1003, %v7099, %v6896
    %v7116 = vsel %vm1003, %v7100, %v6898
    %v7117 = vsel %vm1003, %v7101, %v6900
    %v7118 = vsel %vm1003, %v7102, %v6902
    %v7119 = vsel %vm1003, %v7103, %v6904
    %v7120 = vsel %vm1003, %v7104, %v6906
    %v7121 = vsel %vm2333, %v7105, %v6930
    %v7122 = vsel %vm2333, %v7106, %v6932
    %v7123 = vsel %vm2333, %v7107, %v6934
    %v7124 = vsel %vm2333, %v7108, %v6936
    %v7125 = vsel %vm2333, %v7109, %v6938
    %v7126 = vsel %vm2333, %v7110, %v6940
    %v7127 = vsel %vm2333, %v7111, %v6942
    %v7128 = vsel %vm2333, %v7112, %v6944
    %v7129 = vsel %vm2333, %v7113, %v6946
    %v7130 = vsel %vm2333, %v7114, %v6948
    %v7131 = vsel %vm2333, %v7115, %v6950
    %v7132 = vsel %vm2333, %v7116, %v6952
    %v7133 = vsel %vm2333, %v7117, %v6954
    %v7134 = vsel %vm2333, %v7118, %v6956
    %v7135 = vsel %vm2333, %v7119, %v6958
    %v7136 = vsel %vm2333, %v7120, %v6960
    %v7137 = vsel %vm1019, %v7121, %v6978
    %v7138 = vsel %vm1019, %v7122, %v6980
    %v7139 = vsel %vm1019, %v7123, %v6982
    %v7140 = vsel %vm1019, %v7124, %v6984
    %v7141 = vsel %vm1019, %v7125, %v6986
    %v7142 = vsel %vm1019, %v7126, %v6988
    %v7143 = vsel %vm1019, %v7127, %v6990
    %v7144 = vsel %vm1019, %v7128, %v2194
    %v7145 = vsel %vm1019, %v7129, %v6992
    %v7146 = vsel %vm1019, %v7130, %v6994
    %v7147 = vsel %vm1019, %v7131, %v6996
    %v7148 = vsel %vm1019, %v7132, %v6998
    %v7149 = vsel %vm1019, %v7133, %v7000
    %v7150 = vsel %vm1019, %v7134, %v7002
    %v7151 = vsel %vm1019, %v7135, %v7004
    %v7152 = vsel %vm1019, %v7136, %v2194
    %v7153 = vsel %vm2366, %v7137, %v7020
    %v7154 = vsel %vm2366, %v7138, %v7022
    %v7155 = vsel %vm2366, %v7139, %v7024
    %v7156 = vsel %vm2366, %v7140, %v7026
    %v7157 = vsel %vm2366, %v7141, %v7028
    %v7158 = vsel %vm2366, %v7142, %v7030
    %v7159 = vsel %vm2366, %v7143, %v7032
    %v7160 = vsel %vm2366, %v7144, %v2239
    %v7161 = vsel %vm2366, %v7145, %v7034
    %v7162 = vsel %vm2366, %v7146, %v7036
    %v7163 = vsel %vm2366, %v7147, %v7038
    %v7164 = vsel %vm2366, %v7148, %v7040
    %v7165 = vsel %vm2366, %v7149, %v7042
    %v7166 = vsel %vm2366, %v7150, %v7044
    %v7167 = vsel %vm2366, %v7151, %v7046
    %v7168 = vsel %vm2366, %v7152, %v2239
    %v7169 = vld [vmem:[%s18] sm:$0xff]
    %v7170 = vld [vmem:[%s18 + $0x8] sm:$0xff]
    %v7171 = vld [vmem:[%s18 + $0x10] sm:$0xff]
    %v7172 = vld [vmem:[%s18 + $0x18] sm:$0xff]
    %v7173 = vld [vmem:[%s18 + $0x20] sm:$0xff]
    %v7174 = vld [vmem:[%s18 + $0x28] sm:$0xff]
    %v7175 = vld [vmem:[%s18 + $0x30] sm:$0xff]
    %v7176 = vld [vmem:[%s18 + $0x38] sm:$0xff]
    %v7177 = vld [vmem:[%s18 + $0x40] sm:$0xff]
    %v7178 = vld [vmem:[%s18 + $0x48] sm:$0xff]
    %v7179 = vld [vmem:[%s18 + $0x50] sm:$0xff]
    %v7180 = vld [vmem:[%s18 + $0x58] sm:$0xff]
    %v7181 = vld [vmem:[%s18 + $0x60] sm:$0xff]
    %v7182 = vld [vmem:[%s18 + $0x68] sm:$0xff]
    %v7183 = vld [vmem:[%s18 + $0x70] sm:$0xff]
    %v7184 = vld [vmem:[%s18 + $0x78] sm:$0xff]
    %v7185 = vld [vmem:[%s18 + $0x80] sm:$0xff]
    %v7186 = vld [vmem:[%s18 + $0x88] sm:$0xff]
    %v7187 = vsel %vm2269, %v6738, 0
    %v7189 = vsel %vm2269, %v6741, 0
    %v7191 = vsel %vm2269, %v6744, 0
    %v7193 = vsel %vm2269, %v6747, 0
    %v7195 = vsel %vm2269, %v6750, 0
    %v7197 = vsel %vm2269, %v6753, 0
    %v7199 = vsel %vm2269, %v6925, 0
    %v7201 = vsel %vm2269, %v6759, 0
    %v7203 = vsel %vm2269, %v6762, 0
    %v7205 = vsel %vm2269, %v6765, 0
    %v7207 = vsel %vm2269, %v6768, 0
    %v7209 = vsel %vm2269, %v6771, 0
    %v7211 = vsel %vm2269, %v6774, 0
    %v7213 = vsel %vm2269, %v6928, 0
    %7215 = vmatpush.msra.mxu0 %v7184
    %7216 = vmatpush.msra.mxu0 %v7183
    %7217 = vmatpush.msra.mxu0 %v7182
    %7218 = vmatpush.msra.mxu0 %v7181
    %7219 = vmatpush.msra.mxu0 %v7180
    %7220 = vmatpush.msra.mxu0 %v7179
    %7221 = vmatpush.msra.mxu0 %v7178
    %7222 = vmatpush.msra.mxu0 %v7177
    %7223 = vmatpush.msra.mxu0 %v7176
    %7224 = vmatpush.msra.mxu0 %v7175
    %7225 = vmatpush.msra.mxu0 %v7174
    %7226 = vmatpush.msra.mxu0 %v7173
    %7227 = vmatpush.msra.mxu0 %v7172
    %7228 = vmatpush.msra.mxu0 %v7171
    %7229 = vmatpush.msra.mxu0 %v7170
    %7230 = vmatpush.msra.mxu0 %v7169
    %7231 = vmatmul.f32.gmra.mxu0 %v7153
    %v7232 = vpop.f32.mrf.mxu0
    %v7233 = vadd.f32 %v63, %v7232
    %7234 = vmatmul.f32.gmra.mxu0 %v7154
    %v7235 = vpop.f32.mrf.mxu0
    %v7236 = vadd.f32 %v64, %v7235
    %7237 = vmatmul.f32.gmra.mxu0 %v7155
    %v7238 = vpop.f32.mrf.mxu0
    %v7239 = vadd.f32 %v65, %v7238
    %7240 = vmatmul.f32.gmra.mxu0 %v7156
    %v7241 = vpop.f32.mrf.mxu0
    %v7242 = vadd.f32 %v66, %v7241
    %7243 = vmatmul.f32.gmra.mxu0 %v7157
    %v7244 = vpop.f32.mrf.mxu0
    %v7245 = vadd.f32 %v67, %v7244
    %7246 = vmatmul.f32.gmra.mxu0 %v7158
    %v7247 = vpop.f32.mrf.mxu0
    %v7248 = vadd.f32 %v68, %v7247
    %7249 = vmatmul.f32.gmra.mxu0 %v7159
    %v7250 = vpop.f32.mrf.mxu0
    %v7251 = vadd.f32 %v69, %v7250
    %7252 = vmatmul.f32.gmra.mxu0 %v7160
    %v7253 = vpop.f32.mrf.mxu0
    %v7254 = vadd.f32 %v70, %v7253
    %7255 = vmatmul.f32.gmra.mxu0 %v7161
    %v7256 = vpop.f32.mrf.mxu0
    %v7257 = vadd.f32 %v71, %v7256
    %7258 = vmatmul.f32.gmra.mxu0 %v7162
    %v7259 = vpop.f32.mrf.mxu0
    %v7260 = vadd.f32 %v72, %v7259
    %7261 = vmatmul.f32.gmra.mxu0 %v7163
    %v7262 = vpop.f32.mrf.mxu0
    %v7263 = vadd.f32 %v73, %v7262
    %7264 = vmatmul.f32.gmra.mxu0 %v7164
    %v7265 = vpop.f32.mrf.mxu0
    %v7266 = vadd.f32 %v74, %v7265
    %7267 = vmatmul.f32.gmra.mxu0 %v7165
    %v7268 = vpop.f32.mrf.mxu0
    %v7269 = vadd.f32 %v75, %v7268
    %7270 = vmatmul.f32.gmra.mxu0 %v7166
    %v7271 = vpop.f32.mrf.mxu0
    %v7272 = vadd.f32 %v76, %v7271
    %7273 = vmatmul.f32.gmra.mxu0 %v7167
    %v7274 = vpop.f32.mrf.mxu0
    %v7275 = vadd.f32 %v77, %v7274
    %7276 = vmatmul.f32.gmra.mxu0 %v7168
    %v7277 = vpop.f32.mrf.mxu0
    %v7278 = vadd.f32 %v78, %v7277
    %7279 = vdwg.mxu0
    %7280 = vmatpush.msra.mxu0 0.0
    %7281 = vmatpush.msra.mxu0 0.0
    %7282 = vmatpush.msra.mxu0 0.0
    %7283 = vmatpush.msra.mxu0 0.0
    %7284 = vmatpush.msra.mxu0 0.0
    %7285 = vmatpush.msra.mxu0 0.0
    %7286 = vmatpush.msra.mxu0 0.0
    %7287 = vmatpush.msra.mxu0 0.0
    %7288 = vmatpush.msra.mxu0 0.0
    %7289 = vmatpush.msra.mxu0 0.0
    %7290 = vmatpush.msra.mxu0 0.0
    %7291 = vmatpush.msra.mxu0 0.0
    %7292 = vmatpush.msra.mxu0 0.0
    %7293 = vmatpush.msra.mxu0 0.0
    %7294 = vmatpush.msra.mxu0 %v7186
    %7295 = vmatpush.msra.mxu0 %v7185
    %7296 = vmatmul.f32.gmra.mxu0 %v7187
    %v7297 = vpop.f32.mrf.mxu0
    %v7298 = vadd.f32 %v7233, %v7297
    %7299 = vmatmul.f32.gmra.mxu0 %v7189
    %v7300 = vpop.f32.mrf.mxu0
    %v7301 = vadd.f32 %v7236, %v7300
    %7302 = vmatmul.f32.gmra.mxu0 %v7191
    %v7303 = vpop.f32.mrf.mxu0
    %v7304 = vadd.f32 %v7239, %v7303
    %7305 = vmatmul.f32.gmra.mxu0 %v7193
    %v7306 = vpop.f32.mrf.mxu0
    %v7307 = vadd.f32 %v7242, %v7306
    %7308 = vmatmul.f32.gmra.mxu0 %v7195
    %v7309 = vpop.f32.mrf.mxu0
    %v7310 = vadd.f32 %v7245, %v7309
    %7311 = vmatmul.f32.gmra.mxu0 %v7197
    %v7312 = vpop.f32.mrf.mxu0
    %v7313 = vadd.f32 %v7248, %v7312
    %7314 = vmatmul.f32.gmra.mxu0 %v7199
    %v7315 = vpop.f32.mrf.mxu0
    %v7316 = vadd.f32 %v7251, %v7315
    %7317 = vmatmul.f32.gmra.mxu0 %v2415
    %v7318 = vpop.f32.mrf.mxu0
    %v7319 = vadd.f32 %v7254, %v7318
    %7320 = vmatmul.f32.gmra.mxu0 %v7201
    %v7321 = vpop.f32.mrf.mxu0
    %v7322 = vadd.f32 %v7257, %v7321
    %7323 = vmatmul.f32.gmra.mxu0 %v7203
    %v7324 = vpop.f32.mrf.mxu0
    %v7325 = vadd.f32 %v7260, %v7324
    %7326 = vmatmul.f32.gmra.mxu0 %v7205
    %v7327 = vpop.f32.mrf.mxu0
    %v7328 = vadd.f32 %v7263, %v7327
    %7329 = vmatmul.f32.gmra.mxu0 %v7207
    %v7330 = vpop.f32.mrf.mxu0
    %v7331 = vadd.f32 %v7266, %v7330
    %7332 = vmatmul.f32.gmra.mxu0 %v7209
    %v7333 = vpop.f32.mrf.mxu0
    %v7334 = vadd.f32 %v7269, %v7333
    %7335 = vmatmul.f32.gmra.mxu0 %v7211
    %v7336 = vpop.f32.mrf.mxu0
    %v7337 = vadd.f32 %v7272, %v7336
    %7338 = vmatmul.f32.gmra.mxu0 %v7213
    %v7339 = vpop.f32.mrf.mxu0
    %v7340 = vadd.f32 %v7275, %v7339
    %7341 = vmatmul.f32.gmra.mxu0 %v2415
    %v7342 = vpop.f32.mrf.mxu0
    %v7343 = vadd.f32 %v7278, %v7342
    %7344 = vdwg.mxu0
    %7345 = vst.msk [vmem:[#allocation2] sm:$0xff] %vm987, %v7298
    %7346 = vst.msk [vmem:[#allocation2 + $0x8] sm:$0xff] %vm987, %v7301
    %7347 = vst.msk [vmem:[#allocation2 + $0x10] sm:$0xff] %vm987, %v7304
    %7348 = vst.msk [vmem:[#allocation2 + $0x18] sm:$0xff] %vm987, %v7307
    %7349 = vst.msk [vmem:[#allocation2 + $0x20] sm:$0xff] %vm987, %v7310
    %7350 = vst.msk [vmem:[#allocation2 + $0x28] sm:$0xff] %vm987, %v7313
    %7351 = vst.msk [vmem:[#allocation2 + $0x30] sm:$0xff] %vm987, %v7316
    %7352 = vst.msk [vmem:[#allocation2 + $0x38] sm:$0xff] %vm987, %v7319
    %7353 = vst.msk [vmem:[#allocation2 + $0x40] sm:$0xff] %vm987, %v7322
    %7354 = vst.msk [vmem:[#allocation2 + $0x48] sm:$0xff] %vm987, %v7325
    %7355 = vst.msk [vmem:[#allocation2 + $0x50] sm:$0xff] %vm987, %v7328
    %7356 = vst.msk [vmem:[#allocation2 + $0x58] sm:$0xff] %vm987, %v7331
    %7357 = vst.msk [vmem:[#allocation2 + $0x60] sm:$0xff] %vm987, %v7334
    %7358 = vst.msk [vmem:[#allocation2 + $0x68] sm:$0xff] %vm987, %v7337
    %7359 = vst.msk [vmem:[#allocation2 + $0x70] sm:$0xff] %vm987, %v7340
    %7360 = vst.msk [vmem:[#allocation2 + $0x78] sm:$0xff] %vm987, %v7343
    // Predicated region
    $region78: #{nested_residual_block.1} parent=1 // pred_check
      _
    $region79: #{nested_residual_block.1} parent=1 // pred_check_branch
      %7362 = sbr.rel (0) target = $region81
    $region80: #{nested_residual_block.1} parent=1 // pred_region
      %7364 = vsyncadd [#allocation3], 0
      %s7365 = sshll.u32 [#allocation2], 4
      %s7366 = int_to_ptr.vmem [resolvable:$true] %s7365
      %s7367 = sshll.u32 %s19, 4
      %s7368 = int_to_ptr.hbm [resolvable:$true] %s7367
      %7373 = dma.vmem_to_hbm [thread:$0]  %s7366, 2048, %s7368, [#allocation3], 128, 128, 8
    $region81: #{nested_residual_block.1} parent=1 // pred_fallthru
      _
    // Predicated region
    $region82: #{nested_residual_block.1} parent=1 // pred_check
      _
    $region83: #{nested_residual_block.1} parent=1 // pred_check_branch
      %7375 = sbr.rel (0) target = $region85
    $region84: #{nested_residual_block.1} parent=1 // pred_region
      %7377 = dma.done [#allocation3], 2048
    $region85: #{nested_residual_block.1} parent=1 // pred_fallthru
      _
    %7378 = vsyncpa [#allocation3], 1

</llo_original>
